<compile_context>
chip_gen: v7x
topology: tpu7x:2x2x1
jax: 0.10.0
libtpu: 0.0.40
codegen_flags: <defaults>
</compile_context>

<pallas_src>
import functools

import jax
import jax.numpy as jnp
from jax.experimental import pallas as pl
from jax.experimental.pallas import tpu as pltpu

# ----- module hyper-parameters (from the PyTorch __init__) -----
EMBED = 128          # embedding_size
NUM_HEADS = 2
HEAD_DIM = EMBED // NUM_HEADS
FF_DIM = 256         # feedforward_dim
NUM_ENC = 3          # num_encoder_layers
NUM_DEC = 3          # num_decoder_layers
MAX_LEN = 50
LN_EPS = 1e-5
ATTN_SCALE = 1.0 / float(HEAD_DIM) ** 0.5
NEG_INF = -1e9       # finite "minus infinity" for additive masks (NaN-safe softmax)
VMEM_LIMIT = 32 * 1024 * 1024   # fits v7x's 64 MiB physical VMEM; plenty at these sizes
FUSE_FC_MAX_VP = 4096           # hoist fc_out to XLA beyond this padded vocab width

# Stacked per-layer parameter order (wrapper and kernel must agree).
ENC_STACKED = ("wqkv", "bqkv", "wo", "bo",
               "ln1_g", "ln1_b",
               "ff_w1", "ff_b1", "ff_w2", "ff_b2",
               "ln2_g", "ln2_b")

DEC_STACKED = ("s_wqkv", "s_bqkv", "s_wo", "s_bo",
               "ln1_g", "ln1_b",
               "c_wq", "c_bq", "c_wkv", "c_bkv", "c_wo", "c_bo",
               "ln2_g", "ln2_b",
               "ff_w1", "ff_b1", "ff_w2", "ff_b2",
               "ln3_g", "ln3_b")


def _round_up(x, m):
    return (x + m - 1) // m * m


# ---------------- in-kernel building blocks ----------------

def _layernorm(x, g, b):
    """x: (M, E) f32, g/b: (1, E) f32."""
    mu = jnp.mean(x, axis=-1, keepdims=True)
    xc = x - mu
    var = jnp.mean(xc * xc, axis=-1, keepdims=True)
    return xc * jax.lax.rsqrt(var + LN_EPS) * g + b


def _ffn(x, w1_ref, b1_ref, w2_ref, b2_ref):
    """x: (M, E) f32; weights bf16 blocks (1, ., .); returns (M, E) f32."""
    h = jnp.dot(x.astype(jnp.bfloat16), w1_ref[0],
                preferred_element_type=jnp.float32) + b1_ref[0]
    # ReLU in bf16 (packed VALU on v6e/v7x); relu(round(x)) == round(relu(x)) for bf16.
    h = jnp.maximum(h.astype(jnp.bfloat16), 0.0)
    return jnp.dot(h, w2_ref[0], preferred_element_type=jnp.float32) + b2_ref[0]


def _attn_core(q, k, v, N, Lq, Lk, mask):
    """Scaled-dot attention (scale pre-folded into q's projection).

    q: (N*Lq, E) f32, k/v: (N*Lk, E) f32 with heads concatenated along lanes.
    mask: additive f32, broadcastable to (N, Lq, Lk), or None.
    Returns (N*Lq, E) f32 with heads concatenated along lanes.
    """
    qb = q.astype(jnp.bfloat16)
    kb = k.astype(jnp.bfloat16)
    vb = v.astype(jnp.bfloat16)
    heads = []
    for h in range(NUM_HEADS):                       # static unroll, H == 2
        lo, hi = h * HEAD_DIM, (h + 1) * HEAD_DIM
        qh = qb[:, lo:hi].reshape(N, Lq, HEAD_DIM)
        kh = kb[:, lo:hi].reshape(N, Lk, HEAD_DIM)
        vh = vb[:, lo:hi].reshape(N, Lk, HEAD_DIM)
        s = jnp.einsum("nqd,nkd->nqk", qh, kh, preferred_element_type=jnp.float32)
        if mask is not None:
            s = s + mask
        s = s - jnp.max(s, axis=-1, keepdims=True)
        p = jnp.exp(s)
        p = p / jnp.sum(p, axis=-1, keepdims=True)   # exact divide (parity w/ PyTorch)
        oh = jnp.einsum("nqk,nkd->nqd", p.astype(jnp.bfloat16), vh,
                        preferred_element_type=jnp.float32)
        heads.append(oh.reshape(N * Lq, HEAD_DIM))
    return jnp.concatenate(heads, axis=-1)           # (N*Lq, E) heads along lanes


def _self_attn(x, N, L, wqkv_ref, bqkv_ref, wo_ref, bo_ref, mask):
    """Fused-QKV self-attention.  wqkv block (1,E,3E) bf16, bqkv (1,1,3E) f32."""
    xb = x.astype(jnp.bfloat16)
    qkv = jnp.dot(xb, wqkv_ref[0], preferred_element_type=jnp.float32) + bqkv_ref[0]
    q = qkv[:, :EMBED]
    k = qkv[:, EMBED:2 * EMBED]
    v = qkv[:, 2 * EMBED:]
    o = _attn_core(q, k, v, N, L, L, mask)
    return jnp.dot(o.astype(jnp.bfloat16), wo_ref[0],
                   preferred_element_type=jnp.float32) + bo_ref[0]


def _cross_attn(xq, mem, N, Lq, Lk, wq_ref, bq_ref, wkv_ref, bkv_ref,
                wo_ref, bo_ref, mask):
    """Cross attention: Q from decoder stream, fused KV from encoder memory."""
    q = jnp.dot(xq.astype(jnp.bfloat16), wq_ref[0],
                preferred_element_type=jnp.float32) + bq_ref[0]
    kv = jnp.dot(mem.astype(jnp.bfloat16), wkv_ref[0],
                 preferred_element_type=jnp.float32) + bkv_ref[0]
    k = kv[:, :EMBED]
    v = kv[:, EMBED:]
    o = _attn_core(q, k, v, N, Lq, Lk, mask)
    return jnp.dot(o.astype(jnp.bfloat16), wo_ref[0],
                   preferred_element_type=jnp.float32) + bo_ref[0]


# ---------------- single fused encoder+decoder stack kernel ----------------

def _transformer_kernel(bn, Sp, Tp, n_enc, fuse_fc, has_cmask, *refs):
    it = iter(refs)
    x0_ref = next(it)
    y0_ref = next(it)
    emask_ref = next(it)
    smask_ref = next(it)
    cmask_ref = next(it) if has_cmask else None
    enc = {k: next(it) for k in ENC_STACKED}
    e_fg = next(it)
    e_fb = next(it)
    dec = {k: next(it) for k in DEC_STACKED}
    d_fg = next(it)
    d_fb = next(it)
    fcw_ref = next(it) if fuse_fc else None
    fcb_ref = next(it) if fuse_fc else None
    out_ref = next(it)
    x_scr = next(it)
    mem_scr = next(it)
    y_scr = next(it)

    l = pl.program_id(1)
    n_total = pl.num_programs(1)

    @pl.when(l == 0)
    def _():
        x_scr[...] = x0_ref[...]
        y_scr[...] = y0_ref[...]

    # ---------- encoder layers: grid steps 0 .. n_enc-1 ----------
    @pl.when(l < n_enc)
    def _():
        x = x_scr[...]
        a = _self_attn(x, bn, Sp, enc["wqkv"], enc["bqkv"], enc["wo"], enc["bo"],
                       emask_ref[...])
        x = _layernorm(x + a, enc["ln1_g"][0], enc["ln1_b"][0])
        h = _ffn(x, enc["ff_w1"], enc["ff_b1"], enc["ff_w2"], enc["ff_b2"])
        x = _layernorm(x + h, enc["ln2_g"][0], enc["ln2_b"][0])
        x_scr[...] = x

        @pl.when(l == n_enc - 1)
        def _():
            # final encoder norm fused; memory stays in VMEM (never written to HBM)
            mem_scr[...] = _layernorm(x, e_fg[...], e_fb[...])

    # ---------- decoder layers: grid steps n_enc .. n_total-1 ----------
    @pl.when(l >= n_enc)
    def _():
        y = y_scr[...]
        a = _self_attn(y, bn, Tp, dec["s_wqkv"], dec["s_bqkv"], dec["s_wo"],
                       dec["s_bo"], smask_ref[...])
        y = _layernorm(y + a, dec["ln1_g"][0], dec["ln1_b"][0])
        cmask = cmask_ref[...] if has_cmask else None
        a = _cross_attn(y, mem_scr[...], bn, Tp, Sp,
                        dec["c_wq"], dec["c_bq"], dec["c_wkv"], dec["c_bkv"],
                        dec["c_wo"], dec["c_bo"], cmask)
        y = _layernorm(y + a, dec["ln2_g"][0], dec["ln2_b"][0])
        h = _ffn(y, dec["ff_w1"], dec["ff_b1"], dec["ff_w2"], dec["ff_b2"])
        y = _layernorm(y + h, dec["ln3_g"][0], dec["ln3_b"][0])
        y_scr[...] = y

        @pl.when(l == n_total - 1)
        def _():
            yn = _layernorm(y, d_fg[...], d_fb[...])     # final decoder norm fused
            if fuse_fc:
                out_ref[...] = (jnp.dot(yn.astype(jnp.bfloat16), fcw_ref[...],
                                        preferred_element_type=jnp.float32)
                                + fcb_ref[...])
            else:
                out_ref[...] = yn


# ---------------- pallas_call wrapper ----------------

def _const_spec(shape):
    nd = len(shape)
    return pl.BlockSpec(tuple(shape), lambda b, l, nd=nd: (0,) * nd)


def _layer_spec(per_shape, n_enc, is_dec):
    nd = len(per_shape)
    if is_dec:
        idx = lambda b, l, nd=nd, n=n_enc: (jnp.maximum(l - n, 0),) + (0,) * nd
    else:
        idx = lambda b, l, nd=nd, n=n_enc: (jnp.minimum(l, n - 1),) + (0,) * nd
    return pl.BlockSpec((1,) + tuple(per_shape), idx)


def transformer_stack(x0, y0, emask, smask, cmask, params, *, batch_blocks=1,
                      fuse_fc=True):
    enc, dec = params["enc"], params["dec"]
    M_s, E = x0.shape
    M_t, _ = y0.shape
    N = emask.shape[0]
    Sp = emask.shape[2]
    Tp = smask.shape[1]
    assert N % batch_blocks == 0
    bn = N // batch_blocks
    n_enc = enc["wqkv"].shape[0]
    n_dec = dec["s_wqkv"].shape[0]
    n_total = n_enc + n_dec
    fcw, fcb = params["fc_w"], params["fc_b"]
    Vp = fcw.shape[1]
    has_cmask = cmask is not None

    enc_arrs = [enc[k] for k in ENC_STACKED]
    dec_arrs = [dec[k] for k in DEC_STACKED]

    inputs = [x0, y0, emask, smask]
    in_specs = [
        pl.BlockSpec((bn * Sp, E), lambda b, l: (b, 0)),
        pl.BlockSpec((bn * Tp, E), lambda b, l: (b, 0)),
        pl.BlockSpec((bn, 1, Sp), lambda b, l: (b, 0, 0)),
        _const_spec(smask.shape),
    ]
    if has_cmask:
        inputs.append(cmask)
        in_specs.append(_const_spec(cmask.shape))

    inputs += enc_arrs
    in_specs += [_layer_spec(a.shape[1:], n_enc, is_dec=False) for a in enc_arrs]
    inputs += [params["enc_norm_g"], params["enc_norm_b"]]
    in_specs += [_const_spec(params["enc_norm_g"].shape),
                 _const_spec(params["enc_norm_b"].shape)]

    inputs += dec_arrs
    in_specs += [_layer_spec(a.shape[1:], n_enc, is_dec=True) for a in dec_arrs]
    inputs += [params["dec_norm_g"], params["dec_norm_b"]]
    in_specs += [_const_spec(params["dec_norm_g"].shape),
                 _const_spec(params["dec_norm_b"].shape)]

    if fuse_fc:
        inputs += [fcw, fcb]
        in_specs += [_const_spec(fcw.shape), _const_spec(fcb.shape)]
        out_width = Vp
    else:
        out_width = E

    kernel = functools.partial(_transformer_kernel, bn, Sp, Tp, n_enc,
                               fuse_fc, has_cmask)

    out = pl.pallas_call(
        kernel,
        out_shape=jax.ShapeDtypeStruct((M_t, out_width), jnp.float32),
        grid=(batch_blocks, n_total),
        in_specs=in_specs,
        out_specs=pl.BlockSpec((bn * Tp, out_width), lambda b, l: (b, 0)),
        scratch_shapes=[pltpu.VMEM((bn * Sp, E), jnp.float32),   # encoder activation
                        pltpu.VMEM((bn * Sp, E), jnp.float32),   # encoder memory
                        pltpu.VMEM((bn * Tp, E), jnp.float32)],  # decoder activation
        compiler_params=pltpu.CompilerParams(
            dimension_semantics=("parallel", "arbitrary"),
            vmem_limit_bytes=VMEM_LIMIT),
    )(*inputs)

    if not fuse_fc:
        # large-vocab path: fc_out as a plain XLA GEMM (keeps v7x VMEM budget sane)
        out = jnp.dot(out.astype(jnp.bfloat16), fcw,
                      preferred_element_type=jnp.float32) + fcb
    return out


# ---------------- transformer forward (thin JAX glue) ----------------

def transformer_forward(params, src, trg, trg_mask, src_pad_idx, trg_vocab):
    """src: (S, N) int32, trg: (T, N) int32, trg_mask: (T, T) additive float."""
    S, N = src.shape
    T, _ = trg.shape
    E = EMBED
    Sp = _round_up(S, 8)      # sublane-aligned so in-kernel reshapes stay layout-preserving
    Tp = _round_up(T, 8)

    src_t = src.T                                   # (N, S) batch-major tokens
    trg_t = trg.T                                   # (N, T)

    pos_s = params["src_pos_emb"][jnp.arange(S)]    # (S, E)
    pos_t = params["trg_pos_emb"][jnp.arange(T)]    # (T, E)
    x0 = params["src_word_emb"][src_t] + pos_s[None, :, :]     # (N, S, E)
    y0 = params["trg_word_emb"][trg_t] + pos_t[None, :, :]     # (N, T, E)
    # self.dropout(...) == identity in eval mode.
    x0 = jnp.pad(x0, ((0, 0), (0, Sp - S), (0, 0))).reshape(N * Sp, E)
    y0 = jnp.pad(y0, ((0, 0), (0, Tp - T), (0, 0))).reshape(N * Tp, E)

    # compact masks (broadcast in-kernel):
    #  - encoder key-padding mask (N, 1, Sp): pad tokens + artificial length padding
    key_pad = (src_t == src_pad_idx)
    key_pad = jnp.pad(key_pad, ((0, 0), (0, Sp - S)), constant_values=True)
    emask = jnp.where(key_pad, NEG_INF, 0.0).astype(jnp.float32)[:, None, :]
    #  - causal target mask (1, Tp, Tp); clamp -inf to finite (NaN-safe softmax)
    smask = jnp.full((Tp, Tp), NEG_INF, jnp.float32)
    smask = smask.at[:T, :T].set(jnp.maximum(trg_mask.astype(jnp.float32), NEG_INF))
    smask = smask[None, :, :]
    #  - cross-attn: nn.Transformer is called without memory_key_padding_mask, so it is
    #    unmasked; only artificial length padding (if any) needs masking.
    cmask = None
    if Sp != S:
        cmask = jnp.where(jnp.arange(Sp) >= S, NEG_INF, 0.0).astype(jnp.float32)
        cmask = cmask[None, None, :]

    # two batch blocks -> layer stack can shard across both TensorCores (v7x/megacore);
    # on single-core parts the parallel axis simply iterates.
    batch_blocks = 2 if (N % 2 == 0 and N >= 2) else 1
    fuse_fc = params["fc_w"].shape[1] <= FUSE_FC_MAX_VP

    logits = transformer_stack(x0, y0, emask, smask, cmask, params,
                               batch_blocks=batch_blocks, fuse_fc=fuse_fc)
    # (N*Tp, Vpad) -> (T, N, trg_vocab)
    out = logits.reshape(N, Tp, -1)[:, :T, :trg_vocab].transpose(1, 0, 2)
    return out


# ---------------- deterministic parameter init ----------------

def init_params(key, src_vocab, trg_vocab):
    E, F = EMBED, FF_DIM
    Vp = ((trg_vocab + 127) // 128) * 128
    kit = iter(jax.random.split(key, 64))

    def nrm(shape, scale=0.02):
        return scale * jax.random.normal(next(kit), shape, jnp.float32)

    def fused_self_attn(L, prefix=""):
        wqkv = nrm((L, E, 3 * E))
        # fold the 1/sqrt(head_dim) attention scale into the Q projection
        wqkv = wqkv.at[:, :, :E].multiply(ATTN_SCALE)
        return {
            prefix + "wqkv": wqkv.astype(jnp.bfloat16),
            prefix + "bqkv": jnp.zeros((L, 1, 3 * E), jnp.float32),
            prefix + "wo": nrm((L, E, E)).astype(jnp.bfloat16),
            prefix + "bo": jnp.zeros((L, 1, E), jnp.float32),
        }

    def cross_attn(L):
        return {
            "c_wq": (nrm((L, E, E)) * ATTN_SCALE).astype(jnp.bfloat16),
            "c_bq": jnp.zeros((L, 1, E), jnp.float32),
            "c_wkv": nrm((L, E, 2 * E)).astype(jnp.bfloat16),
            "c_bkv": jnp.zeros((L, 1, 2 * E), jnp.float32),
            "c_wo": nrm((L, E, E)).astype(jnp.bfloat16),
            "c_bo": jnp.zeros((L, 1, E), jnp.float32),
        }

    def ffn(L):
        return {
            "ff_w1": nrm((L, E, F)).astype(jnp.bfloat16),
            "ff_b1": jnp.zeros((L, 1, F), jnp.float32),
            "ff_w2": nrm((L, F, E)).astype(jnp.bfloat16),
            "ff_b2": jnp.zeros((L, 1, E), jnp.float32),
        }

    def ln(L, name):
        return {name + "_g": jnp.ones((L, 1, E), jnp.float32),
                name + "_b": jnp.zeros((L, 1, E), jnp.float32)}

    enc = {}
    enc.update(fused_self_attn(NUM_ENC))
    enc.update(ln(NUM_ENC, "ln1"))
    enc.update(ffn(NUM_ENC))
    enc.update(ln(NUM_ENC, "ln2"))

    dec = {}
    dec.update(fused_self_attn(NUM_DEC, "s_"))
    dec.update(ln(NUM_DEC, "ln1"))
    dec.update(cross_attn(NUM_DEC))
    dec.update(ln(NUM_DEC, "ln2"))
    dec.update(ffn(NUM_DEC))
    dec.update(ln(NUM_DEC, "ln3"))

    # fc_out weight padded to a 128-lane multiple output width (lane-dense stores)
    fc_w = jnp.zeros((E, Vp), jnp.float32).at[:, :trg_vocab].set(
        nrm((E, trg_vocab))).astype(jnp.bfloat16)
    fc_b = jnp.zeros((1, Vp), jnp.float32)

    return {
        "src_word_emb": nrm((src_vocab, E)),
        "src_pos_emb": nrm((MAX_LEN, E)),
        "trg_word_emb": nrm((trg_vocab, E)),
        "trg_pos_emb": nrm((MAX_LEN, E)),
        "enc": enc,
        "enc_norm_g": jnp.ones((1, E), jnp.float32),
        "enc_norm_b": jnp.zeros((1, E), jnp.float32),
        "dec": dec,
        "dec_norm_g": jnp.ones((1, E), jnp.float32),
        "dec_norm_b": jnp.zeros((1, E), jnp.float32),
        "fc_w": fc_w,
        "fc_b": fc_b,
    }


# ---------------- pure-JAX reference (same params / same math, all f32) ----------------

def _ref_ln(x, g, b):
    mu = x.mean(-1, keepdims=True)
    xc = x - mu
    return xc * jax.lax.rsqrt((xc * xc).mean(-1, keepdims=True) + LN_EPS) * g + b


def _ref_heads_attn(q, k, v, mask):
    N, Lq, _ = q.shape
    Lk = k.shape[1]
    qh = q.reshape(N, Lq, NUM_HEADS, HEAD_DIM).transpose(0, 2, 1, 3)
    kh = k.reshape(N, Lk, NUM_HEADS, HEAD_DIM).transpose(0, 2, 1, 3)
    vh = v.reshape(N, Lk, NUM_HEADS, HEAD_DIM).transpose(0, 2, 1, 3)
    s = qh @ kh.transpose(0, 1, 3, 2)
    if mask is not None:
        s = s + mask
    p = jax.nn.softmax(s, axis=-1)
    return (p @ vh).transpose(0, 2, 1, 3).reshape(N, Lq, EMBED)


def reference_forward(params, src, trg, trg_mask, src_pad_idx, trg_vocab):
    f32 = lambda a: a.astype(jnp.float32)
    S, N = src.shape
    T, _ = trg.shape
    x = params["src_word_emb"][src.T] + params["src_pos_emb"][jnp.arange(S)][None]
    y = params["trg_word_emb"][trg.T] + params["trg_pos_emb"][jnp.arange(T)][None]
    emask = jnp.where(src.T == src_pad_idx, NEG_INF, 0.0)[:, None, None, :]
    smask = jnp.maximum(trg_mask.astype(jnp.float32), NEG_INF)[None, None]
    enc, dec = params["enc"], params["dec"]
    for l in range(NUM_ENC):
        qkv = x @ f32(enc["wqkv"][l]) + enc["bqkv"][l]
        a = _ref_heads_attn(qkv[..., :EMBED], qkv[..., EMBED:2 * EMBED],
                            qkv[..., 2 * EMBED:], emask)
        a = a @ f32(enc["wo"][l]) + enc["bo"][l]
        x = _ref_ln(x + a, enc["ln1_g"][l], enc["ln1_b"][l])
        h = jnp.maximum(x @ f32(enc["ff_w1"][l]) + enc["ff_b1"][l], 0.0)
        h = h @ f32(enc["ff_w2"][l]) + enc["ff_b2"][l]
        x = _ref_ln(x + h, enc["ln2_g"][l], enc["ln2_b"][l])
    mem = _ref_ln(x, params["enc_norm_g"], params["enc_norm_b"])
    for l in range(NUM_DEC):
        qkv = y @ f32(dec["s_wqkv"][l]) + dec["s_bqkv"][l]
        a = _ref_heads_attn(qkv[..., :EMBED], qkv[..., EMBED:2 * EMBED],
                            qkv[..., 2 * EMBED:], smask)
        a = a @ f32(dec["s_wo"][l]) + dec["s_bo"][l]
        y = _ref_ln(y + a, dec["ln1_g"][l], dec["ln1_b"][l])
        q = y @ f32(dec["c_wq"][l]) + dec["c_bq"][l]
        kv = mem @ f32(dec["c_wkv"][l]) + dec["c_bkv"][l]
        a = _ref_heads_attn(q, kv[..., :EMBED], kv[..., EMBED:], None)
        a = a @ f32(dec["c_wo"][l]) + dec["c_bo"][l]
        y = _ref_ln(y + a, dec["ln2_g"][l], dec["ln2_b"][l])
        h = jnp.maximum(y @ f32(dec["ff_w1"][l]) + dec["ff_b1"][l], 0.0)
        h = h @ f32(dec["ff_w2"][l]) + dec["ff_b2"][l]
        y = _ref_ln(y + h, dec["ln3_g"][l], dec["ln3_b"][l])
    yn = _ref_ln(y, params["dec_norm_g"], params["dec_norm_b"])
    logits = yn @ f32(params["fc_w"]) + params["fc_b"]
    return logits.transpose(1, 0, 2)[:, :, :trg_vocab]


# ---------------- demo ----------------

if __name__ == "__main__":
    SRC_VOCAB = 64
    TRG_VOCAB = 64
    SRC_PAD_IDX = 1
    S, T, N = 8, 8, 2   # (src_seq_length, trg_seq_length, batch)

    root = jax.random.PRNGKey(0)
    k_params, k_src, k_trg = jax.random.split(root, 3)
    params = init_params(k_params, SRC_VOCAB, TRG_VOCAB)

    src = jax.random.randint(k_src, (S, N), 2, SRC_VOCAB, dtype=jnp.int32)
    # pad the tail of the second source sequence to exercise src_key_padding_mask
    src = src.at[-2:, 1].set(SRC_PAD_IDX)
    trg = jax.random.randint(k_trg, (T, N), 2, TRG_VOCAB, dtype=jnp.int32)

    # causal target mask (nn.Transformer.generate_square_subsequent_mask semantics)
    idx = jnp.arange(T)
    trg_mask = jnp.where(idx[None, :] <= idx[:, None], 0.0, -jnp.inf).astype(jnp.float32)

    fwd = jax.jit(transformer_forward, static_argnums=(4, 5))
    out = fwd(params, src, trg, trg_mask, SRC_PAD_IDX, TRG_VOCAB)
    out = jax.block_until_ready(out)

    assert out.shape == (T, N, TRG_VOCAB), out.shape
    assert bool(jnp.all(jnp.isfinite(out)))

    # numerical check vs. a pure-JAX f32 reference (bf16 MXU drift only)
    ref = jax.jit(reference_forward, static_argnums=(4, 5))(
        params, src, trg, trg_mask, SRC_PAD_IDX, TRG_VOCAB)
    ref = jax.block_until_ready(ref)
    max_err = float(jnp.max(jnp.abs(out - ref)))
    assert max_err < 5e-2, f"max abs error vs reference: {max_err}"

    print("KERNEL_OK")
</pallas_src>

<mosaic_0001>
module attributes {stable_mosaic.version = 11 : i64} {
  func.func @_transformer_kernel(%arg0: i32, %arg1: i32, %arg2: memref<8x128xf32, #tpu.memory_space<vmem>>, %arg3: memref<8x128xf32, #tpu.memory_space<vmem>>, %arg4: memref<1x1x8xf32, #tpu.memory_space<vmem>>, %arg5: memref<1x8x8xf32, #tpu.memory_space<vmem>>, %arg6: memref<1x128x384xbf16, #tpu.memory_space<vmem>>, %arg7: memref<1x1x384xf32, #tpu.memory_space<vmem>>, %arg8: memref<1x128x128xbf16, #tpu.memory_space<vmem>>, %arg9: memref<1x1x128xf32, #tpu.memory_space<vmem>>, %arg10: memref<1x1x128xf32, #tpu.memory_space<vmem>>, %arg11: memref<1x1x128xf32, #tpu.memory_space<vmem>>, %arg12: memref<1x128x256xbf16, #tpu.memory_space<vmem>>, %arg13: memref<1x1x256xf32, #tpu.memory_space<vmem>>, %arg14: memref<1x256x128xbf16, #tpu.memory_space<vmem>>, %arg15: memref<1x1x128xf32, #tpu.memory_space<vmem>>, %arg16: memref<1x1x128xf32, #tpu.memory_space<vmem>>, %arg17: memref<1x1x128xf32, #tpu.memory_space<vmem>>, %arg18: memref<1x128xf32, #tpu.memory_space<vmem>>, %arg19: memref<1x128xf32, #tpu.memory_space<vmem>>, %arg20: memref<1x128x384xbf16, #tpu.memory_space<vmem>>, %arg21: memref<1x1x384xf32, #tpu.memory_space<vmem>>, %arg22: memref<1x128x128xbf16, #tpu.memory_space<vmem>>, %arg23: memref<1x1x128xf32, #tpu.memory_space<vmem>>, %arg24: memref<1x1x128xf32, #tpu.memory_space<vmem>>, %arg25: memref<1x1x128xf32, #tpu.memory_space<vmem>>, %arg26: memref<1x128x128xbf16, #tpu.memory_space<vmem>>, %arg27: memref<1x1x128xf32, #tpu.memory_space<vmem>>, %arg28: memref<1x128x256xbf16, #tpu.memory_space<vmem>>, %arg29: memref<1x1x256xf32, #tpu.memory_space<vmem>>, %arg30: memref<1x128x128xbf16, #tpu.memory_space<vmem>>, %arg31: memref<1x1x128xf32, #tpu.memory_space<vmem>>, %arg32: memref<1x1x128xf32, #tpu.memory_space<vmem>>, %arg33: memref<1x1x128xf32, #tpu.memory_space<vmem>>, %arg34: memref<1x128x256xbf16, #tpu.memory_space<vmem>>, %arg35: memref<1x1x256xf32, #tpu.memory_space<vmem>>, %arg36: memref<1x256x128xbf16, #tpu.memory_space<vmem>>, %arg37: memref<1x1x128xf32, #tpu.memory_space<vmem>>, %arg38: memref<1x1x128xf32, #tpu.memory_space<vmem>>, %arg39: memref<1x1x128xf32, #tpu.memory_space<vmem>>, %arg40: memref<1x128xf32, #tpu.memory_space<vmem>>, %arg41: memref<1x128xf32, #tpu.memory_space<vmem>>, %arg42: memref<128x128xbf16, #tpu.memory_space<vmem>>, %arg43: memref<1x128xf32, #tpu.memory_space<vmem>>, %arg44: memref<8x128xf32, #tpu.memory_space<vmem>>, %arg45: memref<8x128xf32, #tpu.memory_space<vmem>>, %arg46: memref<8x128xf32, #tpu.memory_space<vmem>>, %arg47: memref<8x128xf32, #tpu.memory_space<vmem>>) attributes {dimension_semantics = [#tpu.dimension_semantics<parallel>, #tpu.dimension_semantics<arbitrary>], iteration_bounds = array<i64: 2, 6>, scalar_prefetch = 0 : i64, scratch_operands = 3 : i64, tpu.core_type = #tpu.core_type<tc>, window_params = [{transform_indices = @transform_0, window_bounds = array<i64: 8, 128>}, {transform_indices = @transform_1, window_bounds = array<i64: 8, 128>}, {transform_indices = @transform_2, window_bounds = array<i64: 1, 1, 8>}, {pipeline_mode = #tpu.pipeline_mode<synchronous>, transform_indices = @transform_3, window_bounds = array<i64: 1, 8, 8>}, {transform_indices = @transform_4, window_bounds = array<i64: 1, 128, 384>}, {transform_indices = @transform_5, window_bounds = array<i64: 1, 1, 384>}, {transform_indices = @transform_6, window_bounds = array<i64: 1, 128, 128>}, {transform_indices = @transform_7, window_bounds = array<i64: 1, 1, 128>}, {transform_indices = @transform_8, window_bounds = array<i64: 1, 1, 128>}, {transform_indices = @transform_9, window_bounds = array<i64: 1, 1, 128>}, {transform_indices = @transform_10, window_bounds = array<i64: 1, 128, 256>}, {transform_indices = @transform_11, window_bounds = array<i64: 1, 1, 256>}, {transform_indices = @transform_12, window_bounds = array<i64: 1, 256, 128>}, {transform_indices = @transform_13, window_bounds = array<i64: 1, 1, 128>}, {transform_indices = @transform_14, window_bounds = array<i64: 1, 1, 128>}, {transform_indices = @transform_15, window_bounds = array<i64: 1, 1, 128>}, {pipeline_mode = #tpu.pipeline_mode<synchronous>, transform_indices = @transform_16, window_bounds = array<i64: 1, 128>}, {pipeline_mode = #tpu.pipeline_mode<synchronous>, transform_indices = @transform_17, window_bounds = array<i64: 1, 128>}, {transform_indices = @transform_18, window_bounds = array<i64: 1, 128, 384>}, {transform_indices = @transform_19, window_bounds = array<i64: 1, 1, 384>}, {transform_indices = @transform_20, window_bounds = array<i64: 1, 128, 128>}, {transform_indices = @transform_21, window_bounds = array<i64: 1, 1, 128>}, {transform_indices = @transform_22, window_bounds = array<i64: 1, 1, 128>}, {transform_indices = @transform_23, window_bounds = array<i64: 1, 1, 128>}, {transform_indices = @transform_24, window_bounds = array<i64: 1, 128, 128>}, {transform_indices = @transform_25, window_bounds = array<i64: 1, 1, 128>}, {transform_indices = @transform_26, window_bounds = array<i64: 1, 128, 256>}, {transform_indices = @transform_27, window_bounds = array<i64: 1, 1, 256>}, {transform_indices = @transform_28, window_bounds = array<i64: 1, 128, 128>}, {transform_indices = @transform_29, window_bounds = array<i64: 1, 1, 128>}, {transform_indices = @transform_30, window_bounds = array<i64: 1, 1, 128>}, {transform_indices = @transform_31, window_bounds = array<i64: 1, 1, 128>}, {transform_indices = @transform_32, window_bounds = array<i64: 1, 128, 256>}, {transform_indices = @transform_33, window_bounds = array<i64: 1, 1, 256>}, {transform_indices = @transform_34, window_bounds = array<i64: 1, 256, 128>}, {transform_indices = @transform_35, window_bounds = array<i64: 1, 1, 128>}, {transform_indices = @transform_36, window_bounds = array<i64: 1, 1, 128>}, {transform_indices = @transform_37, window_bounds = array<i64: 1, 1, 128>}, {pipeline_mode = #tpu.pipeline_mode<synchronous>, transform_indices = @transform_38, window_bounds = array<i64: 1, 128>}, {pipeline_mode = #tpu.pipeline_mode<synchronous>, transform_indices = @transform_39, window_bounds = array<i64: 1, 128>}, {pipeline_mode = #tpu.pipeline_mode<synchronous>, transform_indices = @transform_40, window_bounds = array<i64: 128, 128>}, {pipeline_mode = #tpu.pipeline_mode<synchronous>, transform_indices = @transform_41, window_bounds = array<i64: 1, 128>}, {transform_indices = @transform_42, window_bounds = array<i64: 8, 128>}]} {
    %c0_i32 = arith.constant 0 : i32
    %0 = arith.cmpi eq, %arg1, %c0_i32 : i32
    %1 = arith.extui %0 : i1 to i32
    %c0_i32_0 = arith.constant 0 : i32
    %2 = arith.cmpi ne, %1, %c0_i32_0 : i32
    scf.if %2 {
      %c0 = arith.constant 0 : index
      %c0_4 = arith.constant 0 : index
      %9 = vector.load %arg2[%c0, %c0_4] : memref<8x128xf32, #tpu.memory_space<vmem>>, vector<8x128xf32>
      %c0_5 = arith.constant 0 : index
      %c0_6 = arith.constant 0 : index
      %10 = vector.load %arg45[%c0_5, %c0_6] : memref<8x128xf32, #tpu.memory_space<vmem>>, vector<8x128xf32>
      tpu.vector_store %arg45[%c0_5, %c0_6], %9 {strides = array<i32>} : memref<8x128xf32, #tpu.memory_space<vmem>>, vector<8x128xf32>,
      %c0_7 = arith.constant 0 : index
      %c0_8 = arith.constant 0 : index
      %11 = vector.load %arg3[%c0_7, %c0_8] : memref<8x128xf32, #tpu.memory_space<vmem>>, vector<8x128xf32>
      %c0_9 = arith.constant 0 : index
      %c0_10 = arith.constant 0 : index
      %12 = vector.load %arg47[%c0_9, %c0_10] : memref<8x128xf32, #tpu.memory_space<vmem>>, vector<8x128xf32>
      tpu.vector_store %arg47[%c0_9, %c0_10], %11 {strides = array<i32>} : memref<8x128xf32, #tpu.memory_space<vmem>>, vector<8x128xf32>,
    } else {
    }
    %c3_i32 = arith.constant 3 : i32
    %3 = arith.cmpi slt, %arg1, %c3_i32 : i32
    %4 = arith.extui %3 : i1 to i32
    %c0_i32_1 = arith.constant 0 : i32
    %5 = arith.cmpi ne, %4, %c0_i32_1 : i32
    scf.if %5 {
      %c0 = arith.constant 0 : index
      %c0_4 = arith.constant 0 : index
      %9 = vector.load %arg45[%c0, %c0_4] : memref<8x128xf32, #tpu.memory_space<vmem>>, vector<8x128xf32>
      %c0_5 = arith.constant 0 : index
      %c0_6 = arith.constant 0 : index
      %c0_7 = arith.constant 0 : index
      %10 = vector.load %arg4[%c0_5, %c0_6, %c0_7] : memref<1x1x8xf32, #tpu.memory_space<vmem>>, vector<1x1x8xf32>
      %11 = arith.truncf %9 : vector<8x128xf32> to vector<8x128xbf16>
      %c0_8 = arith.constant 0 : index
      %c0_9 = arith.constant 0 : index
      %c0_10 = arith.constant 0 : index
      %12 = vector.load %arg6[%c0_8, %c0_9, %c0_10] : memref<1x128x384xbf16, #tpu.memory_space<vmem>>, vector<1x128x384xbf16>
      %13 = vector.shape_cast %12 : vector<1x128x384xbf16> to vector<128x384xbf16>
      %cst = arith.constant dense<0.000000e+00> : vector<8x384xf32>
      %14 = tpu.matmul %11, %13, %cst {dimension_numbers = #tpu.dot_dimension_numbers<[1], [0], [0], [1], [0, 0, 1, 1], [], []>} : vector<8x128xbf16>, vector<128x384xbf16>, vector<8x384xf32> -> vector<8x384xf32>
      %c0_11 = arith.constant 0 : index
      %c0_12 = arith.constant 0 : index
      %c0_13 = arith.constant 0 : index
      %15 = vector.load %arg7[%c0_11, %c0_12, %c0_13] : memref<1x1x384xf32, #tpu.memory_space<vmem>>, vector<1x1x384xf32>
      %16 = vector.shape_cast %15 : vector<1x1x384xf32> to vector<1x384xf32>
      %17 = vector.broadcast %16 : vector<1x384xf32> to vector<8x384xf32>
      %18 = arith.addf %14, %17 : vector<8x384xf32>
      %19 = vector.extract_strided_slice %18 {offsets = [0, 0], sizes = [8, 128], strides = [1, 1]} : vector<8x384xf32> to vector<8x128xf32>
      %20 = vector.extract_strided_slice %18 {offsets = [0, 128], sizes = [8, 128], strides = [1, 1]} : vector<8x384xf32> to vector<8x128xf32>
      %21 = vector.extract_strided_slice %18 {offsets = [0, 256], sizes = [8, 128], strides = [1, 1]} : vector<8x384xf32> to vector<8x128xf32>
      %22 = arith.truncf %19 : vector<8x128xf32> to vector<8x128xbf16>
      %23 = arith.truncf %20 : vector<8x128xf32> to vector<8x128xbf16>
      %24 = arith.truncf %21 : vector<8x128xf32> to vector<8x128xbf16>
      %25 = vector.extract_strided_slice %22 {offsets = [0, 0], sizes = [8, 64], strides = [1, 1]} : vector<8x128xbf16> to vector<8x64xbf16>
      %26 = vector.shape_cast %25 : vector<8x64xbf16> to vector<1x8x64xbf16>
      %27 = vector.extract_strided_slice %23 {offsets = [0, 0], sizes = [8, 64], strides = [1, 1]} : vector<8x128xbf16> to vector<8x64xbf16>
      %28 = vector.shape_cast %27 : vector<8x64xbf16> to vector<1x8x64xbf16>
      %29 = vector.extract_strided_slice %24 {offsets = [0, 0], sizes = [8, 64], strides = [1, 1]} : vector<8x128xbf16> to vector<8x64xbf16>
      %30 = vector.shape_cast %29 : vector<8x64xbf16> to vector<1x8x64xbf16>
      "tpu.trace_start"() <{level = 10 : i32, message = "nqd,nkd->nqk"}> : () -> ()
      %cst_14 = arith.constant dense<0.000000e+00> : vector<1x8x8xf32>
      %31 = tpu.matmul %26, %28, %cst_14 {dimension_numbers = #tpu.dot_dimension_numbers<[2], [2], [1], [1], [0, 0, 0, 1, 1, 1], [0], [0]>} : vector<1x8x64xbf16>, vector<1x8x64xbf16>, vector<1x8x8xf32> -> vector<1x8x8xf32>
      "tpu.trace_stop"() : () -> ()
      %32 = vector.broadcast %10 : vector<1x1x8xf32> to vector<1x8x8xf32>
      %33 = arith.addf %31, %32 : vector<1x8x8xf32>
      %cst_15 = arith.constant dense<0xFF800000> : vector<1x8xf32>
      %34 = vector.multi_reduction <maximumf>, %33, %cst_15 [2] : vector<1x8x8xf32> to vector<1x8xf32>
      %35 = vector.shape_cast %34 : vector<1x8xf32> to vector<1x8x1xf32>
      %36 = vector.broadcast %35 : vector<1x8x1xf32> to vector<1x8x8xf32>
      %37 = arith.subf %33, %36 : vector<1x8x8xf32>
      %38 = math.exp %37 : vector<1x8x8xf32>
      %cst_16 = arith.constant dense<0.000000e+00> : vector<1x8xf32>
      %39 = vector.multi_reduction <add>, %38, %cst_16 [2] : vector<1x8x8xf32> to vector<1x8xf32>
      %40 = vector.shape_cast %39 : vector<1x8xf32> to vector<1x8x1xf32>
      %41 = vector.broadcast %40 : vector<1x8x1xf32> to vector<1x8x8xf32>
      %42 = arith.divf %38, %41 : vector<1x8x8xf32>
      %43 = arith.truncf %42 : vector<1x8x8xf32> to vector<1x8x8xbf16>
      "tpu.trace_start"() <{level = 10 : i32, message = "nqk,nkd->nqd"}> : () -> ()
      %cst_17 = arith.constant dense<0.000000e+00> : vector<1x8x64xf32>
      %44 = tpu.matmul %43, %30, %cst_17 {dimension_numbers = #tpu.dot_dimension_numbers<[2], [1], [1], [2], [0, 0, 0, 1, 1, 2], [0], [0]>} : vector<1x8x8xbf16>, vector<1x8x64xbf16>, vector<1x8x64xf32> -> vector<1x8x64xf32>
      "tpu.trace_stop"() : () -> ()
      %45 = vector.shape_cast %44 : vector<1x8x64xf32> to vector<8x64xf32>
      %46 = vector.extract_strided_slice %22 {offsets = [0, 64], sizes = [8, 64], strides = [1, 1]} : vector<8x128xbf16> to vector<8x64xbf16>
      %47 = vector.shape_cast %46 : vector<8x64xbf16> to vector<1x8x64xbf16>
      %48 = vector.extract_strided_slice %23 {offsets = [0, 64], sizes = [8, 64], strides = [1, 1]} : vector<8x128xbf16> to vector<8x64xbf16>
      %49 = vector.shape_cast %48 : vector<8x64xbf16> to vector<1x8x64xbf16>
      %50 = vector.extract_strided_slice %24 {offsets = [0, 64], sizes = [8, 64], strides = [1, 1]} : vector<8x128xbf16> to vector<8x64xbf16>
      %51 = vector.shape_cast %50 : vector<8x64xbf16> to vector<1x8x64xbf16>
      "tpu.trace_start"() <{level = 10 : i32, message = "nqd,nkd->nqk"}> : () -> ()
      %cst_18 = arith.constant dense<0.000000e+00> : vector<1x8x8xf32>
      %52 = tpu.matmul %47, %49, %cst_18 {dimension_numbers = #tpu.dot_dimension_numbers<[2], [2], [1], [1], [0, 0, 0, 1, 1, 1], [0], [0]>} : vector<1x8x64xbf16>, vector<1x8x64xbf16>, vector<1x8x8xf32> -> vector<1x8x8xf32>
      "tpu.trace_stop"() : () -> ()
      %53 = vector.broadcast %10 : vector<1x1x8xf32> to vector<1x8x8xf32>
      %54 = arith.addf %52, %53 : vector<1x8x8xf32>
      %cst_19 = arith.constant dense<0xFF800000> : vector<1x8xf32>
      %55 = vector.multi_reduction <maximumf>, %54, %cst_19 [2] : vector<1x8x8xf32> to vector<1x8xf32>
      %56 = vector.shape_cast %55 : vector<1x8xf32> to vector<1x8x1xf32>
      %57 = vector.broadcast %56 : vector<1x8x1xf32> to vector<1x8x8xf32>
      %58 = arith.subf %54, %57 : vector<1x8x8xf32>
      %59 = math.exp %58 : vector<1x8x8xf32>
      %cst_20 = arith.constant dense<0.000000e+00> : vector<1x8xf32>
      %60 = vector.multi_reduction <add>, %59, %cst_20 [2] : vector<1x8x8xf32> to vector<1x8xf32>
      %61 = vector.shape_cast %60 : vector<1x8xf32> to vector<1x8x1xf32>
      %62 = vector.broadcast %61 : vector<1x8x1xf32> to vector<1x8x8xf32>
      %63 = arith.divf %59, %62 : vector<1x8x8xf32>
      %64 = arith.truncf %63 : vector<1x8x8xf32> to vector<1x8x8xbf16>
      "tpu.trace_start"() <{level = 10 : i32, message = "nqk,nkd->nqd"}> : () -> ()
      %cst_21 = arith.constant dense<0.000000e+00> : vector<1x8x64xf32>
      %65 = tpu.matmul %64, %51, %cst_21 {dimension_numbers = #tpu.dot_dimension_numbers<[2], [1], [1], [2], [0, 0, 0, 1, 1, 2], [0], [0]>} : vector<1x8x8xbf16>, vector<1x8x64xbf16>, vector<1x8x64xf32> -> vector<1x8x64xf32>
      "tpu.trace_stop"() : () -> ()
      %66 = vector.shape_cast %65 : vector<1x8x64xf32> to vector<8x64xf32>
      %67 = tpu.concatenate %45, %66 in 1 : vector<8x64xf32>, vector<8x64xf32> -> vector<8x128xf32>
      %68 = arith.truncf %67 : vector<8x128xf32> to vector<8x128xbf16>
      %c0_22 = arith.constant 0 : index
      %c0_23 = arith.constant 0 : index
      %c0_24 = arith.constant 0 : index
      %69 = vector.load %arg8[%c0_22, %c0_23, %c0_24] : memref<1x128x128xbf16, #tpu.memory_space<vmem>>, vector<1x128x128xbf16>
      %70 = vector.shape_cast %69 : vector<1x128x128xbf16> to vector<128x128xbf16>
      %cst_25 = arith.constant dense<0.000000e+00> : vector<8x128xf32>
      %71 = tpu.matmul %68, %70, %cst_25 {dimension_numbers = #tpu.dot_dimension_numbers<[1], [0], [0], [1], [0, 0, 1, 1], [], []>} : vector<8x128xbf16>, vector<128x128xbf16>, vector<8x128xf32> -> vector<8x128xf32>
      %c0_26 = arith.constant 0 : index
      %c0_27 = arith.constant 0 : index
      %c0_28 = arith.constant 0 : index
      %72 = vector.load %arg9[%c0_26, %c0_27, %c0_28] : memref<1x1x128xf32, #tpu.memory_space<vmem>>, vector<1x1x128xf32>
      %73 = vector.shape_cast %72 : vector<1x1x128xf32> to vector<1x128xf32>
      %74 = vector.broadcast %73 : vector<1x128xf32> to vector<8x128xf32>
      %75 = arith.addf %71, %74 : vector<8x128xf32>
      %76 = arith.addf %9, %75 : vector<8x128xf32>
      %c0_29 = arith.constant 0 : index
      %c0_30 = arith.constant 0 : index
      %c0_31 = arith.constant 0 : index
      %77 = vector.load %arg10[%c0_29, %c0_30, %c0_31] : memref<1x1x128xf32, #tpu.memory_space<vmem>>, vector<1x1x128xf32>
      %78 = vector.shape_cast %77 : vector<1x1x128xf32> to vector<1x128xf32>
      %c0_32 = arith.constant 0 : index
      %c0_33 = arith.constant 0 : index
      %c0_34 = arith.constant 0 : index
      %79 = vector.load %arg11[%c0_32, %c0_33, %c0_34] : memref<1x1x128xf32, #tpu.memory_space<vmem>>, vector<1x1x128xf32>
      %80 = vector.shape_cast %79 : vector<1x1x128xf32> to vector<1x128xf32>
      %cst_35 = arith.constant dense<0.000000e+00> : vector<8xf32>
      %81 = vector.multi_reduction <add>, %76, %cst_35 [1] : vector<8x128xf32> to vector<8xf32>
      %82 = vector.shape_cast %81 : vector<8xf32> to vector<8x1xf32>
      %cst_36 = arith.constant 1.280000e+02 : f32
      %83 = vector.broadcast %cst_36 : f32 to vector<8x1xf32>
      %84 = arith.divf %82, %83 : vector<8x1xf32>
      %85 = vector.broadcast %84 : vector<8x1xf32> to vector<8x128xf32>
      %86 = arith.subf %76, %85 : vector<8x128xf32>
      %87 = arith.mulf %86, %86 : vector<8x128xf32>
      %cst_37 = arith.constant dense<0.000000e+00> : vector<8xf32>
      %88 = vector.multi_reduction <add>, %87, %cst_37 [1] : vector<8x128xf32> to vector<8xf32>
      %89 = vector.shape_cast %88 : vector<8xf32> to vector<8x1xf32>
      %cst_38 = arith.constant 1.280000e+02 : f32
      %90 = vector.broadcast %cst_38 : f32 to vector<8x1xf32>
      %91 = arith.divf %89, %90 : vector<8x1xf32>
      %cst_39 = arith.constant 9.99999974E-6 : f32
      %92 = vector.broadcast %cst_39 : f32 to vector<8x1xf32>
      %93 = arith.addf %91, %92 : vector<8x1xf32>
      %94 = math.rsqrt %93 : vector<8x1xf32>
      %95 = vector.broadcast %94 : vector<8x1xf32> to vector<8x128xf32>
      %96 = arith.mulf %86, %95 : vector<8x128xf32>
      %97 = vector.broadcast %78 : vector<1x128xf32> to vector<8x128xf32>
      %98 = arith.mulf %96, %97 : vector<8x128xf32>
      %99 = vector.broadcast %80 : vector<1x128xf32> to vector<8x128xf32>
      %100 = arith.addf %98, %99 : vector<8x128xf32>
      %101 = arith.truncf %100 : vector<8x128xf32> to vector<8x128xbf16>
      %c0_40 = arith.constant 0 : index
      %c0_41 = arith.constant 0 : index
      %c0_42 = arith.constant 0 : index
      %102 = vector.load %arg12[%c0_40, %c0_41, %c0_42] : memref<1x128x256xbf16, #tpu.memory_space<vmem>>, vector<1x128x256xbf16>
      %103 = vector.shape_cast %102 : vector<1x128x256xbf16> to vector<128x256xbf16>
      %cst_43 = arith.constant dense<0.000000e+00> : vector<8x256xf32>
      %104 = tpu.matmul %101, %103, %cst_43 {dimension_numbers = #tpu.dot_dimension_numbers<[1], [0], [0], [1], [0, 0, 1, 1], [], []>} : vector<8x128xbf16>, vector<128x256xbf16>, vector<8x256xf32> -> vector<8x256xf32>
      %c0_44 = arith.constant 0 : index
      %c0_45 = arith.constant 0 : index
      %c0_46 = arith.constant 0 : index
      %105 = vector.load %arg13[%c0_44, %c0_45, %c0_46] : memref<1x1x256xf32, #tpu.memory_space<vmem>>, vector<1x1x256xf32>
      %106 = vector.shape_cast %105 : vector<1x1x256xf32> to vector<1x256xf32>
      %107 = vector.broadcast %106 : vector<1x256xf32> to vector<8x256xf32>
      %108 = arith.addf %104, %107 : vector<8x256xf32>
      %109 = arith.truncf %108 : vector<8x256xf32> to vector<8x256xbf16>
      %cst_47 = arith.constant 0.000000e+00 : bf16
      %110 = vector.broadcast %cst_47 : bf16 to vector<8x256xbf16>
      %111 = arith.maximumf %109, %110 : vector<8x256xbf16>
      %c0_48 = arith.constant 0 : index
      %c0_49 = arith.constant 0 : index
      %c0_50 = arith.constant 0 : index
      %112 = vector.load %arg14[%c0_48, %c0_49, %c0_50] : memref<1x256x128xbf16, #tpu.memory_space<vmem>>, vector<1x256x128xbf16>
      %113 = vector.shape_cast %112 : vector<1x256x128xbf16> to vector<256x128xbf16>
      %cst_51 = arith.constant dense<0.000000e+00> : vector<8x128xf32>
      %114 = tpu.matmul %111, %113, %cst_51 {dimension_numbers = #tpu.dot_dimension_numbers<[1], [0], [0], [1], [0, 0, 1, 1], [], []>} : vector<8x256xbf16>, vector<256x128xbf16>, vector<8x128xf32> -> vector<8x128xf32>
      %c0_52 = arith.constant 0 : index
      %c0_53 = arith.constant 0 : index
      %c0_54 = arith.constant 0 : index
      %115 = vector.load %arg15[%c0_52, %c0_53, %c0_54] : memref<1x1x128xf32, #tpu.memory_space<vmem>>, vector<1x1x128xf32>
      %116 = vector.shape_cast %115 : vector<1x1x128xf32> to vector<1x128xf32>
      %117 = vector.broadcast %116 : vector<1x128xf32> to vector<8x128xf32>
      %118 = arith.addf %114, %117 : vector<8x128xf32>
      %119 = arith.addf %100, %118 : vector<8x128xf32>
      %c0_55 = arith.constant 0 : index
      %c0_56 = arith.constant 0 : index
      %c0_57 = arith.constant 0 : index
      %120 = vector.load %arg16[%c0_55, %c0_56, %c0_57] : memref<1x1x128xf32, #tpu.memory_space<vmem>>, vector<1x1x128xf32>
      %121 = vector.shape_cast %120 : vector<1x1x128xf32> to vector<1x128xf32>
      %c0_58 = arith.constant 0 : index
      %c0_59 = arith.constant 0 : index
      %c0_60 = arith.constant 0 : index
      %122 = vector.load %arg17[%c0_58, %c0_59, %c0_60] : memref<1x1x128xf32, #tpu.memory_space<vmem>>, vector<1x1x128xf32>
      %123 = vector.shape_cast %122 : vector<1x1x128xf32> to vector<1x128xf32>
      %cst_61 = arith.constant dense<0.000000e+00> : vector<8xf32>
      %124 = vector.multi_reduction <add>, %119, %cst_61 [1] : vector<8x128xf32> to vector<8xf32>
      %125 = vector.shape_cast %124 : vector<8xf32> to vector<8x1xf32>
      %cst_62 = arith.constant 1.280000e+02 : f32
      %126 = vector.broadcast %cst_62 : f32 to vector<8x1xf32>
      %127 = arith.divf %125, %126 : vector<8x1xf32>
      %128 = vector.broadcast %127 : vector<8x1xf32> to vector<8x128xf32>
      %129 = arith.subf %119, %128 : vector<8x128xf32>
      %130 = arith.mulf %129, %129 : vector<8x128xf32>
      %cst_63 = arith.constant dense<0.000000e+00> : vector<8xf32>
      %131 = vector.multi_reduction <add>, %130, %cst_63 [1] : vector<8x128xf32> to vector<8xf32>
      %132 = vector.shape_cast %131 : vector<8xf32> to vector<8x1xf32>
      %cst_64 = arith.constant 1.280000e+02 : f32
      %133 = vector.broadcast %cst_64 : f32 to vector<8x1xf32>
      %134 = arith.divf %132, %133 : vector<8x1xf32>
      %cst_65 = arith.constant 9.99999974E-6 : f32
      %135 = vector.broadcast %cst_65 : f32 to vector<8x1xf32>
      %136 = arith.addf %134, %135 : vector<8x1xf32>
      %137 = math.rsqrt %136 : vector<8x1xf32>
      %138 = vector.broadcast %137 : vector<8x1xf32> to vector<8x128xf32>
      %139 = arith.mulf %129, %138 : vector<8x128xf32>
      %140 = vector.broadcast %121 : vector<1x128xf32> to vector<8x128xf32>
      %141 = arith.mulf %139, %140 : vector<8x128xf32>
      %142 = vector.broadcast %123 : vector<1x128xf32> to vector<8x128xf32>
      %143 = arith.addf %141, %142 : vector<8x128xf32>
      %c0_66 = arith.constant 0 : index
      %c0_67 = arith.constant 0 : index
      %144 = vector.load %arg45[%c0_66, %c0_67] : memref<8x128xf32, #tpu.memory_space<vmem>>, vector<8x128xf32>
      tpu.vector_store %arg45[%c0_66, %c0_67], %143 {strides = array<i32>} : memref<8x128xf32, #tpu.memory_space<vmem>>, vector<8x128xf32>,
      %c2_i32 = arith.constant 2 : i32
      %145 = arith.cmpi eq, %arg1, %c2_i32 : i32
      %146 = arith.extui %145 : i1 to i32
      %c0_i32_68 = arith.constant 0 : i32
      %147 = arith.cmpi ne, %146, %c0_i32_68 : i32
      scf.if %147 {
        %c0_69 = arith.constant 0 : index
        %c0_70 = arith.constant 0 : index
        %148 = vector.load %arg18[%c0_69, %c0_70] : memref<1x128xf32, #tpu.memory_space<vmem>>, vector<1x128xf32>
        %c0_71 = arith.constant 0 : index
        %c0_72 = arith.constant 0 : index
        %149 = vector.load %arg19[%c0_71, %c0_72] : memref<1x128xf32, #tpu.memory_space<vmem>>, vector<1x128xf32>
        %cst_73 = arith.constant dense<0.000000e+00> : vector<8xf32>
        %150 = vector.multi_reduction <add>, %143, %cst_73 [1] : vector<8x128xf32> to vector<8xf32>
        %151 = vector.shape_cast %150 : vector<8xf32> to vector<8x1xf32>
        %cst_74 = arith.constant 1.280000e+02 : f32
        %152 = vector.broadcast %cst_74 : f32 to vector<8x1xf32>
        %153 = arith.divf %151, %152 : vector<8x1xf32>
        %154 = vector.broadcast %153 : vector<8x1xf32> to vector<8x128xf32>
        %155 = arith.subf %143, %154 : vector<8x128xf32>
        %156 = arith.mulf %155, %155 : vector<8x128xf32>
        %cst_75 = arith.constant dense<0.000000e+00> : vector<8xf32>
        %157 = vector.multi_reduction <add>, %156, %cst_75 [1] : vector<8x128xf32> to vector<8xf32>
        %158 = vector.shape_cast %157 : vector<8xf32> to vector<8x1xf32>
        %cst_76 = arith.constant 1.280000e+02 : f32
        %159 = vector.broadcast %cst_76 : f32 to vector<8x1xf32>
        %160 = arith.divf %158, %159 : vector<8x1xf32>
        %cst_77 = arith.constant 9.99999974E-6 : f32
        %161 = vector.broadcast %cst_77 : f32 to vector<8x1xf32>
        %162 = arith.addf %160, %161 : vector<8x1xf32>
        %163 = math.rsqrt %162 : vector<8x1xf32>
        %164 = vector.broadcast %163 : vector<8x1xf32> to vector<8x128xf32>
        %165 = arith.mulf %155, %164 : vector<8x128xf32>
        %166 = vector.broadcast %148 : vector<1x128xf32> to vector<8x128xf32>
        %167 = arith.mulf %165, %166 : vector<8x128xf32>
        %168 = vector.broadcast %149 : vector<1x128xf32> to vector<8x128xf32>
        %169 = arith.addf %167, %168 : vector<8x128xf32>
        %c0_78 = arith.constant 0 : index
        %c0_79 = arith.constant 0 : index
        %170 = vector.load %arg46[%c0_78, %c0_79] : memref<8x128xf32, #tpu.memory_space<vmem>>, vector<8x128xf32>
        tpu.vector_store %arg46[%c0_78, %c0_79], %169 {strides = array<i32>} : memref<8x128xf32, #tpu.memory_space<vmem>>, vector<8x128xf32>,
      } else {
      }
    } else {
    }
    %c3_i32_2 = arith.constant 3 : i32
    %6 = arith.cmpi sge, %arg1, %c3_i32_2 : i32
    %7 = arith.extui %6 : i1 to i32
    %c0_i32_3 = arith.constant 0 : i32
    %8 = arith.cmpi ne, %7, %c0_i32_3 : i32
    scf.if %8 {
      %c0 = arith.constant 0 : index
      %c0_4 = arith.constant 0 : index
      %9 = vector.load %arg47[%c0, %c0_4] : memref<8x128xf32, #tpu.memory_space<vmem>>, vector<8x128xf32>
      %c0_5 = arith.constant 0 : index
      %c0_6 = arith.constant 0 : index
      %c0_7 = arith.constant 0 : index
      %10 = vector.load %arg5[%c0_5, %c0_6, %c0_7] : memref<1x8x8xf32, #tpu.memory_space<vmem>>, vector<1x8x8xf32>
      %11 = arith.truncf %9 : vector<8x128xf32> to vector<8x128xbf16>
      %c0_8 = arith.constant 0 : index
      %c0_9 = arith.constant 0 : index
      %c0_10 = arith.constant 0 : index
      %12 = vector.load %arg20[%c0_8, %c0_9, %c0_10] : memref<1x128x384xbf16, #tpu.memory_space<vmem>>, vector<1x128x384xbf16>
      %13 = vector.shape_cast %12 : vector<1x128x384xbf16> to vector<128x384xbf16>
      %cst = arith.constant dense<0.000000e+00> : vector<8x384xf32>
      %14 = tpu.matmul %11, %13, %cst {dimension_numbers = #tpu.dot_dimension_numbers<[1], [0], [0], [1], [0, 0, 1, 1], [], []>} : vector<8x128xbf16>, vector<128x384xbf16>, vector<8x384xf32> -> vector<8x384xf32>
      %c0_11 = arith.constant 0 : index
      %c0_12 = arith.constant 0 : index
      %c0_13 = arith.constant 0 : index
      %15 = vector.load %arg21[%c0_11, %c0_12, %c0_13] : memref<1x1x384xf32, #tpu.memory_space<vmem>>, vector<1x1x384xf32>
      %16 = vector.shape_cast %15 : vector<1x1x384xf32> to vector<1x384xf32>
      %17 = vector.broadcast %16 : vector<1x384xf32> to vector<8x384xf32>
      %18 = arith.addf %14, %17 : vector<8x384xf32>
      %19 = vector.extract_strided_slice %18 {offsets = [0, 0], sizes = [8, 128], strides = [1, 1]} : vector<8x384xf32> to vector<8x128xf32>
      %20 = vector.extract_strided_slice %18 {offsets = [0, 128], sizes = [8, 128], strides = [1, 1]} : vector<8x384xf32> to vector<8x128xf32>
      %21 = vector.extract_strided_slice %18 {offsets = [0, 256], sizes = [8, 128], strides = [1, 1]} : vector<8x384xf32> to vector<8x128xf32>
      %22 = arith.truncf %19 : vector<8x128xf32> to vector<8x128xbf16>
      %23 = arith.truncf %20 : vector<8x128xf32> to vector<8x128xbf16>
      %24 = arith.truncf %21 : vector<8x128xf32> to vector<8x128xbf16>
      %25 = vector.extract_strided_slice %22 {offsets = [0, 0], sizes = [8, 64], strides = [1, 1]} : vector<8x128xbf16> to vector<8x64xbf16>
      %26 = vector.shape_cast %25 : vector<8x64xbf16> to vector<1x8x64xbf16>
      %27 = vector.extract_strided_slice %23 {offsets = [0, 0], sizes = [8, 64], strides = [1, 1]} : vector<8x128xbf16> to vector<8x64xbf16>
      %28 = vector.shape_cast %27 : vector<8x64xbf16> to vector<1x8x64xbf16>
      %29 = vector.extract_strided_slice %24 {offsets = [0, 0], sizes = [8, 64], strides = [1, 1]} : vector<8x128xbf16> to vector<8x64xbf16>
      %30 = vector.shape_cast %29 : vector<8x64xbf16> to vector<1x8x64xbf16>
      "tpu.trace_start"() <{level = 10 : i32, message = "nqd,nkd->nqk"}> : () -> ()
      %cst_14 = arith.constant dense<0.000000e+00> : vector<1x8x8xf32>
      %31 = tpu.matmul %26, %28, %cst_14 {dimension_numbers = #tpu.dot_dimension_numbers<[2], [2], [1], [1], [0, 0, 0, 1, 1, 1], [0], [0]>} : vector<1x8x64xbf16>, vector<1x8x64xbf16>, vector<1x8x8xf32> -> vector<1x8x8xf32>
      "tpu.trace_stop"() : () -> ()
      %32 = arith.addf %31, %10 : vector<1x8x8xf32>
      %cst_15 = arith.constant dense<0xFF800000> : vector<1x8xf32>
      %33 = vector.multi_reduction <maximumf>, %32, %cst_15 [2] : vector<1x8x8xf32> to vector<1x8xf32>
      %34 = vector.shape_cast %33 : vector<1x8xf32> to vector<1x8x1xf32>
      %35 = vector.broadcast %34 : vector<1x8x1xf32> to vector<1x8x8xf32>
      %36 = arith.subf %32, %35 : vector<1x8x8xf32>
      %37 = math.exp %36 : vector<1x8x8xf32>
      %cst_16 = arith.constant dense<0.000000e+00> : vector<1x8xf32>
      %38 = vector.multi_reduction <add>, %37, %cst_16 [2] : vector<1x8x8xf32> to vector<1x8xf32>
      %39 = vector.shape_cast %38 : vector<1x8xf32> to vector<1x8x1xf32>
      %40 = vector.broadcast %39 : vector<1x8x1xf32> to vector<1x8x8xf32>
      %41 = arith.divf %37, %40 : vector<1x8x8xf32>
      %42 = arith.truncf %41 : vector<1x8x8xf32> to vector<1x8x8xbf16>
      "tpu.trace_start"() <{level = 10 : i32, message = "nqk,nkd->nqd"}> : () -> ()
      %cst_17 = arith.constant dense<0.000000e+00> : vector<1x8x64xf32>
      %43 = tpu.matmul %42, %30, %cst_17 {dimension_numbers = #tpu.dot_dimension_numbers<[2], [1], [1], [2], [0, 0, 0, 1, 1, 2], [0], [0]>} : vector<1x8x8xbf16>, vector<1x8x64xbf16>, vector<1x8x64xf32> -> vector<1x8x64xf32>
      "tpu.trace_stop"() : () -> ()
      %44 = vector.shape_cast %43 : vector<1x8x64xf32> to vector<8x64xf32>
      %45 = vector.extract_strided_slice %22 {offsets = [0, 64], sizes = [8, 64], strides = [1, 1]} : vector<8x128xbf16> to vector<8x64xbf16>
      %46 = vector.shape_cast %45 : vector<8x64xbf16> to vector<1x8x64xbf16>
      %47 = vector.extract_strided_slice %23 {offsets = [0, 64], sizes = [8, 64], strides = [1, 1]} : vector<8x128xbf16> to vector<8x64xbf16>
      %48 = vector.shape_cast %47 : vector<8x64xbf16> to vector<1x8x64xbf16>
      %49 = vector.extract_strided_slice %24 {offsets = [0, 64], sizes = [8, 64], strides = [1, 1]} : vector<8x128xbf16> to vector<8x64xbf16>
      %50 = vector.shape_cast %49 : vector<8x64xbf16> to vector<1x8x64xbf16>
      "tpu.trace_start"() <{level = 10 : i32, message = "nqd,nkd->nqk"}> : () -> ()
      %cst_18 = arith.constant dense<0.000000e+00> : vector<1x8x8xf32>
      %51 = tpu.matmul %46, %48, %cst_18 {dimension_numbers = #tpu.dot_dimension_numbers<[2], [2], [1], [1], [0, 0, 0, 1, 1, 1], [0], [0]>} : vector<1x8x64xbf16>, vector<1x8x64xbf16>, vector<1x8x8xf32> -> vector<1x8x8xf32>
      "tpu.trace_stop"() : () -> ()
      %52 = arith.addf %51, %10 : vector<1x8x8xf32>
      %cst_19 = arith.constant dense<0xFF800000> : vector<1x8xf32>
      %53 = vector.multi_reduction <maximumf>, %52, %cst_19 [2] : vector<1x8x8xf32> to vector<1x8xf32>
      %54 = vector.shape_cast %53 : vector<1x8xf32> to vector<1x8x1xf32>
      %55 = vector.broadcast %54 : vector<1x8x1xf32> to vector<1x8x8xf32>
      %56 = arith.subf %52, %55 : vector<1x8x8xf32>
      %57 = math.exp %56 : vector<1x8x8xf32>
      %cst_20 = arith.constant dense<0.000000e+00> : vector<1x8xf32>
      %58 = vector.multi_reduction <add>, %57, %cst_20 [2] : vector<1x8x8xf32> to vector<1x8xf32>
      %59 = vector.shape_cast %58 : vector<1x8xf32> to vector<1x8x1xf32>
      %60 = vector.broadcast %59 : vector<1x8x1xf32> to vector<1x8x8xf32>
      %61 = arith.divf %57, %60 : vector<1x8x8xf32>
      %62 = arith.truncf %61 : vector<1x8x8xf32> to vector<1x8x8xbf16>
      "tpu.trace_start"() <{level = 10 : i32, message = "nqk,nkd->nqd"}> : () -> ()
      %cst_21 = arith.constant dense<0.000000e+00> : vector<1x8x64xf32>
      %63 = tpu.matmul %62, %50, %cst_21 {dimension_numbers = #tpu.dot_dimension_numbers<[2], [1], [1], [2], [0, 0, 0, 1, 1, 2], [0], [0]>} : vector<1x8x8xbf16>, vector<1x8x64xbf16>, vector<1x8x64xf32> -> vector<1x8x64xf32>
      "tpu.trace_stop"() : () -> ()
      %64 = vector.shape_cast %63 : vector<1x8x64xf32> to vector<8x64xf32>
      %65 = tpu.concatenate %44, %64 in 1 : vector<8x64xf32>, vector<8x64xf32> -> vector<8x128xf32>
      %66 = arith.truncf %65 : vector<8x128xf32> to vector<8x128xbf16>
      %c0_22 = arith.constant 0 : index
      %c0_23 = arith.constant 0 : index
      %c0_24 = arith.constant 0 : index
      %67 = vector.load %arg22[%c0_22, %c0_23, %c0_24] : memref<1x128x128xbf16, #tpu.memory_space<vmem>>, vector<1x128x128xbf16>
      %68 = vector.shape_cast %67 : vector<1x128x128xbf16> to vector<128x128xbf16>
      %cst_25 = arith.constant dense<0.000000e+00> : vector<8x128xf32>
      %69 = tpu.matmul %66, %68, %cst_25 {dimension_numbers = #tpu.dot_dimension_numbers<[1], [0], [0], [1], [0, 0, 1, 1], [], []>} : vector<8x128xbf16>, vector<128x128xbf16>, vector<8x128xf32> -> vector<8x128xf32>
      %c0_26 = arith.constant 0 : index
      %c0_27 = arith.constant 0 : index
      %c0_28 = arith.constant 0 : index
      %70 = vector.load %arg23[%c0_26, %c0_27, %c0_28] : memref<1x1x128xf32, #tpu.memory_space<vmem>>, vector<1x1x128xf32>
      %71 = vector.shape_cast %70 : vector<1x1x128xf32> to vector<1x128xf32>
      %72 = vector.broadcast %71 : vector<1x128xf32> to vector<8x128xf32>
      %73 = arith.addf %69, %72 : vector<8x128xf32>
      %74 = arith.addf %9, %73 : vector<8x128xf32>
      %c0_29 = arith.constant 0 : index
      %c0_30 = arith.constant 0 : index
      %c0_31 = arith.constant 0 : index
      %75 = vector.load %arg24[%c0_29, %c0_30, %c0_31] : memref<1x1x128xf32, #tpu.memory_space<vmem>>, vector<1x1x128xf32>
      %76 = vector.shape_cast %75 : vector<1x1x128xf32> to vector<1x128xf32>
      %c0_32 = arith.constant 0 : index
      %c0_33 = arith.constant 0 : index
      %c0_34 = arith.constant 0 : index
      %77 = vector.load %arg25[%c0_32, %c0_33, %c0_34] : memref<1x1x128xf32, #tpu.memory_space<vmem>>, vector<1x1x128xf32>
      %78 = vector.shape_cast %77 : vector<1x1x128xf32> to vector<1x128xf32>
      %cst_35 = arith.constant dense<0.000000e+00> : vector<8xf32>
      %79 = vector.multi_reduction <add>, %74, %cst_35 [1] : vector<8x128xf32> to vector<8xf32>
      %80 = vector.shape_cast %79 : vector<8xf32> to vector<8x1xf32>
      %cst_36 = arith.constant 1.280000e+02 : f32
      %81 = vector.broadcast %cst_36 : f32 to vector<8x1xf32>
      %82 = arith.divf %80, %81 : vector<8x1xf32>
      %83 = vector.broadcast %82 : vector<8x1xf32> to vector<8x128xf32>
      %84 = arith.subf %74, %83 : vector<8x128xf32>
      %85 = arith.mulf %84, %84 : vector<8x128xf32>
      %cst_37 = arith.constant dense<0.000000e+00> : vector<8xf32>
      %86 = vector.multi_reduction <add>, %85, %cst_37 [1] : vector<8x128xf32> to vector<8xf32>
      %87 = vector.shape_cast %86 : vector<8xf32> to vector<8x1xf32>
      %cst_38 = arith.constant 1.280000e+02 : f32
      %88 = vector.broadcast %cst_38 : f32 to vector<8x1xf32>
      %89 = arith.divf %87, %88 : vector<8x1xf32>
      %cst_39 = arith.constant 9.99999974E-6 : f32
      %90 = vector.broadcast %cst_39 : f32 to vector<8x1xf32>
      %91 = arith.addf %89, %90 : vector<8x1xf32>
      %92 = math.rsqrt %91 : vector<8x1xf32>
      %93 = vector.broadcast %92 : vector<8x1xf32> to vector<8x128xf32>
      %94 = arith.mulf %84, %93 : vector<8x128xf32>
      %95 = vector.broadcast %76 : vector<1x128xf32> to vector<8x128xf32>
      %96 = arith.mulf %94, %95 : vector<8x128xf32>
      %97 = vector.broadcast %78 : vector<1x128xf32> to vector<8x128xf32>
      %98 = arith.addf %96, %97 : vector<8x128xf32>
      %c0_40 = arith.constant 0 : index
      %c0_41 = arith.constant 0 : index
      %99 = vector.load %arg46[%c0_40, %c0_41] : memref<8x128xf32, #tpu.memory_space<vmem>>, vector<8x128xf32>
      %100 = arith.truncf %98 : vector<8x128xf32> to vector<8x128xbf16>
      %c0_42 = arith.constant 0 : index
      %c0_43 = arith.constant 0 : index
      %c0_44 = arith.constant 0 : index
      %101 = vector.load %arg26[%c0_42, %c0_43, %c0_44] : memref<1x128x128xbf16, #tpu.memory_space<vmem>>, vector<1x128x128xbf16>
      %102 = vector.shape_cast %101 : vector<1x128x128xbf16> to vector<128x128xbf16>
      %cst_45 = arith.constant dense<0.000000e+00> : vector<8x128xf32>
      %103 = tpu.matmul %100, %102, %cst_45 {dimension_numbers = #tpu.dot_dimension_numbers<[1], [0], [0], [1], [0, 0, 1, 1], [], []>} : vector<8x128xbf16>, vector<128x128xbf16>, vector<8x128xf32> -> vector<8x128xf32>
      %c0_46 = arith.constant 0 : index
      %c0_47 = arith.constant 0 : index
      %c0_48 = arith.constant 0 : index
      %104 = vector.load %arg27[%c0_46, %c0_47, %c0_48] : memref<1x1x128xf32, #tpu.memory_space<vmem>>, vector<1x1x128xf32>
      %105 = vector.shape_cast %104 : vector<1x1x128xf32> to vector<1x128xf32>
      %106 = vector.broadcast %105 : vector<1x128xf32> to vector<8x128xf32>
      %107 = arith.addf %103, %106 : vector<8x128xf32>
      %108 = arith.truncf %99 : vector<8x128xf32> to vector<8x128xbf16>
      %c0_49 = arith.constant 0 : index
      %c0_50 = arith.constant 0 : index
      %c0_51 = arith.constant 0 : index
      %109 = vector.load %arg28[%c0_49, %c0_50, %c0_51] : memref<1x128x256xbf16, #tpu.memory_space<vmem>>, vector<1x128x256xbf16>
      %110 = vector.shape_cast %109 : vector<1x128x256xbf16> to vector<128x256xbf16>
      %cst_52 = arith.constant dense<0.000000e+00> : vector<8x256xf32>
      %111 = tpu.matmul %108, %110, %cst_52 {dimension_numbers = #tpu.dot_dimension_numbers<[1], [0], [0], [1], [0, 0, 1, 1], [], []>} : vector<8x128xbf16>, vector<128x256xbf16>, vector<8x256xf32> -> vector<8x256xf32>
      %c0_53 = arith.constant 0 : index
      %c0_54 = arith.constant 0 : index
      %c0_55 = arith.constant 0 : index
      %112 = vector.load %arg29[%c0_53, %c0_54, %c0_55] : memref<1x1x256xf32, #tpu.memory_space<vmem>>, vector<1x1x256xf32>
      %113 = vector.shape_cast %112 : vector<1x1x256xf32> to vector<1x256xf32>
      %114 = vector.broadcast %113 : vector<1x256xf32> to vector<8x256xf32>
      %115 = arith.addf %111, %114 : vector<8x256xf32>
      %116 = vector.extract_strided_slice %115 {offsets = [0, 0], sizes = [8, 128], strides = [1, 1]} : vector<8x256xf32> to vector<8x128xf32>
      %117 = vector.extract_strided_slice %115 {offsets = [0, 128], sizes = [8, 128], strides = [1, 1]} : vector<8x256xf32> to vector<8x128xf32>
      %118 = arith.truncf %107 : vector<8x128xf32> to vector<8x128xbf16>
      %119 = arith.truncf %116 : vector<8x128xf32> to vector<8x128xbf16>
      %120 = arith.truncf %117 : vector<8x128xf32> to vector<8x128xbf16>
      %121 = vector.extract_strided_slice %118 {offsets = [0, 0], sizes = [8, 64], strides = [1, 1]} : vector<8x128xbf16> to vector<8x64xbf16>
      %122 = vector.shape_cast %121 : vector<8x64xbf16> to vector<1x8x64xbf16>
      %123 = vector.extract_strided_slice %119 {offsets = [0, 0], sizes = [8, 64], strides = [1, 1]} : vector<8x128xbf16> to vector<8x64xbf16>
      %124 = vector.shape_cast %123 : vector<8x64xbf16> to vector<1x8x64xbf16>
      %125 = vector.extract_strided_slice %120 {offsets = [0, 0], sizes = [8, 64], strides = [1, 1]} : vector<8x128xbf16> to vector<8x64xbf16>
      %126 = vector.shape_cast %125 : vector<8x64xbf16> to vector<1x8x64xbf16>
      "tpu.trace_start"() <{level = 10 : i32, message = "nqd,nkd->nqk"}> : () -> ()
      %cst_56 = arith.constant dense<0.000000e+00> : vector<1x8x8xf32>
      %127 = tpu.matmul %122, %124, %cst_56 {dimension_numbers = #tpu.dot_dimension_numbers<[2], [2], [1], [1], [0, 0, 0, 1, 1, 1], [0], [0]>} : vector<1x8x64xbf16>, vector<1x8x64xbf16>, vector<1x8x8xf32> -> vector<1x8x8xf32>
      "tpu.trace_stop"() : () -> ()
      %cst_57 = arith.constant dense<0xFF800000> : vector<1x8xf32>
      %128 = vector.multi_reduction <maximumf>, %127, %cst_57 [2] : vector<1x8x8xf32> to vector<1x8xf32>
      %129 = vector.shape_cast %128 : vector<1x8xf32> to vector<1x8x1xf32>
      %130 = vector.broadcast %129 : vector<1x8x1xf32> to vector<1x8x8xf32>
      %131 = arith.subf %127, %130 : vector<1x8x8xf32>
      %132 = math.exp %131 : vector<1x8x8xf32>
      %cst_58 = arith.constant dense<0.000000e+00> : vector<1x8xf32>
      %133 = vector.multi_reduction <add>, %132, %cst_58 [2] : vector<1x8x8xf32> to vector<1x8xf32>
      %134 = vector.shape_cast %133 : vector<1x8xf32> to vector<1x8x1xf32>
      %135 = vector.broadcast %134 : vector<1x8x1xf32> to vector<1x8x8xf32>
      %136 = arith.divf %132, %135 : vector<1x8x8xf32>
      %137 = arith.truncf %136 : vector<1x8x8xf32> to vector<1x8x8xbf16>
      "tpu.trace_start"() <{level = 10 : i32, message = "nqk,nkd->nqd"}> : () -> ()
      %cst_59 = arith.constant dense<0.000000e+00> : vector<1x8x64xf32>
      %138 = tpu.matmul %137, %126, %cst_59 {dimension_numbers = #tpu.dot_dimension_numbers<[2], [1], [1], [2], [0, 0, 0, 1, 1, 2], [0], [0]>} : vector<1x8x8xbf16>, vector<1x8x64xbf16>, vector<1x8x64xf32> -> vector<1x8x64xf32>
      "tpu.trace_stop"() : () -> ()
      %139 = vector.shape_cast %138 : vector<1x8x64xf32> to vector<8x64xf32>
      %140 = vector.extract_strided_slice %118 {offsets = [0, 64], sizes = [8, 64], strides = [1, 1]} : vector<8x128xbf16> to vector<8x64xbf16>
      %141 = vector.shape_cast %140 : vector<8x64xbf16> to vector<1x8x64xbf16>
      %142 = vector.extract_strided_slice %119 {offsets = [0, 64], sizes = [8, 64], strides = [1, 1]} : vector<8x128xbf16> to vector<8x64xbf16>
      %143 = vector.shape_cast %142 : vector<8x64xbf16> to vector<1x8x64xbf16>
      %144 = vector.extract_strided_slice %120 {offsets = [0, 64], sizes = [8, 64], strides = [1, 1]} : vector<8x128xbf16> to vector<8x64xbf16>
      %145 = vector.shape_cast %144 : vector<8x64xbf16> to vector<1x8x64xbf16>
      "tpu.trace_start"() <{level = 10 : i32, message = "nqd,nkd->nqk"}> : () -> ()
      %cst_60 = arith.constant dense<0.000000e+00> : vector<1x8x8xf32>
      %146 = tpu.matmul %141, %143, %cst_60 {dimension_numbers = #tpu.dot_dimension_numbers<[2], [2], [1], [1], [0, 0, 0, 1, 1, 1], [0], [0]>} : vector<1x8x64xbf16>, vector<1x8x64xbf16>, vector<1x8x8xf32> -> vector<1x8x8xf32>
      "tpu.trace_stop"() : () -> ()
      %cst_61 = arith.constant dense<0xFF800000> : vector<1x8xf32>
      %147 = vector.multi_reduction <maximumf>, %146, %cst_61 [2] : vector<1x8x8xf32> to vector<1x8xf32>
      %148 = vector.shape_cast %147 : vector<1x8xf32> to vector<1x8x1xf32>
      %149 = vector.broadcast %148 : vector<1x8x1xf32> to vector<1x8x8xf32>
      %150 = arith.subf %146, %149 : vector<1x8x8xf32>
      %151 = math.exp %150 : vector<1x8x8xf32>
      %cst_62 = arith.constant dense<0.000000e+00> : vector<1x8xf32>
      %152 = vector.multi_reduction <add>, %151, %cst_62 [2] : vector<1x8x8xf32> to vector<1x8xf32>
      %153 = vector.shape_cast %152 : vector<1x8xf32> to vector<1x8x1xf32>
      %154 = vector.broadcast %153 : vector<1x8x1xf32> to vector<1x8x8xf32>
      %155 = arith.divf %151, %154 : vector<1x8x8xf32>
      %156 = arith.truncf %155 : vector<1x8x8xf32> to vector<1x8x8xbf16>
      "tpu.trace_start"() <{level = 10 : i32, message = "nqk,nkd->nqd"}> : () -> ()
      %cst_63 = arith.constant dense<0.000000e+00> : vector<1x8x64xf32>
      %157 = tpu.matmul %156, %145, %cst_63 {dimension_numbers = #tpu.dot_dimension_numbers<[2], [1], [1], [2], [0, 0, 0, 1, 1, 2], [0], [0]>} : vector<1x8x8xbf16>, vector<1x8x64xbf16>, vector<1x8x64xf32> -> vector<1x8x64xf32>
      "tpu.trace_stop"() : () -> ()
      %158 = vector.shape_cast %157 : vector<1x8x64xf32> to vector<8x64xf32>
      %159 = tpu.concatenate %139, %158 in 1 : vector<8x64xf32>, vector<8x64xf32> -> vector<8x128xf32>
      %160 = arith.truncf %159 : vector<8x128xf32> to vector<8x128xbf16>
      %c0_64 = arith.constant 0 : index
      %c0_65 = arith.constant 0 : index
      %c0_66 = arith.constant 0 : index
      %161 = vector.load %arg30[%c0_64, %c0_65, %c0_66] : memref<1x128x128xbf16, #tpu.memory_space<vmem>>, vector<1x128x128xbf16>
      %162 = vector.shape_cast %161 : vector<1x128x128xbf16> to vector<128x128xbf16>
      %cst_67 = arith.constant dense<0.000000e+00> : vector<8x128xf32>
      %163 = tpu.matmul %160, %162, %cst_67 {dimension_numbers = #tpu.dot_dimension_numbers<[1], [0], [0], [1], [0, 0, 1, 1], [], []>} : vector<8x128xbf16>, vector<128x128xbf16>, vector<8x128xf32> -> vector<8x128xf32>
      %c0_68 = arith.constant 0 : index
      %c0_69 = arith.constant 0 : index
      %c0_70 = arith.constant 0 : index
      %164 = vector.load %arg31[%c0_68, %c0_69, %c0_70] : memref<1x1x128xf32, #tpu.memory_space<vmem>>, vector<1x1x128xf32>
      %165 = vector.shape_cast %164 : vector<1x1x128xf32> to vector<1x128xf32>
      %166 = vector.broadcast %165 : vector<1x128xf32> to vector<8x128xf32>
      %167 = arith.addf %163, %166 : vector<8x128xf32>
      %168 = arith.addf %98, %167 : vector<8x128xf32>
      %c0_71 = arith.constant 0 : index
      %c0_72 = arith.constant 0 : index
      %c0_73 = arith.constant 0 : index
      %169 = vector.load %arg32[%c0_71, %c0_72, %c0_73] : memref<1x1x128xf32, #tpu.memory_space<vmem>>, vector<1x1x128xf32>
      %170 = vector.shape_cast %169 : vector<1x1x128xf32> to vector<1x128xf32>
      %c0_74 = arith.constant 0 : index
      %c0_75 = arith.constant 0 : index
      %c0_76 = arith.constant 0 : index
      %171 = vector.load %arg33[%c0_74, %c0_75, %c0_76] : memref<1x1x128xf32, #tpu.memory_space<vmem>>, vector<1x1x128xf32>
      %172 = vector.shape_cast %171 : vector<1x1x128xf32> to vector<1x128xf32>
      %cst_77 = arith.constant dense<0.000000e+00> : vector<8xf32>
      %173 = vector.multi_reduction <add>, %168, %cst_77 [1] : vector<8x128xf32> to vector<8xf32>
      %174 = vector.shape_cast %173 : vector<8xf32> to vector<8x1xf32>
      %cst_78 = arith.constant 1.280000e+02 : f32
      %175 = vector.broadcast %cst_78 : f32 to vector<8x1xf32>
      %176 = arith.divf %174, %175 : vector<8x1xf32>
      %177 = vector.broadcast %176 : vector<8x1xf32> to vector<8x128xf32>
      %178 = arith.subf %168, %177 : vector<8x128xf32>
      %179 = arith.mulf %178, %178 : vector<8x128xf32>
      %cst_79 = arith.constant dense<0.000000e+00> : vector<8xf32>
      %180 = vector.multi_reduction <add>, %179, %cst_79 [1] : vector<8x128xf32> to vector<8xf32>
      %181 = vector.shape_cast %180 : vector<8xf32> to vector<8x1xf32>
      %cst_80 = arith.constant 1.280000e+02 : f32
      %182 = vector.broadcast %cst_80 : f32 to vector<8x1xf32>
      %183 = arith.divf %181, %182 : vector<8x1xf32>
      %cst_81 = arith.constant 9.99999974E-6 : f32
      %184 = vector.broadcast %cst_81 : f32 to vector<8x1xf32>
      %185 = arith.addf %183, %184 : vector<8x1xf32>
      %186 = math.rsqrt %185 : vector<8x1xf32>
      %187 = vector.broadcast %186 : vector<8x1xf32> to vector<8x128xf32>
      %188 = arith.mulf %178, %187 : vector<8x128xf32>
      %189 = vector.broadcast %170 : vector<1x128xf32> to vector<8x128xf32>
      %190 = arith.mulf %188, %189 : vector<8x128xf32>
      %191 = vector.broadcast %172 : vector<1x128xf32> to vector<8x128xf32>
      %192 = arith.addf %190, %191 : vector<8x128xf32>
      %193 = arith.truncf %192 : vector<8x128xf32> to vector<8x128xbf16>
      %c0_82 = arith.constant 0 : index
      %c0_83 = arith.constant 0 : index
      %c0_84 = arith.constant 0 : index
      %194 = vector.load %arg34[%c0_82, %c0_83, %c0_84] : memref<1x128x256xbf16, #tpu.memory_space<vmem>>, vector<1x128x256xbf16>
      %195 = vector.shape_cast %194 : vector<1x128x256xbf16> to vector<128x256xbf16>
      %cst_85 = arith.constant dense<0.000000e+00> : vector<8x256xf32>
      %196 = tpu.matmul %193, %195, %cst_85 {dimension_numbers = #tpu.dot_dimension_numbers<[1], [0], [0], [1], [0, 0, 1, 1], [], []>} : vector<8x128xbf16>, vector<128x256xbf16>, vector<8x256xf32> -> vector<8x256xf32>
      %c0_86 = arith.constant 0 : index
      %c0_87 = arith.constant 0 : index
      %c0_88 = arith.constant 0 : index
      %197 = vector.load %arg35[%c0_86, %c0_87, %c0_88] : memref<1x1x256xf32, #tpu.memory_space<vmem>>, vector<1x1x256xf32>
      %198 = vector.shape_cast %197 : vector<1x1x256xf32> to vector<1x256xf32>
      %199 = vector.broadcast %198 : vector<1x256xf32> to vector<8x256xf32>
      %200 = arith.addf %196, %199 : vector<8x256xf32>
      %201 = arith.truncf %200 : vector<8x256xf32> to vector<8x256xbf16>
      %cst_89 = arith.constant 0.000000e+00 : bf16
      %202 = vector.broadcast %cst_89 : bf16 to vector<8x256xbf16>
      %203 = arith.maximumf %201, %202 : vector<8x256xbf16>
      %c0_90 = arith.constant 0 : index
      %c0_91 = arith.constant 0 : index
      %c0_92 = arith.constant 0 : index
      %204 = vector.load %arg36[%c0_90, %c0_91, %c0_92] : memref<1x256x128xbf16, #tpu.memory_space<vmem>>, vector<1x256x128xbf16>
      %205 = vector.shape_cast %204 : vector<1x256x128xbf16> to vector<256x128xbf16>
      %cst_93 = arith.constant dense<0.000000e+00> : vector<8x128xf32>
      %206 = tpu.matmul %203, %205, %cst_93 {dimension_numbers = #tpu.dot_dimension_numbers<[1], [0], [0], [1], [0, 0, 1, 1], [], []>} : vector<8x256xbf16>, vector<256x128xbf16>, vector<8x128xf32> -> vector<8x128xf32>
      %c0_94 = arith.constant 0 : index
      %c0_95 = arith.constant 0 : index
      %c0_96 = arith.constant 0 : index
      %207 = vector.load %arg37[%c0_94, %c0_95, %c0_96] : memref<1x1x128xf32, #tpu.memory_space<vmem>>, vector<1x1x128xf32>
      %208 = vector.shape_cast %207 : vector<1x1x128xf32> to vector<1x128xf32>
      %209 = vector.broadcast %208 : vector<1x128xf32> to vector<8x128xf32>
      %210 = arith.addf %206, %209 : vector<8x128xf32>
      %211 = arith.addf %192, %210 : vector<8x128xf32>
      %c0_97 = arith.constant 0 : index
      %c0_98 = arith.constant 0 : index
      %c0_99 = arith.constant 0 : index
      %212 = vector.load %arg38[%c0_97, %c0_98, %c0_99] : memref<1x1x128xf32, #tpu.memory_space<vmem>>, vector<1x1x128xf32>
      %213 = vector.shape_cast %212 : vector<1x1x128xf32> to vector<1x128xf32>
      %c0_100 = arith.constant 0 : index
      %c0_101 = arith.constant 0 : index
      %c0_102 = arith.constant 0 : index
      %214 = vector.load %arg39[%c0_100, %c0_101, %c0_102] : memref<1x1x128xf32, #tpu.memory_space<vmem>>, vector<1x1x128xf32>
      %215 = vector.shape_cast %214 : vector<1x1x128xf32> to vector<1x128xf32>
      %cst_103 = arith.constant dense<0.000000e+00> : vector<8xf32>
      %216 = vector.multi_reduction <add>, %211, %cst_103 [1] : vector<8x128xf32> to vector<8xf32>
      %217 = vector.shape_cast %216 : vector<8xf32> to vector<8x1xf32>
      %cst_104 = arith.constant 1.280000e+02 : f32
      %218 = vector.broadcast %cst_104 : f32 to vector<8x1xf32>
      %219 = arith.divf %217, %218 : vector<8x1xf32>
      %220 = vector.broadcast %219 : vector<8x1xf32> to vector<8x128xf32>
      %221 = arith.subf %211, %220 : vector<8x128xf32>
      %222 = arith.mulf %221, %221 : vector<8x128xf32>
      %cst_105 = arith.constant dense<0.000000e+00> : vector<8xf32>
      %223 = vector.multi_reduction <add>, %222, %cst_105 [1] : vector<8x128xf32> to vector<8xf32>
      %224 = vector.shape_cast %223 : vector<8xf32> to vector<8x1xf32>
      %cst_106 = arith.constant 1.280000e+02 : f32
      %225 = vector.broadcast %cst_106 : f32 to vector<8x1xf32>
      %226 = arith.divf %224, %225 : vector<8x1xf32>
      %cst_107 = arith.constant 9.99999974E-6 : f32
      %227 = vector.broadcast %cst_107 : f32 to vector<8x1xf32>
      %228 = arith.addf %226, %227 : vector<8x1xf32>
      %229 = math.rsqrt %228 : vector<8x1xf32>
      %230 = vector.broadcast %229 : vector<8x1xf32> to vector<8x128xf32>
      %231 = arith.mulf %221, %230 : vector<8x128xf32>
      %232 = vector.broadcast %213 : vector<1x128xf32> to vector<8x128xf32>
      %233 = arith.mulf %231, %232 : vector<8x128xf32>
      %234 = vector.broadcast %215 : vector<1x128xf32> to vector<8x128xf32>
      %235 = arith.addf %233, %234 : vector<8x128xf32>
      %c0_108 = arith.constant 0 : index
      %c0_109 = arith.constant 0 : index
      %236 = vector.load %arg47[%c0_108, %c0_109] : memref<8x128xf32, #tpu.memory_space<vmem>>, vector<8x128xf32>
      tpu.vector_store %arg47[%c0_108, %c0_109], %235 {strides = array<i32>} : memref<8x128xf32, #tpu.memory_space<vmem>>, vector<8x128xf32>,
      %c5_i32 = arith.constant 5 : i32
      %237 = arith.cmpi eq, %arg1, %c5_i32 : i32
      %238 = arith.extui %237 : i1 to i32
      %c0_i32_110 = arith.constant 0 : i32
      %239 = arith.cmpi ne, %238, %c0_i32_110 : i32
      scf.if %239 {
        %c0_111 = arith.constant 0 : index
        %c0_112 = arith.constant 0 : index
        %240 = vector.load %arg40[%c0_111, %c0_112] : memref<1x128xf32, #tpu.memory_space<vmem>>, vector<1x128xf32>
        %c0_113 = arith.constant 0 : index
        %c0_114 = arith.constant 0 : index
        %241 = vector.load %arg41[%c0_113, %c0_114] : memref<1x128xf32, #tpu.memory_space<vmem>>, vector<1x128xf32>
        %cst_115 = arith.constant dense<0.000000e+00> : vector<8xf32>
        %242 = vector.multi_reduction <add>, %235, %cst_115 [1] : vector<8x128xf32> to vector<8xf32>
        %243 = vector.shape_cast %242 : vector<8xf32> to vector<8x1xf32>
        %cst_116 = arith.constant 1.280000e+02 : f32
        %244 = vector.broadcast %cst_116 : f32 to vector<8x1xf32>
        %245 = arith.divf %243, %244 : vector<8x1xf32>
        %246 = vector.broadcast %245 : vector<8x1xf32> to vector<8x128xf32>
        %247 = arith.subf %235, %246 : vector<8x128xf32>
        %248 = arith.mulf %247, %247 : vector<8x128xf32>
        %cst_117 = arith.constant dense<0.000000e+00> : vector<8xf32>
        %249 = vector.multi_reduction <add>, %248, %cst_117 [1] : vector<8x128xf32> to vector<8xf32>
        %250 = vector.shape_cast %249 : vector<8xf32> to vector<8x1xf32>
        %cst_118 = arith.constant 1.280000e+02 : f32
        %251 = vector.broadcast %cst_118 : f32 to vector<8x1xf32>
        %252 = arith.divf %250, %251 : vector<8x1xf32>
        %cst_119 = arith.constant 9.99999974E-6 : f32
        %253 = vector.broadcast %cst_119 : f32 to vector<8x1xf32>
        %254 = arith.addf %252, %253 : vector<8x1xf32>
        %255 = math.rsqrt %254 : vector<8x1xf32>
        %256 = vector.broadcast %255 : vector<8x1xf32> to vector<8x128xf32>
        %257 = arith.mulf %247, %256 : vector<8x128xf32>
        %258 = vector.broadcast %240 : vector<1x128xf32> to vector<8x128xf32>
        %259 = arith.mulf %257, %258 : vector<8x128xf32>
        %260 = vector.broadcast %241 : vector<1x128xf32> to vector<8x128xf32>
        %261 = arith.addf %259, %260 : vector<8x128xf32>
        %262 = arith.truncf %261 : vector<8x128xf32> to vector<8x128xbf16>
        %c0_120 = arith.constant 0 : index
        %c0_121 = arith.constant 0 : index
        %263 = vector.load %arg42[%c0_120, %c0_121] : memref<128x128xbf16, #tpu.memory_space<vmem>>, vector<128x128xbf16>
        %cst_122 = arith.constant dense<0.000000e+00> : vector<8x128xf32>
        %264 = tpu.matmul %262, %263, %cst_122 {dimension_numbers = #tpu.dot_dimension_numbers<[1], [0], [0], [1], [0, 0, 1, 1], [], []>} : vector<8x128xbf16>, vector<128x128xbf16>, vector<8x128xf32> -> vector<8x128xf32>
        %c0_123 = arith.constant 0 : index
        %c0_124 = arith.constant 0 : index
        %265 = vector.load %arg43[%c0_123, %c0_124] : memref<1x128xf32, #tpu.memory_space<vmem>>, vector<1x128xf32>
        %266 = vector.broadcast %265 : vector<1x128xf32> to vector<8x128xf32>
        %267 = arith.addf %264, %266 : vector<8x128xf32>
        %c0_125 = arith.constant 0 : index
        %c0_126 = arith.constant 0 : index
        %268 = vector.load %arg44[%c0_125, %c0_126] : memref<8x128xf32, #tpu.memory_space<vmem>>, vector<8x128xf32>
        tpu.vector_store %arg44[%c0_125, %c0_126], %267 {strides = array<i32>} : memref<8x128xf32, #tpu.memory_space<vmem>>, vector<8x128xf32>,
      } else {
      }
    } else {
    }
    return
  }
  func.func @transform_0(%arg0: i32, %arg1: i32) -> (i32, i32) {
    %c0_i32 = arith.constant 0 : i32
    %c0_i32_0 = arith.constant 0 : i32
    return %arg0, %c0_i32 : i32, i32
  }
  func.func @transform_1(%arg0: i32, %arg1: i32) -> (i32, i32) {
    %c0_i32 = arith.constant 0 : i32
    %c0_i32_0 = arith.constant 0 : i32
    return %arg0, %c0_i32 : i32, i32
  }
  func.func @transform_2(%arg0: i32, %arg1: i32) -> (i32, i32, i32) {
    %c0_i32 = arith.constant 0 : i32
    %c0_i32_0 = arith.constant 0 : i32
    %c0_i32_1 = arith.constant 0 : i32
    return %arg0, %c0_i32, %c0_i32_0 : i32, i32, i32
  }
  func.func @transform_3(%arg0: i32, %arg1: i32) -> (i32, i32, i32) {
    %c0_i32 = arith.constant 0 : i32
    %c0_i32_0 = arith.constant 0 : i32
    %c0_i32_1 = arith.constant 0 : i32
    %c0_i32_2 = arith.constant 0 : i32
    return %c0_i32, %c0_i32_0, %c0_i32_1 : i32, i32, i32
  }
  func.func @transform_4(%arg0: i32, %arg1: i32) -> (i32, i32, i32) {
    %c2_i32 = arith.constant 2 : i32
    %0 = arith.minsi %arg1, %c2_i32 : i32
    %c0_i32 = arith.constant 0 : i32
    %c0_i32_0 = arith.constant 0 : i32
    %c0_i32_1 = arith.constant 0 : i32
    return %0, %c0_i32, %c0_i32_0 : i32, i32, i32
  }
  func.func @transform_5(%arg0: i32, %arg1: i32) -> (i32, i32, i32) {
    %c2_i32 = arith.constant 2 : i32
    %0 = arith.minsi %arg1, %c2_i32 : i32
    %c0_i32 = arith.constant 0 : i32
    %c0_i32_0 = arith.constant 0 : i32
    %c0_i32_1 = arith.constant 0 : i32
    return %0, %c0_i32, %c0_i32_0 : i32, i32, i32
  }
  func.func @transform_6(%arg0: i32, %arg1: i32) -> (i32, i32, i32) {
    %c2_i32 = arith.constant 2 : i32
    %0 = arith.minsi %arg1, %c2_i32 : i32
    %c0_i32 = arith.constant 0 : i32
    %c0_i32_0 = arith.constant 0 : i32
    %c0_i32_1 = arith.constant 0 : i32
    return %0, %c0_i32, %c0_i32_0 : i32, i32, i32
  }
  func.func @transform_7(%arg0: i32, %arg1: i32) -> (i32, i32, i32) {
    %c2_i32 = arith.constant 2 : i32
    %0 = arith.minsi %arg1, %c2_i32 : i32
    %c0_i32 = arith.constant 0 : i32
    %c0_i32_0 = arith.constant 0 : i32
    %c0_i32_1 = arith.constant 0 : i32
    return %0, %c0_i32, %c0_i32_0 : i32, i32, i32
  }
  func.func @transform_8(%arg0: i32, %arg1: i32) -> (i32, i32, i32) {
    %c2_i32 = arith.constant 2 : i32
    %0 = arith.minsi %arg1, %c2_i32 : i32
    %c0_i32 = arith.constant 0 : i32
    %c0_i32_0 = arith.constant 0 : i32
    %c0_i32_1 = arith.constant 0 : i32
    return %0, %c0_i32, %c0_i32_0 : i32, i32, i32
  }
  func.func @transform_9(%arg0: i32, %arg1: i32) -> (i32, i32, i32) {
    %c2_i32 = arith.constant 2 : i32
    %0 = arith.minsi %arg1, %c2_i32 : i32
    %c0_i32 = arith.constant 0 : i32
    %c0_i32_0 = arith.constant 0 : i32
    %c0_i32_1 = arith.constant 0 : i32
    return %0, %c0_i32, %c0_i32_0 : i32, i32, i32
  }
  func.func @transform_10(%arg0: i32, %arg1: i32) -> (i32, i32, i32) {
    %c2_i32 = arith.constant 2 : i32
    %0 = arith.minsi %arg1, %c2_i32 : i32
    %c0_i32 = arith.constant 0 : i32
    %c0_i32_0 = arith.constant 0 : i32
    %c0_i32_1 = arith.constant 0 : i32
    return %0, %c0_i32, %c0_i32_0 : i32, i32, i32
  }
  func.func @transform_11(%arg0: i32, %arg1: i32) -> (i32, i32, i32) {
    %c2_i32 = arith.constant 2 : i32
    %0 = arith.minsi %arg1, %c2_i32 : i32
    %c0_i32 = arith.constant 0 : i32
    %c0_i32_0 = arith.constant 0 : i32
    %c0_i32_1 = arith.constant 0 : i32
    return %0, %c0_i32, %c0_i32_0 : i32, i32, i32
  }
  func.func @transform_12(%arg0: i32, %arg1: i32) -> (i32, i32, i32) {
    %c2_i32 = arith.constant 2 : i32
    %0 = arith.minsi %arg1, %c2_i32 : i32
    %c0_i32 = arith.constant 0 : i32
    %c0_i32_0 = arith.constant 0 : i32
    %c0_i32_1 = arith.constant 0 : i32
    return %0, %c0_i32, %c0_i32_0 : i32, i32, i32
  }
  func.func @transform_13(%arg0: i32, %arg1: i32) -> (i32, i32, i32) {
    %c2_i32 = arith.constant 2 : i32
    %0 = arith.minsi %arg1, %c2_i32 : i32
    %c0_i32 = arith.constant 0 : i32
    %c0_i32_0 = arith.constant 0 : i32
    %c0_i32_1 = arith.constant 0 : i32
    return %0, %c0_i32, %c0_i32_0 : i32, i32, i32
  }
  func.func @transform_14(%arg0: i32, %arg1: i32) -> (i32, i32, i32) {
    %c2_i32 = arith.constant 2 : i32
    %0 = arith.minsi %arg1, %c2_i32 : i32
    %c0_i32 = arith.constant 0 : i32
    %c0_i32_0 = arith.constant 0 : i32
    %c0_i32_1 = arith.constant 0 : i32
    return %0, %c0_i32, %c0_i32_0 : i32, i32, i32
  }
  func.func @transform_15(%arg0: i32, %arg1: i32) -> (i32, i32, i32) {
    %c2_i32 = arith.constant 2 : i32
    %0 = arith.minsi %arg1, %c2_i32 : i32
    %c0_i32 = arith.constant 0 : i32
    %c0_i32_0 = arith.constant 0 : i32
    %c0_i32_1 = arith.constant 0 : i32
    return %0, %c0_i32, %c0_i32_0 : i32, i32, i32
  }
  func.func @transform_16(%arg0: i32, %arg1: i32) -> (i32, i32) {
    %c0_i32 = arith.constant 0 : i32
    %c0_i32_0 = arith.constant 0 : i32
    %c0_i32_1 = arith.constant 0 : i32
    return %c0_i32, %c0_i32_0 : i32, i32
  }
  func.func @transform_17(%arg0: i32, %arg1: i32) -> (i32, i32) {
    %c0_i32 = arith.constant 0 : i32
    %c0_i32_0 = arith.constant 0 : i32
    %c0_i32_1 = arith.constant 0 : i32
    return %c0_i32, %c0_i32_0 : i32, i32
  }
  func.func @transform_18(%arg0: i32, %arg1: i32) -> (i32, i32, i32) {
    %c3_i32 = arith.constant 3 : i32
    %0 = arith.subi %arg1, %c3_i32 : i32
    %c0_i32 = arith.constant 0 : i32
    %1 = arith.maxsi %0, %c0_i32 : i32
    %c0_i32_0 = arith.constant 0 : i32
    %c0_i32_1 = arith.constant 0 : i32
    %c0_i32_2 = arith.constant 0 : i32
    return %1, %c0_i32_0, %c0_i32_1 : i32, i32, i32
  }
  func.func @transform_19(%arg0: i32, %arg1: i32) -> (i32, i32, i32) {
    %c3_i32 = arith.constant 3 : i32
    %0 = arith.subi %arg1, %c3_i32 : i32
    %c0_i32 = arith.constant 0 : i32
    %1 = arith.maxsi %0, %c0_i32 : i32
    %c0_i32_0 = arith.constant 0 : i32
    %c0_i32_1 = arith.constant 0 : i32
    %c0_i32_2 = arith.constant 0 : i32
    return %1, %c0_i32_0, %c0_i32_1 : i32, i32, i32
  }
  func.func @transform_20(%arg0: i32, %arg1: i32) -> (i32, i32, i32) {
    %c3_i32 = arith.constant 3 : i32
    %0 = arith.subi %arg1, %c3_i32 : i32
    %c0_i32 = arith.constant 0 : i32
    %1 = arith.maxsi %0, %c0_i32 : i32
    %c0_i32_0 = arith.constant 0 : i32
    %c0_i32_1 = arith.constant 0 : i32
    %c0_i32_2 = arith.constant 0 : i32
    return %1, %c0_i32_0, %c0_i32_1 : i32, i32, i32
  }
  func.func @transform_21(%arg0: i32, %arg1: i32) -> (i32, i32, i32) {
    %c3_i32 = arith.constant 3 : i32
    %0 = arith.subi %arg1, %c3_i32 : i32
    %c0_i32 = arith.constant 0 : i32
    %1 = arith.maxsi %0, %c0_i32 : i32
    %c0_i32_0 = arith.constant 0 : i32
    %c0_i32_1 = arith.constant 0 : i32
    %c0_i32_2 = arith.constant 0 : i32
    return %1, %c0_i32_0, %c0_i32_1 : i32, i32, i32
  }
  func.func @transform_22(%arg0: i32, %arg1: i32) -> (i32, i32, i32) {
    %c3_i32 = arith.constant 3 : i32
    %0 = arith.subi %arg1, %c3_i32 : i32
    %c0_i32 = arith.constant 0 : i32
    %1 = arith.maxsi %0, %c0_i32 : i32
    %c0_i32_0 = arith.constant 0 : i32
    %c0_i32_1 = arith.constant 0 : i32
    %c0_i32_2 = arith.constant 0 : i32
    return %1, %c0_i32_0, %c0_i32_1 : i32, i32, i32
  }
  func.func @transform_23(%arg0: i32, %arg1: i32) -> (i32, i32, i32) {
    %c3_i32 = arith.constant 3 : i32
    %0 = arith.subi %arg1, %c3_i32 : i32
    %c0_i32 = arith.constant 0 : i32
    %1 = arith.maxsi %0, %c0_i32 : i32
    %c0_i32_0 = arith.constant 0 : i32
    %c0_i32_1 = arith.constant 0 : i32
    %c0_i32_2 = arith.constant 0 : i32
    return %1, %c0_i32_0, %c0_i32_1 : i32, i32, i32
  }
  func.func @transform_24(%arg0: i32, %arg1: i32) -> (i32, i32, i32) {
    %c3_i32 = arith.constant 3 : i32
    %0 = arith.subi %arg1, %c3_i32 : i32
    %c0_i32 = arith.constant 0 : i32
    %1 = arith.maxsi %0, %c0_i32 : i32
    %c0_i32_0 = arith.constant 0 : i32
    %c0_i32_1 = arith.constant 0 : i32
    %c0_i32_2 = arith.constant 0 : i32
    return %1, %c0_i32_0, %c0_i32_1 : i32, i32, i32
  }
  func.func @transform_25(%arg0: i32, %arg1: i32) -> (i32, i32, i32) {
    %c3_i32 = arith.constant 3 : i32
    %0 = arith.subi %arg1, %c3_i32 : i32
    %c0_i32 = arith.constant 0 : i32
    %1 = arith.maxsi %0, %c0_i32 : i32
    %c0_i32_0 = arith.constant 0 : i32
    %c0_i32_1 = arith.constant 0 : i32
    %c0_i32_2 = arith.constant 0 : i32
    return %1, %c0_i32_0, %c0_i32_1 : i32, i32, i32
  }
  func.func @transform_26(%arg0: i32, %arg1: i32) -> (i32, i32, i32) {
    %c3_i32 = arith.constant 3 : i32
    %0 = arith.subi %arg1, %c3_i32 : i32
    %c0_i32 = arith.constant 0 : i32
    %1 = arith.maxsi %0, %c0_i32 : i32
    %c0_i32_0 = arith.constant 0 : i32
    %c0_i32_1 = arith.constant 0 : i32
    %c0_i32_2 = arith.constant 0 : i32
    return %1, %c0_i32_0, %c0_i32_1 : i32, i32, i32
  }
  func.func @transform_27(%arg0: i32, %arg1: i32) -> (i32, i32, i32) {
    %c3_i32 = arith.constant 3 : i32
    %0 = arith.subi %arg1, %c3_i32 : i32
    %c0_i32 = arith.constant 0 : i32
    %1 = arith.maxsi %0, %c0_i32 : i32
    %c0_i32_0 = arith.constant 0 : i32
    %c0_i32_1 = arith.constant 0 : i32
    %c0_i32_2 = arith.constant 0 : i32
    return %1, %c0_i32_0, %c0_i32_1 : i32, i32, i32
  }
  func.func @transform_28(%arg0: i32, %arg1: i32) -> (i32, i32, i32) {
    %c3_i32 = arith.constant 3 : i32
    %0 = arith.subi %arg1, %c3_i32 : i32
    %c0_i32 = arith.constant 0 : i32
    %1 = arith.maxsi %0, %c0_i32 : i32
    %c0_i32_0 = arith.constant 0 : i32
    %c0_i32_1 = arith.constant 0 : i32
    %c0_i32_2 = arith.constant 0 : i32
    return %1, %c0_i32_0, %c0_i32_1 : i32, i32, i32
  }
  func.func @transform_29(%arg0: i32, %arg1: i32) -> (i32, i32, i32) {
    %c3_i32 = arith.constant 3 : i32
    %0 = arith.subi %arg1, %c3_i32 : i32
    %c0_i32 = arith.constant 0 : i32
    %1 = arith.maxsi %0, %c0_i32 : i32
    %c0_i32_0 = arith.constant 0 : i32
    %c0_i32_1 = arith.constant 0 : i32
    %c0_i32_2 = arith.constant 0 : i32
    return %1, %c0_i32_0, %c0_i32_1 : i32, i32, i32
  }
  func.func @transform_30(%arg0: i32, %arg1: i32) -> (i32, i32, i32) {
    %c3_i32 = arith.constant 3 : i32
    %0 = arith.subi %arg1, %c3_i32 : i32
    %c0_i32 = arith.constant 0 : i32
    %1 = arith.maxsi %0, %c0_i32 : i32
    %c0_i32_0 = arith.constant 0 : i32
    %c0_i32_1 = arith.constant 0 : i32
    %c0_i32_2 = arith.constant 0 : i32
    return %1, %c0_i32_0, %c0_i32_1 : i32, i32, i32
  }
  func.func @transform_31(%arg0: i32, %arg1: i32) -> (i32, i32, i32) {
    %c3_i32 = arith.constant 3 : i32
    %0 = arith.subi %arg1, %c3_i32 : i32
    %c0_i32 = arith.constant 0 : i32
    %1 = arith.maxsi %0, %c0_i32 : i32
    %c0_i32_0 = arith.constant 0 : i32
    %c0_i32_1 = arith.constant 0 : i32
    %c0_i32_2 = arith.constant 0 : i32
    return %1, %c0_i32_0, %c0_i32_1 : i32, i32, i32
  }
  func.func @transform_32(%arg0: i32, %arg1: i32) -> (i32, i32, i32) {
    %c3_i32 = arith.constant 3 : i32
    %0 = arith.subi %arg1, %c3_i32 : i32
    %c0_i32 = arith.constant 0 : i32
    %1 = arith.maxsi %0, %c0_i32 : i32
    %c0_i32_0 = arith.constant 0 : i32
    %c0_i32_1 = arith.constant 0 : i32
    %c0_i32_2 = arith.constant 0 : i32
    return %1, %c0_i32_0, %c0_i32_1 : i32, i32, i32
  }
  func.func @transform_33(%arg0: i32, %arg1: i32) -> (i32, i32, i32) {
    %c3_i32 = arith.constant 3 : i32
    %0 = arith.subi %arg1, %c3_i32 : i32
    %c0_i32 = arith.constant 0 : i32
    %1 = arith.maxsi %0, %c0_i32 : i32
    %c0_i32_0 = arith.constant 0 : i32
    %c0_i32_1 = arith.constant 0 : i32
    %c0_i32_2 = arith.constant 0 : i32
    return %1, %c0_i32_0, %c0_i32_1 : i32, i32, i32
  }
  func.func @transform_34(%arg0: i32, %arg1: i32) -> (i32, i32, i32) {
    %c3_i32 = arith.constant 3 : i32
    %0 = arith.subi %arg1, %c3_i32 : i32
    %c0_i32 = arith.constant 0 : i32
    %1 = arith.maxsi %0, %c0_i32 : i32
    %c0_i32_0 = arith.constant 0 : i32
    %c0_i32_1 = arith.constant 0 : i32
    %c0_i32_2 = arith.constant 0 : i32
    return %1, %c0_i32_0, %c0_i32_1 : i32, i32, i32
  }
  func.func @transform_35(%arg0: i32, %arg1: i32) -> (i32, i32, i32) {
    %c3_i32 = arith.constant 3 : i32
    %0 = arith.subi %arg1, %c3_i32 : i32
    %c0_i32 = arith.constant 0 : i32
    %1 = arith.maxsi %0, %c0_i32 : i32
    %c0_i32_0 = arith.constant 0 : i32
    %c0_i32_1 = arith.constant 0 : i32
    %c0_i32_2 = arith.constant 0 : i32
    return %1, %c0_i32_0, %c0_i32_1 : i32, i32, i32
  }
  func.func @transform_36(%arg0: i32, %arg1: i32) -> (i32, i32, i32) {
    %c3_i32 = arith.constant 3 : i32
    %0 = arith.subi %arg1, %c3_i32 : i32
    %c0_i32 = arith.constant 0 : i32
    %1 = arith.maxsi %0, %c0_i32 : i32
    %c0_i32_0 = arith.constant 0 : i32
    %c0_i32_1 = arith.constant 0 : i32
    %c0_i32_2 = arith.constant 0 : i32
    return %1, %c0_i32_0, %c0_i32_1 : i32, i32, i32
  }
  func.func @transform_37(%arg0: i32, %arg1: i32) -> (i32, i32, i32) {
    %c3_i32 = arith.constant 3 : i32
    %0 = arith.subi %arg1, %c3_i32 : i32
    %c0_i32 = arith.constant 0 : i32
    %1 = arith.maxsi %0, %c0_i32 : i32
    %c0_i32_0 = arith.constant 0 : i32
    %c0_i32_1 = arith.constant 0 : i32
    %c0_i32_2 = arith.constant 0 : i32
    return %1, %c0_i32_0, %c0_i32_1 : i32, i32, i32
  }
  func.func @transform_38(%arg0: i32, %arg1: i32) -> (i32, i32) {
    %c0_i32 = arith.constant 0 : i32
    %c0_i32_0 = arith.constant 0 : i32
    %c0_i32_1 = arith.constant 0 : i32
    return %c0_i32, %c0_i32_0 : i32, i32
  }
  func.func @transform_39(%arg0: i32, %arg1: i32) -> (i32, i32) {
    %c0_i32 = arith.constant 0 : i32
    %c0_i32_0 = arith.constant 0 : i32
    %c0_i32_1 = arith.constant 0 : i32
    return %c0_i32, %c0_i32_0 : i32, i32
  }
  func.func @transform_40(%arg0: i32, %arg1: i32) -> (i32, i32) {
    %c0_i32 = arith.constant 0 : i32
    %c0_i32_0 = arith.constant 0 : i32
    %c0_i32_1 = arith.constant 0 : i32
    return %c0_i32, %c0_i32_0 : i32, i32
  }
  func.func @transform_41(%arg0: i32, %arg1: i32) -> (i32, i32) {
    %c0_i32 = arith.constant 0 : i32
    %c0_i32_0 = arith.constant 0 : i32
    %c0_i32_1 = arith.constant 0 : i32
    return %c0_i32, %c0_i32_0 : i32, i32
  }
  func.func @transform_42(%arg0: i32, %arg1: i32) -> (i32, i32) {
    %c0_i32 = arith.constant 0 : i32
    %c0_i32_0 = arith.constant 0 : i32
    return %arg0, %c0_i32 : i32, i32
  }
}

</mosaic_0001>

<llo_original>
// kernel: transformer_forward.1
$region0: #{transformer_forward.1}
  #allocation0 [shape = 'u32[]', space=smem, size = 0x4, offset = 0x4, fixed_abs, tag = 'smem constant byte address 0x4 - core index']
  #allocation1 [shape = 'u32[144,128]{1,0:T(1,128)}', space=vmem, size = 0x12000, scoped, tag = 'internal scratch']
  #allocation2 [shape = 'f32[8,128]{1,0:T(8,128)}', space=vmem, size = 0x1000, scoped, tag = 'scratch operand']
  #allocation3 [shape = 'f32[8,128]{1,0:T(8,128)}', space=vmem, size = 0x1000, scoped, tag = 'scratch operand']
  #allocation4 [shape = 'f32[8,128]{1,0:T(8,128)}', space=vmem, size = 0x1000, scoped, tag = 'scratch operand']
  %s0 = inlined_call_operand.smem [shape: u32[43], index: -1, kind: input, shape index: {}]
  %s1 = sld [smem:[%s0]]
  %s2 = scalar_lea.smem %s0, 1
  %s3 = sld [smem:[%s2]]
  %s4 = scalar_lea.smem %s0, 2
  %s5 = sld [smem:[%s4]]
  %s6 = scalar_lea.smem %s0, 3
  %s7 = sld [smem:[%s6]]
  %s8 = scalar_lea.smem %s0, 4
  %s9 = sld [smem:[%s8]]
  %s10 = scalar_lea.smem %s0, 5
  %s11 = sld [smem:[%s10]]
  %s12 = scalar_lea.smem %s0, 6
  %s13 = sld [smem:[%s12]]
  %s14 = scalar_lea.smem %s0, 7
  %s15 = sld [smem:[%s14]]
  %s16 = scalar_lea.smem %s0, 8
  %s17 = sld [smem:[%s16]]
  %s18 = scalar_lea.smem %s0, 9
  %s19 = sld [smem:[%s18]]
  %s20 = scalar_lea.smem %s0, 10
  %s21 = sld [smem:[%s20]]
  %s22 = scalar_lea.smem %s0, 11
  %s23 = sld [smem:[%s22]]
  %s24 = scalar_lea.smem %s0, 12
  %s25 = sld [smem:[%s24]]
  %s26 = scalar_lea.smem %s0, 13
  %s27 = sld [smem:[%s26]]
  %s28 = scalar_lea.smem %s0, 14
  %s29 = sld [smem:[%s28]]
  %s30 = scalar_lea.smem %s0, 15
  %s31 = sld [smem:[%s30]]
  %s32 = scalar_lea.smem %s0, 16
  %s33 = sld [smem:[%s32]]
  %s34 = scalar_lea.smem %s0, 17
  %s35 = sld [smem:[%s34]]
  %s36 = scalar_lea.smem %s0, 18
  %s37 = sld [smem:[%s36]]
  %s38 = scalar_lea.smem %s0, 19
  %s39 = sld [smem:[%s38]]
  %s40 = scalar_lea.smem %s0, 20
  %s41 = sld [smem:[%s40]]
  %s42 = scalar_lea.smem %s0, 21
  %s43 = sld [smem:[%s42]]
  %s44 = scalar_lea.smem %s0, 22
  %s45 = sld [smem:[%s44]]
  %s46 = scalar_lea.smem %s0, 23
  %s47 = sld [smem:[%s46]]
  %s48 = scalar_lea.smem %s0, 24
  %s49 = sld [smem:[%s48]]
  %s50 = scalar_lea.smem %s0, 25
  %s51 = sld [smem:[%s50]]
  %s52 = scalar_lea.smem %s0, 26
  %s53 = sld [smem:[%s52]]
  %s54 = scalar_lea.smem %s0, 27
  %s55 = sld [smem:[%s54]]
  %s56 = scalar_lea.smem %s0, 28
  %s57 = sld [smem:[%s56]]
  %s58 = scalar_lea.smem %s0, 29
  %s59 = sld [smem:[%s58]]
  %s60 = scalar_lea.smem %s0, 30
  %s61 = sld [smem:[%s60]]
  %s62 = scalar_lea.smem %s0, 31
  %s63 = sld [smem:[%s62]]
  %s64 = scalar_lea.smem %s0, 32
  %s65 = sld [smem:[%s64]]
  %s66 = scalar_lea.smem %s0, 33
  %s67 = sld [smem:[%s66]]
  %s68 = scalar_lea.smem %s0, 34
  %s69 = sld [smem:[%s68]]
  %s70 = scalar_lea.smem %s0, 35
  %s71 = sld [smem:[%s70]]
  %s72 = scalar_lea.smem %s0, 36
  %s73 = sld [smem:[%s72]]
  %s74 = scalar_lea.smem %s0, 37
  %s75 = sld [smem:[%s74]]
  %s76 = scalar_lea.smem %s0, 38
  %s77 = sld [smem:[%s76]]
  %s78 = scalar_lea.smem %s0, 39
  %s79 = sld [smem:[%s78]]
  %s80 = scalar_lea.smem %s0, 40
  %s81 = sld [smem:[%s80]]
  %s82 = scalar_lea.smem %s0, 41
  %s83 = sld [smem:[%s82]]
  %s84 = scalar_lea.smem %s0, 42
  %s85 = sld [smem:[%s84]]
  %s86 = sld [smem:[#allocation0]]
  $region353: #{transformer_forward.1} parent=0
    _
  %s88 = ssub.s32 1, %s86
  %s89 = scalar_select 0, %s88, %s86
  $region1: #{transformer_forward.1} parent=0
    #allocation5 [shape = 'u8[65536]{0}', space=vmem, size = 0x10000, scoped, tag = 'input window, operand 6']
    #allocation6 [shape = 's32[2]{0}', space=sflag, size = 0x8, scoped, tag = 'scoped memory for transformer_forward.1']
    #allocation7 [shape = 'u8[1024]{0}', space=vmem, size = 0x400, scoped, tag = 'input window, operand 8']
    #allocation8 [shape = 's32[2]{0}', space=sflag, size = 0x8, scoped, tag = 'scoped memory for transformer_forward.1']
    #allocation9 [shape = 'u8[1024]{0}', space=vmem, size = 0x400, scoped, tag = 'input window, operand 9']
    #allocation10 [shape = 'u8[131072]{0}', space=vmem, size = 0x20000, scoped, tag = 'input window, operand 10']
    #allocation11 [shape = 's32[2]{0}', space=sflag, size = 0x8, scoped, tag = 'scoped memory for transformer_forward.1']
    #allocation12 [shape = 'u8[2048]{0}', space=vmem, size = 0x800, scoped, tag = 'input window, operand 11']
    #allocation13 [shape = 'u8[131072]{0}', space=vmem, size = 0x20000, scoped, tag = 'input window, operand 12']
    #allocation14 [shape = 's32[2]{0}', space=sflag, size = 0x8, scoped, tag = 'scoped memory for transformer_forward.1']
    #allocation15 [shape = 'u8[1024]{0}', space=vmem, size = 0x400, scoped, tag = 'input window, operand 13']
    #allocation16 [shape = 'u8[1024]{0}', space=vmem, size = 0x400, scoped, tag = 'input window, operand 14']
    #allocation17 [shape = 's32[2]{0}', space=sflag, size = 0x8, scoped, tag = 'scoped memory for transformer_forward.1']
    #allocation18 [shape = 'u8[1024]{0}', space=vmem, size = 0x400, scoped, tag = 'input window, operand 15']
    #allocation19 [shape = 'u8[512]{0}', space=vmem, size = 0x400, scoped, tag = 'input window, operand 17, single buffered']
    #allocation20 [shape = 's32[1]{0}', space=sflag, size = 0x4, scoped, tag = 'scoped memory for transformer_forward.1']
    #allocation21 [shape = 'u8[196608]{0}', space=vmem, size = 0x30000, scoped, tag = 'input window, operand 18']
    #allocation22 [shape = 'u8[65536]{0}', space=vmem, size = 0x10000, scoped, tag = 'input window, operand 20']
    #allocation23 [shape = 'u8[1024]{0}', space=vmem, size = 0x400, scoped, tag = 'input window, operand 21']
    #allocation24 [shape = 'u8[1024]{0}', space=vmem, size = 0x400, scoped, tag = 'input window, operand 22']
    #allocation25 [shape = 'u8[1024]{0}', space=vmem, size = 0x400, scoped, tag = 'input window, operand 23']
    #allocation26 [shape = 'u8[65536]{0}', space=vmem, size = 0x10000, scoped, tag = 'input window, operand 24']
    #allocation27 [shape = 'u8[1024]{0}', space=vmem, size = 0x400, scoped, tag = 'input window, operand 25']
    #allocation28 [shape = 'u8[131072]{0}', space=vmem, size = 0x20000, scoped, tag = 'input window, operand 26']
    #allocation29 [shape = 'u8[2048]{0}', space=vmem, size = 0x800, scoped, tag = 'input window, operand 27']
    #allocation30 [shape = 'u8[65536]{0}', space=vmem, size = 0x10000, scoped, tag = 'input window, operand 28']
    #allocation31 [shape = 'u8[1024]{0}', space=vmem, size = 0x400, scoped, tag = 'input window, operand 29']
    #allocation32 [shape = 'u8[1024]{0}', space=vmem, size = 0x400, scoped, tag = 'input window, operand 30']
    #allocation33 [shape = 'u8[1024]{0}', space=vmem, size = 0x400, scoped, tag = 'input window, operand 31']
    #allocation34 [shape = 'u8[131072]{0}', space=vmem, size = 0x20000, scoped, tag = 'input window, operand 32']
    #allocation35 [shape = 'u8[2048]{0}', space=vmem, size = 0x800, scoped, tag = 'input window, operand 33']
    #allocation36 [shape = 'u8[131072]{0}', space=vmem, size = 0x20000, scoped, tag = 'input window, operand 34']
    #allocation37 [shape = 'u8[1024]{0}', space=vmem, size = 0x400, scoped, tag = 'input window, operand 35']
    #allocation38 [shape = 'u8[1024]{0}', space=vmem, size = 0x400, scoped, tag = 'input window, operand 36']
    #allocation39 [shape = 'u8[1024]{0}', space=vmem, size = 0x400, scoped, tag = 'input window, operand 37']
    #allocation40 [shape = 'u8[512]{0}', space=vmem, size = 0x400, scoped, tag = 'input window, operand 38, single buffered']
    #allocation41 [shape = 'u8[512]{0}', space=vmem, size = 0x400, scoped, tag = 'input window, operand 39, single buffered']
    #allocation42 [shape = 'u8[32768]{0}', space=vmem, size = 0x8000, scoped, tag = 'input window, operand 40, single buffered']
    #allocation43 [shape = 's32[1]{0}', space=sflag, size = 0x4, scoped, tag = 'scoped memory for transformer_forward.1']
    #allocation44 [shape = 'u8[512]{0}', space=vmem, size = 0x400, scoped, tag = 'input window, operand 41, single buffered']
    %90 = vsyncpa [#allocation6], 0
    %s91 = scalar_lea.sflag [#allocation6], 1
    %92 = vsyncpa %s91, 0
    %93 = vsyncpa [#allocation8], 0
    %s94 = scalar_lea.sflag [#allocation8], 1
    %95 = vsyncpa %s94, 0
    %96 = vsyncpa [#allocation11], 0
    %s97 = scalar_lea.sflag [#allocation11], 1
    %98 = vsyncpa %s97, 0
    %99 = vsyncpa [#allocation14], 0
    %s100 = scalar_lea.sflag [#allocation14], 1
    %101 = vsyncpa %s100, 0
    %102 = vsyncpa [#allocation17], 0
    %s103 = scalar_lea.sflag [#allocation17], 1
    %104 = vsyncpa %s103, 0
    %105 = vsyncpa [#allocation20], 0
    %106 = vsyncpa [#allocation43], 0
    loop: start=0, step=1, limit=14
    $region2: #{transformer_forward.1} parent=1 // loop_pre_header
      _
    $region3: #{transformer_forward.1} parent=1 // loop_header
      %s108 = sphi 0, %s112
      %p109 = scmp.ge.s32.totalorder %s108, 14
      %s115 = sphi 0, %s127
      %s116 = sphi 0, %s123
      %s117 = sphi 0, %s115
      %s118 = sphi 0, %s116
      %s119 = sphi 0, %s117
      %s120 = sphi 0, %s118
      %s130 = sphi 0, %s132
      %s133 = sphi 0, %s130
      %s134 = sphi 0, %s133
      %s150 = sphi 0, %s134
      %s156 = sphi 0, %s158
      %s159 = sphi 0, %s156
      %s160 = sphi 0, %s159
      %s176 = sphi 0, %s160
      %s182 = sphi 0, %s184
      %s185 = sphi 0, %s182
      %s186 = sphi 0, %s185
      %s202 = sphi 0, %s186
      %s206 = sphi 0, %s206
      %s208 = sphi 0, %s206
      %s209 = sphi 0, %s208
      %s223 = sphi 0, %s209
      %s233 = sphi 0, %s235
      %s236 = sphi 0, %s233
      %s237 = sphi 0, %s236
      %s253 = sphi 0, %s237
      %s263 = sphi 0, %s265
      %s266 = sphi 0, %s263
      %s267 = sphi 0, %s266
      %s283 = sphi 0, %s267
      %s293 = sphi 0, %s295
      %s296 = sphi 0, %s293
      %s297 = sphi 0, %s296
      %s313 = sphi 0, %s297
      %s323 = sphi 0, %s325
      %s326 = sphi 0, %s323
      %s327 = sphi 0, %s326
      %s343 = sphi 0, %s327
      %s353 = sphi 0, %s355
      %s356 = sphi 0, %s353
      %s357 = sphi 0, %s356
      %s373 = sphi 0, %s357
      %s383 = sphi 0, %s385
      %s386 = sphi 0, %s383
      %s387 = sphi 0, %s386
      %s403 = sphi 0, %s387
      %s413 = sphi 0, %s415
      %s416 = sphi 0, %s413
      %s417 = sphi 0, %s416
      %s433 = sphi 0, %s417
      %s443 = sphi 0, %s445
      %s446 = sphi 0, %s443
      %s447 = sphi 0, %s446
      %s463 = sphi 0, %s447
      %s473 = sphi 0, %s475
      %s476 = sphi 0, %s473
      %s477 = sphi 0, %s476
      %s493 = sphi 0, %s477
      %s503 = sphi 0, %s505
      %s506 = sphi 0, %s503
      %s507 = sphi 0, %s506
      %s523 = sphi 0, %s507
      %s533 = sphi 0, %s535
      %s536 = sphi 0, %s533
      %s537 = sphi 0, %s536
      %s553 = sphi 0, %s537
      %s563 = sphi 0, %s565
      %s566 = sphi 0, %s563
      %s567 = sphi 0, %s566
      %s583 = sphi 0, %s567
      %s587 = sphi 0, %s587
      %s589 = sphi 0, %s587
      %s590 = sphi 0, %s589
      %s604 = sphi 0, %s590
      %s608 = sphi 0, %s608
      %s610 = sphi 0, %s608
      %s611 = sphi 0, %s610
      %s625 = sphi 0, %s611
      %s637 = sphi 0, %s639
      %s640 = sphi 0, %s637
      %s641 = sphi 0, %s640
      %s657 = sphi 0, %s641
      %s669 = sphi 0, %s671
      %s672 = sphi 0, %s669
      %s673 = sphi 0, %s672
      %s689 = sphi 0, %s673
      %s701 = sphi 0, %s703
      %s704 = sphi 0, %s701
      %s705 = sphi 0, %s704
      %s721 = sphi 0, %s705
      %s733 = sphi 0, %s735
      %s736 = sphi 0, %s733
      %s737 = sphi 0, %s736
      %s753 = sphi 0, %s737
      %s765 = sphi 0, %s767
      %s768 = sphi 0, %s765
      %s769 = sphi 0, %s768
      %s785 = sphi 0, %s769
      %s797 = sphi 0, %s799
      %s800 = sphi 0, %s797
      %s801 = sphi 0, %s800
      %s817 = sphi 0, %s801
      %s829 = sphi 0, %s831
      %s832 = sphi 0, %s829
      %s833 = sphi 0, %s832
      %s849 = sphi 0, %s833
      %s861 = sphi 0, %s863
      %s864 = sphi 0, %s861
      %s865 = sphi 0, %s864
      %s881 = sphi 0, %s865
      %s893 = sphi 0, %s895
      %s896 = sphi 0, %s893
      %s897 = sphi 0, %s896
      %s913 = sphi 0, %s897
      %s925 = sphi 0, %s927
      %s928 = sphi 0, %s925
      %s929 = sphi 0, %s928
      %s945 = sphi 0, %s929
      %s957 = sphi 0, %s959
      %s960 = sphi 0, %s957
      %s961 = sphi 0, %s960
      %s977 = sphi 0, %s961
      %s989 = sphi 0, %s991
      %s992 = sphi 0, %s989
      %s993 = sphi 0, %s992
      %s1009 = sphi 0, %s993
      %s1021 = sphi 0, %s1023
      %s1024 = sphi 0, %s1021
      %s1025 = sphi 0, %s1024
      %s1041 = sphi 0, %s1025
      %s1053 = sphi 0, %s1055
      %s1056 = sphi 0, %s1053
      %s1057 = sphi 0, %s1056
      %s1073 = sphi 0, %s1057
      %s1085 = sphi 0, %s1087
      %s1088 = sphi 0, %s1085
      %s1089 = sphi 0, %s1088
      %s1105 = sphi 0, %s1089
      %s1117 = sphi 0, %s1119
      %s1120 = sphi 0, %s1117
      %s1121 = sphi 0, %s1120
      %s1137 = sphi 0, %s1121
      %s1149 = sphi 0, %s1151
      %s1152 = sphi 0, %s1149
      %s1153 = sphi 0, %s1152
      %s1169 = sphi 0, %s1153
      %s1181 = sphi 0, %s1183
      %s1184 = sphi 0, %s1181
      %s1185 = sphi 0, %s1184
      %s1201 = sphi 0, %s1185
      %s1213 = sphi 0, %s1215
      %s1216 = sphi 0, %s1213
      %s1217 = sphi 0, %s1216
      %s1233 = sphi 0, %s1217
      %s1245 = sphi 0, %s1247
      %s1248 = sphi 0, %s1245
      %s1249 = sphi 0, %s1248
      %s1265 = sphi 0, %s1249
      %s1269 = sphi 0, %s1269
      %s1271 = sphi 0, %s1269
      %s1272 = sphi 0, %s1271
      %s1286 = sphi 0, %s1272
      %s1290 = sphi 0, %s1290
      %s1292 = sphi 0, %s1290
      %s1293 = sphi 0, %s1292
      %s1307 = sphi 0, %s1293
      %s1311 = sphi 0, %s1311
      %s1313 = sphi 0, %s1311
      %s1314 = sphi 0, %s1313
      %s1328 = sphi 0, %s1314
      %s1332 = sphi 0, %s1332
      %s1334 = sphi 0, %s1332
      %s1335 = sphi 0, %s1334
      %s1349 = sphi 0, %s1335
      %s1355 = sphi 0, %s1357
      %s1358 = sphi 0, %s1355
      %s1359 = sphi 0, %s1358
      %s1375 = sphi 0, %s1359
    $region4: #{transformer_forward.1} parent=1 // loop_header_branch
      %111 = sbr.rel (%p109) target = $region8
    $region5: #{transformer_forward.1} parent=1 // loop_body
      %s113 = ssub.s32 %s108, 1
      %s114 = ssub.s32 %s108, 2
      %s121 = sadd.s32 1, %s116
      %p122 = scmp.ge.s32.totalorder %s121, 6
      %s123 = scalar_select %p122, 0, %s121
      %s124 = sadd.s32 1, %s115
      %s125 = scalar_select %p122, %s124, %s115
      %p126 = scmp.ge.s32.totalorder %s125, 2
      %s127 = scalar_select %p126, 0, %s125
      %s128 = ssub.s32 %s115, %s127
      %p129 = scmp.eq.s32.totalorder %s128, 0
      %s131 = sadd.s32 %s130, 1
      %s132 = scalar_select %p129, %s130, %s131
      %p135 = pneg %p129
      %p136 = scmp.eq.s32.totalorder %s108, 11
      %p137 = por %p135, %p136
      %p138 = scmp.ne.s32.totalorder %s130, %s133
      %p139 = scmp.eq.s32.totalorder %s108, 0
      %p140 = por %p138, %p139
      %p141 = scmp.ne.s32.totalorder %s130, %s133
      %p142 = scmp.eq.s32.totalorder %s113, 11
      %p143 = por %p141, %p142
      %p144 = scmp.ne.s32.totalorder %s133, %s134
      %p145 = scmp.eq.s32.totalorder %s113, 0
      %p146 = por %p144, %p145
      %p147 = scmp.ne.s32.totalorder %s133, %s134
      %p148 = scmp.eq.s32.totalorder %s114, 11
      %p149 = por %p147, %p148
      %p151 = scmp.ne.s32.totalorder %s134, %s150
      %p152 = scmp.eq.s32.totalorder %s114, 0
      %p153 = por %p151, %p152
      %s154 = ssub.s32 %s115, %s127
      %p155 = scmp.eq.s32.totalorder %s154, 0
      %s157 = sadd.s32 %s156, 1
      %s158 = scalar_select %p155, %s156, %s157
      %p161 = pneg %p155
      %p162 = scmp.eq.s32.totalorder %s108, 11
      %p163 = por %p161, %p162
      %p164 = scmp.ne.s32.totalorder %s156, %s159
      %p165 = scmp.eq.s32.totalorder %s108, 0
      %p166 = por %p164, %p165
      %p167 = scmp.ne.s32.totalorder %s156, %s159
      %p168 = scmp.eq.s32.totalorder %s113, 11
      %p169 = por %p167, %p168
      %p170 = scmp.ne.s32.totalorder %s159, %s160
      %p171 = scmp.eq.s32.totalorder %s113, 0
      %p172 = por %p170, %p171
      %p173 = scmp.ne.s32.totalorder %s159, %s160
      %p174 = scmp.eq.s32.totalorder %s114, 11
      %p175 = por %p173, %p174
      %p177 = scmp.ne.s32.totalorder %s160, %s176
      %p178 = scmp.eq.s32.totalorder %s114, 0
      %p179 = por %p177, %p178
      %s180 = ssub.s32 %s115, %s127
      %p181 = scmp.eq.s32.totalorder %s180, 0
      %s183 = sadd.s32 %s182, 1
      %s184 = scalar_select %p181, %s182, %s183
      %p187 = pneg %p181
      %p188 = scmp.eq.s32.totalorder %s108, 11
      %p189 = por %p187, %p188
      %p190 = scmp.ne.s32.totalorder %s182, %s185
      %p191 = scmp.eq.s32.totalorder %s108, 0
      %p192 = por %p190, %p191
      %p193 = scmp.ne.s32.totalorder %s182, %s185
      %p194 = scmp.eq.s32.totalorder %s113, 11
      %p195 = por %p193, %p194
      %p196 = scmp.ne.s32.totalorder %s185, %s186
      %p197 = scmp.eq.s32.totalorder %s113, 0
      %p198 = por %p196, %p197
      %p199 = scmp.ne.s32.totalorder %s185, %s186
      %p200 = scmp.eq.s32.totalorder %s114, 11
      %p201 = por %p199, %p200
      %p203 = scmp.ne.s32.totalorder %s186, %s202
      %p204 = scmp.eq.s32.totalorder %s114, 0
      %p205 = por %p203, %p204
      %s207 = sadd.s32 %s206, 1
      %p210 = scmp.eq.s32.totalorder %s108, 11
      %p211 = scmp.ne.s32.totalorder %s206, %s208
      %p212 = scmp.eq.s32.totalorder %s108, 0
      %p213 = por %p211, %p212
      %p214 = scmp.ne.s32.totalorder %s206, %s208
      %p215 = scmp.eq.s32.totalorder %s113, 11
      %p216 = por %p214, %p215
      %p217 = scmp.ne.s32.totalorder %s208, %s209
      %p218 = scmp.eq.s32.totalorder %s113, 0
      %p219 = por %p217, %p218
      %p220 = scmp.ne.s32.totalorder %s208, %s209
      %p221 = scmp.eq.s32.totalorder %s114, 11
      %p222 = por %p220, %p221
      %p224 = scmp.ne.s32.totalorder %s209, %s223
      %p225 = scmp.eq.s32.totalorder %s114, 0
      %p226 = por %p224, %p225
      %p227 = scmp.lt.s32.totalorder %s116, 2
      %s228 = scalar_select %p227, %s116, 2
      %p229 = scmp.lt.s32.totalorder %s123, 2
      %s230 = scalar_select %p229, %s123, 2
      %s231 = ssub.s32 %s228, %s230
      %p232 = scmp.eq.s32.totalorder %s231, 0
      %s234 = sadd.s32 %s233, 1
      %s235 = scalar_select %p232, %s233, %s234
      %p238 = pneg %p232
      %p239 = scmp.eq.s32.totalorder %s108, 11
      %p240 = por %p238, %p239
      %p241 = scmp.ne.s32.totalorder %s233, %s236
      %p242 = scmp.eq.s32.totalorder %s108, 0
      %p243 = por %p241, %p242
      %p244 = scmp.ne.s32.totalorder %s233, %s236
      %p245 = scmp.eq.s32.totalorder %s113, 11
      %p246 = por %p244, %p245
      %p247 = scmp.ne.s32.totalorder %s236, %s237
      %p248 = scmp.eq.s32.totalorder %s113, 0
      %p249 = por %p247, %p248
      %p250 = scmp.ne.s32.totalorder %s236, %s237
      %p251 = scmp.eq.s32.totalorder %s114, 11
      %p252 = por %p250, %p251
      %p254 = scmp.ne.s32.totalorder %s237, %s253
      %p255 = scmp.eq.s32.totalorder %s114, 0
      %p256 = por %p254, %p255
      %p257 = scmp.lt.s32.totalorder %s116, 2
      %s258 = scalar_select %p257, %s116, 2
      %p259 = scmp.lt.s32.totalorder %s123, 2
      %s260 = scalar_select %p259, %s123, 2
      %s261 = ssub.s32 %s258, %s260
      %p262 = scmp.eq.s32.totalorder %s261, 0
      %s264 = sadd.s32 %s263, 1
      %s265 = scalar_select %p262, %s263, %s264
      %p268 = pneg %p262
      %p269 = scmp.eq.s32.totalorder %s108, 11
      %p270 = por %p268, %p269
      %p271 = scmp.ne.s32.totalorder %s263, %s266
      %p272 = scmp.eq.s32.totalorder %s108, 0
      %p273 = por %p271, %p272
      %p274 = scmp.ne.s32.totalorder %s263, %s266
      %p275 = scmp.eq.s32.totalorder %s113, 11
      %p276 = por %p274, %p275
      %p277 = scmp.ne.s32.totalorder %s266, %s267
      %p278 = scmp.eq.s32.totalorder %s113, 0
      %p279 = por %p277, %p278
      %p280 = scmp.ne.s32.totalorder %s266, %s267
      %p281 = scmp.eq.s32.totalorder %s114, 11
      %p282 = por %p280, %p281
      %p284 = scmp.ne.s32.totalorder %s267, %s283
      %p285 = scmp.eq.s32.totalorder %s114, 0
      %p286 = por %p284, %p285
      %p287 = scmp.lt.s32.totalorder %s116, 2
      %s288 = scalar_select %p287, %s116, 2
      %p289 = scmp.lt.s32.totalorder %s123, 2
      %s290 = scalar_select %p289, %s123, 2
      %s291 = ssub.s32 %s288, %s290
      %p292 = scmp.eq.s32.totalorder %s291, 0
      %s294 = sadd.s32 %s293, 1
      %s295 = scalar_select %p292, %s293, %s294
      %p298 = pneg %p292
      %p299 = scmp.eq.s32.totalorder %s108, 11
      %p300 = por %p298, %p299
      %p301 = scmp.ne.s32.totalorder %s293, %s296
      %p302 = scmp.eq.s32.totalorder %s108, 0
      %p303 = por %p301, %p302
      %p304 = scmp.ne.s32.totalorder %s293, %s296
      %p305 = scmp.eq.s32.totalorder %s113, 11
      %p306 = por %p304, %p305
      %p307 = scmp.ne.s32.totalorder %s296, %s297
      %p308 = scmp.eq.s32.totalorder %s113, 0
      %p309 = por %p307, %p308
      %p310 = scmp.ne.s32.totalorder %s296, %s297
      %p311 = scmp.eq.s32.totalorder %s114, 11
      %p312 = por %p310, %p311
      %p314 = scmp.ne.s32.totalorder %s297, %s313
      %p315 = scmp.eq.s32.totalorder %s114, 0
      %p316 = por %p314, %p315
      %p317 = scmp.lt.s32.totalorder %s116, 2
      %s318 = scalar_select %p317, %s116, 2
      %p319 = scmp.lt.s32.totalorder %s123, 2
      %s320 = scalar_select %p319, %s123, 2
      %s321 = ssub.s32 %s318, %s320
      %p322 = scmp.eq.s32.totalorder %s321, 0
      %s324 = sadd.s32 %s323, 1
      %s325 = scalar_select %p322, %s323, %s324
      %p328 = pneg %p322
      %p329 = scmp.eq.s32.totalorder %s108, 11
      %p330 = por %p328, %p329
      %p331 = scmp.ne.s32.totalorder %s323, %s326
      %p332 = scmp.eq.s32.totalorder %s108, 0
      %p333 = por %p331, %p332
      %p334 = scmp.ne.s32.totalorder %s323, %s326
      %p335 = scmp.eq.s32.totalorder %s113, 11
      %p336 = por %p334, %p335
      %p337 = scmp.ne.s32.totalorder %s326, %s327
      %p338 = scmp.eq.s32.totalorder %s113, 0
      %p339 = por %p337, %p338
      %p340 = scmp.ne.s32.totalorder %s326, %s327
      %p341 = scmp.eq.s32.totalorder %s114, 11
      %p342 = por %p340, %p341
      %p344 = scmp.ne.s32.totalorder %s327, %s343
      %p345 = scmp.eq.s32.totalorder %s114, 0
      %p346 = por %p344, %p345
      %p347 = scmp.lt.s32.totalorder %s116, 2
      %s348 = scalar_select %p347, %s116, 2
      %p349 = scmp.lt.s32.totalorder %s123, 2
      %s350 = scalar_select %p349, %s123, 2
      %s351 = ssub.s32 %s348, %s350
      %p352 = scmp.eq.s32.totalorder %s351, 0
      %s354 = sadd.s32 %s353, 1
      %s355 = scalar_select %p352, %s353, %s354
      %p358 = pneg %p352
      %p359 = scmp.eq.s32.totalorder %s108, 11
      %p360 = por %p358, %p359
      %p361 = scmp.ne.s32.totalorder %s353, %s356
      %p362 = scmp.eq.s32.totalorder %s108, 0
      %p363 = por %p361, %p362
      %p364 = scmp.ne.s32.totalorder %s353, %s356
      %p365 = scmp.eq.s32.totalorder %s113, 11
      %p366 = por %p364, %p365
      %p367 = scmp.ne.s32.totalorder %s356, %s357
      %p368 = scmp.eq.s32.totalorder %s113, 0
      %p369 = por %p367, %p368
      %p370 = scmp.ne.s32.totalorder %s356, %s357
      %p371 = scmp.eq.s32.totalorder %s114, 11
      %p372 = por %p370, %p371
      %p374 = scmp.ne.s32.totalorder %s357, %s373
      %p375 = scmp.eq.s32.totalorder %s114, 0
      %p376 = por %p374, %p375
      %p377 = scmp.lt.s32.totalorder %s116, 2
      %s378 = scalar_select %p377, %s116, 2
      %p379 = scmp.lt.s32.totalorder %s123, 2
      %s380 = scalar_select %p379, %s123, 2
      %s381 = ssub.s32 %s378, %s380
      %p382 = scmp.eq.s32.totalorder %s381, 0
      %s384 = sadd.s32 %s383, 1
      %s385 = scalar_select %p382, %s383, %s384
      %p388 = pneg %p382
      %p389 = scmp.eq.s32.totalorder %s108, 11
      %p390 = por %p388, %p389
      %p391 = scmp.ne.s32.totalorder %s383, %s386
      %p392 = scmp.eq.s32.totalorder %s108, 0
      %p393 = por %p391, %p392
      %p394 = scmp.ne.s32.totalorder %s383, %s386
      %p395 = scmp.eq.s32.totalorder %s113, 11
      %p396 = por %p394, %p395
      %p397 = scmp.ne.s32.totalorder %s386, %s387
      %p398 = scmp.eq.s32.totalorder %s113, 0
      %p399 = por %p397, %p398
      %p400 = scmp.ne.s32.totalorder %s386, %s387
      %p401 = scmp.eq.s32.totalorder %s114, 11
      %p402 = por %p400, %p401
      %p404 = scmp.ne.s32.totalorder %s387, %s403
      %p405 = scmp.eq.s32.totalorder %s114, 0
      %p406 = por %p404, %p405
      %p407 = scmp.lt.s32.totalorder %s116, 2
      %s408 = scalar_select %p407, %s116, 2
      %p409 = scmp.lt.s32.totalorder %s123, 2
      %s410 = scalar_select %p409, %s123, 2
      %s411 = ssub.s32 %s408, %s410
      %p412 = scmp.eq.s32.totalorder %s411, 0
      %s414 = sadd.s32 %s413, 1
      %s415 = scalar_select %p412, %s413, %s414
      %p418 = pneg %p412
      %p419 = scmp.eq.s32.totalorder %s108, 11
      %p420 = por %p418, %p419
      %p421 = scmp.ne.s32.totalorder %s413, %s416
      %p422 = scmp.eq.s32.totalorder %s108, 0
      %p423 = por %p421, %p422
      %p424 = scmp.ne.s32.totalorder %s413, %s416
      %p425 = scmp.eq.s32.totalorder %s113, 11
      %p426 = por %p424, %p425
      %p427 = scmp.ne.s32.totalorder %s416, %s417
      %p428 = scmp.eq.s32.totalorder %s113, 0
      %p429 = por %p427, %p428
      %p430 = scmp.ne.s32.totalorder %s416, %s417
      %p431 = scmp.eq.s32.totalorder %s114, 11
      %p432 = por %p430, %p431
      %p434 = scmp.ne.s32.totalorder %s417, %s433
      %p435 = scmp.eq.s32.totalorder %s114, 0
      %p436 = por %p434, %p435
      %p437 = scmp.lt.s32.totalorder %s116, 2
      %s438 = scalar_select %p437, %s116, 2
      %p439 = scmp.lt.s32.totalorder %s123, 2
      %s440 = scalar_select %p439, %s123, 2
      %s441 = ssub.s32 %s438, %s440
      %p442 = scmp.eq.s32.totalorder %s441, 0
      %s444 = sadd.s32 %s443, 1
      %s445 = scalar_select %p442, %s443, %s444
      %p448 = pneg %p442
      %p449 = scmp.eq.s32.totalorder %s108, 11
      %p450 = por %p448, %p449
      %p451 = scmp.ne.s32.totalorder %s443, %s446
      %p452 = scmp.eq.s32.totalorder %s108, 0
      %p453 = por %p451, %p452
      %p454 = scmp.ne.s32.totalorder %s443, %s446
      %p455 = scmp.eq.s32.totalorder %s113, 11
      %p456 = por %p454, %p455
      %p457 = scmp.ne.s32.totalorder %s446, %s447
      %p458 = scmp.eq.s32.totalorder %s113, 0
      %p459 = por %p457, %p458
      %p460 = scmp.ne.s32.totalorder %s446, %s447
      %p461 = scmp.eq.s32.totalorder %s114, 11
      %p462 = por %p460, %p461
      %p464 = scmp.ne.s32.totalorder %s447, %s463
      %p465 = scmp.eq.s32.totalorder %s114, 0
      %p466 = por %p464, %p465
      %p467 = scmp.lt.s32.totalorder %s116, 2
      %s468 = scalar_select %p467, %s116, 2
      %p469 = scmp.lt.s32.totalorder %s123, 2
      %s470 = scalar_select %p469, %s123, 2
      %s471 = ssub.s32 %s468, %s470
      %p472 = scmp.eq.s32.totalorder %s471, 0
      %s474 = sadd.s32 %s473, 1
      %s475 = scalar_select %p472, %s473, %s474
      %p478 = pneg %p472
      %p479 = scmp.eq.s32.totalorder %s108, 11
      %p480 = por %p478, %p479
      %p481 = scmp.ne.s32.totalorder %s473, %s476
      %p482 = scmp.eq.s32.totalorder %s108, 0
      %p483 = por %p481, %p482
      %p484 = scmp.ne.s32.totalorder %s473, %s476
      %p485 = scmp.eq.s32.totalorder %s113, 11
      %p486 = por %p484, %p485
      %p487 = scmp.ne.s32.totalorder %s476, %s477
      %p488 = scmp.eq.s32.totalorder %s113, 0
      %p489 = por %p487, %p488
      %p490 = scmp.ne.s32.totalorder %s476, %s477
      %p491 = scmp.eq.s32.totalorder %s114, 11
      %p492 = por %p490, %p491
      %p494 = scmp.ne.s32.totalorder %s477, %s493
      %p495 = scmp.eq.s32.totalorder %s114, 0
      %p496 = por %p494, %p495
      %p497 = scmp.lt.s32.totalorder %s116, 2
      %s498 = scalar_select %p497, %s116, 2
      %p499 = scmp.lt.s32.totalorder %s123, 2
      %s500 = scalar_select %p499, %s123, 2
      %s501 = ssub.s32 %s498, %s500
      %p502 = scmp.eq.s32.totalorder %s501, 0
      %s504 = sadd.s32 %s503, 1
      %s505 = scalar_select %p502, %s503, %s504
      %p508 = pneg %p502
      %p509 = scmp.eq.s32.totalorder %s108, 11
      %p510 = por %p508, %p509
      %p511 = scmp.ne.s32.totalorder %s503, %s506
      %p512 = scmp.eq.s32.totalorder %s108, 0
      %p513 = por %p511, %p512
      %p514 = scmp.ne.s32.totalorder %s503, %s506
      %p515 = scmp.eq.s32.totalorder %s113, 11
      %p516 = por %p514, %p515
      %p517 = scmp.ne.s32.totalorder %s506, %s507
      %p518 = scmp.eq.s32.totalorder %s113, 0
      %p519 = por %p517, %p518
      %p520 = scmp.ne.s32.totalorder %s506, %s507
      %p521 = scmp.eq.s32.totalorder %s114, 11
      %p522 = por %p520, %p521
      %p524 = scmp.ne.s32.totalorder %s507, %s523
      %p525 = scmp.eq.s32.totalorder %s114, 0
      %p526 = por %p524, %p525
      %p527 = scmp.lt.s32.totalorder %s116, 2
      %s528 = scalar_select %p527, %s116, 2
      %p529 = scmp.lt.s32.totalorder %s123, 2
      %s530 = scalar_select %p529, %s123, 2
      %s531 = ssub.s32 %s528, %s530
      %p532 = scmp.eq.s32.totalorder %s531, 0
      %s534 = sadd.s32 %s533, 1
      %s535 = scalar_select %p532, %s533, %s534
      %p538 = pneg %p532
      %p539 = scmp.eq.s32.totalorder %s108, 11
      %p540 = por %p538, %p539
      %p541 = scmp.ne.s32.totalorder %s533, %s536
      %p542 = scmp.eq.s32.totalorder %s108, 0
      %p543 = por %p541, %p542
      %p544 = scmp.ne.s32.totalorder %s533, %s536
      %p545 = scmp.eq.s32.totalorder %s113, 11
      %p546 = por %p544, %p545
      %p547 = scmp.ne.s32.totalorder %s536, %s537
      %p548 = scmp.eq.s32.totalorder %s113, 0
      %p549 = por %p547, %p548
      %p550 = scmp.ne.s32.totalorder %s536, %s537
      %p551 = scmp.eq.s32.totalorder %s114, 11
      %p552 = por %p550, %p551
      %p554 = scmp.ne.s32.totalorder %s537, %s553
      %p555 = scmp.eq.s32.totalorder %s114, 0
      %p556 = por %p554, %p555
      %p557 = scmp.lt.s32.totalorder %s116, 2
      %s558 = scalar_select %p557, %s116, 2
      %p559 = scmp.lt.s32.totalorder %s123, 2
      %s560 = scalar_select %p559, %s123, 2
      %s561 = ssub.s32 %s558, %s560
      %p562 = scmp.eq.s32.totalorder %s561, 0
      %s564 = sadd.s32 %s563, 1
      %s565 = scalar_select %p562, %s563, %s564
      %p568 = pneg %p562
      %p569 = scmp.eq.s32.totalorder %s108, 11
      %p570 = por %p568, %p569
      %p571 = scmp.ne.s32.totalorder %s563, %s566
      %p572 = scmp.eq.s32.totalorder %s108, 0
      %p573 = por %p571, %p572
      %p574 = scmp.ne.s32.totalorder %s563, %s566
      %p575 = scmp.eq.s32.totalorder %s113, 11
      %p576 = por %p574, %p575
      %p577 = scmp.ne.s32.totalorder %s566, %s567
      %p578 = scmp.eq.s32.totalorder %s113, 0
      %p579 = por %p577, %p578
      %p580 = scmp.ne.s32.totalorder %s566, %s567
      %p581 = scmp.eq.s32.totalorder %s114, 11
      %p582 = por %p580, %p581
      %p584 = scmp.ne.s32.totalorder %s567, %s583
      %p585 = scmp.eq.s32.totalorder %s114, 0
      %p586 = por %p584, %p585
      %s588 = sadd.s32 %s587, 1
      %p591 = scmp.eq.s32.totalorder %s108, 11
      %p592 = scmp.ne.s32.totalorder %s587, %s589
      %p593 = scmp.eq.s32.totalorder %s108, 0
      %p594 = por %p592, %p593
      %p595 = scmp.ne.s32.totalorder %s587, %s589
      %p596 = scmp.eq.s32.totalorder %s113, 11
      %p597 = por %p595, %p596
      %p598 = scmp.ne.s32.totalorder %s589, %s590
      %p599 = scmp.eq.s32.totalorder %s113, 0
      %p600 = por %p598, %p599
      %p601 = scmp.ne.s32.totalorder %s589, %s590
      %p602 = scmp.eq.s32.totalorder %s114, 11
      %p603 = por %p601, %p602
      %p605 = scmp.ne.s32.totalorder %s590, %s604
      %p606 = scmp.eq.s32.totalorder %s114, 0
      %p607 = por %p605, %p606
      %s609 = sadd.s32 %s608, 1
      %p612 = scmp.eq.s32.totalorder %s108, 11
      %p613 = scmp.ne.s32.totalorder %s608, %s610
      %p614 = scmp.eq.s32.totalorder %s108, 0
      %p615 = por %p613, %p614
      %p616 = scmp.ne.s32.totalorder %s608, %s610
      %p617 = scmp.eq.s32.totalorder %s113, 11
      %p618 = por %p616, %p617
      %p619 = scmp.ne.s32.totalorder %s610, %s611
      %p620 = scmp.eq.s32.totalorder %s113, 0
      %p621 = por %p619, %p620
      %p622 = scmp.ne.s32.totalorder %s610, %s611
      %p623 = scmp.eq.s32.totalorder %s114, 11
      %p624 = por %p622, %p623
      %p626 = scmp.ne.s32.totalorder %s611, %s625
      %p627 = scmp.eq.s32.totalorder %s114, 0
      %p628 = por %p626, %p627
      %s629 = ssub.s32 %s116, 3
      %p630 = scmp.gt.s32.totalorder %s629, 0
      %s631 = scalar_select %p630, %s629, 0
      %s632 = ssub.s32 %s123, 3
      %p633 = scmp.gt.s32.totalorder %s632, 0
      %s634 = scalar_select %p633, %s632, 0
      %s635 = ssub.s32 %s631, %s634
      %p636 = scmp.eq.s32.totalorder %s635, 0
      %s638 = sadd.s32 %s637, 1
      %s639 = scalar_select %p636, %s637, %s638
      %p642 = pneg %p636
      %p643 = scmp.eq.s32.totalorder %s108, 11
      %p644 = por %p642, %p643
      %p645 = scmp.ne.s32.totalorder %s637, %s640
      %p646 = scmp.eq.s32.totalorder %s108, 0
      %p647 = por %p645, %p646
      %p648 = scmp.ne.s32.totalorder %s637, %s640
      %p649 = scmp.eq.s32.totalorder %s113, 11
      %p650 = por %p648, %p649
      %p651 = scmp.ne.s32.totalorder %s640, %s641
      %p652 = scmp.eq.s32.totalorder %s113, 0
      %p653 = por %p651, %p652
      %p654 = scmp.ne.s32.totalorder %s640, %s641
      %p655 = scmp.eq.s32.totalorder %s114, 11
      %p656 = por %p654, %p655
      %p658 = scmp.ne.s32.totalorder %s641, %s657
      %p659 = scmp.eq.s32.totalorder %s114, 0
      %p660 = por %p658, %p659
      %s661 = ssub.s32 %s116, 3
      %p662 = scmp.gt.s32.totalorder %s661, 0
      %s663 = scalar_select %p662, %s661, 0
      %s664 = ssub.s32 %s123, 3
      %p665 = scmp.gt.s32.totalorder %s664, 0
      %s666 = scalar_select %p665, %s664, 0
      %s667 = ssub.s32 %s663, %s666
      %p668 = scmp.eq.s32.totalorder %s667, 0
      %s670 = sadd.s32 %s669, 1
      %s671 = scalar_select %p668, %s669, %s670
      %p674 = pneg %p668
      %p675 = scmp.eq.s32.totalorder %s108, 11
      %p676 = por %p674, %p675
      %p677 = scmp.ne.s32.totalorder %s669, %s672
      %p678 = scmp.eq.s32.totalorder %s108, 0
      %p679 = por %p677, %p678
      %p680 = scmp.ne.s32.totalorder %s669, %s672
      %p681 = scmp.eq.s32.totalorder %s113, 11
      %p682 = por %p680, %p681
      %p683 = scmp.ne.s32.totalorder %s672, %s673
      %p684 = scmp.eq.s32.totalorder %s113, 0
      %p685 = por %p683, %p684
      %p686 = scmp.ne.s32.totalorder %s672, %s673
      %p687 = scmp.eq.s32.totalorder %s114, 11
      %p688 = por %p686, %p687
      %p690 = scmp.ne.s32.totalorder %s673, %s689
      %p691 = scmp.eq.s32.totalorder %s114, 0
      %p692 = por %p690, %p691
      %s693 = ssub.s32 %s116, 3
      %p694 = scmp.gt.s32.totalorder %s693, 0
      %s695 = scalar_select %p694, %s693, 0
      %s696 = ssub.s32 %s123, 3
      %p697 = scmp.gt.s32.totalorder %s696, 0
      %s698 = scalar_select %p697, %s696, 0
      %s699 = ssub.s32 %s695, %s698
      %p700 = scmp.eq.s32.totalorder %s699, 0
      %s702 = sadd.s32 %s701, 1
      %s703 = scalar_select %p700, %s701, %s702
      %p706 = pneg %p700
      %p707 = scmp.eq.s32.totalorder %s108, 11
      %p708 = por %p706, %p707
      %p709 = scmp.ne.s32.totalorder %s701, %s704
      %p710 = scmp.eq.s32.totalorder %s108, 0
      %p711 = por %p709, %p710
      %p712 = scmp.ne.s32.totalorder %s701, %s704
      %p713 = scmp.eq.s32.totalorder %s113, 11
      %p714 = por %p712, %p713
      %p715 = scmp.ne.s32.totalorder %s704, %s705
      %p716 = scmp.eq.s32.totalorder %s113, 0
      %p717 = por %p715, %p716
      %p718 = scmp.ne.s32.totalorder %s704, %s705
      %p719 = scmp.eq.s32.totalorder %s114, 11
      %p720 = por %p718, %p719
      %p722 = scmp.ne.s32.totalorder %s705, %s721
      %p723 = scmp.eq.s32.totalorder %s114, 0
      %p724 = por %p722, %p723
      %s725 = ssub.s32 %s116, 3
      %p726 = scmp.gt.s32.totalorder %s725, 0
      %s727 = scalar_select %p726, %s725, 0
      %s728 = ssub.s32 %s123, 3
      %p729 = scmp.gt.s32.totalorder %s728, 0
      %s730 = scalar_select %p729, %s728, 0
      %s731 = ssub.s32 %s727, %s730
      %p732 = scmp.eq.s32.totalorder %s731, 0
      %s734 = sadd.s32 %s733, 1
      %s735 = scalar_select %p732, %s733, %s734
      %p738 = pneg %p732
      %p739 = scmp.eq.s32.totalorder %s108, 11
      %p740 = por %p738, %p739
      %p741 = scmp.ne.s32.totalorder %s733, %s736
      %p742 = scmp.eq.s32.totalorder %s108, 0
      %p743 = por %p741, %p742
      %p744 = scmp.ne.s32.totalorder %s733, %s736
      %p745 = scmp.eq.s32.totalorder %s113, 11
      %p746 = por %p744, %p745
      %p747 = scmp.ne.s32.totalorder %s736, %s737
      %p748 = scmp.eq.s32.totalorder %s113, 0
      %p749 = por %p747, %p748
      %p750 = scmp.ne.s32.totalorder %s736, %s737
      %p751 = scmp.eq.s32.totalorder %s114, 11
      %p752 = por %p750, %p751
      %p754 = scmp.ne.s32.totalorder %s737, %s753
      %p755 = scmp.eq.s32.totalorder %s114, 0
      %p756 = por %p754, %p755
      %s757 = ssub.s32 %s116, 3
      %p758 = scmp.gt.s32.totalorder %s757, 0
      %s759 = scalar_select %p758, %s757, 0
      %s760 = ssub.s32 %s123, 3
      %p761 = scmp.gt.s32.totalorder %s760, 0
      %s762 = scalar_select %p761, %s760, 0
      %s763 = ssub.s32 %s759, %s762
      %p764 = scmp.eq.s32.totalorder %s763, 0
      %s766 = sadd.s32 %s765, 1
      %s767 = scalar_select %p764, %s765, %s766
      %p770 = pneg %p764
      %p771 = scmp.eq.s32.totalorder %s108, 11
      %p772 = por %p770, %p771
      %p773 = scmp.ne.s32.totalorder %s765, %s768
      %p774 = scmp.eq.s32.totalorder %s108, 0
      %p775 = por %p773, %p774
      %p776 = scmp.ne.s32.totalorder %s765, %s768
      %p777 = scmp.eq.s32.totalorder %s113, 11
      %p778 = por %p776, %p777
      %p779 = scmp.ne.s32.totalorder %s768, %s769
      %p780 = scmp.eq.s32.totalorder %s113, 0
      %p781 = por %p779, %p780
      %p782 = scmp.ne.s32.totalorder %s768, %s769
      %p783 = scmp.eq.s32.totalorder %s114, 11
      %p784 = por %p782, %p783
      %p786 = scmp.ne.s32.totalorder %s769, %s785
      %p787 = scmp.eq.s32.totalorder %s114, 0
      %p788 = por %p786, %p787
      %s789 = ssub.s32 %s116, 3
      %p790 = scmp.gt.s32.totalorder %s789, 0
      %s791 = scalar_select %p790, %s789, 0
      %s792 = ssub.s32 %s123, 3
      %p793 = scmp.gt.s32.totalorder %s792, 0
      %s794 = scalar_select %p793, %s792, 0
      %s795 = ssub.s32 %s791, %s794
      %p796 = scmp.eq.s32.totalorder %s795, 0
      %s798 = sadd.s32 %s797, 1
      %s799 = scalar_select %p796, %s797, %s798
      %p802 = pneg %p796
      %p803 = scmp.eq.s32.totalorder %s108, 11
      %p804 = por %p802, %p803
      %p805 = scmp.ne.s32.totalorder %s797, %s800
      %p806 = scmp.eq.s32.totalorder %s108, 0
      %p807 = por %p805, %p806
      %p808 = scmp.ne.s32.totalorder %s797, %s800
      %p809 = scmp.eq.s32.totalorder %s113, 11
      %p810 = por %p808, %p809
      %p811 = scmp.ne.s32.totalorder %s800, %s801
      %p812 = scmp.eq.s32.totalorder %s113, 0
      %p813 = por %p811, %p812
      %p814 = scmp.ne.s32.totalorder %s800, %s801
      %p815 = scmp.eq.s32.totalorder %s114, 11
      %p816 = por %p814, %p815
      %p818 = scmp.ne.s32.totalorder %s801, %s817
      %p819 = scmp.eq.s32.totalorder %s114, 0
      %p820 = por %p818, %p819
      %s821 = ssub.s32 %s116, 3
      %p822 = scmp.gt.s32.totalorder %s821, 0
      %s823 = scalar_select %p822, %s821, 0
      %s824 = ssub.s32 %s123, 3
      %p825 = scmp.gt.s32.totalorder %s824, 0
      %s826 = scalar_select %p825, %s824, 0
      %s827 = ssub.s32 %s823, %s826
      %p828 = scmp.eq.s32.totalorder %s827, 0
      %s830 = sadd.s32 %s829, 1
      %s831 = scalar_select %p828, %s829, %s830
      %p834 = pneg %p828
      %p835 = scmp.eq.s32.totalorder %s108, 11
      %p836 = por %p834, %p835
      %p837 = scmp.ne.s32.totalorder %s829, %s832
      %p838 = scmp.eq.s32.totalorder %s108, 0
      %p839 = por %p837, %p838
      %p840 = scmp.ne.s32.totalorder %s829, %s832
      %p841 = scmp.eq.s32.totalorder %s113, 11
      %p842 = por %p840, %p841
      %p843 = scmp.ne.s32.totalorder %s832, %s833
      %p844 = scmp.eq.s32.totalorder %s113, 0
      %p845 = por %p843, %p844
      %p846 = scmp.ne.s32.totalorder %s832, %s833
      %p847 = scmp.eq.s32.totalorder %s114, 11
      %p848 = por %p846, %p847
      %p850 = scmp.ne.s32.totalorder %s833, %s849
      %p851 = scmp.eq.s32.totalorder %s114, 0
      %p852 = por %p850, %p851
      %s853 = ssub.s32 %s116, 3
      %p854 = scmp.gt.s32.totalorder %s853, 0
      %s855 = scalar_select %p854, %s853, 0
      %s856 = ssub.s32 %s123, 3
      %p857 = scmp.gt.s32.totalorder %s856, 0
      %s858 = scalar_select %p857, %s856, 0
      %s859 = ssub.s32 %s855, %s858
      %p860 = scmp.eq.s32.totalorder %s859, 0
      %s862 = sadd.s32 %s861, 1
      %s863 = scalar_select %p860, %s861, %s862
      %p866 = pneg %p860
      %p867 = scmp.eq.s32.totalorder %s108, 11
      %p868 = por %p866, %p867
      %p869 = scmp.ne.s32.totalorder %s861, %s864
      %p870 = scmp.eq.s32.totalorder %s108, 0
      %p871 = por %p869, %p870
      %p872 = scmp.ne.s32.totalorder %s861, %s864
      %p873 = scmp.eq.s32.totalorder %s113, 11
      %p874 = por %p872, %p873
      %p875 = scmp.ne.s32.totalorder %s864, %s865
      %p876 = scmp.eq.s32.totalorder %s113, 0
      %p877 = por %p875, %p876
      %p878 = scmp.ne.s32.totalorder %s864, %s865
      %p879 = scmp.eq.s32.totalorder %s114, 11
      %p880 = por %p878, %p879
      %p882 = scmp.ne.s32.totalorder %s865, %s881
      %p883 = scmp.eq.s32.totalorder %s114, 0
      %p884 = por %p882, %p883
      %s885 = ssub.s32 %s116, 3
      %p886 = scmp.gt.s32.totalorder %s885, 0
      %s887 = scalar_select %p886, %s885, 0
      %s888 = ssub.s32 %s123, 3
      %p889 = scmp.gt.s32.totalorder %s888, 0
      %s890 = scalar_select %p889, %s888, 0
      %s891 = ssub.s32 %s887, %s890
      %p892 = scmp.eq.s32.totalorder %s891, 0
      %s894 = sadd.s32 %s893, 1
      %s895 = scalar_select %p892, %s893, %s894
      %p898 = pneg %p892
      %p899 = scmp.eq.s32.totalorder %s108, 11
      %p900 = por %p898, %p899
      %p901 = scmp.ne.s32.totalorder %s893, %s896
      %p902 = scmp.eq.s32.totalorder %s108, 0
      %p903 = por %p901, %p902
      %p904 = scmp.ne.s32.totalorder %s893, %s896
      %p905 = scmp.eq.s32.totalorder %s113, 11
      %p906 = por %p904, %p905
      %p907 = scmp.ne.s32.totalorder %s896, %s897
      %p908 = scmp.eq.s32.totalorder %s113, 0
      %p909 = por %p907, %p908
      %p910 = scmp.ne.s32.totalorder %s896, %s897
      %p911 = scmp.eq.s32.totalorder %s114, 11
      %p912 = por %p910, %p911
      %p914 = scmp.ne.s32.totalorder %s897, %s913
      %p915 = scmp.eq.s32.totalorder %s114, 0
      %p916 = por %p914, %p915
      %s917 = ssub.s32 %s116, 3
      %p918 = scmp.gt.s32.totalorder %s917, 0
      %s919 = scalar_select %p918, %s917, 0
      %s920 = ssub.s32 %s123, 3
      %p921 = scmp.gt.s32.totalorder %s920, 0
      %s922 = scalar_select %p921, %s920, 0
      %s923 = ssub.s32 %s919, %s922
      %p924 = scmp.eq.s32.totalorder %s923, 0
      %s926 = sadd.s32 %s925, 1
      %s927 = scalar_select %p924, %s925, %s926
      %p930 = pneg %p924
      %p931 = scmp.eq.s32.totalorder %s108, 11
      %p932 = por %p930, %p931
      %p933 = scmp.ne.s32.totalorder %s925, %s928
      %p934 = scmp.eq.s32.totalorder %s108, 0
      %p935 = por %p933, %p934
      %p936 = scmp.ne.s32.totalorder %s925, %s928
      %p937 = scmp.eq.s32.totalorder %s113, 11
      %p938 = por %p936, %p937
      %p939 = scmp.ne.s32.totalorder %s928, %s929
      %p940 = scmp.eq.s32.totalorder %s113, 0
      %p941 = por %p939, %p940
      %p942 = scmp.ne.s32.totalorder %s928, %s929
      %p943 = scmp.eq.s32.totalorder %s114, 11
      %p944 = por %p942, %p943
      %p946 = scmp.ne.s32.totalorder %s929, %s945
      %p947 = scmp.eq.s32.totalorder %s114, 0
      %p948 = por %p946, %p947
      %s949 = ssub.s32 %s116, 3
      %p950 = scmp.gt.s32.totalorder %s949, 0
      %s951 = scalar_select %p950, %s949, 0
      %s952 = ssub.s32 %s123, 3
      %p953 = scmp.gt.s32.totalorder %s952, 0
      %s954 = scalar_select %p953, %s952, 0
      %s955 = ssub.s32 %s951, %s954
      %p956 = scmp.eq.s32.totalorder %s955, 0
      %s958 = sadd.s32 %s957, 1
      %s959 = scalar_select %p956, %s957, %s958
      %p962 = pneg %p956
      %p963 = scmp.eq.s32.totalorder %s108, 11
      %p964 = por %p962, %p963
      %p965 = scmp.ne.s32.totalorder %s957, %s960
      %p966 = scmp.eq.s32.totalorder %s108, 0
      %p967 = por %p965, %p966
      %p968 = scmp.ne.s32.totalorder %s957, %s960
      %p969 = scmp.eq.s32.totalorder %s113, 11
      %p970 = por %p968, %p969
      %p971 = scmp.ne.s32.totalorder %s960, %s961
      %p972 = scmp.eq.s32.totalorder %s113, 0
      %p973 = por %p971, %p972
      %p974 = scmp.ne.s32.totalorder %s960, %s961
      %p975 = scmp.eq.s32.totalorder %s114, 11
      %p976 = por %p974, %p975
      %p978 = scmp.ne.s32.totalorder %s961, %s977
      %p979 = scmp.eq.s32.totalorder %s114, 0
      %p980 = por %p978, %p979
      %s981 = ssub.s32 %s116, 3
      %p982 = scmp.gt.s32.totalorder %s981, 0
      %s983 = scalar_select %p982, %s981, 0
      %s984 = ssub.s32 %s123, 3
      %p985 = scmp.gt.s32.totalorder %s984, 0
      %s986 = scalar_select %p985, %s984, 0
      %s987 = ssub.s32 %s983, %s986
      %p988 = scmp.eq.s32.totalorder %s987, 0
      %s990 = sadd.s32 %s989, 1
      %s991 = scalar_select %p988, %s989, %s990
      %p994 = pneg %p988
      %p995 = scmp.eq.s32.totalorder %s108, 11
      %p996 = por %p994, %p995
      %p997 = scmp.ne.s32.totalorder %s989, %s992
      %p998 = scmp.eq.s32.totalorder %s108, 0
      %p999 = por %p997, %p998
      %p1000 = scmp.ne.s32.totalorder %s989, %s992
      %p1001 = scmp.eq.s32.totalorder %s113, 11
      %p1002 = por %p1000, %p1001
      %p1003 = scmp.ne.s32.totalorder %s992, %s993
      %p1004 = scmp.eq.s32.totalorder %s113, 0
      %p1005 = por %p1003, %p1004
      %p1006 = scmp.ne.s32.totalorder %s992, %s993
      %p1007 = scmp.eq.s32.totalorder %s114, 11
      %p1008 = por %p1006, %p1007
      %p1010 = scmp.ne.s32.totalorder %s993, %s1009
      %p1011 = scmp.eq.s32.totalorder %s114, 0
      %p1012 = por %p1010, %p1011
      %s1013 = ssub.s32 %s116, 3
      %p1014 = scmp.gt.s32.totalorder %s1013, 0
      %s1015 = scalar_select %p1014, %s1013, 0
      %s1016 = ssub.s32 %s123, 3
      %p1017 = scmp.gt.s32.totalorder %s1016, 0
      %s1018 = scalar_select %p1017, %s1016, 0
      %s1019 = ssub.s32 %s1015, %s1018
      %p1020 = scmp.eq.s32.totalorder %s1019, 0
      %s1022 = sadd.s32 %s1021, 1
      %s1023 = scalar_select %p1020, %s1021, %s1022
      %p1026 = pneg %p1020
      %p1027 = scmp.eq.s32.totalorder %s108, 11
      %p1028 = por %p1026, %p1027
      %p1029 = scmp.ne.s32.totalorder %s1021, %s1024
      %p1030 = scmp.eq.s32.totalorder %s108, 0
      %p1031 = por %p1029, %p1030
      %p1032 = scmp.ne.s32.totalorder %s1021, %s1024
      %p1033 = scmp.eq.s32.totalorder %s113, 11
      %p1034 = por %p1032, %p1033
      %p1035 = scmp.ne.s32.totalorder %s1024, %s1025
      %p1036 = scmp.eq.s32.totalorder %s113, 0
      %p1037 = por %p1035, %p1036
      %p1038 = scmp.ne.s32.totalorder %s1024, %s1025
      %p1039 = scmp.eq.s32.totalorder %s114, 11
      %p1040 = por %p1038, %p1039
      %p1042 = scmp.ne.s32.totalorder %s1025, %s1041
      %p1043 = scmp.eq.s32.totalorder %s114, 0
      %p1044 = por %p1042, %p1043
      %s1045 = ssub.s32 %s116, 3
      %p1046 = scmp.gt.s32.totalorder %s1045, 0
      %s1047 = scalar_select %p1046, %s1045, 0
      %s1048 = ssub.s32 %s123, 3
      %p1049 = scmp.gt.s32.totalorder %s1048, 0
      %s1050 = scalar_select %p1049, %s1048, 0
      %s1051 = ssub.s32 %s1047, %s1050
      %p1052 = scmp.eq.s32.totalorder %s1051, 0
      %s1054 = sadd.s32 %s1053, 1
      %s1055 = scalar_select %p1052, %s1053, %s1054
      %p1058 = pneg %p1052
      %p1059 = scmp.eq.s32.totalorder %s108, 11
      %p1060 = por %p1058, %p1059
      %p1061 = scmp.ne.s32.totalorder %s1053, %s1056
      %p1062 = scmp.eq.s32.totalorder %s108, 0
      %p1063 = por %p1061, %p1062
      %p1064 = scmp.ne.s32.totalorder %s1053, %s1056
      %p1065 = scmp.eq.s32.totalorder %s113, 11
      %p1066 = por %p1064, %p1065
      %p1067 = scmp.ne.s32.totalorder %s1056, %s1057
      %p1068 = scmp.eq.s32.totalorder %s113, 0
      %p1069 = por %p1067, %p1068
      %p1070 = scmp.ne.s32.totalorder %s1056, %s1057
      %p1071 = scmp.eq.s32.totalorder %s114, 11
      %p1072 = por %p1070, %p1071
      %p1074 = scmp.ne.s32.totalorder %s1057, %s1073
      %p1075 = scmp.eq.s32.totalorder %s114, 0
      %p1076 = por %p1074, %p1075
      %s1077 = ssub.s32 %s116, 3
      %p1078 = scmp.gt.s32.totalorder %s1077, 0
      %s1079 = scalar_select %p1078, %s1077, 0
      %s1080 = ssub.s32 %s123, 3
      %p1081 = scmp.gt.s32.totalorder %s1080, 0
      %s1082 = scalar_select %p1081, %s1080, 0
      %s1083 = ssub.s32 %s1079, %s1082
      %p1084 = scmp.eq.s32.totalorder %s1083, 0
      %s1086 = sadd.s32 %s1085, 1
      %s1087 = scalar_select %p1084, %s1085, %s1086
      %p1090 = pneg %p1084
      %p1091 = scmp.eq.s32.totalorder %s108, 11
      %p1092 = por %p1090, %p1091
      %p1093 = scmp.ne.s32.totalorder %s1085, %s1088
      %p1094 = scmp.eq.s32.totalorder %s108, 0
      %p1095 = por %p1093, %p1094
      %p1096 = scmp.ne.s32.totalorder %s1085, %s1088
      %p1097 = scmp.eq.s32.totalorder %s113, 11
      %p1098 = por %p1096, %p1097
      %p1099 = scmp.ne.s32.totalorder %s1088, %s1089
      %p1100 = scmp.eq.s32.totalorder %s113, 0
      %p1101 = por %p1099, %p1100
      %p1102 = scmp.ne.s32.totalorder %s1088, %s1089
      %p1103 = scmp.eq.s32.totalorder %s114, 11
      %p1104 = por %p1102, %p1103
      %p1106 = scmp.ne.s32.totalorder %s1089, %s1105
      %p1107 = scmp.eq.s32.totalorder %s114, 0
      %p1108 = por %p1106, %p1107
      %s1109 = ssub.s32 %s116, 3
      %p1110 = scmp.gt.s32.totalorder %s1109, 0
      %s1111 = scalar_select %p1110, %s1109, 0
      %s1112 = ssub.s32 %s123, 3
      %p1113 = scmp.gt.s32.totalorder %s1112, 0
      %s1114 = scalar_select %p1113, %s1112, 0
      %s1115 = ssub.s32 %s1111, %s1114
      %p1116 = scmp.eq.s32.totalorder %s1115, 0
      %s1118 = sadd.s32 %s1117, 1
      %s1119 = scalar_select %p1116, %s1117, %s1118
      %p1122 = pneg %p1116
      %p1123 = scmp.eq.s32.totalorder %s108, 11
      %p1124 = por %p1122, %p1123
      %p1125 = scmp.ne.s32.totalorder %s1117, %s1120
      %p1126 = scmp.eq.s32.totalorder %s108, 0
      %p1127 = por %p1125, %p1126
      %p1128 = scmp.ne.s32.totalorder %s1117, %s1120
      %p1129 = scmp.eq.s32.totalorder %s113, 11
      %p1130 = por %p1128, %p1129
      %p1131 = scmp.ne.s32.totalorder %s1120, %s1121
      %p1132 = scmp.eq.s32.totalorder %s113, 0
      %p1133 = por %p1131, %p1132
      %p1134 = scmp.ne.s32.totalorder %s1120, %s1121
      %p1135 = scmp.eq.s32.totalorder %s114, 11
      %p1136 = por %p1134, %p1135
      %p1138 = scmp.ne.s32.totalorder %s1121, %s1137
      %p1139 = scmp.eq.s32.totalorder %s114, 0
      %p1140 = por %p1138, %p1139
      %s1141 = ssub.s32 %s116, 3
      %p1142 = scmp.gt.s32.totalorder %s1141, 0
      %s1143 = scalar_select %p1142, %s1141, 0
      %s1144 = ssub.s32 %s123, 3
      %p1145 = scmp.gt.s32.totalorder %s1144, 0
      %s1146 = scalar_select %p1145, %s1144, 0
      %s1147 = ssub.s32 %s1143, %s1146
      %p1148 = scmp.eq.s32.totalorder %s1147, 0
      %s1150 = sadd.s32 %s1149, 1
      %s1151 = scalar_select %p1148, %s1149, %s1150
      %p1154 = pneg %p1148
      %p1155 = scmp.eq.s32.totalorder %s108, 11
      %p1156 = por %p1154, %p1155
      %p1157 = scmp.ne.s32.totalorder %s1149, %s1152
      %p1158 = scmp.eq.s32.totalorder %s108, 0
      %p1159 = por %p1157, %p1158
      %p1160 = scmp.ne.s32.totalorder %s1149, %s1152
      %p1161 = scmp.eq.s32.totalorder %s113, 11
      %p1162 = por %p1160, %p1161
      %p1163 = scmp.ne.s32.totalorder %s1152, %s1153
      %p1164 = scmp.eq.s32.totalorder %s113, 0
      %p1165 = por %p1163, %p1164
      %p1166 = scmp.ne.s32.totalorder %s1152, %s1153
      %p1167 = scmp.eq.s32.totalorder %s114, 11
      %p1168 = por %p1166, %p1167
      %p1170 = scmp.ne.s32.totalorder %s1153, %s1169
      %p1171 = scmp.eq.s32.totalorder %s114, 0
      %p1172 = por %p1170, %p1171
      %s1173 = ssub.s32 %s116, 3
      %p1174 = scmp.gt.s32.totalorder %s1173, 0
      %s1175 = scalar_select %p1174, %s1173, 0
      %s1176 = ssub.s32 %s123, 3
      %p1177 = scmp.gt.s32.totalorder %s1176, 0
      %s1178 = scalar_select %p1177, %s1176, 0
      %s1179 = ssub.s32 %s1175, %s1178
      %p1180 = scmp.eq.s32.totalorder %s1179, 0
      %s1182 = sadd.s32 %s1181, 1
      %s1183 = scalar_select %p1180, %s1181, %s1182
      %p1186 = pneg %p1180
      %p1187 = scmp.eq.s32.totalorder %s108, 11
      %p1188 = por %p1186, %p1187
      %p1189 = scmp.ne.s32.totalorder %s1181, %s1184
      %p1190 = scmp.eq.s32.totalorder %s108, 0
      %p1191 = por %p1189, %p1190
      %p1192 = scmp.ne.s32.totalorder %s1181, %s1184
      %p1193 = scmp.eq.s32.totalorder %s113, 11
      %p1194 = por %p1192, %p1193
      %p1195 = scmp.ne.s32.totalorder %s1184, %s1185
      %p1196 = scmp.eq.s32.totalorder %s113, 0
      %p1197 = por %p1195, %p1196
      %p1198 = scmp.ne.s32.totalorder %s1184, %s1185
      %p1199 = scmp.eq.s32.totalorder %s114, 11
      %p1200 = por %p1198, %p1199
      %p1202 = scmp.ne.s32.totalorder %s1185, %s1201
      %p1203 = scmp.eq.s32.totalorder %s114, 0
      %p1204 = por %p1202, %p1203
      %s1205 = ssub.s32 %s116, 3
      %p1206 = scmp.gt.s32.totalorder %s1205, 0
      %s1207 = scalar_select %p1206, %s1205, 0
      %s1208 = ssub.s32 %s123, 3
      %p1209 = scmp.gt.s32.totalorder %s1208, 0
      %s1210 = scalar_select %p1209, %s1208, 0
      %s1211 = ssub.s32 %s1207, %s1210
      %p1212 = scmp.eq.s32.totalorder %s1211, 0
      %s1214 = sadd.s32 %s1213, 1
      %s1215 = scalar_select %p1212, %s1213, %s1214
      %p1218 = pneg %p1212
      %p1219 = scmp.eq.s32.totalorder %s108, 11
      %p1220 = por %p1218, %p1219
      %p1221 = scmp.ne.s32.totalorder %s1213, %s1216
      %p1222 = scmp.eq.s32.totalorder %s108, 0
      %p1223 = por %p1221, %p1222
      %p1224 = scmp.ne.s32.totalorder %s1213, %s1216
      %p1225 = scmp.eq.s32.totalorder %s113, 11
      %p1226 = por %p1224, %p1225
      %p1227 = scmp.ne.s32.totalorder %s1216, %s1217
      %p1228 = scmp.eq.s32.totalorder %s113, 0
      %p1229 = por %p1227, %p1228
      %p1230 = scmp.ne.s32.totalorder %s1216, %s1217
      %p1231 = scmp.eq.s32.totalorder %s114, 11
      %p1232 = por %p1230, %p1231
      %p1234 = scmp.ne.s32.totalorder %s1217, %s1233
      %p1235 = scmp.eq.s32.totalorder %s114, 0
      %p1236 = por %p1234, %p1235
      %s1237 = ssub.s32 %s116, 3
      %p1238 = scmp.gt.s32.totalorder %s1237, 0
      %s1239 = scalar_select %p1238, %s1237, 0
      %s1240 = ssub.s32 %s123, 3
      %p1241 = scmp.gt.s32.totalorder %s1240, 0
      %s1242 = scalar_select %p1241, %s1240, 0
      %s1243 = ssub.s32 %s1239, %s1242
      %p1244 = scmp.eq.s32.totalorder %s1243, 0
      %s1246 = sadd.s32 %s1245, 1
      %s1247 = scalar_select %p1244, %s1245, %s1246
      %p1250 = pneg %p1244
      %p1251 = scmp.eq.s32.totalorder %s108, 11
      %p1252 = por %p1250, %p1251
      %p1253 = scmp.ne.s32.totalorder %s1245, %s1248
      %p1254 = scmp.eq.s32.totalorder %s108, 0
      %p1255 = por %p1253, %p1254
      %p1256 = scmp.ne.s32.totalorder %s1245, %s1248
      %p1257 = scmp.eq.s32.totalorder %s113, 11
      %p1258 = por %p1256, %p1257
      %p1259 = scmp.ne.s32.totalorder %s1248, %s1249
      %p1260 = scmp.eq.s32.totalorder %s113, 0
      %p1261 = por %p1259, %p1260
      %p1262 = scmp.ne.s32.totalorder %s1248, %s1249
      %p1263 = scmp.eq.s32.totalorder %s114, 11
      %p1264 = por %p1262, %p1263
      %p1266 = scmp.ne.s32.totalorder %s1249, %s1265
      %p1267 = scmp.eq.s32.totalorder %s114, 0
      %p1268 = por %p1266, %p1267
      %s1270 = sadd.s32 %s1269, 1
      %p1273 = scmp.eq.s32.totalorder %s108, 11
      %p1274 = scmp.ne.s32.totalorder %s1269, %s1271
      %p1275 = scmp.eq.s32.totalorder %s108, 0
      %p1276 = por %p1274, %p1275
      %p1277 = scmp.ne.s32.totalorder %s1269, %s1271
      %p1278 = scmp.eq.s32.totalorder %s113, 11
      %p1279 = por %p1277, %p1278
      %p1280 = scmp.ne.s32.totalorder %s1271, %s1272
      %p1281 = scmp.eq.s32.totalorder %s113, 0
      %p1282 = por %p1280, %p1281
      %p1283 = scmp.ne.s32.totalorder %s1271, %s1272
      %p1284 = scmp.eq.s32.totalorder %s114, 11
      %p1285 = por %p1283, %p1284
      %p1287 = scmp.ne.s32.totalorder %s1272, %s1286
      %p1288 = scmp.eq.s32.totalorder %s114, 0
      %p1289 = por %p1287, %p1288
      %s1291 = sadd.s32 %s1290, 1
      %p1294 = scmp.eq.s32.totalorder %s108, 11
      %p1295 = scmp.ne.s32.totalorder %s1290, %s1292
      %p1296 = scmp.eq.s32.totalorder %s108, 0
      %p1297 = por %p1295, %p1296
      %p1298 = scmp.ne.s32.totalorder %s1290, %s1292
      %p1299 = scmp.eq.s32.totalorder %s113, 11
      %p1300 = por %p1298, %p1299
      %p1301 = scmp.ne.s32.totalorder %s1292, %s1293
      %p1302 = scmp.eq.s32.totalorder %s113, 0
      %p1303 = por %p1301, %p1302
      %p1304 = scmp.ne.s32.totalorder %s1292, %s1293
      %p1305 = scmp.eq.s32.totalorder %s114, 11
      %p1306 = por %p1304, %p1305
      %p1308 = scmp.ne.s32.totalorder %s1293, %s1307
      %p1309 = scmp.eq.s32.totalorder %s114, 0
      %p1310 = por %p1308, %p1309
      %s1312 = sadd.s32 %s1311, 1
      %p1315 = scmp.eq.s32.totalorder %s108, 11
      %p1316 = scmp.ne.s32.totalorder %s1311, %s1313
      %p1317 = scmp.eq.s32.totalorder %s108, 0
      %p1318 = por %p1316, %p1317
      %p1319 = scmp.ne.s32.totalorder %s1311, %s1313
      %p1320 = scmp.eq.s32.totalorder %s113, 11
      %p1321 = por %p1319, %p1320
      %p1322 = scmp.ne.s32.totalorder %s1313, %s1314
      %p1323 = scmp.eq.s32.totalorder %s113, 0
      %p1324 = por %p1322, %p1323
      %p1325 = scmp.ne.s32.totalorder %s1313, %s1314
      %p1326 = scmp.eq.s32.totalorder %s114, 11
      %p1327 = por %p1325, %p1326
      %p1329 = scmp.ne.s32.totalorder %s1314, %s1328
      %p1330 = scmp.eq.s32.totalorder %s114, 0
      %p1331 = por %p1329, %p1330
      %s1333 = sadd.s32 %s1332, 1
      %p1336 = scmp.eq.s32.totalorder %s108, 11
      %p1337 = scmp.ne.s32.totalorder %s1332, %s1334
      %p1338 = scmp.eq.s32.totalorder %s108, 0
      %p1339 = por %p1337, %p1338
      %p1340 = scmp.ne.s32.totalorder %s1332, %s1334
      %p1341 = scmp.eq.s32.totalorder %s113, 11
      %p1342 = por %p1340, %p1341
      %p1343 = scmp.ne.s32.totalorder %s1334, %s1335
      %p1344 = scmp.eq.s32.totalorder %s113, 0
      %p1345 = por %p1343, %p1344
      %p1346 = scmp.ne.s32.totalorder %s1334, %s1335
      %p1347 = scmp.eq.s32.totalorder %s114, 11
      %p1348 = por %p1346, %p1347
      %p1350 = scmp.ne.s32.totalorder %s1335, %s1349
      %p1351 = scmp.eq.s32.totalorder %s114, 0
      %p1352 = por %p1350, %p1351
      %s1353 = ssub.s32 %s115, %s127
      %p1354 = scmp.eq.s32.totalorder %s1353, 0
      %s1356 = sadd.s32 %s1355, 1
      %s1357 = scalar_select %p1354, %s1355, %s1356
      %p1360 = pneg %p1354
      %p1361 = scmp.eq.s32.totalorder %s108, 11
      %p1362 = por %p1360, %p1361
      %p1363 = scmp.ne.s32.totalorder %s1355, %s1358
      %p1364 = scmp.eq.s32.totalorder %s108, 0
      %p1365 = por %p1363, %p1364
      %p1366 = scmp.ne.s32.totalorder %s1355, %s1358
      %p1367 = scmp.eq.s32.totalorder %s113, 11
      %p1368 = por %p1366, %p1367
      %p1369 = scmp.ne.s32.totalorder %s1358, %s1359
      %p1370 = scmp.eq.s32.totalorder %s113, 0
      %p1371 = por %p1369, %p1370
      %p1372 = scmp.ne.s32.totalorder %s1358, %s1359
      %p1373 = scmp.eq.s32.totalorder %s114, 11
      %p1374 = por %p1372, %p1373
      %p1376 = scmp.ne.s32.totalorder %s1359, %s1375
      %p1377 = scmp.eq.s32.totalorder %s114, 0
      %p1378 = por %p1376, %p1377
      %p1379 = scmp.le.s32.totalorder 1, %s108
      %p1380 = scmp.lt.s32.totalorder %s108, 13
      %p1381 = pnand %p1379, %p1380
      %p1382 = pneg %p1381
      // Predicated region
      $region9: #{transformer_forward.1} parent=5 // pred_check
        _
      $region10: #{transformer_forward.1} parent=5 // pred_check_branch
        %1384 = sbr.rel (%p1381) target = $region12
      $region11: #{transformer_forward.1} parent=5 // pred_region
        %s1385 = ssub.s32 %s108, 1
        // Predicated region
        $region13: #{transformer_forward.1} parent=11 // pred_check
          %p1386 = pneg %p219
        $region14: #{transformer_forward.1} parent=11 // pred_check_branch
          %1388 = sbr.rel (%p1386) target = $region16
        $region15: #{transformer_forward.1} parent=11 // pred_region
          _
        $region16: #{transformer_forward.1} parent=11 // pred_fallthru
          _
        // Predicated region
        $region17: #{transformer_forward.1} parent=11 // pred_check
          %p1389 = pneg %p600
        $region18: #{transformer_forward.1} parent=11 // pred_check_branch
          %1391 = sbr.rel (%p1389) target = $region20
        $region19: #{transformer_forward.1} parent=11 // pred_region
          _
        $region20: #{transformer_forward.1} parent=11 // pred_fallthru
          _
        // Predicated region
        $region21: #{transformer_forward.1} parent=11 // pred_check
          %p1392 = pneg %p621
        $region22: #{transformer_forward.1} parent=11 // pred_check_branch
          %1394 = sbr.rel (%p1392) target = $region24
        $region23: #{transformer_forward.1} parent=11 // pred_region
          %s1396 = ssub.s32 16, 16
          %1397 = vsyncadd [#allocation20], %s1396
          %s1399 = sshll.u32 [#allocation19], 4
          %s1400 = int_to_ptr.vmem [resolvable:$true] %s1399
          %1402 = dma.hbm_to_vmem [thread:$0]  %s35, 16, %s1400, [#allocation20]
        $region24: #{transformer_forward.1} parent=11 // pred_fallthru
          _
        // Predicated region
        $region25: #{transformer_forward.1} parent=11 // pred_check
          %p1403 = pneg %p1282
        $region26: #{transformer_forward.1} parent=11 // pred_check_branch
          %1405 = sbr.rel (%p1403) target = $region28
        $region27: #{transformer_forward.1} parent=11 // pred_region
          %s1407 = ssub.s32 16, 16
          %1408 = vsyncadd [#allocation17], %s1407
          %s1410 = sshll.u32 [#allocation40], 4
          %s1411 = int_to_ptr.vmem [resolvable:$true] %s1410
          %1413 = dma.hbm_to_vmem [thread:$0]  %s77, 16, %s1411, [#allocation17]
        $region28: #{transformer_forward.1} parent=11 // pred_fallthru
          _
        // Predicated region
        $region29: #{transformer_forward.1} parent=11 // pred_check
          %p1414 = pneg %p1303
        $region30: #{transformer_forward.1} parent=11 // pred_check_branch
          %1416 = sbr.rel (%p1414) target = $region32
        $region31: #{transformer_forward.1} parent=11 // pred_region
          %s1418 = ssub.s32 16, 16
          %1419 = vsyncadd [#allocation20], %s1418
          %s1421 = sshll.u32 [#allocation41], 4
          %s1422 = int_to_ptr.vmem [resolvable:$true] %s1421
          %1424 = dma.hbm_to_vmem [thread:$0]  %s79, 16, %s1422, [#allocation20]
        $region32: #{transformer_forward.1} parent=11 // pred_fallthru
          _
        // Predicated region
        $region33: #{transformer_forward.1} parent=11 // pred_check
          %p1425 = pneg %p1324
        $region34: #{transformer_forward.1} parent=11 // pred_check_branch
          %1427 = sbr.rel (%p1425) target = $region36
        $region35: #{transformer_forward.1} parent=11 // pred_region
          %s1429 = ssub.s32 1024, 1024
          %1430 = vsyncadd [#allocation43], %s1429
          %s1431 = sshll.u32 [#allocation42], 4
          %s1432 = int_to_ptr.vmem [resolvable:$true] %s1431
          %1437 = dma.hbm_to_vmem [thread:$0]  %s81, 1024, %s1432, [#allocation43], 64, 64, 4
        $region36: #{transformer_forward.1} parent=11 // pred_fallthru
          _
        // Predicated region
        $region37: #{transformer_forward.1} parent=11 // pred_check
          %p1438 = pneg %p1345
        $region38: #{transformer_forward.1} parent=11 // pred_check_branch
          %1440 = sbr.rel (%p1438) target = $region40
        $region39: #{transformer_forward.1} parent=11 // pred_region
          %s1442 = ssub.s32 16, 16
          %1443 = vsyncadd [#allocation43], %s1442
          %s1445 = sshll.u32 [#allocation44], 4
          %s1446 = int_to_ptr.vmem [resolvable:$true] %s1445
          %1448 = dma.hbm_to_vmem [thread:$0]  %s83, 16, %s1446, [#allocation43]
        $region40: #{transformer_forward.1} parent=11 // pred_fallthru
          _
      $region12: #{transformer_forward.1} parent=5 // pred_fallthru
        _
      %p1449 = scmp.lt.s32.totalorder %s108, 12
      // Predicated region
      $region41: #{transformer_forward.1} parent=5 // pred_check
        %p1450 = pneg %p1449
      $region42: #{transformer_forward.1} parent=5 // pred_check_branch
        %1452 = sbr.rel (%p1450) target = $region44
      $region43: #{transformer_forward.1} parent=5 // pred_region
        // Predicated region
        $region45: #{transformer_forward.1} parent=43 // pred_check
          %p1453 = pneg %p140
        $region46: #{transformer_forward.1} parent=43 // pred_check_branch
          %1455 = sbr.rel (%p1453) target = $region48
        $region47: #{transformer_forward.1} parent=43 // pred_region
          %p1456 = scmp.lt.s32.totalorder %s115, 1
          %s1457 = scalar_select %p1456, %s115, 1
          %s1458 = smul.addr %s1457, 8
          %s1459 = scalar_lea.vmem %s1, %s1458
        $region48: #{transformer_forward.1} parent=43 // pred_fallthru
          _
        // Predicated region
        $region49: #{transformer_forward.1} parent=43 // pred_check
          %p1460 = pneg %p166
        $region50: #{transformer_forward.1} parent=43 // pred_check_branch
          %1462 = sbr.rel (%p1460) target = $region52
        $region51: #{transformer_forward.1} parent=43 // pred_region
          %p1463 = scmp.lt.s32.totalorder %s115, 1
          %s1464 = scalar_select %p1463, %s115, 1
          %s1465 = smul.addr %s1464, 8
          %s1466 = scalar_lea.vmem %s3, %s1465
        $region52: #{transformer_forward.1} parent=43 // pred_fallthru
          _
        // Predicated region
        $region53: #{transformer_forward.1} parent=43 // pred_check
          %p1467 = pneg %p192
        $region54: #{transformer_forward.1} parent=43 // pred_check_branch
          %1469 = sbr.rel (%p1467) target = $region56
        $region55: #{transformer_forward.1} parent=43 // pred_region
          %p1470 = scmp.lt.s32.totalorder %s115, 1
          %s1471 = scalar_select %p1470, %s115, 1
          %s1472 = scalar_lea.vmem %s5, %s1471
        $region56: #{transformer_forward.1} parent=43 // pred_fallthru
          _
        // Predicated region
        $region57: #{transformer_forward.1} parent=43 // pred_check
          %p1473 = pneg %p243
        $region58: #{transformer_forward.1} parent=43 // pred_check_branch
          %1475 = sbr.rel (%p1473) target = $region60
        $region59: #{transformer_forward.1} parent=43 // pred_region
          %p1476 = scmp.lt.s32.totalorder %s116, 2
          %s1477 = scalar_select %p1476, %s116, 2
          %p1478 = scmp.lt.s32.totalorder %s1477, 2
          %s1479 = scalar_select %p1478, %s1477, 2
          %s1480 = smul.addr %s1479, 48
          %s1481 = smul.addr %s1480, 4
          %s1482 = scalar_lea.vmem %s9, %s1481
          %p1483 = scmp.lt.s32.totalorder %s116, 2
          %s1484 = scalar_select %p1483, %s116, 2
        $region60: #{transformer_forward.1} parent=43 // pred_fallthru
          _
        // Predicated region
        $region61: #{transformer_forward.1} parent=43 // pred_check
          %p1485 = pneg %p273
        $region62: #{transformer_forward.1} parent=43 // pred_check_branch
          %1487 = sbr.rel (%p1485) target = $region64
        $region63: #{transformer_forward.1} parent=43 // pred_region
          %p1488 = scmp.lt.s32.totalorder %s116, 2
          %s1489 = scalar_select %p1488, %s116, 2
          %p1490 = scmp.lt.s32.totalorder %s1489, 2
          %s1491 = scalar_select %p1490, %s1489, 2
          %s1492 = smul.addr %s1491, 3
          %s1493 = scalar_lea.vmem %s11, %s1492
          %p1494 = scmp.lt.s32.totalorder %s116, 2
          %s1495 = scalar_select %p1494, %s116, 2
        $region64: #{transformer_forward.1} parent=43 // pred_fallthru
          _
        // Predicated region
        $region65: #{transformer_forward.1} parent=43 // pred_check
          %p1496 = pneg %p303
        $region66: #{transformer_forward.1} parent=43 // pred_check_branch
          %1498 = sbr.rel (%p1496) target = $region68
        $region67: #{transformer_forward.1} parent=43 // pred_region
          %s1499 = sand.u32 %s108, 1
          %s1500 = scalar_lea.sflag [#allocation6], %s1499
          %s1501 = sand.u32 %s293, 1
          %s1502 = smul.addr %s1501, 64
          %s1503 = scalar_lea.vmem [#allocation5], %s1502
          %p1504 = scmp.lt.s32.totalorder %s116, 2
          %s1505 = scalar_select %p1504, %s116, 2
          %s1507 = ssub.s32 1024, 1024
          %1508 = vsyncadd %s1500, %s1507
          %s1509 = smul.addr %s1505, 16
          %s1510 = smul.addr %s1509, 64
          %s1511 = scalar_lea.hbm %s13, %s1510
          %s1512 = sshll.u32 %s1503, 4
          %s1513 = int_to_ptr.vmem [resolvable:$true] %s1512
          %1518 = dma.hbm_to_vmem [thread:$0]  %s1511, 1024, %s1513, %s1500, 64, 64, 4
        $region68: #{transformer_forward.1} parent=43 // pred_fallthru
          _
        // Predicated region
        $region69: #{transformer_forward.1} parent=43 // pred_check
          %p1519 = pneg %p333
        $region70: #{transformer_forward.1} parent=43 // pred_check_branch
          %1521 = sbr.rel (%p1519) target = $region72
        $region71: #{transformer_forward.1} parent=43 // pred_region
          %p1522 = scmp.lt.s32.totalorder %s116, 2
          %s1523 = scalar_select %p1522, %s116, 2
          %p1524 = scmp.lt.s32.totalorder %s1523, 2
          %s1525 = scalar_select %p1524, %s1523, 2
          %s1526 = scalar_lea.vmem %s15, %s1525
          %p1527 = scmp.lt.s32.totalorder %s116, 2
          %s1528 = scalar_select %p1527, %s116, 2
        $region72: #{transformer_forward.1} parent=43 // pred_fallthru
          _
        // Predicated region
        $region73: #{transformer_forward.1} parent=43 // pred_check
          %p1529 = pneg %p363
        $region74: #{transformer_forward.1} parent=43 // pred_check_branch
          %1531 = sbr.rel (%p1529) target = $region76
        $region75: #{transformer_forward.1} parent=43 // pred_region
          %s1532 = sand.u32 %s108, 1
          %s1533 = scalar_lea.sflag [#allocation8], %s1532
          %s1534 = sand.u32 %s353, 1
          %s1535 = scalar_lea.vmem [#allocation7], %s1534
          %p1536 = scmp.lt.s32.totalorder %s116, 2
          %s1537 = scalar_select %p1536, %s116, 2
          %s1539 = ssub.s32 16, 16
          %1540 = vsyncadd %s1533, %s1539
          %s1541 = smul.addr %s1537, 16
          %s1542 = scalar_lea.hbm %s17, %s1541
          %s1544 = sshll.u32 %s1535, 4
          %s1545 = int_to_ptr.vmem [resolvable:$true] %s1544
          %1547 = dma.hbm_to_vmem [thread:$0]  %s1542, 16, %s1545, %s1533
        $region76: #{transformer_forward.1} parent=43 // pred_fallthru
          _
        // Predicated region
        $region77: #{transformer_forward.1} parent=43 // pred_check
          %p1548 = pneg %p393
        $region78: #{transformer_forward.1} parent=43 // pred_check_branch
          %1550 = sbr.rel (%p1548) target = $region80
        $region79: #{transformer_forward.1} parent=43 // pred_region
          %s1551 = sand.u32 %s108, 1
          %s1552 = scalar_lea.sflag [#allocation8], %s1551
          %s1553 = sand.u32 %s383, 1
          %s1554 = scalar_lea.vmem [#allocation9], %s1553
          %p1555 = scmp.lt.s32.totalorder %s116, 2
          %s1556 = scalar_select %p1555, %s116, 2
          %s1558 = ssub.s32 16, 16
          %1559 = vsyncadd %s1552, %s1558
          %s1560 = smul.addr %s1556, 16
          %s1561 = scalar_lea.hbm %s19, %s1560
          %s1563 = sshll.u32 %s1554, 4
          %s1564 = int_to_ptr.vmem [resolvable:$true] %s1563
          %1566 = dma.hbm_to_vmem [thread:$0]  %s1561, 16, %s1564, %s1552
        $region80: #{transformer_forward.1} parent=43 // pred_fallthru
          _
        // Predicated region
        $region81: #{transformer_forward.1} parent=43 // pred_check
          %p1567 = pneg %p423
        $region82: #{transformer_forward.1} parent=43 // pred_check_branch
          %1569 = sbr.rel (%p1567) target = $region84
        $region83: #{transformer_forward.1} parent=43 // pred_region
          %s1570 = sand.u32 %s108, 1
          %s1571 = scalar_lea.sflag [#allocation11], %s1570
          %s1572 = sand.u32 %s413, 1
          %s1573 = smul.addr %s1572, 128
          %s1574 = scalar_lea.vmem [#allocation10], %s1573
          %p1575 = scmp.lt.s32.totalorder %s116, 2
          %s1576 = scalar_select %p1575, %s116, 2
          %s1578 = ssub.s32 2048, 2048
          %1579 = vsyncadd %s1571, %s1578
          %s1580 = smul.addr %s1576, 32
          %s1581 = smul.addr %s1580, 64
          %s1582 = scalar_lea.hbm %s21, %s1581
          %s1583 = sshll.u32 %s1574, 4
          %s1584 = int_to_ptr.vmem [resolvable:$true] %s1583
          %1589 = dma.hbm_to_vmem [thread:$0]  %s1582, 2048, %s1584, %s1571, 128, 128, 8
        $region84: #{transformer_forward.1} parent=43 // pred_fallthru
          _
        // Predicated region
        $region85: #{transformer_forward.1} parent=43 // pred_check
          %p1590 = pneg %p453
        $region86: #{transformer_forward.1} parent=43 // pred_check_branch
          %1592 = sbr.rel (%p1590) target = $region88
        $region87: #{transformer_forward.1} parent=43 // pred_region
          %s1593 = sand.u32 %s108, 1
          %s1594 = scalar_lea.sflag [#allocation11], %s1593
          %s1595 = sand.u32 %s443, 1
          %s1596 = smul.addr %s1595, 2
          %s1597 = scalar_lea.vmem [#allocation12], %s1596
          %p1598 = scmp.lt.s32.totalorder %s116, 2
          %s1599 = scalar_select %p1598, %s116, 2
          %s1601 = ssub.s32 32, 32
          %1602 = vsyncadd %s1594, %s1601
          %s1603 = smul.addr %s1599, 2
          %s1604 = smul.addr %s1603, 16
          %s1605 = scalar_lea.hbm %s23, %s1604
          %s1607 = sshll.u32 %s1597, 4
          %s1608 = int_to_ptr.vmem [resolvable:$true] %s1607
          %1610 = dma.hbm_to_vmem [thread:$0]  %s1605, 32, %s1608, %s1594
        $region88: #{transformer_forward.1} parent=43 // pred_fallthru
          _
        // Predicated region
        $region89: #{transformer_forward.1} parent=43 // pred_check
          %p1611 = pneg %p483
        $region90: #{transformer_forward.1} parent=43 // pred_check_branch
          %1613 = sbr.rel (%p1611) target = $region92
        $region91: #{transformer_forward.1} parent=43 // pred_region
          %s1614 = sand.u32 %s108, 1
          %s1615 = scalar_lea.sflag [#allocation14], %s1614
          %s1616 = sand.u32 %s473, 1
          %s1617 = smul.addr %s1616, 128
          %s1618 = scalar_lea.vmem [#allocation13], %s1617
          %p1619 = scmp.lt.s32.totalorder %s116, 2
          %s1620 = scalar_select %p1619, %s116, 2
          %s1622 = ssub.s32 2048, 2048
          %1623 = vsyncadd %s1615, %s1622
          %s1624 = smul.addr %s1620, 32
          %s1625 = smul.addr %s1624, 64
          %s1626 = scalar_lea.hbm %s25, %s1625
          %s1627 = sshll.u32 %s1618, 4
          %s1628 = int_to_ptr.vmem [resolvable:$true] %s1627
          %1633 = dma.hbm_to_vmem [thread:$0]  %s1626, 2048, %s1628, %s1615, 64, 64, 4
        $region92: #{transformer_forward.1} parent=43 // pred_fallthru
          _
        // Predicated region
        $region93: #{transformer_forward.1} parent=43 // pred_check
          %p1634 = pneg %p513
        $region94: #{transformer_forward.1} parent=43 // pred_check_branch
          %1636 = sbr.rel (%p1634) target = $region96
        $region95: #{transformer_forward.1} parent=43 // pred_region
          %s1637 = sand.u32 %s108, 1
          %s1638 = scalar_lea.sflag [#allocation14], %s1637
          %s1639 = sand.u32 %s503, 1
          %s1640 = scalar_lea.vmem [#allocation15], %s1639
          %p1641 = scmp.lt.s32.totalorder %s116, 2
          %s1642 = scalar_select %p1641, %s116, 2
          %s1644 = ssub.s32 16, 16
          %1645 = vsyncadd %s1638, %s1644
          %s1646 = smul.addr %s1642, 16
          %s1647 = scalar_lea.hbm %s27, %s1646
          %s1649 = sshll.u32 %s1640, 4
          %s1650 = int_to_ptr.vmem [resolvable:$true] %s1649
          %1652 = dma.hbm_to_vmem [thread:$0]  %s1647, 16, %s1650, %s1638
        $region96: #{transformer_forward.1} parent=43 // pred_fallthru
          _
        // Predicated region
        $region97: #{transformer_forward.1} parent=43 // pred_check
          %p1653 = pneg %p543
        $region98: #{transformer_forward.1} parent=43 // pred_check_branch
          %1655 = sbr.rel (%p1653) target = $region100
        $region99: #{transformer_forward.1} parent=43 // pred_region
          %s1656 = sand.u32 %s108, 1
          %s1657 = scalar_lea.sflag [#allocation17], %s1656
          %s1658 = sand.u32 %s533, 1
          %s1659 = scalar_lea.vmem [#allocation16], %s1658
          %p1660 = scmp.lt.s32.totalorder %s116, 2
          %s1661 = scalar_select %p1660, %s116, 2
          %s1663 = ssub.s32 16, 16
          %1664 = vsyncadd %s1657, %s1663
          %s1665 = smul.addr %s1661, 16
          %s1666 = scalar_lea.hbm %s29, %s1665
          %s1668 = sshll.u32 %s1659, 4
          %s1669 = int_to_ptr.vmem [resolvable:$true] %s1668
          %1671 = dma.hbm_to_vmem [thread:$0]  %s1666, 16, %s1669, %s1657
        $region100: #{transformer_forward.1} parent=43 // pred_fallthru
          _
        // Predicated region
        $region101: #{transformer_forward.1} parent=43 // pred_check
          %p1672 = pneg %p573
        $region102: #{transformer_forward.1} parent=43 // pred_check_branch
          %1674 = sbr.rel (%p1672) target = $region104
        $region103: #{transformer_forward.1} parent=43 // pred_region
          %s1675 = sand.u32 %s108, 1
          %s1676 = scalar_lea.sflag [#allocation17], %s1675
          %s1677 = sand.u32 %s563, 1
          %s1678 = scalar_lea.vmem [#allocation18], %s1677
          %p1679 = scmp.lt.s32.totalorder %s116, 2
          %s1680 = scalar_select %p1679, %s116, 2
          %s1682 = ssub.s32 16, 16
          %1683 = vsyncadd %s1676, %s1682
          %s1684 = smul.addr %s1680, 16
          %s1685 = scalar_lea.hbm %s31, %s1684
          %s1687 = sshll.u32 %s1678, 4
          %s1688 = int_to_ptr.vmem [resolvable:$true] %s1687
          %1690 = dma.hbm_to_vmem [thread:$0]  %s1685, 16, %s1688, %s1676
        $region104: #{transformer_forward.1} parent=43 // pred_fallthru
          _
        // Predicated region
        $region105: #{transformer_forward.1} parent=43 // pred_check
          %p1691 = pneg %p647
        $region106: #{transformer_forward.1} parent=43 // pred_check_branch
          %1693 = sbr.rel (%p1691) target = $region108
        $region107: #{transformer_forward.1} parent=43 // pred_region
          %s1694 = sand.u32 %s108, 1
          %s1695 = scalar_lea.sflag [#allocation6], %s1694
          %s1696 = sand.u32 %s637, 1
          %s1697 = smul.addr %s1696, 192
          %s1698 = scalar_lea.vmem [#allocation21], %s1697
          %s1699 = ssub.s32 %s116, 3
          %p1700 = scmp.gt.s32.totalorder %s1699, 0
          %s1701 = scalar_select %p1700, %s1699, 0
          %s1703 = ssub.s32 3072, 3072
          %1704 = vsyncadd %s1695, %s1703
          %s1705 = smul.addr %s1701, 48
          %s1706 = smul.addr %s1705, 64
          %s1707 = scalar_lea.hbm %s37, %s1706
          %s1708 = sshll.u32 %s1698, 4
          %s1709 = int_to_ptr.vmem [resolvable:$true] %s1708
          %1714 = dma.hbm_to_vmem [thread:$0]  %s1707, 3072, %s1709, %s1695, 192, 192, 12
        $region108: #{transformer_forward.1} parent=43 // pred_fallthru
          _
        // Predicated region
        $region109: #{transformer_forward.1} parent=43 // pred_check
          %p1715 = pneg %p679
        $region110: #{transformer_forward.1} parent=43 // pred_check_branch
          %1717 = sbr.rel (%p1715) target = $region112
        $region111: #{transformer_forward.1} parent=43 // pred_region
          %s1718 = ssub.s32 %s116, 3
          %p1719 = scmp.gt.s32.totalorder %s1718, 0
          %s1720 = scalar_select %p1719, %s1718, 0
          %p1721 = scmp.lt.s32.totalorder %s1720, 2
          %s1722 = scalar_select %p1721, %s1720, 2
          %s1723 = smul.addr %s1722, 3
          %s1724 = scalar_lea.vmem %s39, %s1723
          %s1725 = ssub.s32 %s116, 3
          %p1726 = scmp.gt.s32.totalorder %s1725, 0
          %s1727 = scalar_select %p1726, %s1725, 0
        $region112: #{transformer_forward.1} parent=43 // pred_fallthru
          _
        // Predicated region
        $region113: #{transformer_forward.1} parent=43 // pred_check
          %p1728 = pneg %p711
        $region114: #{transformer_forward.1} parent=43 // pred_check_branch
          %1730 = sbr.rel (%p1728) target = $region116
        $region115: #{transformer_forward.1} parent=43 // pred_region
          %s1731 = sand.u32 %s108, 1
          %s1732 = scalar_lea.sflag [#allocation8], %s1731
          %s1733 = sand.u32 %s701, 1
          %s1734 = smul.addr %s1733, 64
          %s1735 = scalar_lea.vmem [#allocation22], %s1734
          %s1736 = ssub.s32 %s116, 3
          %p1737 = scmp.gt.s32.totalorder %s1736, 0
          %s1738 = scalar_select %p1737, %s1736, 0
          %s1740 = ssub.s32 1024, 1024
          %1741 = vsyncadd %s1732, %s1740
          %s1742 = smul.addr %s1738, 16
          %s1743 = smul.addr %s1742, 64
          %s1744 = scalar_lea.hbm %s41, %s1743
          %s1745 = sshll.u32 %s1735, 4
          %s1746 = int_to_ptr.vmem [resolvable:$true] %s1745
          %1751 = dma.hbm_to_vmem [thread:$0]  %s1744, 1024, %s1746, %s1732, 64, 64, 4
        $region116: #{transformer_forward.1} parent=43 // pred_fallthru
          _
        // Predicated region
        $region117: #{transformer_forward.1} parent=43 // pred_check
          %p1752 = pneg %p743
        $region118: #{transformer_forward.1} parent=43 // pred_check_branch
          %1754 = sbr.rel (%p1752) target = $region120
        $region119: #{transformer_forward.1} parent=43 // pred_region
          %s1755 = sand.u32 %s108, 1
          %s1756 = scalar_lea.sflag [#allocation11], %s1755
          %s1757 = sand.u32 %s733, 1
          %s1758 = scalar_lea.vmem [#allocation23], %s1757
          %s1759 = ssub.s32 %s116, 3
          %p1760 = scmp.gt.s32.totalorder %s1759, 0
          %s1761 = scalar_select %p1760, %s1759, 0
          %s1763 = ssub.s32 16, 16
          %1764 = vsyncadd %s1756, %s1763
          %s1765 = smul.addr %s1761, 16
          %s1766 = scalar_lea.hbm %s43, %s1765
          %s1768 = sshll.u32 %s1758, 4
          %s1769 = int_to_ptr.vmem [resolvable:$true] %s1768
          %1771 = dma.hbm_to_vmem [thread:$0]  %s1766, 16, %s1769, %s1756
        $region120: #{transformer_forward.1} parent=43 // pred_fallthru
          _
        // Predicated region
        $region121: #{transformer_forward.1} parent=43 // pred_check
          %p1772 = pneg %p775
        $region122: #{transformer_forward.1} parent=43 // pred_check_branch
          %1774 = sbr.rel (%p1772) target = $region124
        $region123: #{transformer_forward.1} parent=43 // pred_region
          %s1775 = sand.u32 %s108, 1
          %s1776 = scalar_lea.sflag [#allocation14], %s1775
          %s1777 = sand.u32 %s765, 1
          %s1778 = scalar_lea.vmem [#allocation24], %s1777
          %s1779 = ssub.s32 %s116, 3
          %p1780 = scmp.gt.s32.totalorder %s1779, 0
          %s1781 = scalar_select %p1780, %s1779, 0
          %s1783 = ssub.s32 16, 16
          %1784 = vsyncadd %s1776, %s1783
          %s1785 = smul.addr %s1781, 16
          %s1786 = scalar_lea.hbm %s45, %s1785
          %s1788 = sshll.u32 %s1778, 4
          %s1789 = int_to_ptr.vmem [resolvable:$true] %s1788
          %1791 = dma.hbm_to_vmem [thread:$0]  %s1786, 16, %s1789, %s1776
        $region124: #{transformer_forward.1} parent=43 // pred_fallthru
          _
        // Predicated region
        $region125: #{transformer_forward.1} parent=43 // pred_check
          %p1792 = pneg %p807
        $region126: #{transformer_forward.1} parent=43 // pred_check_branch
          %1794 = sbr.rel (%p1792) target = $region128
        $region127: #{transformer_forward.1} parent=43 // pred_region
          %s1795 = sand.u32 %s108, 1
          %s1796 = scalar_lea.sflag [#allocation17], %s1795
          %s1797 = sand.u32 %s797, 1
          %s1798 = scalar_lea.vmem [#allocation25], %s1797
          %s1799 = ssub.s32 %s116, 3
          %p1800 = scmp.gt.s32.totalorder %s1799, 0
          %s1801 = scalar_select %p1800, %s1799, 0
          %s1803 = ssub.s32 16, 16
          %1804 = vsyncadd %s1796, %s1803
          %s1805 = smul.addr %s1801, 16
          %s1806 = scalar_lea.hbm %s47, %s1805
          %s1808 = sshll.u32 %s1798, 4
          %s1809 = int_to_ptr.vmem [resolvable:$true] %s1808
          %1811 = dma.hbm_to_vmem [thread:$0]  %s1806, 16, %s1809, %s1796
        $region128: #{transformer_forward.1} parent=43 // pred_fallthru
          _
        // Predicated region
        $region129: #{transformer_forward.1} parent=43 // pred_check
          %p1812 = pneg %p839
        $region130: #{transformer_forward.1} parent=43 // pred_check_branch
          %1814 = sbr.rel (%p1812) target = $region132
        $region131: #{transformer_forward.1} parent=43 // pred_region
          %s1815 = sand.u32 %s108, 1
          %s1816 = scalar_lea.sflag [#allocation6], %s1815
          %s1817 = sand.u32 %s829, 1
          %s1818 = smul.addr %s1817, 64
          %s1819 = scalar_lea.vmem [#allocation26], %s1818
          %s1820 = ssub.s32 %s116, 3
          %p1821 = scmp.gt.s32.totalorder %s1820, 0
          %s1822 = scalar_select %p1821, %s1820, 0
          %s1824 = ssub.s32 1024, 1024
          %1825 = vsyncadd %s1816, %s1824
          %s1826 = smul.addr %s1822, 16
          %s1827 = smul.addr %s1826, 64
          %s1828 = scalar_lea.hbm %s49, %s1827
          %s1829 = sshll.u32 %s1819, 4
          %s1830 = int_to_ptr.vmem [resolvable:$true] %s1829
          %1835 = dma.hbm_to_vmem [thread:$0]  %s1828, 1024, %s1830, %s1816, 64, 64, 4
        $region132: #{transformer_forward.1} parent=43 // pred_fallthru
          _
        // Predicated region
        $region133: #{transformer_forward.1} parent=43 // pred_check
          %p1836 = pneg %p871
        $region134: #{transformer_forward.1} parent=43 // pred_check_branch
          %1838 = sbr.rel (%p1836) target = $region136
        $region135: #{transformer_forward.1} parent=43 // pred_region
          %s1839 = sand.u32 %s108, 1
          %s1840 = scalar_lea.sflag [#allocation8], %s1839
          %s1841 = sand.u32 %s861, 1
          %s1842 = scalar_lea.vmem [#allocation27], %s1841
          %s1843 = ssub.s32 %s116, 3
          %p1844 = scmp.gt.s32.totalorder %s1843, 0
          %s1845 = scalar_select %p1844, %s1843, 0
          %s1847 = ssub.s32 16, 16
          %1848 = vsyncadd %s1840, %s1847
          %s1849 = smul.addr %s1845, 16
          %s1850 = scalar_lea.hbm %s51, %s1849
          %s1852 = sshll.u32 %s1842, 4
          %s1853 = int_to_ptr.vmem [resolvable:$true] %s1852
          %1855 = dma.hbm_to_vmem [thread:$0]  %s1850, 16, %s1853, %s1840
        $region136: #{transformer_forward.1} parent=43 // pred_fallthru
          _
        // Predicated region
        $region137: #{transformer_forward.1} parent=43 // pred_check
          %p1856 = pneg %p903
        $region138: #{transformer_forward.1} parent=43 // pred_check_branch
          %1858 = sbr.rel (%p1856) target = $region140
        $region139: #{transformer_forward.1} parent=43 // pred_region
          %s1859 = sand.u32 %s108, 1
          %s1860 = scalar_lea.sflag [#allocation11], %s1859
          %s1861 = sand.u32 %s893, 1
          %s1862 = smul.addr %s1861, 128
          %s1863 = scalar_lea.vmem [#allocation28], %s1862
          %s1864 = ssub.s32 %s116, 3
          %p1865 = scmp.gt.s32.totalorder %s1864, 0
          %s1866 = scalar_select %p1865, %s1864, 0
          %s1868 = ssub.s32 2048, 2048
          %1869 = vsyncadd %s1860, %s1868
          %s1870 = smul.addr %s1866, 32
          %s1871 = smul.addr %s1870, 64
          %s1872 = scalar_lea.hbm %s53, %s1871
          %s1873 = sshll.u32 %s1863, 4
          %s1874 = int_to_ptr.vmem [resolvable:$true] %s1873
          %1879 = dma.hbm_to_vmem [thread:$0]  %s1872, 2048, %s1874, %s1860, 128, 128, 8
        $region140: #{transformer_forward.1} parent=43 // pred_fallthru
          _
        // Predicated region
        $region141: #{transformer_forward.1} parent=43 // pred_check
          %p1880 = pneg %p935
        $region142: #{transformer_forward.1} parent=43 // pred_check_branch
          %1882 = sbr.rel (%p1880) target = $region144
        $region143: #{transformer_forward.1} parent=43 // pred_region
          %s1883 = sand.u32 %s108, 1
          %s1884 = scalar_lea.sflag [#allocation14], %s1883
          %s1885 = sand.u32 %s925, 1
          %s1886 = smul.addr %s1885, 2
          %s1887 = scalar_lea.vmem [#allocation29], %s1886
          %s1888 = ssub.s32 %s116, 3
          %p1889 = scmp.gt.s32.totalorder %s1888, 0
          %s1890 = scalar_select %p1889, %s1888, 0
          %s1892 = ssub.s32 32, 32
          %1893 = vsyncadd %s1884, %s1892
          %s1894 = smul.addr %s1890, 2
          %s1895 = smul.addr %s1894, 16
          %s1896 = scalar_lea.hbm %s55, %s1895
          %s1898 = sshll.u32 %s1887, 4
          %s1899 = int_to_ptr.vmem [resolvable:$true] %s1898
          %1901 = dma.hbm_to_vmem [thread:$0]  %s1896, 32, %s1899, %s1884
        $region144: #{transformer_forward.1} parent=43 // pred_fallthru
          _
        // Predicated region
        $region145: #{transformer_forward.1} parent=43 // pred_check
          %p1902 = pneg %p967
        $region146: #{transformer_forward.1} parent=43 // pred_check_branch
          %1904 = sbr.rel (%p1902) target = $region148
        $region147: #{transformer_forward.1} parent=43 // pred_region
          %s1905 = sand.u32 %s108, 1
          %s1906 = scalar_lea.sflag [#allocation17], %s1905
          %s1907 = sand.u32 %s957, 1
          %s1908 = smul.addr %s1907, 64
          %s1909 = scalar_lea.vmem [#allocation30], %s1908
          %s1910 = ssub.s32 %s116, 3
          %p1911 = scmp.gt.s32.totalorder %s1910, 0
          %s1912 = scalar_select %p1911, %s1910, 0
          %s1914 = ssub.s32 1024, 1024
          %1915 = vsyncadd %s1906, %s1914
          %s1916 = smul.addr %s1912, 16
          %s1917 = smul.addr %s1916, 64
          %s1918 = scalar_lea.hbm %s57, %s1917
          %s1919 = sshll.u32 %s1909, 4
          %s1920 = int_to_ptr.vmem [resolvable:$true] %s1919
          %1925 = dma.hbm_to_vmem [thread:$0]  %s1918, 1024, %s1920, %s1906, 64, 64, 4
        $region148: #{transformer_forward.1} parent=43 // pred_fallthru
          _
        // Predicated region
        $region149: #{transformer_forward.1} parent=43 // pred_check
          %p1926 = pneg %p999
        $region150: #{transformer_forward.1} parent=43 // pred_check_branch
          %1928 = sbr.rel (%p1926) target = $region152
        $region151: #{transformer_forward.1} parent=43 // pred_region
          %s1929 = sand.u32 %s108, 1
          %s1930 = scalar_lea.sflag [#allocation6], %s1929
          %s1931 = sand.u32 %s989, 1
          %s1932 = scalar_lea.vmem [#allocation31], %s1931
          %s1933 = ssub.s32 %s116, 3
          %p1934 = scmp.gt.s32.totalorder %s1933, 0
          %s1935 = scalar_select %p1934, %s1933, 0
          %s1937 = ssub.s32 16, 16
          %1938 = vsyncadd %s1930, %s1937
          %s1939 = smul.addr %s1935, 16
          %s1940 = scalar_lea.hbm %s59, %s1939
          %s1942 = sshll.u32 %s1932, 4
          %s1943 = int_to_ptr.vmem [resolvable:$true] %s1942
          %1945 = dma.hbm_to_vmem [thread:$0]  %s1940, 16, %s1943, %s1930
        $region152: #{transformer_forward.1} parent=43 // pred_fallthru
          _
        // Predicated region
        $region153: #{transformer_forward.1} parent=43 // pred_check
          %p1946 = pneg %p1031
        $region154: #{transformer_forward.1} parent=43 // pred_check_branch
          %1948 = sbr.rel (%p1946) target = $region156
        $region155: #{transformer_forward.1} parent=43 // pred_region
          %s1949 = sand.u32 %s108, 1
          %s1950 = scalar_lea.sflag [#allocation8], %s1949
          %s1951 = sand.u32 %s1021, 1
          %s1952 = scalar_lea.vmem [#allocation32], %s1951
          %s1953 = ssub.s32 %s116, 3
          %p1954 = scmp.gt.s32.totalorder %s1953, 0
          %s1955 = scalar_select %p1954, %s1953, 0
          %s1957 = ssub.s32 16, 16
          %1958 = vsyncadd %s1950, %s1957
          %s1959 = smul.addr %s1955, 16
          %s1960 = scalar_lea.hbm %s61, %s1959
          %s1962 = sshll.u32 %s1952, 4
          %s1963 = int_to_ptr.vmem [resolvable:$true] %s1962
          %1965 = dma.hbm_to_vmem [thread:$0]  %s1960, 16, %s1963, %s1950
        $region156: #{transformer_forward.1} parent=43 // pred_fallthru
          _
        // Predicated region
        $region157: #{transformer_forward.1} parent=43 // pred_check
          %p1966 = pneg %p1063
        $region158: #{transformer_forward.1} parent=43 // pred_check_branch
          %1968 = sbr.rel (%p1966) target = $region160
        $region159: #{transformer_forward.1} parent=43 // pred_region
          %s1969 = sand.u32 %s108, 1
          %s1970 = scalar_lea.sflag [#allocation11], %s1969
          %s1971 = sand.u32 %s1053, 1
          %s1972 = scalar_lea.vmem [#allocation33], %s1971
          %s1973 = ssub.s32 %s116, 3
          %p1974 = scmp.gt.s32.totalorder %s1973, 0
          %s1975 = scalar_select %p1974, %s1973, 0
          %s1977 = ssub.s32 16, 16
          %1978 = vsyncadd %s1970, %s1977
          %s1979 = smul.addr %s1975, 16
          %s1980 = scalar_lea.hbm %s63, %s1979
          %s1982 = sshll.u32 %s1972, 4
          %s1983 = int_to_ptr.vmem [resolvable:$true] %s1982
          %1985 = dma.hbm_to_vmem [thread:$0]  %s1980, 16, %s1983, %s1970
        $region160: #{transformer_forward.1} parent=43 // pred_fallthru
          _
        // Predicated region
        $region161: #{transformer_forward.1} parent=43 // pred_check
          %p1986 = pneg %p1095
        $region162: #{transformer_forward.1} parent=43 // pred_check_branch
          %1988 = sbr.rel (%p1986) target = $region164
        $region163: #{transformer_forward.1} parent=43 // pred_region
          %s1989 = sand.u32 %s108, 1
          %s1990 = scalar_lea.sflag [#allocation14], %s1989
          %s1991 = sand.u32 %s1085, 1
          %s1992 = smul.addr %s1991, 128
          %s1993 = scalar_lea.vmem [#allocation34], %s1992
          %s1994 = ssub.s32 %s116, 3
          %p1995 = scmp.gt.s32.totalorder %s1994, 0
          %s1996 = scalar_select %p1995, %s1994, 0
          %s1998 = ssub.s32 2048, 2048
          %1999 = vsyncadd %s1990, %s1998
          %s2000 = smul.addr %s1996, 32
          %s2001 = smul.addr %s2000, 64
          %s2002 = scalar_lea.hbm %s65, %s2001
          %s2003 = sshll.u32 %s1993, 4
          %s2004 = int_to_ptr.vmem [resolvable:$true] %s2003
          %2009 = dma.hbm_to_vmem [thread:$0]  %s2002, 2048, %s2004, %s1990, 128, 128, 8
        $region164: #{transformer_forward.1} parent=43 // pred_fallthru
          _
        // Predicated region
        $region165: #{transformer_forward.1} parent=43 // pred_check
          %p2010 = pneg %p1127
        $region166: #{transformer_forward.1} parent=43 // pred_check_branch
          %2012 = sbr.rel (%p2010) target = $region168
        $region167: #{transformer_forward.1} parent=43 // pred_region
          %s2013 = sand.u32 %s108, 1
          %s2014 = scalar_lea.sflag [#allocation17], %s2013
          %s2015 = sand.u32 %s1117, 1
          %s2016 = smul.addr %s2015, 2
          %s2017 = scalar_lea.vmem [#allocation35], %s2016
          %s2018 = ssub.s32 %s116, 3
          %p2019 = scmp.gt.s32.totalorder %s2018, 0
          %s2020 = scalar_select %p2019, %s2018, 0
          %s2022 = ssub.s32 32, 32
          %2023 = vsyncadd %s2014, %s2022
          %s2024 = smul.addr %s2020, 2
          %s2025 = smul.addr %s2024, 16
          %s2026 = scalar_lea.hbm %s67, %s2025
          %s2028 = sshll.u32 %s2017, 4
          %s2029 = int_to_ptr.vmem [resolvable:$true] %s2028
          %2031 = dma.hbm_to_vmem [thread:$0]  %s2026, 32, %s2029, %s2014
        $region168: #{transformer_forward.1} parent=43 // pred_fallthru
          _
        // Predicated region
        $region169: #{transformer_forward.1} parent=43 // pred_check
          %p2032 = pneg %p1159
        $region170: #{transformer_forward.1} parent=43 // pred_check_branch
          %2034 = sbr.rel (%p2032) target = $region172
        $region171: #{transformer_forward.1} parent=43 // pred_region
          %s2035 = sand.u32 %s108, 1
          %s2036 = scalar_lea.sflag [#allocation6], %s2035
          %s2037 = sand.u32 %s1149, 1
          %s2038 = smul.addr %s2037, 128
          %s2039 = scalar_lea.vmem [#allocation36], %s2038
          %s2040 = ssub.s32 %s116, 3
          %p2041 = scmp.gt.s32.totalorder %s2040, 0
          %s2042 = scalar_select %p2041, %s2040, 0
          %s2044 = ssub.s32 2048, 2048
          %2045 = vsyncadd %s2036, %s2044
          %s2046 = smul.addr %s2042, 32
          %s2047 = smul.addr %s2046, 64
          %s2048 = scalar_lea.hbm %s69, %s2047
          %s2049 = sshll.u32 %s2039, 4
          %s2050 = int_to_ptr.vmem [resolvable:$true] %s2049
          %2055 = dma.hbm_to_vmem [thread:$0]  %s2048, 2048, %s2050, %s2036, 64, 64, 4
        $region172: #{transformer_forward.1} parent=43 // pred_fallthru
          _
        // Predicated region
        $region173: #{transformer_forward.1} parent=43 // pred_check
          %p2056 = pneg %p1191
        $region174: #{transformer_forward.1} parent=43 // pred_check_branch
          %2058 = sbr.rel (%p2056) target = $region176
        $region175: #{transformer_forward.1} parent=43 // pred_region
          %s2059 = sand.u32 %s108, 1
          %s2060 = scalar_lea.sflag [#allocation8], %s2059
          %s2061 = sand.u32 %s1181, 1
          %s2062 = scalar_lea.vmem [#allocation37], %s2061
          %s2063 = ssub.s32 %s116, 3
          %p2064 = scmp.gt.s32.totalorder %s2063, 0
          %s2065 = scalar_select %p2064, %s2063, 0
          %s2067 = ssub.s32 16, 16
          %2068 = vsyncadd %s2060, %s2067
          %s2069 = smul.addr %s2065, 16
          %s2070 = scalar_lea.hbm %s71, %s2069
          %s2072 = sshll.u32 %s2062, 4
          %s2073 = int_to_ptr.vmem [resolvable:$true] %s2072
          %2075 = dma.hbm_to_vmem [thread:$0]  %s2070, 16, %s2073, %s2060
        $region176: #{transformer_forward.1} parent=43 // pred_fallthru
          _
        // Predicated region
        $region177: #{transformer_forward.1} parent=43 // pred_check
          %p2076 = pneg %p1223
        $region178: #{transformer_forward.1} parent=43 // pred_check_branch
          %2078 = sbr.rel (%p2076) target = $region180
        $region179: #{transformer_forward.1} parent=43 // pred_region
          %s2079 = sand.u32 %s108, 1
          %s2080 = scalar_lea.sflag [#allocation11], %s2079
          %s2081 = sand.u32 %s1213, 1
          %s2082 = scalar_lea.vmem [#allocation38], %s2081
          %s2083 = ssub.s32 %s116, 3
          %p2084 = scmp.gt.s32.totalorder %s2083, 0
          %s2085 = scalar_select %p2084, %s2083, 0
          %s2087 = ssub.s32 16, 16
          %2088 = vsyncadd %s2080, %s2087
          %s2089 = smul.addr %s2085, 16
          %s2090 = scalar_lea.hbm %s73, %s2089
          %s2092 = sshll.u32 %s2082, 4
          %s2093 = int_to_ptr.vmem [resolvable:$true] %s2092
          %2095 = dma.hbm_to_vmem [thread:$0]  %s2090, 16, %s2093, %s2080
        $region180: #{transformer_forward.1} parent=43 // pred_fallthru
          _
        // Predicated region
        $region181: #{transformer_forward.1} parent=43 // pred_check
          %p2096 = pneg %p1255
        $region182: #{transformer_forward.1} parent=43 // pred_check_branch
          %2098 = sbr.rel (%p2096) target = $region184
        $region183: #{transformer_forward.1} parent=43 // pred_region
          %s2099 = sand.u32 %s108, 1
          %s2100 = scalar_lea.sflag [#allocation14], %s2099
          %s2101 = sand.u32 %s1245, 1
          %s2102 = scalar_lea.vmem [#allocation39], %s2101
          %s2103 = ssub.s32 %s116, 3
          %p2104 = scmp.gt.s32.totalorder %s2103, 0
          %s2105 = scalar_select %p2104, %s2103, 0
          %s2107 = ssub.s32 16, 16
          %2108 = vsyncadd %s2100, %s2107
          %s2109 = smul.addr %s2105, 16
          %s2110 = scalar_lea.hbm %s75, %s2109
          %s2112 = sshll.u32 %s2102, 4
          %s2113 = int_to_ptr.vmem [resolvable:$true] %s2112
          %2115 = dma.hbm_to_vmem [thread:$0]  %s2110, 16, %s2113, %s2100
        $region184: #{transformer_forward.1} parent=43 // pred_fallthru
          _
      $region44: #{transformer_forward.1} parent=5 // pred_fallthru
        _
      %p2116 = scmp.le.s32.totalorder 1, %s108
      %p2117 = scmp.lt.s32.totalorder %s108, 13
      %p2118 = pnand %p2116, %p2117
      %p2119 = pneg %p2118
      // Predicated region
      $region185: #{transformer_forward.1} parent=5 // pred_check
        _
      $region186: #{transformer_forward.1} parent=5 // pred_check_branch
        %2121 = sbr.rel (%p2118) target = $region188
      $region187: #{transformer_forward.1} parent=5 // pred_region
        %s2122 = ssub.s32 %s108, 1
        %s2123 = sand.u32 %s113, 1
        %s2124 = scalar_lea.sflag [#allocation6], %s2123
        %s2125 = sand.u32 %s296, 1
        %s2126 = smul.addr %s2125, 64
        %s2127 = scalar_lea.vmem [#allocation5], %s2126
        // Predicated region
        $region189: #{transformer_forward.1} parent=187 // pred_check
          %p2128 = pneg %p309
        $region190: #{transformer_forward.1} parent=187 // pred_check_branch
          %2130 = sbr.rel (%p2128) target = $region192
        $region191: #{transformer_forward.1} parent=187 // pred_region
          %2131 = dma.done %s2124, 1024
        $region192: #{transformer_forward.1} parent=187 // pred_fallthru
          _
        %s2132 = sand.u32 %s113, 1
        %s2133 = scalar_lea.sflag [#allocation8], %s2132
        %s2134 = sand.u32 %s356, 1
        %s2135 = scalar_lea.vmem [#allocation7], %s2134
        // Predicated region
        $region193: #{transformer_forward.1} parent=187 // pred_check
          %p2136 = pneg %p369
        $region194: #{transformer_forward.1} parent=187 // pred_check_branch
          %2138 = sbr.rel (%p2136) target = $region196
        $region195: #{transformer_forward.1} parent=187 // pred_region
          %2139 = dma.done %s2133, 16
        $region196: #{transformer_forward.1} parent=187 // pred_fallthru
          _
        %s2140 = sand.u32 %s113, 1
        %s2141 = scalar_lea.sflag [#allocation8], %s2140
        %s2142 = sand.u32 %s386, 1
        %s2143 = scalar_lea.vmem [#allocation9], %s2142
        // Predicated region
        $region197: #{transformer_forward.1} parent=187 // pred_check
          %p2144 = pneg %p399
        $region198: #{transformer_forward.1} parent=187 // pred_check_branch
          %2146 = sbr.rel (%p2144) target = $region200
        $region199: #{transformer_forward.1} parent=187 // pred_region
          %2147 = dma.done %s2141, 16
        $region200: #{transformer_forward.1} parent=187 // pred_fallthru
          _
        %s2148 = sand.u32 %s113, 1
        %s2149 = scalar_lea.sflag [#allocation11], %s2148
        %s2150 = sand.u32 %s416, 1
        %s2151 = smul.addr %s2150, 128
        %s2152 = scalar_lea.vmem [#allocation10], %s2151
        // Predicated region
        $region201: #{transformer_forward.1} parent=187 // pred_check
          %p2153 = pneg %p429
        $region202: #{transformer_forward.1} parent=187 // pred_check_branch
          %2155 = sbr.rel (%p2153) target = $region204
        $region203: #{transformer_forward.1} parent=187 // pred_region
          %2156 = dma.done %s2149, 2048
        $region204: #{transformer_forward.1} parent=187 // pred_fallthru
          _
        %s2157 = sand.u32 %s113, 1
        %s2158 = scalar_lea.sflag [#allocation11], %s2157
        %s2159 = sand.u32 %s446, 1
        %s2160 = smul.addr %s2159, 2
        %s2161 = scalar_lea.vmem [#allocation12], %s2160
        // Predicated region
        $region205: #{transformer_forward.1} parent=187 // pred_check
          %p2162 = pneg %p459
        $region206: #{transformer_forward.1} parent=187 // pred_check_branch
          %2164 = sbr.rel (%p2162) target = $region208
        $region207: #{transformer_forward.1} parent=187 // pred_region
          %2165 = dma.done %s2158, 32
        $region208: #{transformer_forward.1} parent=187 // pred_fallthru
          _
        %s2166 = sand.u32 %s113, 1
        %s2167 = scalar_lea.sflag [#allocation14], %s2166
        %s2168 = sand.u32 %s476, 1
        %s2169 = smul.addr %s2168, 128
        %s2170 = scalar_lea.vmem [#allocation13], %s2169
        // Predicated region
        $region209: #{transformer_forward.1} parent=187 // pred_check
          %p2171 = pneg %p489
        $region210: #{transformer_forward.1} parent=187 // pred_check_branch
          %2173 = sbr.rel (%p2171) target = $region212
        $region211: #{transformer_forward.1} parent=187 // pred_region
          %2174 = dma.done %s2167, 2048
        $region212: #{transformer_forward.1} parent=187 // pred_fallthru
          _
        %s2175 = sand.u32 %s113, 1
        %s2176 = scalar_lea.sflag [#allocation14], %s2175
        %s2177 = sand.u32 %s506, 1
        %s2178 = scalar_lea.vmem [#allocation15], %s2177
        // Predicated region
        $region213: #{transformer_forward.1} parent=187 // pred_check
          %p2179 = pneg %p519
        $region214: #{transformer_forward.1} parent=187 // pred_check_branch
          %2181 = sbr.rel (%p2179) target = $region216
        $region215: #{transformer_forward.1} parent=187 // pred_region
          %2182 = dma.done %s2176, 16
        $region216: #{transformer_forward.1} parent=187 // pred_fallthru
          _
        %s2183 = sand.u32 %s113, 1
        %s2184 = scalar_lea.sflag [#allocation17], %s2183
        %s2185 = sand.u32 %s536, 1
        %s2186 = scalar_lea.vmem [#allocation16], %s2185
        // Predicated region
        $region217: #{transformer_forward.1} parent=187 // pred_check
          %p2187 = pneg %p549
        $region218: #{transformer_forward.1} parent=187 // pred_check_branch
          %2189 = sbr.rel (%p2187) target = $region220
        $region219: #{transformer_forward.1} parent=187 // pred_region
          %2190 = dma.done %s2184, 16
        $region220: #{transformer_forward.1} parent=187 // pred_fallthru
          _
        %s2191 = sand.u32 %s113, 1
        %s2192 = scalar_lea.sflag [#allocation17], %s2191
        %s2193 = sand.u32 %s566, 1
        %s2194 = scalar_lea.vmem [#allocation18], %s2193
        // Predicated region
        $region221: #{transformer_forward.1} parent=187 // pred_check
          %p2195 = pneg %p579
        $region222: #{transformer_forward.1} parent=187 // pred_check_branch
          %2197 = sbr.rel (%p2195) target = $region224
        $region223: #{transformer_forward.1} parent=187 // pred_region
          %2198 = dma.done %s2192, 16
        $region224: #{transformer_forward.1} parent=187 // pred_fallthru
          _
        // Predicated region
        $region225: #{transformer_forward.1} parent=187 // pred_check
          %p2199 = pneg %p621
        $region226: #{transformer_forward.1} parent=187 // pred_check_branch
          %2201 = sbr.rel (%p2199) target = $region228
        $region227: #{transformer_forward.1} parent=187 // pred_region
          %2202 = dma.done [#allocation20], 16
        $region228: #{transformer_forward.1} parent=187 // pred_fallthru
          _
        %s2203 = sand.u32 %s113, 1
        %s2204 = scalar_lea.sflag [#allocation6], %s2203
        %s2205 = sand.u32 %s640, 1
        %s2206 = smul.addr %s2205, 192
        %s2207 = scalar_lea.vmem [#allocation21], %s2206
        // Predicated region
        $region229: #{transformer_forward.1} parent=187 // pred_check
          %p2208 = pneg %p653
        $region230: #{transformer_forward.1} parent=187 // pred_check_branch
          %2210 = sbr.rel (%p2208) target = $region232
        $region231: #{transformer_forward.1} parent=187 // pred_region
          %2211 = dma.done %s2204, 3072
        $region232: #{transformer_forward.1} parent=187 // pred_fallthru
          _
        %s2212 = sand.u32 %s113, 1
        %s2213 = scalar_lea.sflag [#allocation8], %s2212
        %s2214 = sand.u32 %s704, 1
        %s2215 = smul.addr %s2214, 64
        %s2216 = scalar_lea.vmem [#allocation22], %s2215
        // Predicated region
        $region233: #{transformer_forward.1} parent=187 // pred_check
          %p2217 = pneg %p717
        $region234: #{transformer_forward.1} parent=187 // pred_check_branch
          %2219 = sbr.rel (%p2217) target = $region236
        $region235: #{transformer_forward.1} parent=187 // pred_region
          %2220 = dma.done %s2213, 1024
        $region236: #{transformer_forward.1} parent=187 // pred_fallthru
          _
        %s2221 = sand.u32 %s113, 1
        %s2222 = scalar_lea.sflag [#allocation11], %s2221
        %s2223 = sand.u32 %s736, 1
        %s2224 = scalar_lea.vmem [#allocation23], %s2223
        // Predicated region
        $region237: #{transformer_forward.1} parent=187 // pred_check
          %p2225 = pneg %p749
        $region238: #{transformer_forward.1} parent=187 // pred_check_branch
          %2227 = sbr.rel (%p2225) target = $region240
        $region239: #{transformer_forward.1} parent=187 // pred_region
          %2228 = dma.done %s2222, 16
        $region240: #{transformer_forward.1} parent=187 // pred_fallthru
          _
        %s2229 = sand.u32 %s113, 1
        %s2230 = scalar_lea.sflag [#allocation14], %s2229
        %s2231 = sand.u32 %s768, 1
        %s2232 = scalar_lea.vmem [#allocation24], %s2231
        // Predicated region
        $region241: #{transformer_forward.1} parent=187 // pred_check
          %p2233 = pneg %p781
        $region242: #{transformer_forward.1} parent=187 // pred_check_branch
          %2235 = sbr.rel (%p2233) target = $region244
        $region243: #{transformer_forward.1} parent=187 // pred_region
          %2236 = dma.done %s2230, 16
        $region244: #{transformer_forward.1} parent=187 // pred_fallthru
          _
        %s2237 = sand.u32 %s113, 1
        %s2238 = scalar_lea.sflag [#allocation17], %s2237
        %s2239 = sand.u32 %s800, 1
        %s2240 = scalar_lea.vmem [#allocation25], %s2239
        // Predicated region
        $region245: #{transformer_forward.1} parent=187 // pred_check
          %p2241 = pneg %p813
        $region246: #{transformer_forward.1} parent=187 // pred_check_branch
          %2243 = sbr.rel (%p2241) target = $region248
        $region247: #{transformer_forward.1} parent=187 // pred_region
          %2244 = dma.done %s2238, 16
        $region248: #{transformer_forward.1} parent=187 // pred_fallthru
          _
        %s2245 = sand.u32 %s113, 1
        %s2246 = scalar_lea.sflag [#allocation6], %s2245
        %s2247 = sand.u32 %s832, 1
        %s2248 = smul.addr %s2247, 64
        %s2249 = scalar_lea.vmem [#allocation26], %s2248
        // Predicated region
        $region249: #{transformer_forward.1} parent=187 // pred_check
          %p2250 = pneg %p845
        $region250: #{transformer_forward.1} parent=187 // pred_check_branch
          %2252 = sbr.rel (%p2250) target = $region252
        $region251: #{transformer_forward.1} parent=187 // pred_region
          %2253 = dma.done %s2246, 1024
        $region252: #{transformer_forward.1} parent=187 // pred_fallthru
          _
        %s2254 = sand.u32 %s113, 1
        %s2255 = scalar_lea.sflag [#allocation8], %s2254
        %s2256 = sand.u32 %s864, 1
        %s2257 = scalar_lea.vmem [#allocation27], %s2256
        // Predicated region
        $region253: #{transformer_forward.1} parent=187 // pred_check
          %p2258 = pneg %p877
        $region254: #{transformer_forward.1} parent=187 // pred_check_branch
          %2260 = sbr.rel (%p2258) target = $region256
        $region255: #{transformer_forward.1} parent=187 // pred_region
          %2261 = dma.done %s2255, 16
        $region256: #{transformer_forward.1} parent=187 // pred_fallthru
          _
        %s2262 = sand.u32 %s113, 1
        %s2263 = scalar_lea.sflag [#allocation11], %s2262
        %s2264 = sand.u32 %s896, 1
        %s2265 = smul.addr %s2264, 128
        %s2266 = scalar_lea.vmem [#allocation28], %s2265
        // Predicated region
        $region257: #{transformer_forward.1} parent=187 // pred_check
          %p2267 = pneg %p909
        $region258: #{transformer_forward.1} parent=187 // pred_check_branch
          %2269 = sbr.rel (%p2267) target = $region260
        $region259: #{transformer_forward.1} parent=187 // pred_region
          %2270 = dma.done %s2263, 2048
        $region260: #{transformer_forward.1} parent=187 // pred_fallthru
          _
        %s2271 = sand.u32 %s113, 1
        %s2272 = scalar_lea.sflag [#allocation14], %s2271
        %s2273 = sand.u32 %s928, 1
        %s2274 = smul.addr %s2273, 2
        %s2275 = scalar_lea.vmem [#allocation29], %s2274
        // Predicated region
        $region261: #{transformer_forward.1} parent=187 // pred_check
          %p2276 = pneg %p941
        $region262: #{transformer_forward.1} parent=187 // pred_check_branch
          %2278 = sbr.rel (%p2276) target = $region264
        $region263: #{transformer_forward.1} parent=187 // pred_region
          %2279 = dma.done %s2272, 32
        $region264: #{transformer_forward.1} parent=187 // pred_fallthru
          _
        %s2280 = sand.u32 %s113, 1
        %s2281 = scalar_lea.sflag [#allocation17], %s2280
        %s2282 = sand.u32 %s960, 1
        %s2283 = smul.addr %s2282, 64
        %s2284 = scalar_lea.vmem [#allocation30], %s2283
        // Predicated region
        $region265: #{transformer_forward.1} parent=187 // pred_check
          %p2285 = pneg %p973
        $region266: #{transformer_forward.1} parent=187 // pred_check_branch
          %2287 = sbr.rel (%p2285) target = $region268
        $region267: #{transformer_forward.1} parent=187 // pred_region
          %2288 = dma.done %s2281, 1024
        $region268: #{transformer_forward.1} parent=187 // pred_fallthru
          _
        %s2289 = sand.u32 %s113, 1
        %s2290 = scalar_lea.sflag [#allocation6], %s2289
        %s2291 = sand.u32 %s992, 1
        %s2292 = scalar_lea.vmem [#allocation31], %s2291
        // Predicated region
        $region269: #{transformer_forward.1} parent=187 // pred_check
          %p2293 = pneg %p1005
        $region270: #{transformer_forward.1} parent=187 // pred_check_branch
          %2295 = sbr.rel (%p2293) target = $region272
        $region271: #{transformer_forward.1} parent=187 // pred_region
          %2296 = dma.done %s2290, 16
        $region272: #{transformer_forward.1} parent=187 // pred_fallthru
          _
        %s2297 = sand.u32 %s113, 1
        %s2298 = scalar_lea.sflag [#allocation8], %s2297
        %s2299 = sand.u32 %s1024, 1
        %s2300 = scalar_lea.vmem [#allocation32], %s2299
        // Predicated region
        $region273: #{transformer_forward.1} parent=187 // pred_check
          %p2301 = pneg %p1037
        $region274: #{transformer_forward.1} parent=187 // pred_check_branch
          %2303 = sbr.rel (%p2301) target = $region276
        $region275: #{transformer_forward.1} parent=187 // pred_region
          %2304 = dma.done %s2298, 16
        $region276: #{transformer_forward.1} parent=187 // pred_fallthru
          _
        %s2305 = sand.u32 %s113, 1
        %s2306 = scalar_lea.sflag [#allocation11], %s2305
        %s2307 = sand.u32 %s1056, 1
        %s2308 = scalar_lea.vmem [#allocation33], %s2307
        // Predicated region
        $region277: #{transformer_forward.1} parent=187 // pred_check
          %p2309 = pneg %p1069
        $region278: #{transformer_forward.1} parent=187 // pred_check_branch
          %2311 = sbr.rel (%p2309) target = $region280
        $region279: #{transformer_forward.1} parent=187 // pred_region
          %2312 = dma.done %s2306, 16
        $region280: #{transformer_forward.1} parent=187 // pred_fallthru
          _
        %s2313 = sand.u32 %s113, 1
        %s2314 = scalar_lea.sflag [#allocation14], %s2313
        %s2315 = sand.u32 %s1088, 1
        %s2316 = smul.addr %s2315, 128
        %s2317 = scalar_lea.vmem [#allocation34], %s2316
        // Predicated region
        $region281: #{transformer_forward.1} parent=187 // pred_check
          %p2318 = pneg %p1101
        $region282: #{transformer_forward.1} parent=187 // pred_check_branch
          %2320 = sbr.rel (%p2318) target = $region284
        $region283: #{transformer_forward.1} parent=187 // pred_region
          %2321 = dma.done %s2314, 2048
        $region284: #{transformer_forward.1} parent=187 // pred_fallthru
          _
        %s2322 = sand.u32 %s113, 1
        %s2323 = scalar_lea.sflag [#allocation17], %s2322
        %s2324 = sand.u32 %s1120, 1
        %s2325 = smul.addr %s2324, 2
        %s2326 = scalar_lea.vmem [#allocation35], %s2325
        // Predicated region
        $region285: #{transformer_forward.1} parent=187 // pred_check
          %p2327 = pneg %p1133
        $region286: #{transformer_forward.1} parent=187 // pred_check_branch
          %2329 = sbr.rel (%p2327) target = $region288
        $region287: #{transformer_forward.1} parent=187 // pred_region
          %2330 = dma.done %s2323, 32
        $region288: #{transformer_forward.1} parent=187 // pred_fallthru
          _
        %s2331 = sand.u32 %s113, 1
        %s2332 = scalar_lea.sflag [#allocation6], %s2331
        %s2333 = sand.u32 %s1152, 1
        %s2334 = smul.addr %s2333, 128
        %s2335 = scalar_lea.vmem [#allocation36], %s2334
        // Predicated region
        $region289: #{transformer_forward.1} parent=187 // pred_check
          %p2336 = pneg %p1165
        $region290: #{transformer_forward.1} parent=187 // pred_check_branch
          %2338 = sbr.rel (%p2336) target = $region292
        $region291: #{transformer_forward.1} parent=187 // pred_region
          %2339 = dma.done %s2332, 2048
        $region292: #{transformer_forward.1} parent=187 // pred_fallthru
          _
        %s2340 = sand.u32 %s113, 1
        %s2341 = scalar_lea.sflag [#allocation8], %s2340
        %s2342 = sand.u32 %s1184, 1
        %s2343 = scalar_lea.vmem [#allocation37], %s2342
        // Predicated region
        $region293: #{transformer_forward.1} parent=187 // pred_check
          %p2344 = pneg %p1197
        $region294: #{transformer_forward.1} parent=187 // pred_check_branch
          %2346 = sbr.rel (%p2344) target = $region296
        $region295: #{transformer_forward.1} parent=187 // pred_region
          %2347 = dma.done %s2341, 16
        $region296: #{transformer_forward.1} parent=187 // pred_fallthru
          _
        %s2348 = sand.u32 %s113, 1
        %s2349 = scalar_lea.sflag [#allocation11], %s2348
        %s2350 = sand.u32 %s1216, 1
        %s2351 = scalar_lea.vmem [#allocation38], %s2350
        // Predicated region
        $region297: #{transformer_forward.1} parent=187 // pred_check
          %p2352 = pneg %p1229
        $region298: #{transformer_forward.1} parent=187 // pred_check_branch
          %2354 = sbr.rel (%p2352) target = $region300
        $region299: #{transformer_forward.1} parent=187 // pred_region
          %2355 = dma.done %s2349, 16
        $region300: #{transformer_forward.1} parent=187 // pred_fallthru
          _
        %s2356 = sand.u32 %s113, 1
        %s2357 = scalar_lea.sflag [#allocation14], %s2356
        %s2358 = sand.u32 %s1248, 1
        %s2359 = scalar_lea.vmem [#allocation39], %s2358
        // Predicated region
        $region301: #{transformer_forward.1} parent=187 // pred_check
          %p2360 = pneg %p1261
        $region302: #{transformer_forward.1} parent=187 // pred_check_branch
          %2362 = sbr.rel (%p2360) target = $region304
        $region303: #{transformer_forward.1} parent=187 // pred_region
          %2363 = dma.done %s2357, 16
        $region304: #{transformer_forward.1} parent=187 // pred_fallthru
          _
        // Predicated region
        $region305: #{transformer_forward.1} parent=187 // pred_check
          %p2364 = pneg %p1282
        $region306: #{transformer_forward.1} parent=187 // pred_check_branch
          %2366 = sbr.rel (%p2364) target = $region308
        $region307: #{transformer_forward.1} parent=187 // pred_region
          %2367 = dma.done [#allocation17], 16
        $region308: #{transformer_forward.1} parent=187 // pred_fallthru
          _
        // Predicated region
        $region309: #{transformer_forward.1} parent=187 // pred_check
          %p2368 = pneg %p1303
        $region310: #{transformer_forward.1} parent=187 // pred_check_branch
          %2370 = sbr.rel (%p2368) target = $region312
        $region311: #{transformer_forward.1} parent=187 // pred_region
          %2371 = dma.done [#allocation20], 16
        $region312: #{transformer_forward.1} parent=187 // pred_fallthru
          _
        // Predicated region
        $region313: #{transformer_forward.1} parent=187 // pred_check
          %p2372 = pneg %p1324
        $region314: #{transformer_forward.1} parent=187 // pred_check_branch
          %2374 = sbr.rel (%p2372) target = $region316
        $region315: #{transformer_forward.1} parent=187 // pred_region
          %2375 = dma.done [#allocation43], 1024
        $region316: #{transformer_forward.1} parent=187 // pred_fallthru
          _
        // Predicated region
        $region317: #{transformer_forward.1} parent=187 // pred_check
          %p2376 = pneg %p1345
        $region318: #{transformer_forward.1} parent=187 // pred_check_branch
          %2378 = sbr.rel (%p2376) target = $region320
        $region319: #{transformer_forward.1} parent=187 // pred_region
          %2379 = dma.done [#allocation43], 16
        $region320: #{transformer_forward.1} parent=187 // pred_fallthru
          _
        %p2380 = scmp.lt.s32.totalorder %s117, 1
        %s2381 = scalar_select %p2380, %s117, 1
        %s2382 = smul.addr %s2381, 8
        %s2383 = scalar_lea.vmem %s1, %s2382
        %p2384 = pneg %p146
        %p2385 = pneg %p143
        %p2386 = scmp.lt.s32.totalorder %s117, 1
        %s2387 = scalar_select %p2386, %s117, 1
        %s2388 = smul.addr %s2387, 8
        %s2389 = scalar_lea.vmem %s3, %s2388
        %p2390 = pneg %p172
        %p2391 = pneg %p169
        %p2392 = scmp.lt.s32.totalorder %s117, 1
        %s2393 = scalar_select %p2392, %s117, 1
        %s2394 = scalar_lea.vmem %s5, %s2393
        %p2395 = pneg %p198
        %p2396 = pneg %p195
        %p2397 = pneg %p219
        %p2398 = pneg %p216
        %p2399 = scmp.lt.s32.totalorder %s118, 2
        %s2400 = scalar_select %p2399, %s118, 2
        %p2401 = scmp.lt.s32.totalorder %s2400, 2
        %s2402 = scalar_select %p2401, %s2400, 2
        %s2403 = smul.addr %s2402, 48
        %s2404 = smul.addr %s2403, 4
        %s2405 = scalar_lea.vmem %s9, %s2404
        %p2406 = pneg %p249
        %p2407 = pneg %p246
        %p2408 = scmp.lt.s32.totalorder %s118, 2
        %s2409 = scalar_select %p2408, %s118, 2
        %p2410 = scmp.lt.s32.totalorder %s2409, 2
        %s2411 = scalar_select %p2410, %s2409, 2
        %s2412 = smul.addr %s2411, 3
        %s2413 = scalar_lea.vmem %s11, %s2412
        %p2414 = pneg %p279
        %p2415 = pneg %p276
        %s2416 = sand.u32 %s113, 1
        %s2417 = scalar_lea.sflag [#allocation6], %s2416
        %s2418 = sand.u32 %s296, 1
        %s2419 = smul.addr %s2418, 64
        %s2420 = scalar_lea.vmem [#allocation5], %s2419
        %p2421 = pneg %p309
        %p2422 = pneg %p306
        %p2423 = scmp.lt.s32.totalorder %s118, 2
        %s2424 = scalar_select %p2423, %s118, 2
        %p2425 = scmp.lt.s32.totalorder %s2424, 2
        %s2426 = scalar_select %p2425, %s2424, 2
        %s2427 = scalar_lea.vmem %s15, %s2426
        %p2428 = pneg %p339
        %p2429 = pneg %p336
        %s2430 = sand.u32 %s113, 1
        %s2431 = scalar_lea.sflag [#allocation8], %s2430
        %s2432 = sand.u32 %s356, 1
        %s2433 = scalar_lea.vmem [#allocation7], %s2432
        %p2434 = pneg %p369
        %p2435 = pneg %p366
        %s2436 = sand.u32 %s113, 1
        %s2437 = scalar_lea.sflag [#allocation8], %s2436
        %s2438 = sand.u32 %s386, 1
        %s2439 = scalar_lea.vmem [#allocation9], %s2438
        %p2440 = pneg %p399
        %p2441 = pneg %p396
        %s2442 = sand.u32 %s113, 1
        %s2443 = scalar_lea.sflag [#allocation11], %s2442
        %s2444 = sand.u32 %s416, 1
        %s2445 = smul.addr %s2444, 128
        %s2446 = scalar_lea.vmem [#allocation10], %s2445
        %p2447 = pneg %p429
        %p2448 = pneg %p426
        %s2449 = sand.u32 %s113, 1
        %s2450 = scalar_lea.sflag [#allocation11], %s2449
        %s2451 = sand.u32 %s446, 1
        %s2452 = smul.addr %s2451, 2
        %s2453 = scalar_lea.vmem [#allocation12], %s2452
        %p2454 = pneg %p459
        %p2455 = pneg %p456
        %s2456 = sand.u32 %s113, 1
        %s2457 = scalar_lea.sflag [#allocation14], %s2456
        %s2458 = sand.u32 %s476, 1
        %s2459 = smul.addr %s2458, 128
        %s2460 = scalar_lea.vmem [#allocation13], %s2459
        %p2461 = pneg %p489
        %p2462 = pneg %p486
        %s2463 = sand.u32 %s113, 1
        %s2464 = scalar_lea.sflag [#allocation14], %s2463
        %s2465 = sand.u32 %s506, 1
        %s2466 = scalar_lea.vmem [#allocation15], %s2465
        %p2467 = pneg %p519
        %p2468 = pneg %p516
        %s2469 = sand.u32 %s113, 1
        %s2470 = scalar_lea.sflag [#allocation17], %s2469
        %s2471 = sand.u32 %s536, 1
        %s2472 = scalar_lea.vmem [#allocation16], %s2471
        %p2473 = pneg %p549
        %p2474 = pneg %p546
        %s2475 = sand.u32 %s113, 1
        %s2476 = scalar_lea.sflag [#allocation17], %s2475
        %s2477 = sand.u32 %s566, 1
        %s2478 = scalar_lea.vmem [#allocation18], %s2477
        %p2479 = pneg %p579
        %p2480 = pneg %p576
        %p2481 = pneg %p600
        %p2482 = pneg %p597
        %p2483 = pneg %p621
        %p2484 = pneg %p618
        %s2485 = sand.u32 %s113, 1
        %s2486 = scalar_lea.sflag [#allocation6], %s2485
        %s2487 = sand.u32 %s640, 1
        %s2488 = smul.addr %s2487, 192
        %s2489 = scalar_lea.vmem [#allocation21], %s2488
        %p2490 = pneg %p653
        %p2491 = pneg %p650
        %s2492 = ssub.s32 %s118, 3
        %p2493 = scmp.gt.s32.totalorder %s2492, 0
        %s2494 = scalar_select %p2493, %s2492, 0
        %p2495 = scmp.lt.s32.totalorder %s2494, 2
        %s2496 = scalar_select %p2495, %s2494, 2
        %s2497 = smul.addr %s2496, 3
        %s2498 = scalar_lea.vmem %s39, %s2497
        %p2499 = pneg %p685
        %p2500 = pneg %p682
        %s2501 = sand.u32 %s113, 1
        %s2502 = scalar_lea.sflag [#allocation8], %s2501
        %s2503 = sand.u32 %s704, 1
        %s2504 = smul.addr %s2503, 64
        %s2505 = scalar_lea.vmem [#allocation22], %s2504
        %p2506 = pneg %p717
        %p2507 = pneg %p714
        %s2508 = sand.u32 %s113, 1
        %s2509 = scalar_lea.sflag [#allocation11], %s2508
        %s2510 = sand.u32 %s736, 1
        %s2511 = scalar_lea.vmem [#allocation23], %s2510
        %p2512 = pneg %p749
        %p2513 = pneg %p746
        %s2514 = sand.u32 %s113, 1
        %s2515 = scalar_lea.sflag [#allocation14], %s2514
        %s2516 = sand.u32 %s768, 1
        %s2517 = scalar_lea.vmem [#allocation24], %s2516
        %p2518 = pneg %p781
        %p2519 = pneg %p778
        %s2520 = sand.u32 %s113, 1
        %s2521 = scalar_lea.sflag [#allocation17], %s2520
        %s2522 = sand.u32 %s800, 1
        %s2523 = scalar_lea.vmem [#allocation25], %s2522
        %p2524 = pneg %p813
        %p2525 = pneg %p810
        %s2526 = sand.u32 %s113, 1
        %s2527 = scalar_lea.sflag [#allocation6], %s2526
        %s2528 = sand.u32 %s832, 1
        %s2529 = smul.addr %s2528, 64
        %s2530 = scalar_lea.vmem [#allocation26], %s2529
        %p2531 = pneg %p845
        %p2532 = pneg %p842
        %s2533 = sand.u32 %s113, 1
        %s2534 = scalar_lea.sflag [#allocation8], %s2533
        %s2535 = sand.u32 %s864, 1
        %s2536 = scalar_lea.vmem [#allocation27], %s2535
        %p2537 = pneg %p877
        %p2538 = pneg %p874
        %s2539 = sand.u32 %s113, 1
        %s2540 = scalar_lea.sflag [#allocation11], %s2539
        %s2541 = sand.u32 %s896, 1
        %s2542 = smul.addr %s2541, 128
        %s2543 = scalar_lea.vmem [#allocation28], %s2542
        %p2544 = pneg %p909
        %p2545 = pneg %p906
        %s2546 = sand.u32 %s113, 1
        %s2547 = scalar_lea.sflag [#allocation14], %s2546
        %s2548 = sand.u32 %s928, 1
        %s2549 = smul.addr %s2548, 2
        %s2550 = scalar_lea.vmem [#allocation29], %s2549
        %p2551 = pneg %p941
        %p2552 = pneg %p938
        %s2553 = sand.u32 %s113, 1
        %s2554 = scalar_lea.sflag [#allocation17], %s2553
        %s2555 = sand.u32 %s960, 1
        %s2556 = smul.addr %s2555, 64
        %s2557 = scalar_lea.vmem [#allocation30], %s2556
        %p2558 = pneg %p973
        %p2559 = pneg %p970
        %s2560 = sand.u32 %s113, 1
        %s2561 = scalar_lea.sflag [#allocation6], %s2560
        %s2562 = sand.u32 %s992, 1
        %s2563 = scalar_lea.vmem [#allocation31], %s2562
        %p2564 = pneg %p1005
        %p2565 = pneg %p1002
        %s2566 = sand.u32 %s113, 1
        %s2567 = scalar_lea.sflag [#allocation8], %s2566
        %s2568 = sand.u32 %s1024, 1
        %s2569 = scalar_lea.vmem [#allocation32], %s2568
        %p2570 = pneg %p1037
        %p2571 = pneg %p1034
        %s2572 = sand.u32 %s113, 1
        %s2573 = scalar_lea.sflag [#allocation11], %s2572
        %s2574 = sand.u32 %s1056, 1
        %s2575 = scalar_lea.vmem [#allocation33], %s2574
        %p2576 = pneg %p1069
        %p2577 = pneg %p1066
        %s2578 = sand.u32 %s113, 1
        %s2579 = scalar_lea.sflag [#allocation14], %s2578
        %s2580 = sand.u32 %s1088, 1
        %s2581 = smul.addr %s2580, 128
        %s2582 = scalar_lea.vmem [#allocation34], %s2581
        %p2583 = pneg %p1101
        %p2584 = pneg %p1098
        %s2585 = sand.u32 %s113, 1
        %s2586 = scalar_lea.sflag [#allocation17], %s2585
        %s2587 = sand.u32 %s1120, 1
        %s2588 = smul.addr %s2587, 2
        %s2589 = scalar_lea.vmem [#allocation35], %s2588
        %p2590 = pneg %p1133
        %p2591 = pneg %p1130
        %s2592 = sand.u32 %s113, 1
        %s2593 = scalar_lea.sflag [#allocation6], %s2592
        %s2594 = sand.u32 %s1152, 1
        %s2595 = smul.addr %s2594, 128
        %s2596 = scalar_lea.vmem [#allocation36], %s2595
        %p2597 = pneg %p1165
        %p2598 = pneg %p1162
        %s2599 = sand.u32 %s113, 1
        %s2600 = scalar_lea.sflag [#allocation8], %s2599
        %s2601 = sand.u32 %s1184, 1
        %s2602 = scalar_lea.vmem [#allocation37], %s2601
        %p2603 = pneg %p1197
        %p2604 = pneg %p1194
        %s2605 = sand.u32 %s113, 1
        %s2606 = scalar_lea.sflag [#allocation11], %s2605
        %s2607 = sand.u32 %s1216, 1
        %s2608 = scalar_lea.vmem [#allocation38], %s2607
        %p2609 = pneg %p1229
        %p2610 = pneg %p1226
        %s2611 = sand.u32 %s113, 1
        %s2612 = scalar_lea.sflag [#allocation14], %s2611
        %s2613 = sand.u32 %s1248, 1
        %s2614 = scalar_lea.vmem [#allocation39], %s2613
        %p2615 = pneg %p1261
        %p2616 = pneg %p1258
        %p2617 = pneg %p1282
        %p2618 = pneg %p1279
        %p2619 = pneg %p1303
        %p2620 = pneg %p1300
        %p2621 = pneg %p1324
        %p2622 = pneg %p1321
        %p2623 = pneg %p1345
        %p2624 = pneg %p1342
        %p2625 = pneg %p1371
        %p2626 = pneg %p1368
        %p2627 = scmp.lt.s32.totalorder %s117, 1
        %s2628 = scalar_select %p2627, %s117, 1
        %s2629 = smul.addr %s2628, 8
        %s2630 = scalar_lea.vmem %s85, %s2629
        %p2631 = scmp.lt.s32.totalorder %s117, 1
        %s2632 = scalar_select %p2631, %s117, 1
        %s2633 = smul.addr %s2632, 8
        %s2634 = scalar_lea.vmem %s1, %s2633
        %p2635 = scmp.lt.s32.totalorder %s117, 1
        %s2636 = scalar_select %p2635, %s117, 1
        %s2637 = smul.addr %s2636, 8
        %s2638 = scalar_lea.vmem %s3, %s2637
        %p2639 = scmp.lt.s32.totalorder %s117, 1
        %s2640 = scalar_select %p2639, %s117, 1
        %s2641 = scalar_lea.vmem %s5, %s2640
        %p2642 = scmp.lt.s32.totalorder %s118, 2
        %s2643 = scalar_select %p2642, %s118, 2
        %p2644 = scmp.lt.s32.totalorder %s2643, 2
        %s2645 = scalar_select %p2644, %s2643, 2
        %s2646 = smul.addr %s2645, 48
        %s2647 = smul.addr %s2646, 4
        %s2648 = scalar_lea.vmem %s9, %s2647
        %p2649 = scmp.lt.s32.totalorder %s118, 2
        %s2650 = scalar_select %p2649, %s118, 2
        %p2651 = scmp.lt.s32.totalorder %s118, 2
        %s2652 = scalar_select %p2651, %s118, 2
        %p2653 = scmp.lt.s32.totalorder %s2652, 2
        %s2654 = scalar_select %p2653, %s2652, 2
        %s2655 = smul.addr %s2654, 3
        %s2656 = scalar_lea.vmem %s11, %s2655
        %p2657 = scmp.lt.s32.totalorder %s118, 2
        %s2658 = scalar_select %p2657, %s118, 2
        %p2659 = scmp.lt.s32.totalorder %s118, 2
        %s2660 = scalar_select %p2659, %s118, 2
        %p2661 = scmp.lt.s32.totalorder %s118, 2
        %s2662 = scalar_select %p2661, %s118, 2
        %p2663 = scmp.lt.s32.totalorder %s2662, 2
        %s2664 = scalar_select %p2663, %s2662, 2
        %s2665 = scalar_lea.vmem %s15, %s2664
        %p2666 = scmp.lt.s32.totalorder %s118, 2
        %s2667 = scalar_select %p2666, %s118, 2
        %p2668 = scmp.lt.s32.totalorder %s118, 2
        %s2669 = scalar_select %p2668, %s118, 2
        %p2670 = scmp.lt.s32.totalorder %s118, 2
        %s2671 = scalar_select %p2670, %s118, 2
        %p2672 = scmp.lt.s32.totalorder %s118, 2
        %s2673 = scalar_select %p2672, %s118, 2
        %p2674 = scmp.lt.s32.totalorder %s118, 2
        %s2675 = scalar_select %p2674, %s118, 2
        %p2676 = scmp.lt.s32.totalorder %s118, 2
        %s2677 = scalar_select %p2676, %s118, 2
        %p2678 = scmp.lt.s32.totalorder %s118, 2
        %s2679 = scalar_select %p2678, %s118, 2
        %p2680 = scmp.lt.s32.totalorder %s118, 2
        %s2681 = scalar_select %p2680, %s118, 2
        %p2682 = scmp.lt.s32.totalorder %s118, 2
        %s2683 = scalar_select %p2682, %s118, 2
        %s2684 = ssub.s32 %s118, 3
        %p2685 = scmp.gt.s32.totalorder %s2684, 0
        %s2686 = scalar_select %p2685, %s2684, 0
        %s2687 = ssub.s32 %s118, 3
        %p2688 = scmp.gt.s32.totalorder %s2687, 0
        %s2689 = scalar_select %p2688, %s2687, 0
        %p2690 = scmp.lt.s32.totalorder %s2689, 2
        %s2691 = scalar_select %p2690, %s2689, 2
        %s2692 = smul.addr %s2691, 3
        %s2693 = scalar_lea.vmem %s39, %s2692
        %s2694 = ssub.s32 %s118, 3
        %p2695 = scmp.gt.s32.totalorder %s2694, 0
        %s2696 = scalar_select %p2695, %s2694, 0
        %s2697 = ssub.s32 %s118, 3
        %p2698 = scmp.gt.s32.totalorder %s2697, 0
        %s2699 = scalar_select %p2698, %s2697, 0
        %s2700 = ssub.s32 %s118, 3
        %p2701 = scmp.gt.s32.totalorder %s2700, 0
        %s2702 = scalar_select %p2701, %s2700, 0
        %s2703 = ssub.s32 %s118, 3
        %p2704 = scmp.gt.s32.totalorder %s2703, 0
        %s2705 = scalar_select %p2704, %s2703, 0
        %s2706 = ssub.s32 %s118, 3
        %p2707 = scmp.gt.s32.totalorder %s2706, 0
        %s2708 = scalar_select %p2707, %s2706, 0
        %s2709 = ssub.s32 %s118, 3
        %p2710 = scmp.gt.s32.totalorder %s2709, 0
        %s2711 = scalar_select %p2710, %s2709, 0
        %s2712 = ssub.s32 %s118, 3
        %p2713 = scmp.gt.s32.totalorder %s2712, 0
        %s2714 = scalar_select %p2713, %s2712, 0
        %s2715 = ssub.s32 %s118, 3
        %p2716 = scmp.gt.s32.totalorder %s2715, 0
        %s2717 = scalar_select %p2716, %s2715, 0
        %s2718 = ssub.s32 %s118, 3
        %p2719 = scmp.gt.s32.totalorder %s2718, 0
        %s2720 = scalar_select %p2719, %s2718, 0
        %s2721 = ssub.s32 %s118, 3
        %p2722 = scmp.gt.s32.totalorder %s2721, 0
        %s2723 = scalar_select %p2722, %s2721, 0
        %s2724 = ssub.s32 %s118, 3
        %p2725 = scmp.gt.s32.totalorder %s2724, 0
        %s2726 = scalar_select %p2725, %s2724, 0
        %s2727 = ssub.s32 %s118, 3
        %p2728 = scmp.gt.s32.totalorder %s2727, 0
        %s2729 = scalar_select %p2728, %s2727, 0
        %s2730 = ssub.s32 %s118, 3
        %p2731 = scmp.gt.s32.totalorder %s2730, 0
        %s2732 = scalar_select %p2731, %s2730, 0
        %s2733 = ssub.s32 %s118, 3
        %p2734 = scmp.gt.s32.totalorder %s2733, 0
        %s2735 = scalar_select %p2734, %s2733, 0
        %s2736 = ssub.s32 %s118, 3
        %p2737 = scmp.gt.s32.totalorder %s2736, 0
        %s2738 = scalar_select %p2737, %s2736, 0
        %s2739 = ssub.s32 %s118, 3
        %p2740 = scmp.gt.s32.totalorder %s2739, 0
        %s2741 = scalar_select %p2740, %s2739, 0
        %s2742 = ssub.s32 %s118, 3
        %p2743 = scmp.gt.s32.totalorder %s2742, 0
        %s2744 = scalar_select %p2743, %s2742, 0
        %s2745 = ssub.s32 %s118, 3
        %p2746 = scmp.gt.s32.totalorder %s2745, 0
        %s2747 = scalar_select %p2746, %s2745, 0
        %s2748 = ssub.s32 %s118, 3
        %p2749 = scmp.gt.s32.totalorder %s2748, 0
        %s2750 = scalar_select %p2749, %s2748, 0
        %p2751 = scmp.lt.s32.totalorder %s117, 1
        %s2752 = scalar_select %p2751, %s117, 1
        %s2753 = smul.addr %s2752, 8
        %s2754 = scalar_lea.vmem %s85, %s2753
        %p2756 = scmp.eq.s32.totalorder %s118, 0
        // Predicated region
        $region321: #{transformer_forward.1} parent=187 // pred_check
          %p2757 = pneg %p2756
        $region322: #{transformer_forward.1} parent=187 // pred_check_branch
          %2759 = sbr.rel (%p2757) target = $region324
        $region323: #{transformer_forward.1} parent=187 // pred_region
          %v2760 = vld [vmem:[%s2634] sm:$0xff]
          %2761 = vst [vmem:[#allocation2] sm:$0xff] %v2760
          %v2762 = vld [vmem:[%s2638] sm:$0xff]
          %2763 = vst [vmem:[#allocation4] sm:$0xff] %v2762
        $region324: #{transformer_forward.1} parent=187 // pred_fallthru
          _
        %p2764 = scmp.lt.s32.totalorder %s118, 3
        // Predicated region
        $region325: #{transformer_forward.1} parent=187 // pred_check
          %p2765 = pneg %p2764
        $region326: #{transformer_forward.1} parent=187 // pred_check_branch
          %2767 = sbr.rel (%p2765) target = $region328
        $region327: #{transformer_forward.1} parent=187 // pred_region
          %v2768 = vld [vmem:[#allocation2] sm:$0xff]
          %v2769 = vld [vmem:[%s2641] sm:$0x1]
          %v2770 = vpack.c.bf16 %v2768, %v2768
          %v2771 = vld [vmem:[%s2648] sm:$0xff]
          %v2772 = vld [vmem:[%s2648 + $0x8] sm:$0xf]
          %v2773 = vld [vmem:[%s2648 + $0xc] sm:$0xff]
          %v2774 = vld [vmem:[%s2648 + $0x14] sm:$0xf]
          %v2775 = vld [vmem:[%s2648 + $0x18] sm:$0xff]
          %v2776 = vld [vmem:[%s2648 + $0x20] sm:$0xf]
          %v2777 = vld [vmem:[%s2648 + $0x24] sm:$0xff]
          %v2778 = vld [vmem:[%s2648 + $0x2c] sm:$0xf]
          %v2779 = vld [vmem:[%s2648 + $0x30] sm:$0xff]
          %v2780 = vld [vmem:[%s2648 + $0x38] sm:$0xf]
          %v2781 = vld [vmem:[%s2648 + $0x3c] sm:$0xff]
          %v2782 = vld [vmem:[%s2648 + $0x44] sm:$0xf]
          %v2783 = vld [vmem:[%s2648 + $0x48] sm:$0xff]
          %v2784 = vld [vmem:[%s2648 + $0x50] sm:$0xf]
          %v2785 = vld [vmem:[%s2648 + $0x54] sm:$0xff]
          %v2786 = vld [vmem:[%s2648 + $0x5c] sm:$0xf]
          %v2787 = vld [vmem:[%s2648 + $0x60] sm:$0xff]
          %v2788 = vld [vmem:[%s2648 + $0x68] sm:$0xf]
          %v2789 = vld [vmem:[%s2648 + $0x6c] sm:$0xff]
          %v2790 = vld [vmem:[%s2648 + $0x74] sm:$0xf]
          %v2791 = vld [vmem:[%s2648 + $0x78] sm:$0xff]
          %v2792 = vld [vmem:[%s2648 + $0x80] sm:$0xf]
          %v2793 = vld [vmem:[%s2648 + $0x84] sm:$0xff]
          %v2794 = vld [vmem:[%s2648 + $0x8c] sm:$0xf]
          %v2795 = vld [vmem:[%s2648 + $0x90] sm:$0xff]
          %v2796 = vld [vmem:[%s2648 + $0x98] sm:$0xf]
          %v2797 = vld [vmem:[%s2648 + $0x9c] sm:$0xff]
          %v2798 = vld [vmem:[%s2648 + $0xa4] sm:$0xf]
          %v2799 = vld [vmem:[%s2648 + $0xa8] sm:$0xff]
          %v2800 = vld [vmem:[%s2648 + $0xb0] sm:$0xf]
          %v2801 = vld [vmem:[%s2648 + $0xb4] sm:$0xff]
          %v2802 = vld [vmem:[%s2648 + $0xbc] sm:$0xf]
          %v2803 = vld [vmem:[%s2656] sm:$0x7]
          %v2805 = vlaneseq
          %v2806 = vshrl.u32 %v2805, 7
          %v2807 = vsub.s32 0, %v2806
          %v2808 = vrot.slane %v2803, %v2807
          %v2809 = vlaneseq
          %v2810 = vshrl.u32 %v2809, 7
          %v2811 = vsub.s32 1, %v2810
          %v2812 = vrot.slane %v2803, %v2811
          %v2813 = vlaneseq
          %v2814 = vshrl.u32 %v2813, 7
          %v2815 = vsub.s32 2, %v2814
          %v2816 = vrot.slane %v2803, %v2815
          %v2852 = vunpack.c.l.b16 %v2771
          %v2853 = vunpack.c.h.b16 %v2771
          %v2854 = vunpack.c.l.b16 %v2772
          %v2855 = vunpack.c.l.b16 %v2773
          %v2856 = vunpack.c.h.b16 %v2773
          %v2857 = vunpack.c.l.b16 %v2774
          %v2858 = vunpack.c.l.b16 %v2775
          %v2859 = vunpack.c.h.b16 %v2775
          %v2860 = vunpack.c.l.b16 %v2776
          %v2861 = vunpack.c.l.b16 %v2777
          %v2862 = vunpack.c.h.b16 %v2777
          %v2863 = vunpack.c.l.b16 %v2778
          %v2864 = vunpack.c.l.b16 %v2779
          %v2865 = vunpack.c.h.b16 %v2779
          %v2866 = vunpack.c.l.b16 %v2780
          %v2867 = vunpack.c.l.b16 %v2781
          %v2868 = vunpack.c.h.b16 %v2781
          %v2869 = vunpack.c.l.b16 %v2782
          %v2870 = vunpack.c.l.b16 %v2783
          %v2871 = vunpack.c.h.b16 %v2783
          %v2872 = vunpack.c.l.b16 %v2784
          %v2873 = vunpack.c.l.b16 %v2785
          %v2874 = vunpack.c.h.b16 %v2785
          %v2875 = vunpack.c.l.b16 %v2786
          %v2876 = vunpack.c.l.b16 %v2787
          %v2877 = vunpack.c.h.b16 %v2787
          %v2878 = vunpack.c.l.b16 %v2788
          %v2879 = vunpack.c.l.b16 %v2789
          %v2880 = vunpack.c.h.b16 %v2789
          %v2881 = vunpack.c.l.b16 %v2790
          %v2882 = vunpack.c.l.b16 %v2791
          %v2883 = vunpack.c.h.b16 %v2791
          %v2884 = vunpack.c.l.b16 %v2792
          %v2885 = vunpack.c.l.b16 %v2793
          %v2886 = vunpack.c.h.b16 %v2793
          %v2887 = vunpack.c.l.b16 %v2794
          %v2888 = vunpack.c.l.b16 %v2795
          %v2889 = vunpack.c.h.b16 %v2795
          %v2890 = vunpack.c.l.b16 %v2796
          %v2891 = vunpack.c.l.b16 %v2797
          %v2892 = vunpack.c.h.b16 %v2797
          %v2893 = vunpack.c.l.b16 %v2798
          %v2894 = vunpack.c.l.b16 %v2799
          %v2895 = vunpack.c.h.b16 %v2799
          %v2896 = vunpack.c.l.b16 %v2800
          %v2897 = vunpack.c.l.b16 %v2801
          %v2898 = vunpack.c.h.b16 %v2801
          %v2899 = vunpack.c.l.b16 %v2802
          %v2900 = vpack.c.b16 %v2855, %v2852
          %v2901 = vpack.c.b16 %v2856, %v2853
          %v2902 = vpack.c.b16 %v2857, %v2854
          %v2903 = vpack.c.b16 %v2861, %v2858
          %v2904 = vpack.c.b16 %v2862, %v2859
          %v2905 = vpack.c.b16 %v2863, %v2860
          %v2906 = vpack.c.b16 %v2867, %v2864
          %v2907 = vpack.c.b16 %v2868, %v2865
          %v2908 = vpack.c.b16 %v2869, %v2866
          %v2909 = vpack.c.b16 %v2873, %v2870
          %v2910 = vpack.c.b16 %v2874, %v2871
          %v2911 = vpack.c.b16 %v2875, %v2872
          %v2912 = vpack.c.b16 %v2879, %v2876
          %v2913 = vpack.c.b16 %v2880, %v2877
          %v2914 = vpack.c.b16 %v2881, %v2878
          %v2915 = vpack.c.b16 %v2885, %v2882
          %v2916 = vpack.c.b16 %v2886, %v2883
          %v2917 = vpack.c.b16 %v2887, %v2884
          %v2918 = vpack.c.b16 %v2891, %v2888
          %v2919 = vpack.c.b16 %v2892, %v2889
          %v2920 = vpack.c.b16 %v2893, %v2890
          %v2921 = vpack.c.b16 %v2897, %v2894
          %v2922 = vpack.c.b16 %v2898, %v2895
          %v2923 = vpack.c.b16 %v2899, %v2896
          %2948 = vmatprep.subr.bf16.mxu0 %v2901
          %2949 = vmatpush1.bf16.msra.mxu0 %v2900
          %2950 = vmatprep.subr.bf16.mxu0 %v2904
          %2951 = vmatpush1.bf16.msra.mxu0 %v2903
          %2952 = vmatprep.subr.bf16.mxu0 %v2907
          %2953 = vmatpush1.bf16.msra.mxu0 %v2906
          %2954 = vmatprep.subr.bf16.mxu0 %v2910
          %2955 = vmatpush1.bf16.msra.mxu0 %v2909
          %2956 = vmatprep.subr.bf16.mxu0 %v2913
          %2957 = vmatpush1.bf16.msra.mxu0 %v2912
          %2958 = vmatprep.subr.bf16.mxu0 %v2916
          %2959 = vmatpush1.bf16.msra.mxu0 %v2915
          %2960 = vmatprep.subr.bf16.mxu0 %v2919
          %2961 = vmatpush1.bf16.msra.mxu0 %v2918
          %2962 = vmatprep.subr.bf16.mxu0 %v2922
          %2963 = vmatpush1.bf16.msra.mxu0 %v2921
          %2964 = vmatprep.subr.bf16.mxu0 0
          %2965 = vmatpush1.bf16.msra.mxu0 0
          %2966 = vmatprep.subr.bf16.mxu0 0
          %2967 = vmatpush1.bf16.msra.mxu0 0
          %2968 = vmatprep.subr.bf16.mxu0 0
          %2969 = vmatpush1.bf16.msra.mxu0 0
          %2970 = vmatprep.subr.bf16.mxu0 0
          %2971 = vmatpush1.bf16.msra.mxu0 0
          %2972 = vmatprep.subr.bf16.mxu0 0
          %2973 = vmatpush1.bf16.msra.mxu0 0
          %2974 = vmatprep.subr.bf16.mxu0 0
          %2975 = vmatpush1.bf16.msra.mxu0 0
          %2976 = vmatprep.subr.bf16.mxu0 0
          %2977 = vmatpush1.bf16.msra.mxu0 0
          %2978 = vmatprep.subr.bf16.mxu0 0
          %2979 = vmatpush1.bf16.msra.mxu0 0
          %2980 = vmatprep.mubr.bf16.mxu0 0
          %2981 = vmatmul.mubr.bf16.gmra.mrb[0].mxu0 %v2770
          %v2982 = vpop.f32.mrb[0].mxu0
          %v2983 = vadd.f32 %v2808, %v2982
          %v2984 = vpop.f32.mrb[0].mxu0
          %v2985 = vadd.f32 %v2812, %v2984
          %v2986 = vpop.f32.mrb[0].mxu0
          %v2987 = vpop.f32.mrb[0].mxu0
          %2988 = vdwg.mxu0
          %2989 = vmatprep.subr.bf16.mxu0 0
          %2990 = vmatpush1.bf16.msra.mxu0 %v2902
          %2991 = vmatprep.subr.bf16.mxu0 0
          %2992 = vmatpush1.bf16.msra.mxu0 %v2905
          %2993 = vmatprep.subr.bf16.mxu0 0
          %2994 = vmatpush1.bf16.msra.mxu0 %v2908
          %2995 = vmatprep.subr.bf16.mxu0 0
          %2996 = vmatpush1.bf16.msra.mxu0 %v2911
          %2997 = vmatprep.subr.bf16.mxu0 0
          %2998 = vmatpush1.bf16.msra.mxu0 %v2914
          %2999 = vmatprep.subr.bf16.mxu0 0
          %3000 = vmatpush1.bf16.msra.mxu0 %v2917
          %3001 = vmatprep.subr.bf16.mxu0 0
          %3002 = vmatpush1.bf16.msra.mxu0 %v2920
          %3003 = vmatprep.subr.bf16.mxu0 0
          %3004 = vmatpush1.bf16.msra.mxu0 %v2923
          %3005 = vmatprep.subr.bf16.mxu0 0
          %3006 = vmatpush1.bf16.msra.mxu0 0
          %3007 = vmatprep.subr.bf16.mxu0 0
          %3008 = vmatpush1.bf16.msra.mxu0 0
          %3009 = vmatprep.subr.bf16.mxu0 0
          %3010 = vmatpush1.bf16.msra.mxu0 0
          %3011 = vmatprep.subr.bf16.mxu0 0
          %3012 = vmatpush1.bf16.msra.mxu0 0
          %3013 = vmatprep.subr.bf16.mxu0 0
          %3014 = vmatpush1.bf16.msra.mxu0 0
          %3015 = vmatprep.subr.bf16.mxu0 0
          %3016 = vmatpush1.bf16.msra.mxu0 0
          %3017 = vmatprep.subr.bf16.mxu0 0
          %3018 = vmatpush1.bf16.msra.mxu0 0
          %3019 = vmatprep.subr.bf16.mxu0 0
          %3020 = vmatpush1.bf16.msra.mxu0 0
          %3021 = vmatprep.mubr.bf16.mxu0 0
          %3022 = vmatmul.mubr.bf16.gmra.mrb[0].mxu0 %v2770
          %v3023 = vpop.f32.mrb[0].mxu0
          %v3024 = vadd.f32 %v2816, %v3023
          %v3025 = vpop.f32.mrb[0].mxu0
          %v3026 = vpop.f32.mrb[0].mxu0
          %v3027 = vpop.f32.mrb[0].mxu0
          %3028 = vdwg.mxu0
          %v3029 = vpack.c.bf16 %v2983, %v2983
          %v3030 = vpack.c.bf16 %v2985, %v2985
          %v3031 = vpack.c.bf16 %v3024, %v3024
          %v3033 = vlaneseq
          %v3034 = vshrl.u32 %v3033, 7
          %v3035 = vsub.s32 0, %v3034
          %v3036 = vrot.slane %v2769, %v3035
          %vm3038 = vcmask 523264
          %v3040 = vsel %vm3038, %v3029, 0
          %v3043 = vsel %vm3038, %v3030, 0
          %3045 = vmatprep.subr.bf16.mxu0 0
          %3046 = vmatpush1.bf16.xpose.msra.mxu0 %v3043
          %3047 = vmatprep.subr.bf16.mxu0 0
          %3048 = vmatpush1.bf16.xpose.msra.mxu0 0
          %3049 = vmatprep.subr.bf16.mxu0 0
          %3050 = vmatpush1.bf16.xpose.msra.mxu0 0
          %3051 = vmatprep.subr.bf16.mxu0 0
          %3052 = vmatpush1.bf16.xpose.msra.mxu0 0
          %3053 = vmatprep.subr.bf16.mxu0 0
          %3054 = vmatpush1.bf16.xpose.msra.mxu0 0
          %3055 = vmatprep.subr.bf16.mxu0 0
          %3056 = vmatpush1.bf16.xpose.msra.mxu0 0
          %3057 = vmatprep.subr.bf16.mxu0 0
          %3058 = vmatpush1.bf16.xpose.msra.mxu0 0
          %3059 = vmatprep.subr.bf16.mxu0 0
          %3060 = vmatpush1.bf16.xpose.msra.mxu0 0
          %3061 = vmatprep.subr.bf16.mxu0 0
          %3062 = vmatpush1.bf16.xpose.msra.mxu0 0
          %3063 = vmatprep.subr.bf16.mxu0 0
          %3064 = vmatpush1.bf16.xpose.msra.mxu0 0
          %3065 = vmatprep.subr.bf16.mxu0 0
          %3066 = vmatpush1.bf16.xpose.msra.mxu0 0
          %3067 = vmatprep.subr.bf16.mxu0 0
          %3068 = vmatpush1.bf16.xpose.msra.mxu0 0
          %3069 = vmatprep.subr.bf16.mxu0 0
          %3070 = vmatpush1.bf16.xpose.msra.mxu0 0
          %3071 = vmatprep.subr.bf16.mxu0 0
          %3072 = vmatpush1.bf16.xpose.msra.mxu0 0
          %3073 = vmatprep.subr.bf16.mxu0 0
          %3074 = vmatpush1.bf16.xpose.msra.mxu0 0
          %3075 = vmatprep.subr.bf16.mxu0 0
          %3076 = vmatpush1.bf16.xpose.msra.mxu0 0
          %3077 = vmatprep.mubr.bf16.mxu0 0
          %3078 = vmatmul.mubr.bf16.gmra.mrb[0].mxu0 %v3040
          %v3079 = vpop.f32.mrb[0].mxu0
          %v3080 = vadd.f32 %v3036, %v3079
          %v3081 = vpop.f32.mrb[0].mxu0
          %v3082 = vpop.f32.mrb[0].mxu0
          %v3083 = vpop.f32.mrb[0].mxu0
          %3084 = vdwg.mxu0
          %vm3085 = vcmask 64512
          %v3086 = vsel %vm3085, %v3080, -inf
          %3087 = vmax.xlane.f32.xlu0 %v3086
          %v3088 = vpop.xlane.xlu0 %3087
          %v3089 = vsub.f32 %v3080, %v3088
          %v3090 = vmul.f32 %v3089, 1.442695
          %v3091 = vpow.pop %v3090
          %v3092 = vsel %vm3085, %v3091, 0.0
          %3093 = vadd.xlane.f32.xlu0 %v3092
          %v3094 = vpop.xlane.xlu0 %3093
          %v3095 = vrcp.pop %v3094
          %v3096 = vmul.f32 %v3091, %v3095
          %v3097 = vpack.c.bf16 %v3096, %v3096
          %v3099 = vsel %vm3085, %v3097, 0
          %vm3101 = vcmask 1043456
          %v3103 = vsel %vm3101, %v3031, 0
          %3105 = vmatprep.subr.bf16.mxu0 0
          %3106 = vmatpush1.bf16.msra.mxu0 %v3103
          %3107 = vmatprep.subr.bf16.mxu0 0
          %3108 = vmatpush1.bf16.msra.mxu0 0
          %3109 = vmatprep.subr.bf16.mxu0 0
          %3110 = vmatpush1.bf16.msra.mxu0 0
          %3111 = vmatprep.subr.bf16.mxu0 0
          %3112 = vmatpush1.bf16.msra.mxu0 0
          %3113 = vmatprep.subr.bf16.mxu0 0
          %3114 = vmatpush1.bf16.msra.mxu0 0
          %3115 = vmatprep.subr.bf16.mxu0 0
          %3116 = vmatpush1.bf16.msra.mxu0 0
          %3117 = vmatprep.subr.bf16.mxu0 0
          %3118 = vmatpush1.bf16.msra.mxu0 0
          %3119 = vmatprep.subr.bf16.mxu0 0
          %3120 = vmatpush1.bf16.msra.mxu0 0
          %3121 = vmatprep.subr.bf16.mxu0 0
          %3122 = vmatpush1.bf16.msra.mxu0 0
          %3123 = vmatprep.subr.bf16.mxu0 0
          %3124 = vmatpush1.bf16.msra.mxu0 0
          %3125 = vmatprep.subr.bf16.mxu0 0
          %3126 = vmatpush1.bf16.msra.mxu0 0
          %3127 = vmatprep.subr.bf16.mxu0 0
          %3128 = vmatpush1.bf16.msra.mxu0 0
          %3129 = vmatprep.subr.bf16.mxu0 0
          %3130 = vmatpush1.bf16.msra.mxu0 0
          %3131 = vmatprep.subr.bf16.mxu0 0
          %3132 = vmatpush1.bf16.msra.mxu0 0
          %3133 = vmatprep.subr.bf16.mxu0 0
          %3134 = vmatpush1.bf16.msra.mxu0 0
          %3135 = vmatprep.subr.bf16.mxu0 0
          %3136 = vmatpush1.bf16.msra.mxu0 0
          %3137 = vmatprep.mubr.bf16.mxu0 0
          %3138 = vmatmul.mubr.bf16.gmra.mrb[0].mxu0 %v3099
          %v3139 = vpop.f32.mrb[0].mxu0
          %v3140 = vadd.f32 0.0, %v3139
          %v3141 = vpop.f32.mrb[0].mxu0
          %v3142 = vpop.f32.mrb[0].mxu0
          %v3143 = vpop.f32.mrb[0].mxu0
          %3144 = vdwg.mxu0
          %3146 = vrot.lane.b32.xlu0 %v3029, 64
          %v3147 = vpop.permute.xlu0 %3146
          %3149 = vrot.lane.b32.xlu0 %v3030, 64
          %v3150 = vpop.permute.xlu0 %3149
          %v3152 = vsel %vm3038, %v3147, 0
          %v3155 = vsel %vm3038, %v3150, 0
          %3157 = vmatprep.subr.bf16.mxu0 0
          %3158 = vmatpush1.bf16.xpose.msra.mxu0 %v3155
          %3159 = vmatprep.subr.bf16.mxu0 0
          %3160 = vmatpush1.bf16.xpose.msra.mxu0 0
          %3161 = vmatprep.subr.bf16.mxu0 0
          %3162 = vmatpush1.bf16.xpose.msra.mxu0 0
          %3163 = vmatprep.subr.bf16.mxu0 0
          %3164 = vmatpush1.bf16.xpose.msra.mxu0 0
          %3165 = vmatprep.subr.bf16.mxu0 0
          %3166 = vmatpush1.bf16.xpose.msra.mxu0 0
          %3167 = vmatprep.subr.bf16.mxu0 0
          %3168 = vmatpush1.bf16.xpose.msra.mxu0 0
          %3169 = vmatprep.subr.bf16.mxu0 0
          %3170 = vmatpush1.bf16.xpose.msra.mxu0 0
          %3171 = vmatprep.subr.bf16.mxu0 0
          %3172 = vmatpush1.bf16.xpose.msra.mxu0 0
          %3173 = vmatprep.subr.bf16.mxu0 0
          %3174 = vmatpush1.bf16.xpose.msra.mxu0 0
          %3175 = vmatprep.subr.bf16.mxu0 0
          %3176 = vmatpush1.bf16.xpose.msra.mxu0 0
          %3177 = vmatprep.subr.bf16.mxu0 0
          %3178 = vmatpush1.bf16.xpose.msra.mxu0 0
          %3179 = vmatprep.subr.bf16.mxu0 0
          %3180 = vmatpush1.bf16.xpose.msra.mxu0 0
          %3181 = vmatprep.subr.bf16.mxu0 0
          %3182 = vmatpush1.bf16.xpose.msra.mxu0 0
          %3183 = vmatprep.subr.bf16.mxu0 0
          %3184 = vmatpush1.bf16.xpose.msra.mxu0 0
          %3185 = vmatprep.subr.bf16.mxu0 0
          %3186 = vmatpush1.bf16.xpose.msra.mxu0 0
          %3187 = vmatprep.subr.bf16.mxu0 0
          %3188 = vmatpush1.bf16.xpose.msra.mxu0 0
          %3189 = vmatprep.mubr.bf16.mxu0 0
          %3190 = vmatmul.mubr.bf16.gmra.mrb[0].mxu0 %v3152
          %v3191 = vpop.f32.mrb[0].mxu0
          %v3192 = vadd.f32 %v3036, %v3191
          %v3193 = vpop.f32.mrb[0].mxu0
          %v3194 = vpop.f32.mrb[0].mxu0
          %v3195 = vpop.f32.mrb[0].mxu0
          %3196 = vdwg.mxu0
          %v3197 = vsel %vm3085, %v3192, -inf
          %3198 = vmax.xlane.f32.xlu0 %v3197
          %v3199 = vpop.xlane.xlu0 %3198
          %v3200 = vsub.f32 %v3192, %v3199
          %v3201 = vmul.f32 %v3200, 1.442695
          %v3202 = vpow.pop %v3201
          %v3203 = vsel %vm3085, %v3202, 0.0
          %3204 = vadd.xlane.f32.xlu0 %v3203
          %v3205 = vpop.xlane.xlu0 %3204
          %v3206 = vrcp.pop %v3205
          %v3207 = vmul.f32 %v3202, %v3206
          %v3208 = vpack.c.bf16 %v3207, %v3207
          %3210 = vrot.lane.b32.xlu0 %v3031, 64
          %v3211 = vpop.permute.xlu0 %3210
          %v3213 = vsel %vm3085, %v3208, 0
          %v3216 = vsel %vm3101, %v3211, 0
          %3218 = vmatprep.subr.bf16.mxu0 0
          %3219 = vmatpush1.bf16.msra.mxu0 %v3216
          %3220 = vmatprep.subr.bf16.mxu0 0
          %3221 = vmatpush1.bf16.msra.mxu0 0
          %3222 = vmatprep.subr.bf16.mxu0 0
          %3223 = vmatpush1.bf16.msra.mxu0 0
          %3224 = vmatprep.subr.bf16.mxu0 0
          %3225 = vmatpush1.bf16.msra.mxu0 0
          %3226 = vmatprep.subr.bf16.mxu0 0
          %3227 = vmatpush1.bf16.msra.mxu0 0
          %3228 = vmatprep.subr.bf16.mxu0 0
          %3229 = vmatpush1.bf16.msra.mxu0 0
          %3230 = vmatprep.subr.bf16.mxu0 0
          %3231 = vmatpush1.bf16.msra.mxu0 0
          %3232 = vmatprep.subr.bf16.mxu0 0
          %3233 = vmatpush1.bf16.msra.mxu0 0
          %3234 = vmatprep.subr.bf16.mxu0 0
          %3235 = vmatpush1.bf16.msra.mxu0 0
          %3236 = vmatprep.subr.bf16.mxu0 0
          %3237 = vmatpush1.bf16.msra.mxu0 0
          %3238 = vmatprep.subr.bf16.mxu0 0
          %3239 = vmatpush1.bf16.msra.mxu0 0
          %3240 = vmatprep.subr.bf16.mxu0 0
          %3241 = vmatpush1.bf16.msra.mxu0 0
          %3242 = vmatprep.subr.bf16.mxu0 0
          %3243 = vmatpush1.bf16.msra.mxu0 0
          %3244 = vmatprep.subr.bf16.mxu0 0
          %3245 = vmatpush1.bf16.msra.mxu0 0
          %3246 = vmatprep.subr.bf16.mxu0 0
          %3247 = vmatpush1.bf16.msra.mxu0 0
          %3248 = vmatprep.subr.bf16.mxu0 0
          %3249 = vmatpush1.bf16.msra.mxu0 0
          %3250 = vmatprep.mubr.bf16.mxu0 0
          %3251 = vmatmul.mubr.bf16.gmra.mrb[0].mxu0 %v3213
          %v3252 = vpop.f32.mrb[0].mxu0
          %v3253 = vadd.f32 0.0, %v3252
          %v3254 = vpop.f32.mrb[0].mxu0
          %v3255 = vpop.f32.mrb[0].mxu0
          %v3256 = vpop.f32.mrb[0].mxu0
          %3257 = vdwg.mxu0
          %3259 = vrot.lane.b32.xlu0 %v3253, 64
          %v3260 = vpop.permute.xlu0 %3259
          %v3262 = vsel %vm3038, %v3140, %v3260
          %v3263 = vpack.c.bf16 %v3262, %v3262
          %v3264 = vld [vmem:[%s2127] sm:$0xf]
          %v3265 = vld [vmem:[%s2127 + $0x4] sm:$0xf]
          %v3266 = vld [vmem:[%s2127 + $0x8] sm:$0xf]
          %v3267 = vld [vmem:[%s2127 + $0xc] sm:$0xf]
          %v3268 = vld [vmem:[%s2127 + $0x10] sm:$0xf]
          %v3269 = vld [vmem:[%s2127 + $0x14] sm:$0xf]
          %v3270 = vld [vmem:[%s2127 + $0x18] sm:$0xf]
          %v3271 = vld [vmem:[%s2127 + $0x1c] sm:$0xf]
          %v3272 = vld [vmem:[%s2127 + $0x20] sm:$0xf]
          %v3273 = vld [vmem:[%s2127 + $0x24] sm:$0xf]
          %v3274 = vld [vmem:[%s2127 + $0x28] sm:$0xf]
          %v3275 = vld [vmem:[%s2127 + $0x2c] sm:$0xf]
          %v3276 = vld [vmem:[%s2127 + $0x30] sm:$0xf]
          %v3277 = vld [vmem:[%s2127 + $0x34] sm:$0xf]
          %v3278 = vld [vmem:[%s2127 + $0x38] sm:$0xf]
          %v3279 = vld [vmem:[%s2127 + $0x3c] sm:$0xf]
          %v3280 = vld [vmem:[%s2665] sm:$0x1]
          %v3282 = vlaneseq
          %v3283 = vshrl.u32 %v3282, 7
          %v3284 = vsub.s32 0, %v3283
          %v3285 = vrot.slane %v3280, %v3284
          %v3303 = vunpack.c.l.b16 %v3264
          %v3304 = vunpack.c.l.b16 %v3265
          %v3305 = vunpack.c.l.b16 %v3266
          %v3306 = vunpack.c.l.b16 %v3267
          %v3307 = vunpack.c.l.b16 %v3268
          %v3308 = vunpack.c.l.b16 %v3269
          %v3309 = vunpack.c.l.b16 %v3270
          %v3310 = vunpack.c.l.b16 %v3271
          %v3311 = vunpack.c.l.b16 %v3272
          %v3312 = vunpack.c.l.b16 %v3273
          %v3313 = vunpack.c.l.b16 %v3274
          %v3314 = vunpack.c.l.b16 %v3275
          %v3315 = vunpack.c.l.b16 %v3276
          %v3316 = vunpack.c.l.b16 %v3277
          %v3317 = vunpack.c.l.b16 %v3278
          %v3318 = vunpack.c.l.b16 %v3279
          %v3319 = vpack.c.b16 %v3304, %v3303
          %v3320 = vpack.c.b16 %v3306, %v3305
          %v3321 = vpack.c.b16 %v3308, %v3307
          %v3322 = vpack.c.b16 %v3310, %v3309
          %v3323 = vpack.c.b16 %v3312, %v3311
          %v3324 = vpack.c.b16 %v3314, %v3313
          %v3325 = vpack.c.b16 %v3316, %v3315
          %v3326 = vpack.c.b16 %v3318, %v3317
          %3335 = vmatprep.subr.bf16.mxu0 0
          %3336 = vmatpush1.bf16.msra.mxu0 %v3319
          %3337 = vmatprep.subr.bf16.mxu0 0
          %3338 = vmatpush1.bf16.msra.mxu0 %v3320
          %3339 = vmatprep.subr.bf16.mxu0 0
          %3340 = vmatpush1.bf16.msra.mxu0 %v3321
          %3341 = vmatprep.subr.bf16.mxu0 0
          %3342 = vmatpush1.bf16.msra.mxu0 %v3322
          %3343 = vmatprep.subr.bf16.mxu0 0
          %3344 = vmatpush1.bf16.msra.mxu0 %v3323
          %3345 = vmatprep.subr.bf16.mxu0 0
          %3346 = vmatpush1.bf16.msra.mxu0 %v3324
          %3347 = vmatprep.subr.bf16.mxu0 0
          %3348 = vmatpush1.bf16.msra.mxu0 %v3325
          %3349 = vmatprep.subr.bf16.mxu0 0
          %3350 = vmatpush1.bf16.msra.mxu0 %v3326
          %3351 = vmatprep.subr.bf16.mxu0 0
          %3352 = vmatpush1.bf16.msra.mxu0 0
          %3353 = vmatprep.subr.bf16.mxu0 0
          %3354 = vmatpush1.bf16.msra.mxu0 0
          %3355 = vmatprep.subr.bf16.mxu0 0
          %3356 = vmatpush1.bf16.msra.mxu0 0
          %3357 = vmatprep.subr.bf16.mxu0 0
          %3358 = vmatpush1.bf16.msra.mxu0 0
          %3359 = vmatprep.subr.bf16.mxu0 0
          %3360 = vmatpush1.bf16.msra.mxu0 0
          %3361 = vmatprep.subr.bf16.mxu0 0
          %3362 = vmatpush1.bf16.msra.mxu0 0
          %3363 = vmatprep.subr.bf16.mxu0 0
          %3364 = vmatpush1.bf16.msra.mxu0 0
          %3365 = vmatprep.subr.bf16.mxu0 0
          %3366 = vmatpush1.bf16.msra.mxu0 0
          %3367 = vmatprep.mubr.bf16.mxu0 0
          %3368 = vmatmul.mubr.bf16.gmra.mrb[0].mxu0 %v3263
          %v3369 = vpop.f32.mrb[0].mxu0
          %v3370 = vadd.f32 %v3285, %v3369
          %v3371 = vpop.f32.mrb[0].mxu0
          %v3372 = vpop.f32.mrb[0].mxu0
          %v3373 = vpop.f32.mrb[0].mxu0
          %3374 = vdwg.mxu0
          %v3375 = vadd.f32 %v2768, %v3370
          %v3376 = vld [vmem:[%s2135] sm:$0x1]
          %v3377 = vld [vmem:[%s2143] sm:$0x1]
          %3378 = vadd.xlane.f32.xlu0 %v3375
          %v3379 = vpop.xlane.xlu0 %3378
          %v3380 = vrcp.pop 128.0
          %v3381 = vmul.f32 %v3379, %v3380
          %v3382 = vsub.f32 %v3375, %v3381
          %v3383 = vmul.f32 %v3382, %v3382
          %3384 = vadd.xlane.f32.xlu0 %v3383
          %v3385 = vpop.xlane.xlu0 %3384
          %v3386 = vmul.f32 %v3385, %v3380
          %v3387 = vadd.f32 %v3386, 1e-05
          %v3388 = vrsqrt.pop %v3387
          %v3389 = vmul.f32 %v3382, %v3388
          %v3391 = vlaneseq
          %v3392 = vshrl.u32 %v3391, 7
          %v3393 = vsub.s32 0, %v3392
          %v3394 = vrot.slane %v3376, %v3393
          %v3396 = vmul.f32 %v3389, %v3394
          %v3398 = vlaneseq
          %v3399 = vshrl.u32 %v3398, 7
          %v3400 = vsub.s32 0, %v3399
          %v3401 = vrot.slane %v3377, %v3400
          %v3403 = vadd.f32 %v3396, %v3401
          %v3404 = vpack.c.bf16 %v3403, %v3403
          %v3405 = vld [vmem:[%s2152] sm:$0xff]
          %v3406 = vld [vmem:[%s2152 + $0x8] sm:$0xff]
          %v3407 = vld [vmem:[%s2152 + $0x10] sm:$0xff]
          %v3408 = vld [vmem:[%s2152 + $0x18] sm:$0xff]
          %v3409 = vld [vmem:[%s2152 + $0x20] sm:$0xff]
          %v3410 = vld [vmem:[%s2152 + $0x28] sm:$0xff]
          %v3411 = vld [vmem:[%s2152 + $0x30] sm:$0xff]
          %v3412 = vld [vmem:[%s2152 + $0x38] sm:$0xff]
          %v3413 = vld [vmem:[%s2152 + $0x40] sm:$0xff]
          %v3414 = vld [vmem:[%s2152 + $0x48] sm:$0xff]
          %v3415 = vld [vmem:[%s2152 + $0x50] sm:$0xff]
          %v3416 = vld [vmem:[%s2152 + $0x58] sm:$0xff]
          %v3417 = vld [vmem:[%s2152 + $0x60] sm:$0xff]
          %v3418 = vld [vmem:[%s2152 + $0x68] sm:$0xff]
          %v3419 = vld [vmem:[%s2152 + $0x70] sm:$0xff]
          %v3420 = vld [vmem:[%s2152 + $0x78] sm:$0xff]
          %v3421 = vld [vmem:[%s2161] sm:$0x3]
          %v3423 = vlaneseq
          %v3424 = vshrl.u32 %v3423, 7
          %v3425 = vsub.s32 0, %v3424
          %v3426 = vrot.slane %v3421, %v3425
          %v3427 = vlaneseq
          %v3428 = vshrl.u32 %v3427, 7
          %v3429 = vsub.s32 1, %v3428
          %v3430 = vrot.slane %v3421, %v3429
          %v3449 = vunpack.c.l.b16 %v3405
          %v3450 = vunpack.c.h.b16 %v3405
          %v3451 = vunpack.c.l.b16 %v3406
          %v3452 = vunpack.c.h.b16 %v3406
          %v3453 = vunpack.c.l.b16 %v3407
          %v3454 = vunpack.c.h.b16 %v3407
          %v3455 = vunpack.c.l.b16 %v3408
          %v3456 = vunpack.c.h.b16 %v3408
          %v3457 = vunpack.c.l.b16 %v3409
          %v3458 = vunpack.c.h.b16 %v3409
          %v3459 = vunpack.c.l.b16 %v3410
          %v3460 = vunpack.c.h.b16 %v3410
          %v3461 = vunpack.c.l.b16 %v3411
          %v3462 = vunpack.c.h.b16 %v3411
          %v3463 = vunpack.c.l.b16 %v3412
          %v3464 = vunpack.c.h.b16 %v3412
          %v3465 = vunpack.c.l.b16 %v3413
          %v3466 = vunpack.c.h.b16 %v3413
          %v3467 = vunpack.c.l.b16 %v3414
          %v3468 = vunpack.c.h.b16 %v3414
          %v3469 = vunpack.c.l.b16 %v3415
          %v3470 = vunpack.c.h.b16 %v3415
          %v3471 = vunpack.c.l.b16 %v3416
          %v3472 = vunpack.c.h.b16 %v3416
          %v3473 = vunpack.c.l.b16 %v3417
          %v3474 = vunpack.c.h.b16 %v3417
          %v3475 = vunpack.c.l.b16 %v3418
          %v3476 = vunpack.c.h.b16 %v3418
          %v3477 = vunpack.c.l.b16 %v3419
          %v3478 = vunpack.c.h.b16 %v3419
          %v3479 = vunpack.c.l.b16 %v3420
          %v3480 = vunpack.c.h.b16 %v3420
          %v3481 = vpack.c.b16 %v3451, %v3449
          %v3482 = vpack.c.b16 %v3452, %v3450
          %v3483 = vpack.c.b16 %v3455, %v3453
          %v3484 = vpack.c.b16 %v3456, %v3454
          %v3485 = vpack.c.b16 %v3459, %v3457
          %v3486 = vpack.c.b16 %v3460, %v3458
          %v3487 = vpack.c.b16 %v3463, %v3461
          %v3488 = vpack.c.b16 %v3464, %v3462
          %v3489 = vpack.c.b16 %v3467, %v3465
          %v3490 = vpack.c.b16 %v3468, %v3466
          %v3491 = vpack.c.b16 %v3471, %v3469
          %v3492 = vpack.c.b16 %v3472, %v3470
          %v3493 = vpack.c.b16 %v3475, %v3473
          %v3494 = vpack.c.b16 %v3476, %v3474
          %v3495 = vpack.c.b16 %v3479, %v3477
          %v3496 = vpack.c.b16 %v3480, %v3478
          %3513 = vmatprep.subr.bf16.mxu0 %v3482
          %3514 = vmatpush1.bf16.msra.mxu0 %v3481
          %3515 = vmatprep.subr.bf16.mxu0 %v3484
          %3516 = vmatpush1.bf16.msra.mxu0 %v3483
          %3517 = vmatprep.subr.bf16.mxu0 %v3486
          %3518 = vmatpush1.bf16.msra.mxu0 %v3485
          %3519 = vmatprep.subr.bf16.mxu0 %v3488
          %3520 = vmatpush1.bf16.msra.mxu0 %v3487
          %3521 = vmatprep.subr.bf16.mxu0 %v3490
          %3522 = vmatpush1.bf16.msra.mxu0 %v3489
          %3523 = vmatprep.subr.bf16.mxu0 %v3492
          %3524 = vmatpush1.bf16.msra.mxu0 %v3491
          %3525 = vmatprep.subr.bf16.mxu0 %v3494
          %3526 = vmatpush1.bf16.msra.mxu0 %v3493
          %3527 = vmatprep.subr.bf16.mxu0 %v3496
          %3528 = vmatpush1.bf16.msra.mxu0 %v3495
          %3529 = vmatprep.subr.bf16.mxu0 0
          %3530 = vmatpush1.bf16.msra.mxu0 0
          %3531 = vmatprep.subr.bf16.mxu0 0
          %3532 = vmatpush1.bf16.msra.mxu0 0
          %3533 = vmatprep.subr.bf16.mxu0 0
          %3534 = vmatpush1.bf16.msra.mxu0 0
          %3535 = vmatprep.subr.bf16.mxu0 0
          %3536 = vmatpush1.bf16.msra.mxu0 0
          %3537 = vmatprep.subr.bf16.mxu0 0
          %3538 = vmatpush1.bf16.msra.mxu0 0
          %3539 = vmatprep.subr.bf16.mxu0 0
          %3540 = vmatpush1.bf16.msra.mxu0 0
          %3541 = vmatprep.subr.bf16.mxu0 0
          %3542 = vmatpush1.bf16.msra.mxu0 0
          %3543 = vmatprep.subr.bf16.mxu0 0
          %3544 = vmatpush1.bf16.msra.mxu0 0
          %3545 = vmatprep.mubr.bf16.mxu0 0
          %3546 = vmatmul.mubr.bf16.gmra.mrb[0].mxu0 %v3404
          %v3547 = vpop.f32.mrb[0].mxu0
          %v3548 = vadd.f32 %v3426, %v3547
          %v3549 = vpop.f32.mrb[0].mxu0
          %v3550 = vadd.f32 %v3430, %v3549
          %v3551 = vpop.f32.mrb[0].mxu0
          %v3552 = vpop.f32.mrb[0].mxu0
          %3553 = vdwg.mxu0
          %v3554 = vpack.c.bf16 %v3548, %v3548
          %v3555 = vpack.c.bf16 %v3550, %v3550
          %v3556 = vmax.bf16 %v3554, 0
          %v3557 = vmax.bf16 %v3555, 0
          %v3558 = vld [vmem:[%s2170] sm:$0xf]
          %v3559 = vld [vmem:[%s2170 + $0x4] sm:$0xf]
          %v3560 = vld [vmem:[%s2170 + $0x8] sm:$0xf]
          %v3561 = vld [vmem:[%s2170 + $0xc] sm:$0xf]
          %v3562 = vld [vmem:[%s2170 + $0x10] sm:$0xf]
          %v3563 = vld [vmem:[%s2170 + $0x14] sm:$0xf]
          %v3564 = vld [vmem:[%s2170 + $0x18] sm:$0xf]
          %v3565 = vld [vmem:[%s2170 + $0x1c] sm:$0xf]
          %v3566 = vld [vmem:[%s2170 + $0x20] sm:$0xf]
          %v3567 = vld [vmem:[%s2170 + $0x24] sm:$0xf]
          %v3568 = vld [vmem:[%s2170 + $0x28] sm:$0xf]
          %v3569 = vld [vmem:[%s2170 + $0x2c] sm:$0xf]
          %v3570 = vld [vmem:[%s2170 + $0x30] sm:$0xf]
          %v3571 = vld [vmem:[%s2170 + $0x34] sm:$0xf]
          %v3572 = vld [vmem:[%s2170 + $0x38] sm:$0xf]
          %v3573 = vld [vmem:[%s2170 + $0x3c] sm:$0xf]
          %v3574 = vld [vmem:[%s2170 + $0x40] sm:$0xf]
          %v3575 = vld [vmem:[%s2170 + $0x44] sm:$0xf]
          %v3576 = vld [vmem:[%s2170 + $0x48] sm:$0xf]
          %v3577 = vld [vmem:[%s2170 + $0x4c] sm:$0xf]
          %v3578 = vld [vmem:[%s2170 + $0x50] sm:$0xf]
          %v3579 = vld [vmem:[%s2170 + $0x54] sm:$0xf]
          %v3580 = vld [vmem:[%s2170 + $0x58] sm:$0xf]
          %v3581 = vld [vmem:[%s2170 + $0x5c] sm:$0xf]
          %v3582 = vld [vmem:[%s2170 + $0x60] sm:$0xf]
          %v3583 = vld [vmem:[%s2170 + $0x64] sm:$0xf]
          %v3584 = vld [vmem:[%s2170 + $0x68] sm:$0xf]
          %v3585 = vld [vmem:[%s2170 + $0x6c] sm:$0xf]
          %v3586 = vld [vmem:[%s2170 + $0x70] sm:$0xf]
          %v3587 = vld [vmem:[%s2170 + $0x74] sm:$0xf]
          %v3588 = vld [vmem:[%s2170 + $0x78] sm:$0xf]
          %v3589 = vld [vmem:[%s2170 + $0x7c] sm:$0xf]
          %v3590 = vld [vmem:[%s2178] sm:$0x1]
          %v3592 = vlaneseq
          %v3593 = vshrl.u32 %v3592, 7
          %v3594 = vsub.s32 0, %v3593
          %v3595 = vrot.slane %v3590, %v3594
          %v3629 = vunpack.c.l.b16 %v3558
          %v3630 = vunpack.c.l.b16 %v3559
          %v3631 = vunpack.c.l.b16 %v3560
          %v3632 = vunpack.c.l.b16 %v3561
          %v3633 = vunpack.c.l.b16 %v3562
          %v3634 = vunpack.c.l.b16 %v3563
          %v3635 = vunpack.c.l.b16 %v3564
          %v3636 = vunpack.c.l.b16 %v3565
          %v3637 = vunpack.c.l.b16 %v3566
          %v3638 = vunpack.c.l.b16 %v3567
          %v3639 = vunpack.c.l.b16 %v3568
          %v3640 = vunpack.c.l.b16 %v3569
          %v3641 = vunpack.c.l.b16 %v3570
          %v3642 = vunpack.c.l.b16 %v3571
          %v3643 = vunpack.c.l.b16 %v3572
          %v3644 = vunpack.c.l.b16 %v3573
          %v3645 = vunpack.c.l.b16 %v3574
          %v3646 = vunpack.c.l.b16 %v3575
          %v3647 = vunpack.c.l.b16 %v3576
          %v3648 = vunpack.c.l.b16 %v3577
          %v3649 = vunpack.c.l.b16 %v3578
          %v3650 = vunpack.c.l.b16 %v3579
          %v3651 = vunpack.c.l.b16 %v3580
          %v3652 = vunpack.c.l.b16 %v3581
          %v3653 = vunpack.c.l.b16 %v3582
          %v3654 = vunpack.c.l.b16 %v3583
          %v3655 = vunpack.c.l.b16 %v3584
          %v3656 = vunpack.c.l.b16 %v3585
          %v3657 = vunpack.c.l.b16 %v3586
          %v3658 = vunpack.c.l.b16 %v3587
          %v3659 = vunpack.c.l.b16 %v3588
          %v3660 = vunpack.c.l.b16 %v3589
          %v3661 = vpack.c.b16 %v3630, %v3629
          %v3662 = vpack.c.b16 %v3632, %v3631
          %v3663 = vpack.c.b16 %v3634, %v3633
          %v3664 = vpack.c.b16 %v3636, %v3635
          %v3665 = vpack.c.b16 %v3638, %v3637
          %v3666 = vpack.c.b16 %v3640, %v3639
          %v3667 = vpack.c.b16 %v3642, %v3641
          %v3668 = vpack.c.b16 %v3644, %v3643
          %v3669 = vpack.c.b16 %v3646, %v3645
          %v3670 = vpack.c.b16 %v3648, %v3647
          %v3671 = vpack.c.b16 %v3650, %v3649
          %v3672 = vpack.c.b16 %v3652, %v3651
          %v3673 = vpack.c.b16 %v3654, %v3653
          %v3674 = vpack.c.b16 %v3656, %v3655
          %v3675 = vpack.c.b16 %v3658, %v3657
          %v3676 = vpack.c.b16 %v3660, %v3659
          %3693 = vmatprep.subr.bf16.mxu0 0
          %3694 = vmatpush1.bf16.msra.mxu0 %v3661
          %3695 = vmatprep.subr.bf16.mxu0 0
          %3696 = vmatpush1.bf16.msra.mxu0 %v3662
          %3697 = vmatprep.subr.bf16.mxu0 0
          %3698 = vmatpush1.bf16.msra.mxu0 %v3663
          %3699 = vmatprep.subr.bf16.mxu0 0
          %3700 = vmatpush1.bf16.msra.mxu0 %v3664
          %3701 = vmatprep.subr.bf16.mxu0 0
          %3702 = vmatpush1.bf16.msra.mxu0 %v3665
          %3703 = vmatprep.subr.bf16.mxu0 0
          %3704 = vmatpush1.bf16.msra.mxu0 %v3666
          %3705 = vmatprep.subr.bf16.mxu0 0
          %3706 = vmatpush1.bf16.msra.mxu0 %v3667
          %3707 = vmatprep.subr.bf16.mxu0 0
          %3708 = vmatpush1.bf16.msra.mxu0 %v3668
          %3709 = vmatprep.subr.bf16.mxu0 0
          %3710 = vmatpush1.bf16.msra.mxu0 %v3669
          %3711 = vmatprep.subr.bf16.mxu0 0
          %3712 = vmatpush1.bf16.msra.mxu0 %v3670
          %3713 = vmatprep.subr.bf16.mxu0 0
          %3714 = vmatpush1.bf16.msra.mxu0 %v3671
          %3715 = vmatprep.subr.bf16.mxu0 0
          %3716 = vmatpush1.bf16.msra.mxu0 %v3672
          %3717 = vmatprep.subr.bf16.mxu0 0
          %3718 = vmatpush1.bf16.msra.mxu0 %v3673
          %3719 = vmatprep.subr.bf16.mxu0 0
          %3720 = vmatpush1.bf16.msra.mxu0 %v3674
          %3721 = vmatprep.subr.bf16.mxu0 0
          %3722 = vmatpush1.bf16.msra.mxu0 %v3675
          %3723 = vmatprep.subr.bf16.mxu0 0
          %3724 = vmatpush1.bf16.msra.mxu0 %v3676
          %3725 = vmatprep.mubr.bf16.mxu0 %v3557
          %3726 = vmatmul.mubr.bf16.gmra.mrb[0].mxu0 %v3556
          %v3727 = vpop.f32.mrb[0].mxu0
          %v3728 = vadd.f32 %v3595, %v3727
          %v3729 = vpop.f32.mrb[0].mxu0
          %v3730 = vpop.f32.mrb[0].mxu0
          %v3731 = vpop.f32.mrb[0].mxu0
          %3732 = vdwg.mxu0
          %v3733 = vadd.f32 %v3403, %v3728
          %v3734 = vld [vmem:[%s2186] sm:$0x1]
          %v3735 = vld [vmem:[%s2194] sm:$0x1]
          %3736 = vadd.xlane.f32.xlu0 %v3733
          %v3737 = vpop.xlane.xlu0 %3736
          %v3738 = vmul.f32 %v3737, %v3380
          %v3739 = vsub.f32 %v3733, %v3738
          %v3740 = vmul.f32 %v3739, %v3739
          %3741 = vadd.xlane.f32.xlu0 %v3740
          %v3742 = vpop.xlane.xlu0 %3741
          %v3743 = vmul.f32 %v3742, %v3380
          %v3744 = vadd.f32 %v3743, 1e-05
          %v3745 = vrsqrt.pop %v3744
          %v3746 = vmul.f32 %v3739, %v3745
          %v3748 = vlaneseq
          %v3749 = vshrl.u32 %v3748, 7
          %v3750 = vsub.s32 0, %v3749
          %v3751 = vrot.slane %v3734, %v3750
          %v3753 = vmul.f32 %v3746, %v3751
          %v3755 = vlaneseq
          %v3756 = vshrl.u32 %v3755, 7
          %v3757 = vsub.s32 0, %v3756
          %v3758 = vrot.slane %v3735, %v3757
          %v3760 = vadd.f32 %v3753, %v3758
          %3761 = vst [vmem:[#allocation2] sm:$0xff] %v3760
          %p3762 = scmp.eq.s32.totalorder %s118, 2
          // Predicated region
          $region329: #{transformer_forward.1} parent=327 // pred_check
            %p3763 = pneg %p3762
          $region330: #{transformer_forward.1} parent=327 // pred_check_branch
            %3765 = sbr.rel (%p3763) target = $region332
          $region331: #{transformer_forward.1} parent=327 // pred_region
            %v3766 = vld [vmem:[%s33] sm:$0x1]
            %v3767 = vld [vmem:[#allocation19] sm:$0x1]
            %3768 = vadd.xlane.f32.xlu0 %v3760
            %v3769 = vpop.xlane.xlu0 %3768
            %v3770 = vmul.f32 %v3769, %v3380
            %v3771 = vsub.f32 %v3760, %v3770
            %v3772 = vmul.f32 %v3771, %v3771
            %3773 = vadd.xlane.f32.xlu0 %v3772
            %v3774 = vpop.xlane.xlu0 %3773
            %v3775 = vmul.f32 %v3774, %v3380
            %v3776 = vadd.f32 %v3775, 1e-05
            %v3777 = vrsqrt.pop %v3776
            %v3778 = vmul.f32 %v3771, %v3777
            %v3780 = vlaneseq
            %v3781 = vshrl.u32 %v3780, 7
            %v3782 = vsub.s32 0, %v3781
            %v3783 = vrot.slane %v3766, %v3782
            %v3785 = vmul.f32 %v3778, %v3783
            %v3787 = vlaneseq
            %v3788 = vshrl.u32 %v3787, 7
            %v3789 = vsub.s32 0, %v3788
            %v3790 = vrot.slane %v3767, %v3789
            %v3792 = vadd.f32 %v3785, %v3790
            %3793 = vst [vmem:[#allocation3] sm:$0xff] %v3792
          $region332: #{transformer_forward.1} parent=327 // pred_fallthru
            _
        $region328: #{transformer_forward.1} parent=187 // pred_fallthru
          _
        %p3794 = scmp.ge.s32.totalorder %s118, 3
        // Predicated region
        $region333: #{transformer_forward.1} parent=187 // pred_check
          %p3795 = pneg %p3794
        $region334: #{transformer_forward.1} parent=187 // pred_check_branch
          %3797 = sbr.rel (%p3795) target = $region336
        $region335: #{transformer_forward.1} parent=187 // pred_region
          %v3798 = vld [vmem:[#allocation4] sm:$0xff]
          %v3799 = vld [vmem:[%s7] sm:$0xff]
          %v3800 = vpack.c.bf16 %v3798, %v3798
          %v3801 = vld [vmem:[%s2207] sm:$0xff]
          %v3802 = vld [vmem:[%s2207 + $0x8] sm:$0xf]
          %v3803 = vld [vmem:[%s2207 + $0xc] sm:$0xff]
          %v3804 = vld [vmem:[%s2207 + $0x14] sm:$0xf]
          %v3805 = vld [vmem:[%s2207 + $0x18] sm:$0xff]
          %v3806 = vld [vmem:[%s2207 + $0x20] sm:$0xf]
          %v3807 = vld [vmem:[%s2207 + $0x24] sm:$0xff]
          %v3808 = vld [vmem:[%s2207 + $0x2c] sm:$0xf]
          %v3809 = vld [vmem:[%s2207 + $0x30] sm:$0xff]
          %v3810 = vld [vmem:[%s2207 + $0x38] sm:$0xf]
          %v3811 = vld [vmem:[%s2207 + $0x3c] sm:$0xff]
          %v3812 = vld [vmem:[%s2207 + $0x44] sm:$0xf]
          %v3813 = vld [vmem:[%s2207 + $0x48] sm:$0xff]
          %v3814 = vld [vmem:[%s2207 + $0x50] sm:$0xf]
          %v3815 = vld [vmem:[%s2207 + $0x54] sm:$0xff]
          %v3816 = vld [vmem:[%s2207 + $0x5c] sm:$0xf]
          %v3817 = vld [vmem:[%s2207 + $0x60] sm:$0xff]
          %v3818 = vld [vmem:[%s2207 + $0x68] sm:$0xf]
          %v3819 = vld [vmem:[%s2207 + $0x6c] sm:$0xff]
          %v3820 = vld [vmem:[%s2207 + $0x74] sm:$0xf]
          %v3821 = vld [vmem:[%s2207 + $0x78] sm:$0xff]
          %v3822 = vld [vmem:[%s2207 + $0x80] sm:$0xf]
          %v3823 = vld [vmem:[%s2207 + $0x84] sm:$0xff]
          %v3824 = vld [vmem:[%s2207 + $0x8c] sm:$0xf]
          %v3825 = vld [vmem:[%s2207 + $0x90] sm:$0xff]
          %v3826 = vld [vmem:[%s2207 + $0x98] sm:$0xf]
          %v3827 = vld [vmem:[%s2207 + $0x9c] sm:$0xff]
          %v3828 = vld [vmem:[%s2207 + $0xa4] sm:$0xf]
          %v3829 = vld [vmem:[%s2207 + $0xa8] sm:$0xff]
          %v3830 = vld [vmem:[%s2207 + $0xb0] sm:$0xf]
          %v3831 = vld [vmem:[%s2207 + $0xb4] sm:$0xff]
          %v3832 = vld [vmem:[%s2207 + $0xbc] sm:$0xf]
          %v3833 = vld [vmem:[%s2693] sm:$0x7]
          %v3835 = vlaneseq
          %v3836 = vshrl.u32 %v3835, 7
          %v3837 = vsub.s32 0, %v3836
          %v3838 = vrot.slane %v3833, %v3837
          %v3839 = vlaneseq
          %v3840 = vshrl.u32 %v3839, 7
          %v3841 = vsub.s32 1, %v3840
          %v3842 = vrot.slane %v3833, %v3841
          %v3843 = vlaneseq
          %v3844 = vshrl.u32 %v3843, 7
          %v3845 = vsub.s32 2, %v3844
          %v3846 = vrot.slane %v3833, %v3845
          %v3882 = vunpack.c.l.b16 %v3801
          %v3883 = vunpack.c.h.b16 %v3801
          %v3884 = vunpack.c.l.b16 %v3802
          %v3885 = vunpack.c.l.b16 %v3803
          %v3886 = vunpack.c.h.b16 %v3803
          %v3887 = vunpack.c.l.b16 %v3804
          %v3888 = vunpack.c.l.b16 %v3805
          %v3889 = vunpack.c.h.b16 %v3805
          %v3890 = vunpack.c.l.b16 %v3806
          %v3891 = vunpack.c.l.b16 %v3807
          %v3892 = vunpack.c.h.b16 %v3807
          %v3893 = vunpack.c.l.b16 %v3808
          %v3894 = vunpack.c.l.b16 %v3809
          %v3895 = vunpack.c.h.b16 %v3809
          %v3896 = vunpack.c.l.b16 %v3810
          %v3897 = vunpack.c.l.b16 %v3811
          %v3898 = vunpack.c.h.b16 %v3811
          %v3899 = vunpack.c.l.b16 %v3812
          %v3900 = vunpack.c.l.b16 %v3813
          %v3901 = vunpack.c.h.b16 %v3813
          %v3902 = vunpack.c.l.b16 %v3814
          %v3903 = vunpack.c.l.b16 %v3815
          %v3904 = vunpack.c.h.b16 %v3815
          %v3905 = vunpack.c.l.b16 %v3816
          %v3906 = vunpack.c.l.b16 %v3817
          %v3907 = vunpack.c.h.b16 %v3817
          %v3908 = vunpack.c.l.b16 %v3818
          %v3909 = vunpack.c.l.b16 %v3819
          %v3910 = vunpack.c.h.b16 %v3819
          %v3911 = vunpack.c.l.b16 %v3820
          %v3912 = vunpack.c.l.b16 %v3821
          %v3913 = vunpack.c.h.b16 %v3821
          %v3914 = vunpack.c.l.b16 %v3822
          %v3915 = vunpack.c.l.b16 %v3823
          %v3916 = vunpack.c.h.b16 %v3823
          %v3917 = vunpack.c.l.b16 %v3824
          %v3918 = vunpack.c.l.b16 %v3825
          %v3919 = vunpack.c.h.b16 %v3825
          %v3920 = vunpack.c.l.b16 %v3826
          %v3921 = vunpack.c.l.b16 %v3827
          %v3922 = vunpack.c.h.b16 %v3827
          %v3923 = vunpack.c.l.b16 %v3828
          %v3924 = vunpack.c.l.b16 %v3829
          %v3925 = vunpack.c.h.b16 %v3829
          %v3926 = vunpack.c.l.b16 %v3830
          %v3927 = vunpack.c.l.b16 %v3831
          %v3928 = vunpack.c.h.b16 %v3831
          %v3929 = vunpack.c.l.b16 %v3832
          %v3930 = vpack.c.b16 %v3885, %v3882
          %v3931 = vpack.c.b16 %v3886, %v3883
          %v3932 = vpack.c.b16 %v3887, %v3884
          %v3933 = vpack.c.b16 %v3891, %v3888
          %v3934 = vpack.c.b16 %v3892, %v3889
          %v3935 = vpack.c.b16 %v3893, %v3890
          %v3936 = vpack.c.b16 %v3897, %v3894
          %v3937 = vpack.c.b16 %v3898, %v3895
          %v3938 = vpack.c.b16 %v3899, %v3896
          %v3939 = vpack.c.b16 %v3903, %v3900
          %v3940 = vpack.c.b16 %v3904, %v3901
          %v3941 = vpack.c.b16 %v3905, %v3902
          %v3942 = vpack.c.b16 %v3909, %v3906
          %v3943 = vpack.c.b16 %v3910, %v3907
          %v3944 = vpack.c.b16 %v3911, %v3908
          %v3945 = vpack.c.b16 %v3915, %v3912
          %v3946 = vpack.c.b16 %v3916, %v3913
          %v3947 = vpack.c.b16 %v3917, %v3914
          %v3948 = vpack.c.b16 %v3921, %v3918
          %v3949 = vpack.c.b16 %v3922, %v3919
          %v3950 = vpack.c.b16 %v3923, %v3920
          %v3951 = vpack.c.b16 %v3927, %v3924
          %v3952 = vpack.c.b16 %v3928, %v3925
          %v3953 = vpack.c.b16 %v3929, %v3926
          %3978 = vmatprep.subr.bf16.mxu0 %v3931
          %3979 = vmatpush1.bf16.msra.mxu0 %v3930
          %3980 = vmatprep.subr.bf16.mxu0 %v3934
          %3981 = vmatpush1.bf16.msra.mxu0 %v3933
          %3982 = vmatprep.subr.bf16.mxu0 %v3937
          %3983 = vmatpush1.bf16.msra.mxu0 %v3936
          %3984 = vmatprep.subr.bf16.mxu0 %v3940
          %3985 = vmatpush1.bf16.msra.mxu0 %v3939
          %3986 = vmatprep.subr.bf16.mxu0 %v3943
          %3987 = vmatpush1.bf16.msra.mxu0 %v3942
          %3988 = vmatprep.subr.bf16.mxu0 %v3946
          %3989 = vmatpush1.bf16.msra.mxu0 %v3945
          %3990 = vmatprep.subr.bf16.mxu0 %v3949
          %3991 = vmatpush1.bf16.msra.mxu0 %v3948
          %3992 = vmatprep.subr.bf16.mxu0 %v3952
          %3993 = vmatpush1.bf16.msra.mxu0 %v3951
          %3994 = vmatprep.subr.bf16.mxu0 0
          %3995 = vmatpush1.bf16.msra.mxu0 0
          %3996 = vmatprep.subr.bf16.mxu0 0
          %3997 = vmatpush1.bf16.msra.mxu0 0
          %3998 = vmatprep.subr.bf16.mxu0 0
          %3999 = vmatpush1.bf16.msra.mxu0 0
          %4000 = vmatprep.subr.bf16.mxu0 0
          %4001 = vmatpush1.bf16.msra.mxu0 0
          %4002 = vmatprep.subr.bf16.mxu0 0
          %4003 = vmatpush1.bf16.msra.mxu0 0
          %4004 = vmatprep.subr.bf16.mxu0 0
          %4005 = vmatpush1.bf16.msra.mxu0 0
          %4006 = vmatprep.subr.bf16.mxu0 0
          %4007 = vmatpush1.bf16.msra.mxu0 0
          %4008 = vmatprep.subr.bf16.mxu0 0
          %4009 = vmatpush1.bf16.msra.mxu0 0
          %4010 = vmatprep.mubr.bf16.mxu0 0
          %4011 = vmatmul.mubr.bf16.gmra.mrb[0].mxu0 %v3800
          %v4012 = vpop.f32.mrb[0].mxu0
          %v4013 = vadd.f32 %v3838, %v4012
          %v4014 = vpop.f32.mrb[0].mxu0
          %v4015 = vadd.f32 %v3842, %v4014
          %v4016 = vpop.f32.mrb[0].mxu0
          %v4017 = vpop.f32.mrb[0].mxu0
          %4018 = vdwg.mxu0
          %4019 = vmatprep.subr.bf16.mxu0 0
          %4020 = vmatpush1.bf16.msra.mxu0 %v3932
          %4021 = vmatprep.subr.bf16.mxu0 0
          %4022 = vmatpush1.bf16.msra.mxu0 %v3935
          %4023 = vmatprep.subr.bf16.mxu0 0
          %4024 = vmatpush1.bf16.msra.mxu0 %v3938
          %4025 = vmatprep.subr.bf16.mxu0 0
          %4026 = vmatpush1.bf16.msra.mxu0 %v3941
          %4027 = vmatprep.subr.bf16.mxu0 0
          %4028 = vmatpush1.bf16.msra.mxu0 %v3944
          %4029 = vmatprep.subr.bf16.mxu0 0
          %4030 = vmatpush1.bf16.msra.mxu0 %v3947
          %4031 = vmatprep.subr.bf16.mxu0 0
          %4032 = vmatpush1.bf16.msra.mxu0 %v3950
          %4033 = vmatprep.subr.bf16.mxu0 0
          %4034 = vmatpush1.bf16.msra.mxu0 %v3953
          %4035 = vmatprep.subr.bf16.mxu0 0
          %4036 = vmatpush1.bf16.msra.mxu0 0
          %4037 = vmatprep.subr.bf16.mxu0 0
          %4038 = vmatpush1.bf16.msra.mxu0 0
          %4039 = vmatprep.subr.bf16.mxu0 0
          %4040 = vmatpush1.bf16.msra.mxu0 0
          %4041 = vmatprep.subr.bf16.mxu0 0
          %4042 = vmatpush1.bf16.msra.mxu0 0
          %4043 = vmatprep.subr.bf16.mxu0 0
          %4044 = vmatpush1.bf16.msra.mxu0 0
          %4045 = vmatprep.subr.bf16.mxu0 0
          %4046 = vmatpush1.bf16.msra.mxu0 0
          %4047 = vmatprep.subr.bf16.mxu0 0
          %4048 = vmatpush1.bf16.msra.mxu0 0
          %4049 = vmatprep.subr.bf16.mxu0 0
          %4050 = vmatpush1.bf16.msra.mxu0 0
          %4051 = vmatprep.mubr.bf16.mxu0 0
          %4052 = vmatmul.mubr.bf16.gmra.mrb[0].mxu0 %v3800
          %v4053 = vpop.f32.mrb[0].mxu0
          %v4054 = vadd.f32 %v3846, %v4053
          %v4055 = vpop.f32.mrb[0].mxu0
          %v4056 = vpop.f32.mrb[0].mxu0
          %v4057 = vpop.f32.mrb[0].mxu0
          %4058 = vdwg.mxu0
          %v4059 = vpack.c.bf16 %v4013, %v4013
          %v4060 = vpack.c.bf16 %v4015, %v4015
          %v4061 = vpack.c.bf16 %v4054, %v4054
          %vm4062 = vcmask 523264
          %v4064 = vsel %vm4062, %v4059, 0
          %v4067 = vsel %vm4062, %v4060, 0
          %4069 = vmatprep.subr.bf16.mxu0 0
          %4070 = vmatpush1.bf16.xpose.msra.mxu0 %v4067
          %4071 = vmatprep.subr.bf16.mxu0 0
          %4072 = vmatpush1.bf16.xpose.msra.mxu0 0
          %4073 = vmatprep.subr.bf16.mxu0 0
          %4074 = vmatpush1.bf16.xpose.msra.mxu0 0
          %4075 = vmatprep.subr.bf16.mxu0 0
          %4076 = vmatpush1.bf16.xpose.msra.mxu0 0
          %4077 = vmatprep.subr.bf16.mxu0 0
          %4078 = vmatpush1.bf16.xpose.msra.mxu0 0
          %4079 = vmatprep.subr.bf16.mxu0 0
          %4080 = vmatpush1.bf16.xpose.msra.mxu0 0
          %4081 = vmatprep.subr.bf16.mxu0 0
          %4082 = vmatpush1.bf16.xpose.msra.mxu0 0
          %4083 = vmatprep.subr.bf16.mxu0 0
          %4084 = vmatpush1.bf16.xpose.msra.mxu0 0
          %4085 = vmatprep.subr.bf16.mxu0 0
          %4086 = vmatpush1.bf16.xpose.msra.mxu0 0
          %4087 = vmatprep.subr.bf16.mxu0 0
          %4088 = vmatpush1.bf16.xpose.msra.mxu0 0
          %4089 = vmatprep.subr.bf16.mxu0 0
          %4090 = vmatpush1.bf16.xpose.msra.mxu0 0
          %4091 = vmatprep.subr.bf16.mxu0 0
          %4092 = vmatpush1.bf16.xpose.msra.mxu0 0
          %4093 = vmatprep.subr.bf16.mxu0 0
          %4094 = vmatpush1.bf16.xpose.msra.mxu0 0
          %4095 = vmatprep.subr.bf16.mxu0 0
          %4096 = vmatpush1.bf16.xpose.msra.mxu0 0
          %4097 = vmatprep.subr.bf16.mxu0 0
          %4098 = vmatpush1.bf16.xpose.msra.mxu0 0
          %4099 = vmatprep.subr.bf16.mxu0 0
          %4100 = vmatpush1.bf16.xpose.msra.mxu0 0
          %4101 = vmatprep.mubr.bf16.mxu0 0
          %4102 = vmatmul.mubr.bf16.gmra.mrb[0].mxu0 %v4064
          %v4103 = vpop.f32.mrb[0].mxu0
          %v4104 = vadd.f32 %v3799, %v4103
          %v4105 = vpop.f32.mrb[0].mxu0
          %v4106 = vpop.f32.mrb[0].mxu0
          %v4107 = vpop.f32.mrb[0].mxu0
          %4108 = vdwg.mxu0
          %vm4109 = vcmask 64512
          %v4110 = vsel %vm4109, %v4104, -inf
          %4111 = vmax.xlane.f32.xlu0 %v4110
          %v4112 = vpop.xlane.xlu0 %4111
          %v4113 = vsub.f32 %v4104, %v4112
          %v4114 = vmul.f32 %v4113, 1.442695
          %v4115 = vpow.pop %v4114
          %v4116 = vsel %vm4109, %v4115, 0.0
          %4117 = vadd.xlane.f32.xlu0 %v4116
          %v4118 = vpop.xlane.xlu0 %4117
          %v4119 = vrcp.pop %v4118
          %v4120 = vmul.f32 %v4115, %v4119
          %v4121 = vpack.c.bf16 %v4120, %v4120
          %v4123 = vsel %vm4109, %v4121, 0
          %vm4125 = vcmask 1043456
          %v4127 = vsel %vm4125, %v4061, 0
          %4129 = vmatprep.subr.bf16.mxu0 0
          %4130 = vmatpush1.bf16.msra.mxu0 %v4127
          %4131 = vmatprep.subr.bf16.mxu0 0
          %4132 = vmatpush1.bf16.msra.mxu0 0
          %4133 = vmatprep.subr.bf16.mxu0 0
          %4134 = vmatpush1.bf16.msra.mxu0 0
          %4135 = vmatprep.subr.bf16.mxu0 0
          %4136 = vmatpush1.bf16.msra.mxu0 0
          %4137 = vmatprep.subr.bf16.mxu0 0
          %4138 = vmatpush1.bf16.msra.mxu0 0
          %4139 = vmatprep.subr.bf16.mxu0 0
          %4140 = vmatpush1.bf16.msra.mxu0 0
          %4141 = vmatprep.subr.bf16.mxu0 0
          %4142 = vmatpush1.bf16.msra.mxu0 0
          %4143 = vmatprep.subr.bf16.mxu0 0
          %4144 = vmatpush1.bf16.msra.mxu0 0
          %4145 = vmatprep.subr.bf16.mxu0 0
          %4146 = vmatpush1.bf16.msra.mxu0 0
          %4147 = vmatprep.subr.bf16.mxu0 0
          %4148 = vmatpush1.bf16.msra.mxu0 0
          %4149 = vmatprep.subr.bf16.mxu0 0
          %4150 = vmatpush1.bf16.msra.mxu0 0
          %4151 = vmatprep.subr.bf16.mxu0 0
          %4152 = vmatpush1.bf16.msra.mxu0 0
          %4153 = vmatprep.subr.bf16.mxu0 0
          %4154 = vmatpush1.bf16.msra.mxu0 0
          %4155 = vmatprep.subr.bf16.mxu0 0
          %4156 = vmatpush1.bf16.msra.mxu0 0
          %4157 = vmatprep.subr.bf16.mxu0 0
          %4158 = vmatpush1.bf16.msra.mxu0 0
          %4159 = vmatprep.subr.bf16.mxu0 0
          %4160 = vmatpush1.bf16.msra.mxu0 0
          %4161 = vmatprep.mubr.bf16.mxu0 0
          %4162 = vmatmul.mubr.bf16.gmra.mrb[0].mxu0 %v4123
          %v4163 = vpop.f32.mrb[0].mxu0
          %v4164 = vadd.f32 0.0, %v4163
          %v4165 = vpop.f32.mrb[0].mxu0
          %v4166 = vpop.f32.mrb[0].mxu0
          %v4167 = vpop.f32.mrb[0].mxu0
          %4168 = vdwg.mxu0
          %4170 = vrot.lane.b32.xlu0 %v4059, 64
          %v4171 = vpop.permute.xlu0 %4170
          %4173 = vrot.lane.b32.xlu0 %v4060, 64
          %v4174 = vpop.permute.xlu0 %4173
          %v4176 = vsel %vm4062, %v4171, 0
          %v4179 = vsel %vm4062, %v4174, 0
          %4181 = vmatprep.subr.bf16.mxu0 0
          %4182 = vmatpush1.bf16.xpose.msra.mxu0 %v4179
          %4183 = vmatprep.subr.bf16.mxu0 0
          %4184 = vmatpush1.bf16.xpose.msra.mxu0 0
          %4185 = vmatprep.subr.bf16.mxu0 0
          %4186 = vmatpush1.bf16.xpose.msra.mxu0 0
          %4187 = vmatprep.subr.bf16.mxu0 0
          %4188 = vmatpush1.bf16.xpose.msra.mxu0 0
          %4189 = vmatprep.subr.bf16.mxu0 0
          %4190 = vmatpush1.bf16.xpose.msra.mxu0 0
          %4191 = vmatprep.subr.bf16.mxu0 0
          %4192 = vmatpush1.bf16.xpose.msra.mxu0 0
          %4193 = vmatprep.subr.bf16.mxu0 0
          %4194 = vmatpush1.bf16.xpose.msra.mxu0 0
          %4195 = vmatprep.subr.bf16.mxu0 0
          %4196 = vmatpush1.bf16.xpose.msra.mxu0 0
          %4197 = vmatprep.subr.bf16.mxu0 0
          %4198 = vmatpush1.bf16.xpose.msra.mxu0 0
          %4199 = vmatprep.subr.bf16.mxu0 0
          %4200 = vmatpush1.bf16.xpose.msra.mxu0 0
          %4201 = vmatprep.subr.bf16.mxu0 0
          %4202 = vmatpush1.bf16.xpose.msra.mxu0 0
          %4203 = vmatprep.subr.bf16.mxu0 0
          %4204 = vmatpush1.bf16.xpose.msra.mxu0 0
          %4205 = vmatprep.subr.bf16.mxu0 0
          %4206 = vmatpush1.bf16.xpose.msra.mxu0 0
          %4207 = vmatprep.subr.bf16.mxu0 0
          %4208 = vmatpush1.bf16.xpose.msra.mxu0 0
          %4209 = vmatprep.subr.bf16.mxu0 0
          %4210 = vmatpush1.bf16.xpose.msra.mxu0 0
          %4211 = vmatprep.subr.bf16.mxu0 0
          %4212 = vmatpush1.bf16.xpose.msra.mxu0 0
          %4213 = vmatprep.mubr.bf16.mxu0 0
          %4214 = vmatmul.mubr.bf16.gmra.mrb[0].mxu0 %v4176
          %v4215 = vpop.f32.mrb[0].mxu0
          %v4216 = vadd.f32 %v3799, %v4215
          %v4217 = vpop.f32.mrb[0].mxu0
          %v4218 = vpop.f32.mrb[0].mxu0
          %v4219 = vpop.f32.mrb[0].mxu0
          %4220 = vdwg.mxu0
          %v4221 = vsel %vm4109, %v4216, -inf
          %4222 = vmax.xlane.f32.xlu0 %v4221
          %v4223 = vpop.xlane.xlu0 %4222
          %v4224 = vsub.f32 %v4216, %v4223
          %v4225 = vmul.f32 %v4224, 1.442695
          %v4226 = vpow.pop %v4225
          %v4227 = vsel %vm4109, %v4226, 0.0
          %4228 = vadd.xlane.f32.xlu0 %v4227
          %v4229 = vpop.xlane.xlu0 %4228
          %v4230 = vrcp.pop %v4229
          %v4231 = vmul.f32 %v4226, %v4230
          %v4232 = vpack.c.bf16 %v4231, %v4231
          %4234 = vrot.lane.b32.xlu0 %v4061, 64
          %v4235 = vpop.permute.xlu0 %4234
          %v4237 = vsel %vm4109, %v4232, 0
          %v4240 = vsel %vm4125, %v4235, 0
          %4242 = vmatprep.subr.bf16.mxu0 0
          %4243 = vmatpush1.bf16.msra.mxu0 %v4240
          %4244 = vmatprep.subr.bf16.mxu0 0
          %4245 = vmatpush1.bf16.msra.mxu0 0
          %4246 = vmatprep.subr.bf16.mxu0 0
          %4247 = vmatpush1.bf16.msra.mxu0 0
          %4248 = vmatprep.subr.bf16.mxu0 0
          %4249 = vmatpush1.bf16.msra.mxu0 0
          %4250 = vmatprep.subr.bf16.mxu0 0
          %4251 = vmatpush1.bf16.msra.mxu0 0
          %4252 = vmatprep.subr.bf16.mxu0 0
          %4253 = vmatpush1.bf16.msra.mxu0 0
          %4254 = vmatprep.subr.bf16.mxu0 0
          %4255 = vmatpush1.bf16.msra.mxu0 0
          %4256 = vmatprep.subr.bf16.mxu0 0
          %4257 = vmatpush1.bf16.msra.mxu0 0
          %4258 = vmatprep.subr.bf16.mxu0 0
          %4259 = vmatpush1.bf16.msra.mxu0 0
          %4260 = vmatprep.subr.bf16.mxu0 0
          %4261 = vmatpush1.bf16.msra.mxu0 0
          %4262 = vmatprep.subr.bf16.mxu0 0
          %4263 = vmatpush1.bf16.msra.mxu0 0
          %4264 = vmatprep.subr.bf16.mxu0 0
          %4265 = vmatpush1.bf16.msra.mxu0 0
          %4266 = vmatprep.subr.bf16.mxu0 0
          %4267 = vmatpush1.bf16.msra.mxu0 0
          %4268 = vmatprep.subr.bf16.mxu0 0
          %4269 = vmatpush1.bf16.msra.mxu0 0
          %4270 = vmatprep.subr.bf16.mxu0 0
          %4271 = vmatpush1.bf16.msra.mxu0 0
          %4272 = vmatprep.subr.bf16.mxu0 0
          %4273 = vmatpush1.bf16.msra.mxu0 0
          %4274 = vmatprep.mubr.bf16.mxu0 0
          %4275 = vmatmul.mubr.bf16.gmra.mrb[0].mxu0 %v4237
          %v4276 = vpop.f32.mrb[0].mxu0
          %v4277 = vadd.f32 0.0, %v4276
          %v4278 = vpop.f32.mrb[0].mxu0
          %v4279 = vpop.f32.mrb[0].mxu0
          %v4280 = vpop.f32.mrb[0].mxu0
          %4281 = vdwg.mxu0
          %4283 = vrot.lane.b32.xlu0 %v4277, 64
          %v4284 = vpop.permute.xlu0 %4283
          %v4286 = vsel %vm4062, %v4164, %v4284
          %v4287 = vpack.c.bf16 %v4286, %v4286
          %v4288 = vld [vmem:[%s2216] sm:$0xf]
          %v4289 = vld [vmem:[%s2216 + $0x4] sm:$0xf]
          %v4290 = vld [vmem:[%s2216 + $0x8] sm:$0xf]
          %v4291 = vld [vmem:[%s2216 + $0xc] sm:$0xf]
          %v4292 = vld [vmem:[%s2216 + $0x10] sm:$0xf]
          %v4293 = vld [vmem:[%s2216 + $0x14] sm:$0xf]
          %v4294 = vld [vmem:[%s2216 + $0x18] sm:$0xf]
          %v4295 = vld [vmem:[%s2216 + $0x1c] sm:$0xf]
          %v4296 = vld [vmem:[%s2216 + $0x20] sm:$0xf]
          %v4297 = vld [vmem:[%s2216 + $0x24] sm:$0xf]
          %v4298 = vld [vmem:[%s2216 + $0x28] sm:$0xf]
          %v4299 = vld [vmem:[%s2216 + $0x2c] sm:$0xf]
          %v4300 = vld [vmem:[%s2216 + $0x30] sm:$0xf]
          %v4301 = vld [vmem:[%s2216 + $0x34] sm:$0xf]
          %v4302 = vld [vmem:[%s2216 + $0x38] sm:$0xf]
          %v4303 = vld [vmem:[%s2216 + $0x3c] sm:$0xf]
          %v4304 = vld [vmem:[%s2224] sm:$0x1]
          %v4306 = vlaneseq
          %v4307 = vshrl.u32 %v4306, 7
          %v4308 = vsub.s32 0, %v4307
          %v4309 = vrot.slane %v4304, %v4308
          %v4327 = vunpack.c.l.b16 %v4288
          %v4328 = vunpack.c.l.b16 %v4289
          %v4329 = vunpack.c.l.b16 %v4290
          %v4330 = vunpack.c.l.b16 %v4291
          %v4331 = vunpack.c.l.b16 %v4292
          %v4332 = vunpack.c.l.b16 %v4293
          %v4333 = vunpack.c.l.b16 %v4294
          %v4334 = vunpack.c.l.b16 %v4295
          %v4335 = vunpack.c.l.b16 %v4296
          %v4336 = vunpack.c.l.b16 %v4297
          %v4337 = vunpack.c.l.b16 %v4298
          %v4338 = vunpack.c.l.b16 %v4299
          %v4339 = vunpack.c.l.b16 %v4300
          %v4340 = vunpack.c.l.b16 %v4301
          %v4341 = vunpack.c.l.b16 %v4302
          %v4342 = vunpack.c.l.b16 %v4303
          %v4343 = vpack.c.b16 %v4328, %v4327
          %v4344 = vpack.c.b16 %v4330, %v4329
          %v4345 = vpack.c.b16 %v4332, %v4331
          %v4346 = vpack.c.b16 %v4334, %v4333
          %v4347 = vpack.c.b16 %v4336, %v4335
          %v4348 = vpack.c.b16 %v4338, %v4337
          %v4349 = vpack.c.b16 %v4340, %v4339
          %v4350 = vpack.c.b16 %v4342, %v4341
          %4359 = vmatprep.subr.bf16.mxu0 0
          %4360 = vmatpush1.bf16.msra.mxu0 %v4343
          %4361 = vmatprep.subr.bf16.mxu0 0
          %4362 = vmatpush1.bf16.msra.mxu0 %v4344
          %4363 = vmatprep.subr.bf16.mxu0 0
          %4364 = vmatpush1.bf16.msra.mxu0 %v4345
          %4365 = vmatprep.subr.bf16.mxu0 0
          %4366 = vmatpush1.bf16.msra.mxu0 %v4346
          %4367 = vmatprep.subr.bf16.mxu0 0
          %4368 = vmatpush1.bf16.msra.mxu0 %v4347
          %4369 = vmatprep.subr.bf16.mxu0 0
          %4370 = vmatpush1.bf16.msra.mxu0 %v4348
          %4371 = vmatprep.subr.bf16.mxu0 0
          %4372 = vmatpush1.bf16.msra.mxu0 %v4349
          %4373 = vmatprep.subr.bf16.mxu0 0
          %4374 = vmatpush1.bf16.msra.mxu0 %v4350
          %4375 = vmatprep.subr.bf16.mxu0 0
          %4376 = vmatpush1.bf16.msra.mxu0 0
          %4377 = vmatprep.subr.bf16.mxu0 0
          %4378 = vmatpush1.bf16.msra.mxu0 0
          %4379 = vmatprep.subr.bf16.mxu0 0
          %4380 = vmatpush1.bf16.msra.mxu0 0
          %4381 = vmatprep.subr.bf16.mxu0 0
          %4382 = vmatpush1.bf16.msra.mxu0 0
          %4383 = vmatprep.subr.bf16.mxu0 0
          %4384 = vmatpush1.bf16.msra.mxu0 0
          %4385 = vmatprep.subr.bf16.mxu0 0
          %4386 = vmatpush1.bf16.msra.mxu0 0
          %4387 = vmatprep.subr.bf16.mxu0 0
          %4388 = vmatpush1.bf16.msra.mxu0 0
          %4389 = vmatprep.subr.bf16.mxu0 0
          %4390 = vmatpush1.bf16.msra.mxu0 0
          %4391 = vmatprep.mubr.bf16.mxu0 0
          %4392 = vmatmul.mubr.bf16.gmra.mrb[0].mxu0 %v4287
          %v4393 = vpop.f32.mrb[0].mxu0
          %v4394 = vadd.f32 %v4309, %v4393
          %v4395 = vpop.f32.mrb[0].mxu0
          %v4396 = vpop.f32.mrb[0].mxu0
          %v4397 = vpop.f32.mrb[0].mxu0
          %4398 = vdwg.mxu0
          %v4399 = vadd.f32 %v3798, %v4394
          %v4400 = vld [vmem:[%s2232] sm:$0x1]
          %v4401 = vld [vmem:[%s2240] sm:$0x1]
          %4402 = vadd.xlane.f32.xlu0 %v4399
          %v4403 = vpop.xlane.xlu0 %4402
          %v4404 = vrcp.pop 128.0
          %v4405 = vmul.f32 %v4403, %v4404
          %v4406 = vsub.f32 %v4399, %v4405
          %v4407 = vmul.f32 %v4406, %v4406
          %4408 = vadd.xlane.f32.xlu0 %v4407
          %v4409 = vpop.xlane.xlu0 %4408
          %v4410 = vmul.f32 %v4409, %v4404
          %v4411 = vadd.f32 %v4410, 1e-05
          %v4412 = vrsqrt.pop %v4411
          %v4413 = vmul.f32 %v4406, %v4412
          %v4415 = vlaneseq
          %v4416 = vshrl.u32 %v4415, 7
          %v4417 = vsub.s32 0, %v4416
          %v4418 = vrot.slane %v4400, %v4417
          %v4420 = vmul.f32 %v4413, %v4418
          %v4422 = vlaneseq
          %v4423 = vshrl.u32 %v4422, 7
          %v4424 = vsub.s32 0, %v4423
          %v4425 = vrot.slane %v4401, %v4424
          %v4427 = vadd.f32 %v4420, %v4425
          %v4428 = vld [vmem:[#allocation3] sm:$0xff]
          %v4429 = vpack.c.bf16 %v4427, %v4427
          %v4430 = vld [vmem:[%s2249] sm:$0xf]
          %v4431 = vld [vmem:[%s2249 + $0x4] sm:$0xf]
          %v4432 = vld [vmem:[%s2249 + $0x8] sm:$0xf]
          %v4433 = vld [vmem:[%s2249 + $0xc] sm:$0xf]
          %v4434 = vld [vmem:[%s2249 + $0x10] sm:$0xf]
          %v4435 = vld [vmem:[%s2249 + $0x14] sm:$0xf]
          %v4436 = vld [vmem:[%s2249 + $0x18] sm:$0xf]
          %v4437 = vld [vmem:[%s2249 + $0x1c] sm:$0xf]
          %v4438 = vld [vmem:[%s2249 + $0x20] sm:$0xf]
          %v4439 = vld [vmem:[%s2249 + $0x24] sm:$0xf]
          %v4440 = vld [vmem:[%s2249 + $0x28] sm:$0xf]
          %v4441 = vld [vmem:[%s2249 + $0x2c] sm:$0xf]
          %v4442 = vld [vmem:[%s2249 + $0x30] sm:$0xf]
          %v4443 = vld [vmem:[%s2249 + $0x34] sm:$0xf]
          %v4444 = vld [vmem:[%s2249 + $0x38] sm:$0xf]
          %v4445 = vld [vmem:[%s2249 + $0x3c] sm:$0xf]
          %v4446 = vld [vmem:[%s2257] sm:$0x1]
          %v4448 = vlaneseq
          %v4449 = vshrl.u32 %v4448, 7
          %v4450 = vsub.s32 0, %v4449
          %v4451 = vrot.slane %v4446, %v4450
          %v4469 = vunpack.c.l.b16 %v4430
          %v4470 = vunpack.c.l.b16 %v4431
          %v4471 = vunpack.c.l.b16 %v4432
          %v4472 = vunpack.c.l.b16 %v4433
          %v4473 = vunpack.c.l.b16 %v4434
          %v4474 = vunpack.c.l.b16 %v4435
          %v4475 = vunpack.c.l.b16 %v4436
          %v4476 = vunpack.c.l.b16 %v4437
          %v4477 = vunpack.c.l.b16 %v4438
          %v4478 = vunpack.c.l.b16 %v4439
          %v4479 = vunpack.c.l.b16 %v4440
          %v4480 = vunpack.c.l.b16 %v4441
          %v4481 = vunpack.c.l.b16 %v4442
          %v4482 = vunpack.c.l.b16 %v4443
          %v4483 = vunpack.c.l.b16 %v4444
          %v4484 = vunpack.c.l.b16 %v4445
          %v4485 = vpack.c.b16 %v4470, %v4469
          %v4486 = vpack.c.b16 %v4472, %v4471
          %v4487 = vpack.c.b16 %v4474, %v4473
          %v4488 = vpack.c.b16 %v4476, %v4475
          %v4489 = vpack.c.b16 %v4478, %v4477
          %v4490 = vpack.c.b16 %v4480, %v4479
          %v4491 = vpack.c.b16 %v4482, %v4481
          %v4492 = vpack.c.b16 %v4484, %v4483
          %4501 = vmatprep.subr.bf16.mxu0 0
          %4502 = vmatpush1.bf16.msra.mxu0 %v4485
          %4503 = vmatprep.subr.bf16.mxu0 0
          %4504 = vmatpush1.bf16.msra.mxu0 %v4486
          %4505 = vmatprep.subr.bf16.mxu0 0
          %4506 = vmatpush1.bf16.msra.mxu0 %v4487
          %4507 = vmatprep.subr.bf16.mxu0 0
          %4508 = vmatpush1.bf16.msra.mxu0 %v4488
          %4509 = vmatprep.subr.bf16.mxu0 0
          %4510 = vmatpush1.bf16.msra.mxu0 %v4489
          %4511 = vmatprep.subr.bf16.mxu0 0
          %4512 = vmatpush1.bf16.msra.mxu0 %v4490
          %4513 = vmatprep.subr.bf16.mxu0 0
          %4514 = vmatpush1.bf16.msra.mxu0 %v4491
          %4515 = vmatprep.subr.bf16.mxu0 0
          %4516 = vmatpush1.bf16.msra.mxu0 %v4492
          %4517 = vmatprep.subr.bf16.mxu0 0
          %4518 = vmatpush1.bf16.msra.mxu0 0
          %4519 = vmatprep.subr.bf16.mxu0 0
          %4520 = vmatpush1.bf16.msra.mxu0 0
          %4521 = vmatprep.subr.bf16.mxu0 0
          %4522 = vmatpush1.bf16.msra.mxu0 0
          %4523 = vmatprep.subr.bf16.mxu0 0
          %4524 = vmatpush1.bf16.msra.mxu0 0
          %4525 = vmatprep.subr.bf16.mxu0 0
          %4526 = vmatpush1.bf16.msra.mxu0 0
          %4527 = vmatprep.subr.bf16.mxu0 0
          %4528 = vmatpush1.bf16.msra.mxu0 0
          %4529 = vmatprep.subr.bf16.mxu0 0
          %4530 = vmatpush1.bf16.msra.mxu0 0
          %4531 = vmatprep.subr.bf16.mxu0 0
          %4532 = vmatpush1.bf16.msra.mxu0 0
          %4533 = vmatprep.mubr.bf16.mxu0 0
          %4534 = vmatmul.mubr.bf16.gmra.mrb[0].mxu0 %v4429
          %v4535 = vpop.f32.mrb[0].mxu0
          %v4536 = vadd.f32 %v4451, %v4535
          %v4537 = vpop.f32.mrb[0].mxu0
          %v4538 = vpop.f32.mrb[0].mxu0
          %v4539 = vpop.f32.mrb[0].mxu0
          %4540 = vdwg.mxu0
          %v4541 = vpack.c.bf16 %v4428, %v4428
          %v4542 = vld [vmem:[%s2266] sm:$0xff]
          %v4543 = vld [vmem:[%s2266 + $0x8] sm:$0xff]
          %v4544 = vld [vmem:[%s2266 + $0x10] sm:$0xff]
          %v4545 = vld [vmem:[%s2266 + $0x18] sm:$0xff]
          %v4546 = vld [vmem:[%s2266 + $0x20] sm:$0xff]
          %v4547 = vld [vmem:[%s2266 + $0x28] sm:$0xff]
          %v4548 = vld [vmem:[%s2266 + $0x30] sm:$0xff]
          %v4549 = vld [vmem:[%s2266 + $0x38] sm:$0xff]
          %v4550 = vld [vmem:[%s2266 + $0x40] sm:$0xff]
          %v4551 = vld [vmem:[%s2266 + $0x48] sm:$0xff]
          %v4552 = vld [vmem:[%s2266 + $0x50] sm:$0xff]
          %v4553 = vld [vmem:[%s2266 + $0x58] sm:$0xff]
          %v4554 = vld [vmem:[%s2266 + $0x60] sm:$0xff]
          %v4555 = vld [vmem:[%s2266 + $0x68] sm:$0xff]
          %v4556 = vld [vmem:[%s2266 + $0x70] sm:$0xff]
          %v4557 = vld [vmem:[%s2266 + $0x78] sm:$0xff]
          %v4558 = vld [vmem:[%s2275] sm:$0x3]
          %v4560 = vlaneseq
          %v4561 = vshrl.u32 %v4560, 7
          %v4562 = vsub.s32 0, %v4561
          %v4563 = vrot.slane %v4558, %v4562
          %v4564 = vlaneseq
          %v4565 = vshrl.u32 %v4564, 7
          %v4566 = vsub.s32 1, %v4565
          %v4567 = vrot.slane %v4558, %v4566
          %v4586 = vunpack.c.l.b16 %v4542
          %v4587 = vunpack.c.h.b16 %v4542
          %v4588 = vunpack.c.l.b16 %v4543
          %v4589 = vunpack.c.h.b16 %v4543
          %v4590 = vunpack.c.l.b16 %v4544
          %v4591 = vunpack.c.h.b16 %v4544
          %v4592 = vunpack.c.l.b16 %v4545
          %v4593 = vunpack.c.h.b16 %v4545
          %v4594 = vunpack.c.l.b16 %v4546
          %v4595 = vunpack.c.h.b16 %v4546
          %v4596 = vunpack.c.l.b16 %v4547
          %v4597 = vunpack.c.h.b16 %v4547
          %v4598 = vunpack.c.l.b16 %v4548
          %v4599 = vunpack.c.h.b16 %v4548
          %v4600 = vunpack.c.l.b16 %v4549
          %v4601 = vunpack.c.h.b16 %v4549
          %v4602 = vunpack.c.l.b16 %v4550
          %v4603 = vunpack.c.h.b16 %v4550
          %v4604 = vunpack.c.l.b16 %v4551
          %v4605 = vunpack.c.h.b16 %v4551
          %v4606 = vunpack.c.l.b16 %v4552
          %v4607 = vunpack.c.h.b16 %v4552
          %v4608 = vunpack.c.l.b16 %v4553
          %v4609 = vunpack.c.h.b16 %v4553
          %v4610 = vunpack.c.l.b16 %v4554
          %v4611 = vunpack.c.h.b16 %v4554
          %v4612 = vunpack.c.l.b16 %v4555
          %v4613 = vunpack.c.h.b16 %v4555
          %v4614 = vunpack.c.l.b16 %v4556
          %v4615 = vunpack.c.h.b16 %v4556
          %v4616 = vunpack.c.l.b16 %v4557
          %v4617 = vunpack.c.h.b16 %v4557
          %v4618 = vpack.c.b16 %v4588, %v4586
          %v4619 = vpack.c.b16 %v4589, %v4587
          %v4620 = vpack.c.b16 %v4592, %v4590
          %v4621 = vpack.c.b16 %v4593, %v4591
          %v4622 = vpack.c.b16 %v4596, %v4594
          %v4623 = vpack.c.b16 %v4597, %v4595
          %v4624 = vpack.c.b16 %v4600, %v4598
          %v4625 = vpack.c.b16 %v4601, %v4599
          %v4626 = vpack.c.b16 %v4604, %v4602
          %v4627 = vpack.c.b16 %v4605, %v4603
          %v4628 = vpack.c.b16 %v4608, %v4606
          %v4629 = vpack.c.b16 %v4609, %v4607
          %v4630 = vpack.c.b16 %v4612, %v4610
          %v4631 = vpack.c.b16 %v4613, %v4611
          %v4632 = vpack.c.b16 %v4616, %v4614
          %v4633 = vpack.c.b16 %v4617, %v4615
          %4650 = vmatprep.subr.bf16.mxu0 %v4619
          %4651 = vmatpush1.bf16.msra.mxu0 %v4618
          %4652 = vmatprep.subr.bf16.mxu0 %v4621
          %4653 = vmatpush1.bf16.msra.mxu0 %v4620
          %4654 = vmatprep.subr.bf16.mxu0 %v4623
          %4655 = vmatpush1.bf16.msra.mxu0 %v4622
          %4656 = vmatprep.subr.bf16.mxu0 %v4625
          %4657 = vmatpush1.bf16.msra.mxu0 %v4624
          %4658 = vmatprep.subr.bf16.mxu0 %v4627
          %4659 = vmatpush1.bf16.msra.mxu0 %v4626
          %4660 = vmatprep.subr.bf16.mxu0 %v4629
          %4661 = vmatpush1.bf16.msra.mxu0 %v4628
          %4662 = vmatprep.subr.bf16.mxu0 %v4631
          %4663 = vmatpush1.bf16.msra.mxu0 %v4630
          %4664 = vmatprep.subr.bf16.mxu0 %v4633
          %4665 = vmatpush1.bf16.msra.mxu0 %v4632
          %4666 = vmatprep.subr.bf16.mxu0 0
          %4667 = vmatpush1.bf16.msra.mxu0 0
          %4668 = vmatprep.subr.bf16.mxu0 0
          %4669 = vmatpush1.bf16.msra.mxu0 0
          %4670 = vmatprep.subr.bf16.mxu0 0
          %4671 = vmatpush1.bf16.msra.mxu0 0
          %4672 = vmatprep.subr.bf16.mxu0 0
          %4673 = vmatpush1.bf16.msra.mxu0 0
          %4674 = vmatprep.subr.bf16.mxu0 0
          %4675 = vmatpush1.bf16.msra.mxu0 0
          %4676 = vmatprep.subr.bf16.mxu0 0
          %4677 = vmatpush1.bf16.msra.mxu0 0
          %4678 = vmatprep.subr.bf16.mxu0 0
          %4679 = vmatpush1.bf16.msra.mxu0 0
          %4680 = vmatprep.subr.bf16.mxu0 0
          %4681 = vmatpush1.bf16.msra.mxu0 0
          %4682 = vmatprep.mubr.bf16.mxu0 0
          %4683 = vmatmul.mubr.bf16.gmra.mrb[0].mxu0 %v4541
          %v4684 = vpop.f32.mrb[0].mxu0
          %v4685 = vadd.f32 %v4563, %v4684
          %v4686 = vpop.f32.mrb[0].mxu0
          %v4687 = vadd.f32 %v4567, %v4686
          %v4688 = vpop.f32.mrb[0].mxu0
          %v4689 = vpop.f32.mrb[0].mxu0
          %4690 = vdwg.mxu0
          %v4691 = vpack.c.bf16 %v4536, %v4536
          %v4692 = vpack.c.bf16 %v4685, %v4685
          %v4693 = vpack.c.bf16 %v4687, %v4687
          %v4695 = vsel %vm4062, %v4691, 0
          %v4698 = vsel %vm4062, %v4692, 0
          %4700 = vmatprep.subr.bf16.mxu0 0
          %4701 = vmatpush1.bf16.xpose.msra.mxu0 %v4698
          %4702 = vmatprep.subr.bf16.mxu0 0
          %4703 = vmatpush1.bf16.xpose.msra.mxu0 0
          %4704 = vmatprep.subr.bf16.mxu0 0
          %4705 = vmatpush1.bf16.xpose.msra.mxu0 0
          %4706 = vmatprep.subr.bf16.mxu0 0
          %4707 = vmatpush1.bf16.xpose.msra.mxu0 0
          %4708 = vmatprep.subr.bf16.mxu0 0
          %4709 = vmatpush1.bf16.xpose.msra.mxu0 0
          %4710 = vmatprep.subr.bf16.mxu0 0
          %4711 = vmatpush1.bf16.xpose.msra.mxu0 0
          %4712 = vmatprep.subr.bf16.mxu0 0
          %4713 = vmatpush1.bf16.xpose.msra.mxu0 0
          %4714 = vmatprep.subr.bf16.mxu0 0
          %4715 = vmatpush1.bf16.xpose.msra.mxu0 0
          %4716 = vmatprep.subr.bf16.mxu0 0
          %4717 = vmatpush1.bf16.xpose.msra.mxu0 0
          %4718 = vmatprep.subr.bf16.mxu0 0
          %4719 = vmatpush1.bf16.xpose.msra.mxu0 0
          %4720 = vmatprep.subr.bf16.mxu0 0
          %4721 = vmatpush1.bf16.xpose.msra.mxu0 0
          %4722 = vmatprep.subr.bf16.mxu0 0
          %4723 = vmatpush1.bf16.xpose.msra.mxu0 0
          %4724 = vmatprep.subr.bf16.mxu0 0
          %4725 = vmatpush1.bf16.xpose.msra.mxu0 0
          %4726 = vmatprep.subr.bf16.mxu0 0
          %4727 = vmatpush1.bf16.xpose.msra.mxu0 0
          %4728 = vmatprep.subr.bf16.mxu0 0
          %4729 = vmatpush1.bf16.xpose.msra.mxu0 0
          %4730 = vmatprep.subr.bf16.mxu0 0
          %4731 = vmatpush1.bf16.xpose.msra.mxu0 0
          %4732 = vmatprep.mubr.bf16.mxu0 0
          %4733 = vmatmul.mubr.bf16.gmra.mrb[0].mxu0 %v4695
          %v4734 = vpop.f32.mrb[0].mxu0
          %v4735 = vadd.f32 0.0, %v4734
          %v4736 = vpop.f32.mrb[0].mxu0
          %v4737 = vpop.f32.mrb[0].mxu0
          %v4738 = vpop.f32.mrb[0].mxu0
          %4739 = vdwg.mxu0
          %v4740 = vsel %vm4109, %v4735, -inf
          %4741 = vmax.xlane.f32.xlu0 %v4740
          %v4742 = vpop.xlane.xlu0 %4741
          %v4743 = vsub.f32 %v4735, %v4742
          %v4744 = vmul.f32 %v4743, 1.442695
          %v4745 = vpow.pop %v4744
          %v4746 = vsel %vm4109, %v4745, 0.0
          %4747 = vadd.xlane.f32.xlu0 %v4746
          %v4748 = vpop.xlane.xlu0 %4747
          %v4749 = vrcp.pop %v4748
          %v4750 = vmul.f32 %v4745, %v4749
          %v4751 = vpack.c.bf16 %v4750, %v4750
          %v4753 = vsel %vm4109, %v4751, 0
          %v4756 = vsel %vm4125, %v4693, 0
          %4758 = vmatprep.subr.bf16.mxu0 0
          %4759 = vmatpush1.bf16.msra.mxu0 %v4756
          %4760 = vmatprep.subr.bf16.mxu0 0
          %4761 = vmatpush1.bf16.msra.mxu0 0
          %4762 = vmatprep.subr.bf16.mxu0 0
          %4763 = vmatpush1.bf16.msra.mxu0 0
          %4764 = vmatprep.subr.bf16.mxu0 0
          %4765 = vmatpush1.bf16.msra.mxu0 0
          %4766 = vmatprep.subr.bf16.mxu0 0
          %4767 = vmatpush1.bf16.msra.mxu0 0
          %4768 = vmatprep.subr.bf16.mxu0 0
          %4769 = vmatpush1.bf16.msra.mxu0 0
          %4770 = vmatprep.subr.bf16.mxu0 0
          %4771 = vmatpush1.bf16.msra.mxu0 0
          %4772 = vmatprep.subr.bf16.mxu0 0
          %4773 = vmatpush1.bf16.msra.mxu0 0
          %4774 = vmatprep.subr.bf16.mxu0 0
          %4775 = vmatpush1.bf16.msra.mxu0 0
          %4776 = vmatprep.subr.bf16.mxu0 0
          %4777 = vmatpush1.bf16.msra.mxu0 0
          %4778 = vmatprep.subr.bf16.mxu0 0
          %4779 = vmatpush1.bf16.msra.mxu0 0
          %4780 = vmatprep.subr.bf16.mxu0 0
          %4781 = vmatpush1.bf16.msra.mxu0 0
          %4782 = vmatprep.subr.bf16.mxu0 0
          %4783 = vmatpush1.bf16.msra.mxu0 0
          %4784 = vmatprep.subr.bf16.mxu0 0
          %4785 = vmatpush1.bf16.msra.mxu0 0
          %4786 = vmatprep.subr.bf16.mxu0 0
          %4787 = vmatpush1.bf16.msra.mxu0 0
          %4788 = vmatprep.subr.bf16.mxu0 0
          %4789 = vmatpush1.bf16.msra.mxu0 0
          %4790 = vmatprep.mubr.bf16.mxu0 0
          %4791 = vmatmul.mubr.bf16.gmra.mrb[0].mxu0 %v4753
          %v4792 = vpop.f32.mrb[0].mxu0
          %v4793 = vadd.f32 0.0, %v4792
          %v4794 = vpop.f32.mrb[0].mxu0
          %v4795 = vpop.f32.mrb[0].mxu0
          %v4796 = vpop.f32.mrb[0].mxu0
          %4797 = vdwg.mxu0
          %4799 = vrot.lane.b32.xlu0 %v4691, 64
          %v4800 = vpop.permute.xlu0 %4799
          %4802 = vrot.lane.b32.xlu0 %v4692, 64
          %v4803 = vpop.permute.xlu0 %4802
          %v4805 = vsel %vm4062, %v4800, 0
          %v4808 = vsel %vm4062, %v4803, 0
          %4810 = vmatprep.subr.bf16.mxu0 0
          %4811 = vmatpush1.bf16.xpose.msra.mxu0 %v4808
          %4812 = vmatprep.subr.bf16.mxu0 0
          %4813 = vmatpush1.bf16.xpose.msra.mxu0 0
          %4814 = vmatprep.subr.bf16.mxu0 0
          %4815 = vmatpush1.bf16.xpose.msra.mxu0 0
          %4816 = vmatprep.subr.bf16.mxu0 0
          %4817 = vmatpush1.bf16.xpose.msra.mxu0 0
          %4818 = vmatprep.subr.bf16.mxu0 0
          %4819 = vmatpush1.bf16.xpose.msra.mxu0 0
          %4820 = vmatprep.subr.bf16.mxu0 0
          %4821 = vmatpush1.bf16.xpose.msra.mxu0 0
          %4822 = vmatprep.subr.bf16.mxu0 0
          %4823 = vmatpush1.bf16.xpose.msra.mxu0 0
          %4824 = vmatprep.subr.bf16.mxu0 0
          %4825 = vmatpush1.bf16.xpose.msra.mxu0 0
          %4826 = vmatprep.subr.bf16.mxu0 0
          %4827 = vmatpush1.bf16.xpose.msra.mxu0 0
          %4828 = vmatprep.subr.bf16.mxu0 0
          %4829 = vmatpush1.bf16.xpose.msra.mxu0 0
          %4830 = vmatprep.subr.bf16.mxu0 0
          %4831 = vmatpush1.bf16.xpose.msra.mxu0 0
          %4832 = vmatprep.subr.bf16.mxu0 0
          %4833 = vmatpush1.bf16.xpose.msra.mxu0 0
          %4834 = vmatprep.subr.bf16.mxu0 0
          %4835 = vmatpush1.bf16.xpose.msra.mxu0 0
          %4836 = vmatprep.subr.bf16.mxu0 0
          %4837 = vmatpush1.bf16.xpose.msra.mxu0 0
          %4838 = vmatprep.subr.bf16.mxu0 0
          %4839 = vmatpush1.bf16.xpose.msra.mxu0 0
          %4840 = vmatprep.subr.bf16.mxu0 0
          %4841 = vmatpush1.bf16.xpose.msra.mxu0 0
          %4842 = vmatprep.mubr.bf16.mxu0 0
          %4843 = vmatmul.mubr.bf16.gmra.mrb[0].mxu0 %v4805
          %v4844 = vpop.f32.mrb[0].mxu0
          %v4845 = vadd.f32 0.0, %v4844
          %v4846 = vpop.f32.mrb[0].mxu0
          %v4847 = vpop.f32.mrb[0].mxu0
          %v4848 = vpop.f32.mrb[0].mxu0
          %4849 = vdwg.mxu0
          %v4850 = vsel %vm4109, %v4845, -inf
          %4851 = vmax.xlane.f32.xlu0 %v4850
          %v4852 = vpop.xlane.xlu0 %4851
          %v4853 = vsub.f32 %v4845, %v4852
          %v4854 = vmul.f32 %v4853, 1.442695
          %v4855 = vpow.pop %v4854
          %v4856 = vsel %vm4109, %v4855, 0.0
          %4857 = vadd.xlane.f32.xlu0 %v4856
          %v4858 = vpop.xlane.xlu0 %4857
          %v4859 = vrcp.pop %v4858
          %v4860 = vmul.f32 %v4855, %v4859
          %v4861 = vpack.c.bf16 %v4860, %v4860
          %4863 = vrot.lane.b32.xlu0 %v4693, 64
          %v4864 = vpop.permute.xlu0 %4863
          %v4866 = vsel %vm4109, %v4861, 0
          %v4869 = vsel %vm4125, %v4864, 0
          %4871 = vmatprep.subr.bf16.mxu0 0
          %4872 = vmatpush1.bf16.msra.mxu0 %v4869
          %4873 = vmatprep.subr.bf16.mxu0 0
          %4874 = vmatpush1.bf16.msra.mxu0 0
          %4875 = vmatprep.subr.bf16.mxu0 0
          %4876 = vmatpush1.bf16.msra.mxu0 0
          %4877 = vmatprep.subr.bf16.mxu0 0
          %4878 = vmatpush1.bf16.msra.mxu0 0
          %4879 = vmatprep.subr.bf16.mxu0 0
          %4880 = vmatpush1.bf16.msra.mxu0 0
          %4881 = vmatprep.subr.bf16.mxu0 0
          %4882 = vmatpush1.bf16.msra.mxu0 0
          %4883 = vmatprep.subr.bf16.mxu0 0
          %4884 = vmatpush1.bf16.msra.mxu0 0
          %4885 = vmatprep.subr.bf16.mxu0 0
          %4886 = vmatpush1.bf16.msra.mxu0 0
          %4887 = vmatprep.subr.bf16.mxu0 0
          %4888 = vmatpush1.bf16.msra.mxu0 0
          %4889 = vmatprep.subr.bf16.mxu0 0
          %4890 = vmatpush1.bf16.msra.mxu0 0
          %4891 = vmatprep.subr.bf16.mxu0 0
          %4892 = vmatpush1.bf16.msra.mxu0 0
          %4893 = vmatprep.subr.bf16.mxu0 0
          %4894 = vmatpush1.bf16.msra.mxu0 0
          %4895 = vmatprep.subr.bf16.mxu0 0
          %4896 = vmatpush1.bf16.msra.mxu0 0
          %4897 = vmatprep.subr.bf16.mxu0 0
          %4898 = vmatpush1.bf16.msra.mxu0 0
          %4899 = vmatprep.subr.bf16.mxu0 0
          %4900 = vmatpush1.bf16.msra.mxu0 0
          %4901 = vmatprep.subr.bf16.mxu0 0
          %4902 = vmatpush1.bf16.msra.mxu0 0
          %4903 = vmatprep.mubr.bf16.mxu0 0
          %4904 = vmatmul.mubr.bf16.gmra.mrb[0].mxu0 %v4866
          %v4905 = vpop.f32.mrb[0].mxu0
          %v4906 = vadd.f32 0.0, %v4905
          %v4907 = vpop.f32.mrb[0].mxu0
          %v4908 = vpop.f32.mrb[0].mxu0
          %v4909 = vpop.f32.mrb[0].mxu0
          %4910 = vdwg.mxu0
          %4912 = vrot.lane.b32.xlu0 %v4906, 64
          %v4913 = vpop.permute.xlu0 %4912
          %v4915 = vsel %vm4062, %v4793, %v4913
          %v4916 = vpack.c.bf16 %v4915, %v4915
          %v4917 = vld [vmem:[%s2284] sm:$0xf]
          %v4918 = vld [vmem:[%s2284 + $0x4] sm:$0xf]
          %v4919 = vld [vmem:[%s2284 + $0x8] sm:$0xf]
          %v4920 = vld [vmem:[%s2284 + $0xc] sm:$0xf]
          %v4921 = vld [vmem:[%s2284 + $0x10] sm:$0xf]
          %v4922 = vld [vmem:[%s2284 + $0x14] sm:$0xf]
          %v4923 = vld [vmem:[%s2284 + $0x18] sm:$0xf]
          %v4924 = vld [vmem:[%s2284 + $0x1c] sm:$0xf]
          %v4925 = vld [vmem:[%s2284 + $0x20] sm:$0xf]
          %v4926 = vld [vmem:[%s2284 + $0x24] sm:$0xf]
          %v4927 = vld [vmem:[%s2284 + $0x28] sm:$0xf]
          %v4928 = vld [vmem:[%s2284 + $0x2c] sm:$0xf]
          %v4929 = vld [vmem:[%s2284 + $0x30] sm:$0xf]
          %v4930 = vld [vmem:[%s2284 + $0x34] sm:$0xf]
          %v4931 = vld [vmem:[%s2284 + $0x38] sm:$0xf]
          %v4932 = vld [vmem:[%s2284 + $0x3c] sm:$0xf]
          %v4933 = vld [vmem:[%s2292] sm:$0x1]
          %v4935 = vlaneseq
          %v4936 = vshrl.u32 %v4935, 7
          %v4937 = vsub.s32 0, %v4936
          %v4938 = vrot.slane %v4933, %v4937
          %v4956 = vunpack.c.l.b16 %v4917
          %v4957 = vunpack.c.l.b16 %v4918
          %v4958 = vunpack.c.l.b16 %v4919
          %v4959 = vunpack.c.l.b16 %v4920
          %v4960 = vunpack.c.l.b16 %v4921
          %v4961 = vunpack.c.l.b16 %v4922
          %v4962 = vunpack.c.l.b16 %v4923
          %v4963 = vunpack.c.l.b16 %v4924
          %v4964 = vunpack.c.l.b16 %v4925
          %v4965 = vunpack.c.l.b16 %v4926
          %v4966 = vunpack.c.l.b16 %v4927
          %v4967 = vunpack.c.l.b16 %v4928
          %v4968 = vunpack.c.l.b16 %v4929
          %v4969 = vunpack.c.l.b16 %v4930
          %v4970 = vunpack.c.l.b16 %v4931
          %v4971 = vunpack.c.l.b16 %v4932
          %v4972 = vpack.c.b16 %v4957, %v4956
          %v4973 = vpack.c.b16 %v4959, %v4958
          %v4974 = vpack.c.b16 %v4961, %v4960
          %v4975 = vpack.c.b16 %v4963, %v4962
          %v4976 = vpack.c.b16 %v4965, %v4964
          %v4977 = vpack.c.b16 %v4967, %v4966
          %v4978 = vpack.c.b16 %v4969, %v4968
          %v4979 = vpack.c.b16 %v4971, %v4970
          %4988 = vmatprep.subr.bf16.mxu0 0
          %4989 = vmatpush1.bf16.msra.mxu0 %v4972
          %4990 = vmatprep.subr.bf16.mxu0 0
          %4991 = vmatpush1.bf16.msra.mxu0 %v4973
          %4992 = vmatprep.subr.bf16.mxu0 0
          %4993 = vmatpush1.bf16.msra.mxu0 %v4974
          %4994 = vmatprep.subr.bf16.mxu0 0
          %4995 = vmatpush1.bf16.msra.mxu0 %v4975
          %4996 = vmatprep.subr.bf16.mxu0 0
          %4997 = vmatpush1.bf16.msra.mxu0 %v4976
          %4998 = vmatprep.subr.bf16.mxu0 0
          %4999 = vmatpush1.bf16.msra.mxu0 %v4977
          %5000 = vmatprep.subr.bf16.mxu0 0
          %5001 = vmatpush1.bf16.msra.mxu0 %v4978
          %5002 = vmatprep.subr.bf16.mxu0 0
          %5003 = vmatpush1.bf16.msra.mxu0 %v4979
          %5004 = vmatprep.subr.bf16.mxu0 0
          %5005 = vmatpush1.bf16.msra.mxu0 0
          %5006 = vmatprep.subr.bf16.mxu0 0
          %5007 = vmatpush1.bf16.msra.mxu0 0
          %5008 = vmatprep.subr.bf16.mxu0 0
          %5009 = vmatpush1.bf16.msra.mxu0 0
          %5010 = vmatprep.subr.bf16.mxu0 0
          %5011 = vmatpush1.bf16.msra.mxu0 0
          %5012 = vmatprep.subr.bf16.mxu0 0
          %5013 = vmatpush1.bf16.msra.mxu0 0
          %5014 = vmatprep.subr.bf16.mxu0 0
          %5015 = vmatpush1.bf16.msra.mxu0 0
          %5016 = vmatprep.subr.bf16.mxu0 0
          %5017 = vmatpush1.bf16.msra.mxu0 0
          %5018 = vmatprep.subr.bf16.mxu0 0
          %5019 = vmatpush1.bf16.msra.mxu0 0
          %5020 = vmatprep.mubr.bf16.mxu0 0
          %5021 = vmatmul.mubr.bf16.gmra.mrb[0].mxu0 %v4916
          %v5022 = vpop.f32.mrb[0].mxu0
          %v5023 = vadd.f32 %v4938, %v5022
          %v5024 = vpop.f32.mrb[0].mxu0
          %v5025 = vpop.f32.mrb[0].mxu0
          %v5026 = vpop.f32.mrb[0].mxu0
          %5027 = vdwg.mxu0
          %v5028 = vadd.f32 %v4427, %v5023
          %v5029 = vld [vmem:[%s2300] sm:$0x1]
          %v5030 = vld [vmem:[%s2308] sm:$0x1]
          %5031 = vadd.xlane.f32.xlu0 %v5028
          %v5032 = vpop.xlane.xlu0 %5031
          %v5033 = vmul.f32 %v5032, %v4404
          %v5034 = vsub.f32 %v5028, %v5033
          %v5035 = vmul.f32 %v5034, %v5034
          %5036 = vadd.xlane.f32.xlu0 %v5035
          %v5037 = vpop.xlane.xlu0 %5036
          %v5038 = vmul.f32 %v5037, %v4404
          %v5039 = vadd.f32 %v5038, 1e-05
          %v5040 = vrsqrt.pop %v5039
          %v5041 = vmul.f32 %v5034, %v5040
          %v5043 = vlaneseq
          %v5044 = vshrl.u32 %v5043, 7
          %v5045 = vsub.s32 0, %v5044
          %v5046 = vrot.slane %v5029, %v5045
          %v5048 = vmul.f32 %v5041, %v5046
          %v5050 = vlaneseq
          %v5051 = vshrl.u32 %v5050, 7
          %v5052 = vsub.s32 0, %v5051
          %v5053 = vrot.slane %v5030, %v5052
          %v5055 = vadd.f32 %v5048, %v5053
          %v5056 = vpack.c.bf16 %v5055, %v5055
          %v5057 = vld [vmem:[%s2317] sm:$0xff]
          %v5058 = vld [vmem:[%s2317 + $0x8] sm:$0xff]
          %v5059 = vld [vmem:[%s2317 + $0x10] sm:$0xff]
          %v5060 = vld [vmem:[%s2317 + $0x18] sm:$0xff]
          %v5061 = vld [vmem:[%s2317 + $0x20] sm:$0xff]
          %v5062 = vld [vmem:[%s2317 + $0x28] sm:$0xff]
          %v5063 = vld [vmem:[%s2317 + $0x30] sm:$0xff]
          %v5064 = vld [vmem:[%s2317 + $0x38] sm:$0xff]
          %v5065 = vld [vmem:[%s2317 + $0x40] sm:$0xff]
          %v5066 = vld [vmem:[%s2317 + $0x48] sm:$0xff]
          %v5067 = vld [vmem:[%s2317 + $0x50] sm:$0xff]
          %v5068 = vld [vmem:[%s2317 + $0x58] sm:$0xff]
          %v5069 = vld [vmem:[%s2317 + $0x60] sm:$0xff]
          %v5070 = vld [vmem:[%s2317 + $0x68] sm:$0xff]
          %v5071 = vld [vmem:[%s2317 + $0x70] sm:$0xff]
          %v5072 = vld [vmem:[%s2317 + $0x78] sm:$0xff]
          %v5073 = vld [vmem:[%s2326] sm:$0x3]
          %v5075 = vlaneseq
          %v5076 = vshrl.u32 %v5075, 7
          %v5077 = vsub.s32 0, %v5076
          %v5078 = vrot.slane %v5073, %v5077
          %v5079 = vlaneseq
          %v5080 = vshrl.u32 %v5079, 7
          %v5081 = vsub.s32 1, %v5080
          %v5082 = vrot.slane %v5073, %v5081
          %v5101 = vunpack.c.l.b16 %v5057
          %v5102 = vunpack.c.h.b16 %v5057
          %v5103 = vunpack.c.l.b16 %v5058
          %v5104 = vunpack.c.h.b16 %v5058
          %v5105 = vunpack.c.l.b16 %v5059
          %v5106 = vunpack.c.h.b16 %v5059
          %v5107 = vunpack.c.l.b16 %v5060
          %v5108 = vunpack.c.h.b16 %v5060
          %v5109 = vunpack.c.l.b16 %v5061
          %v5110 = vunpack.c.h.b16 %v5061
          %v5111 = vunpack.c.l.b16 %v5062
          %v5112 = vunpack.c.h.b16 %v5062
          %v5113 = vunpack.c.l.b16 %v5063
          %v5114 = vunpack.c.h.b16 %v5063
          %v5115 = vunpack.c.l.b16 %v5064
          %v5116 = vunpack.c.h.b16 %v5064
          %v5117 = vunpack.c.l.b16 %v5065
          %v5118 = vunpack.c.h.b16 %v5065
          %v5119 = vunpack.c.l.b16 %v5066
          %v5120 = vunpack.c.h.b16 %v5066
          %v5121 = vunpack.c.l.b16 %v5067
          %v5122 = vunpack.c.h.b16 %v5067
          %v5123 = vunpack.c.l.b16 %v5068
          %v5124 = vunpack.c.h.b16 %v5068
          %v5125 = vunpack.c.l.b16 %v5069
          %v5126 = vunpack.c.h.b16 %v5069
          %v5127 = vunpack.c.l.b16 %v5070
          %v5128 = vunpack.c.h.b16 %v5070
          %v5129 = vunpack.c.l.b16 %v5071
          %v5130 = vunpack.c.h.b16 %v5071
          %v5131 = vunpack.c.l.b16 %v5072
          %v5132 = vunpack.c.h.b16 %v5072
          %v5133 = vpack.c.b16 %v5103, %v5101
          %v5134 = vpack.c.b16 %v5104, %v5102
          %v5135 = vpack.c.b16 %v5107, %v5105
          %v5136 = vpack.c.b16 %v5108, %v5106
          %v5137 = vpack.c.b16 %v5111, %v5109
          %v5138 = vpack.c.b16 %v5112, %v5110
          %v5139 = vpack.c.b16 %v5115, %v5113
          %v5140 = vpack.c.b16 %v5116, %v5114
          %v5141 = vpack.c.b16 %v5119, %v5117
          %v5142 = vpack.c.b16 %v5120, %v5118
          %v5143 = vpack.c.b16 %v5123, %v5121
          %v5144 = vpack.c.b16 %v5124, %v5122
          %v5145 = vpack.c.b16 %v5127, %v5125
          %v5146 = vpack.c.b16 %v5128, %v5126
          %v5147 = vpack.c.b16 %v5131, %v5129
          %v5148 = vpack.c.b16 %v5132, %v5130
          %5165 = vmatprep.subr.bf16.mxu0 %v5134
          %5166 = vmatpush1.bf16.msra.mxu0 %v5133
          %5167 = vmatprep.subr.bf16.mxu0 %v5136
          %5168 = vmatpush1.bf16.msra.mxu0 %v5135
          %5169 = vmatprep.subr.bf16.mxu0 %v5138
          %5170 = vmatpush1.bf16.msra.mxu0 %v5137
          %5171 = vmatprep.subr.bf16.mxu0 %v5140
          %5172 = vmatpush1.bf16.msra.mxu0 %v5139
          %5173 = vmatprep.subr.bf16.mxu0 %v5142
          %5174 = vmatpush1.bf16.msra.mxu0 %v5141
          %5175 = vmatprep.subr.bf16.mxu0 %v5144
          %5176 = vmatpush1.bf16.msra.mxu0 %v5143
          %5177 = vmatprep.subr.bf16.mxu0 %v5146
          %5178 = vmatpush1.bf16.msra.mxu0 %v5145
          %5179 = vmatprep.subr.bf16.mxu0 %v5148
          %5180 = vmatpush1.bf16.msra.mxu0 %v5147
          %5181 = vmatprep.subr.bf16.mxu0 0
          %5182 = vmatpush1.bf16.msra.mxu0 0
          %5183 = vmatprep.subr.bf16.mxu0 0
          %5184 = vmatpush1.bf16.msra.mxu0 0
          %5185 = vmatprep.subr.bf16.mxu0 0
          %5186 = vmatpush1.bf16.msra.mxu0 0
          %5187 = vmatprep.subr.bf16.mxu0 0
          %5188 = vmatpush1.bf16.msra.mxu0 0
          %5189 = vmatprep.subr.bf16.mxu0 0
          %5190 = vmatpush1.bf16.msra.mxu0 0
          %5191 = vmatprep.subr.bf16.mxu0 0
          %5192 = vmatpush1.bf16.msra.mxu0 0
          %5193 = vmatprep.subr.bf16.mxu0 0
          %5194 = vmatpush1.bf16.msra.mxu0 0
          %5195 = vmatprep.subr.bf16.mxu0 0
          %5196 = vmatpush1.bf16.msra.mxu0 0
          %5197 = vmatprep.mubr.bf16.mxu0 0
          %5198 = vmatmul.mubr.bf16.gmra.mrb[0].mxu0 %v5056
          %v5199 = vpop.f32.mrb[0].mxu0
          %v5200 = vadd.f32 %v5078, %v5199
          %v5201 = vpop.f32.mrb[0].mxu0
          %v5202 = vadd.f32 %v5082, %v5201
          %v5203 = vpop.f32.mrb[0].mxu0
          %v5204 = vpop.f32.mrb[0].mxu0
          %5205 = vdwg.mxu0
          %v5206 = vpack.c.bf16 %v5200, %v5200
          %v5207 = vpack.c.bf16 %v5202, %v5202
          %v5208 = vmax.bf16 %v5206, 0
          %v5209 = vmax.bf16 %v5207, 0
          %v5210 = vld [vmem:[%s2335] sm:$0xf]
          %v5211 = vld [vmem:[%s2335 + $0x4] sm:$0xf]
          %v5212 = vld [vmem:[%s2335 + $0x8] sm:$0xf]
          %v5213 = vld [vmem:[%s2335 + $0xc] sm:$0xf]
          %v5214 = vld [vmem:[%s2335 + $0x10] sm:$0xf]
          %v5215 = vld [vmem:[%s2335 + $0x14] sm:$0xf]
          %v5216 = vld [vmem:[%s2335 + $0x18] sm:$0xf]
          %v5217 = vld [vmem:[%s2335 + $0x1c] sm:$0xf]
          %v5218 = vld [vmem:[%s2335 + $0x20] sm:$0xf]
          %v5219 = vld [vmem:[%s2335 + $0x24] sm:$0xf]
          %v5220 = vld [vmem:[%s2335 + $0x28] sm:$0xf]
          %v5221 = vld [vmem:[%s2335 + $0x2c] sm:$0xf]
          %v5222 = vld [vmem:[%s2335 + $0x30] sm:$0xf]
          %v5223 = vld [vmem:[%s2335 + $0x34] sm:$0xf]
          %v5224 = vld [vmem:[%s2335 + $0x38] sm:$0xf]
          %v5225 = vld [vmem:[%s2335 + $0x3c] sm:$0xf]
          %v5226 = vld [vmem:[%s2335 + $0x40] sm:$0xf]
          %v5227 = vld [vmem:[%s2335 + $0x44] sm:$0xf]
          %v5228 = vld [vmem:[%s2335 + $0x48] sm:$0xf]
          %v5229 = vld [vmem:[%s2335 + $0x4c] sm:$0xf]
          %v5230 = vld [vmem:[%s2335 + $0x50] sm:$0xf]
          %v5231 = vld [vmem:[%s2335 + $0x54] sm:$0xf]
          %v5232 = vld [vmem:[%s2335 + $0x58] sm:$0xf]
          %v5233 = vld [vmem:[%s2335 + $0x5c] sm:$0xf]
          %v5234 = vld [vmem:[%s2335 + $0x60] sm:$0xf]
          %v5235 = vld [vmem:[%s2335 + $0x64] sm:$0xf]
          %v5236 = vld [vmem:[%s2335 + $0x68] sm:$0xf]
          %v5237 = vld [vmem:[%s2335 + $0x6c] sm:$0xf]
          %v5238 = vld [vmem:[%s2335 + $0x70] sm:$0xf]
          %v5239 = vld [vmem:[%s2335 + $0x74] sm:$0xf]
          %v5240 = vld [vmem:[%s2335 + $0x78] sm:$0xf]
          %v5241 = vld [vmem:[%s2335 + $0x7c] sm:$0xf]
          %v5242 = vld [vmem:[%s2343] sm:$0x1]
          %v5244 = vlaneseq
          %v5245 = vshrl.u32 %v5244, 7
          %v5246 = vsub.s32 0, %v5245
          %v5247 = vrot.slane %v5242, %v5246
          %v5281 = vunpack.c.l.b16 %v5210
          %v5282 = vunpack.c.l.b16 %v5211
          %v5283 = vunpack.c.l.b16 %v5212
          %v5284 = vunpack.c.l.b16 %v5213
          %v5285 = vunpack.c.l.b16 %v5214
          %v5286 = vunpack.c.l.b16 %v5215
          %v5287 = vunpack.c.l.b16 %v5216
          %v5288 = vunpack.c.l.b16 %v5217
          %v5289 = vunpack.c.l.b16 %v5218
          %v5290 = vunpack.c.l.b16 %v5219
          %v5291 = vunpack.c.l.b16 %v5220
          %v5292 = vunpack.c.l.b16 %v5221
          %v5293 = vunpack.c.l.b16 %v5222
          %v5294 = vunpack.c.l.b16 %v5223
          %v5295 = vunpack.c.l.b16 %v5224
          %v5296 = vunpack.c.l.b16 %v5225
          %v5297 = vunpack.c.l.b16 %v5226
          %v5298 = vunpack.c.l.b16 %v5227
          %v5299 = vunpack.c.l.b16 %v5228
          %v5300 = vunpack.c.l.b16 %v5229
          %v5301 = vunpack.c.l.b16 %v5230
          %v5302 = vunpack.c.l.b16 %v5231
          %v5303 = vunpack.c.l.b16 %v5232
          %v5304 = vunpack.c.l.b16 %v5233
          %v5305 = vunpack.c.l.b16 %v5234
          %v5306 = vunpack.c.l.b16 %v5235
          %v5307 = vunpack.c.l.b16 %v5236
          %v5308 = vunpack.c.l.b16 %v5237
          %v5309 = vunpack.c.l.b16 %v5238
          %v5310 = vunpack.c.l.b16 %v5239
          %v5311 = vunpack.c.l.b16 %v5240
          %v5312 = vunpack.c.l.b16 %v5241
          %v5313 = vpack.c.b16 %v5282, %v5281
          %v5314 = vpack.c.b16 %v5284, %v5283
          %v5315 = vpack.c.b16 %v5286, %v5285
          %v5316 = vpack.c.b16 %v5288, %v5287
          %v5317 = vpack.c.b16 %v5290, %v5289
          %v5318 = vpack.c.b16 %v5292, %v5291
          %v5319 = vpack.c.b16 %v5294, %v5293
          %v5320 = vpack.c.b16 %v5296, %v5295
          %v5321 = vpack.c.b16 %v5298, %v5297
          %v5322 = vpack.c.b16 %v5300, %v5299
          %v5323 = vpack.c.b16 %v5302, %v5301
          %v5324 = vpack.c.b16 %v5304, %v5303
          %v5325 = vpack.c.b16 %v5306, %v5305
          %v5326 = vpack.c.b16 %v5308, %v5307
          %v5327 = vpack.c.b16 %v5310, %v5309
          %v5328 = vpack.c.b16 %v5312, %v5311
          %5345 = vmatprep.subr.bf16.mxu0 0
          %5346 = vmatpush1.bf16.msra.mxu0 %v5313
          %5347 = vmatprep.subr.bf16.mxu0 0
          %5348 = vmatpush1.bf16.msra.mxu0 %v5314
          %5349 = vmatprep.subr.bf16.mxu0 0
          %5350 = vmatpush1.bf16.msra.mxu0 %v5315
          %5351 = vmatprep.subr.bf16.mxu0 0
          %5352 = vmatpush1.bf16.msra.mxu0 %v5316
          %5353 = vmatprep.subr.bf16.mxu0 0
          %5354 = vmatpush1.bf16.msra.mxu0 %v5317
          %5355 = vmatprep.subr.bf16.mxu0 0
          %5356 = vmatpush1.bf16.msra.mxu0 %v5318
          %5357 = vmatprep.subr.bf16.mxu0 0
          %5358 = vmatpush1.bf16.msra.mxu0 %v5319
          %5359 = vmatprep.subr.bf16.mxu0 0
          %5360 = vmatpush1.bf16.msra.mxu0 %v5320
          %5361 = vmatprep.subr.bf16.mxu0 0
          %5362 = vmatpush1.bf16.msra.mxu0 %v5321
          %5363 = vmatprep.subr.bf16.mxu0 0
          %5364 = vmatpush1.bf16.msra.mxu0 %v5322
          %5365 = vmatprep.subr.bf16.mxu0 0
          %5366 = vmatpush1.bf16.msra.mxu0 %v5323
          %5367 = vmatprep.subr.bf16.mxu0 0
          %5368 = vmatpush1.bf16.msra.mxu0 %v5324
          %5369 = vmatprep.subr.bf16.mxu0 0
          %5370 = vmatpush1.bf16.msra.mxu0 %v5325
          %5371 = vmatprep.subr.bf16.mxu0 0
          %5372 = vmatpush1.bf16.msra.mxu0 %v5326
          %5373 = vmatprep.subr.bf16.mxu0 0
          %5374 = vmatpush1.bf16.msra.mxu0 %v5327
          %5375 = vmatprep.subr.bf16.mxu0 0
          %5376 = vmatpush1.bf16.msra.mxu0 %v5328
          %5377 = vmatprep.mubr.bf16.mxu0 %v5209
          %5378 = vmatmul.mubr.bf16.gmra.mrb[0].mxu0 %v5208
          %v5379 = vpop.f32.mrb[0].mxu0
          %v5380 = vadd.f32 %v5247, %v5379
          %v5381 = vpop.f32.mrb[0].mxu0
          %v5382 = vpop.f32.mrb[0].mxu0
          %v5383 = vpop.f32.mrb[0].mxu0
          %5384 = vdwg.mxu0
          %v5385 = vadd.f32 %v5055, %v5380
          %v5386 = vld [vmem:[%s2351] sm:$0x1]
          %v5387 = vld [vmem:[%s2359] sm:$0x1]
          %5388 = vadd.xlane.f32.xlu0 %v5385
          %v5389 = vpop.xlane.xlu0 %5388
          %v5390 = vmul.f32 %v5389, %v4404
          %v5391 = vsub.f32 %v5385, %v5390
          %v5392 = vmul.f32 %v5391, %v5391
          %5393 = vadd.xlane.f32.xlu0 %v5392
          %v5394 = vpop.xlane.xlu0 %5393
          %v5395 = vmul.f32 %v5394, %v4404
          %v5396 = vadd.f32 %v5395, 1e-05
          %v5397 = vrsqrt.pop %v5396
          %v5398 = vmul.f32 %v5391, %v5397
          %v5400 = vlaneseq
          %v5401 = vshrl.u32 %v5400, 7
          %v5402 = vsub.s32 0, %v5401
          %v5403 = vrot.slane %v5386, %v5402
          %v5405 = vmul.f32 %v5398, %v5403
          %v5407 = vlaneseq
          %v5408 = vshrl.u32 %v5407, 7
          %v5409 = vsub.s32 0, %v5408
          %v5410 = vrot.slane %v5387, %v5409
          %v5412 = vadd.f32 %v5405, %v5410
          %5413 = vst [vmem:[#allocation4] sm:$0xff] %v5412
          %p5414 = scmp.eq.s32.totalorder %s118, 5
          // Predicated region
          $region337: #{transformer_forward.1} parent=335 // pred_check
            %p5415 = pneg %p5414
          $region338: #{transformer_forward.1} parent=335 // pred_check_branch
            %5417 = sbr.rel (%p5415) target = $region340
          $region339: #{transformer_forward.1} parent=335 // pred_region
            %v5418 = vld [vmem:[#allocation40] sm:$0x1]
            %v5419 = vld [vmem:[#allocation41] sm:$0x1]
            %5420 = vadd.xlane.f32.xlu0 %v5412
            %v5421 = vpop.xlane.xlu0 %5420
            %v5422 = vmul.f32 %v5421, %v4404
            %v5423 = vsub.f32 %v5412, %v5422
            %v5424 = vmul.f32 %v5423, %v5423
            %5425 = vadd.xlane.f32.xlu0 %v5424
            %v5426 = vpop.xlane.xlu0 %5425
            %v5427 = vmul.f32 %v5426, %v4404
            %v5428 = vadd.f32 %v5427, 1e-05
            %v5429 = vrsqrt.pop %v5428
            %v5430 = vmul.f32 %v5423, %v5429
            %v5432 = vlaneseq
            %v5433 = vshrl.u32 %v5432, 7
            %v5434 = vsub.s32 0, %v5433
            %v5435 = vrot.slane %v5418, %v5434
            %v5437 = vmul.f32 %v5430, %v5435
            %v5439 = vlaneseq
            %v5440 = vshrl.u32 %v5439, 7
            %v5441 = vsub.s32 0, %v5440
            %v5442 = vrot.slane %v5419, %v5441
            %v5444 = vadd.f32 %v5437, %v5442
            %v5445 = vpack.c.bf16 %v5444, %v5444
            %v5446 = vld [vmem:[#allocation42] sm:$0xf]
            %v5447 = vld [vmem:[#allocation42 + $0x4] sm:$0xf]
            %v5448 = vld [vmem:[#allocation42 + $0x8] sm:$0xf]
            %v5449 = vld [vmem:[#allocation42 + $0xc] sm:$0xf]
            %v5450 = vld [vmem:[#allocation42 + $0x10] sm:$0xf]
            %v5451 = vld [vmem:[#allocation42 + $0x14] sm:$0xf]
            %v5452 = vld [vmem:[#allocation42 + $0x18] sm:$0xf]
            %v5453 = vld [vmem:[#allocation42 + $0x1c] sm:$0xf]
            %v5454 = vld [vmem:[#allocation42 + $0x20] sm:$0xf]
            %v5455 = vld [vmem:[#allocation42 + $0x24] sm:$0xf]
            %v5456 = vld [vmem:[#allocation42 + $0x28] sm:$0xf]
            %v5457 = vld [vmem:[#allocation42 + $0x2c] sm:$0xf]
            %v5458 = vld [vmem:[#allocation42 + $0x30] sm:$0xf]
            %v5459 = vld [vmem:[#allocation42 + $0x34] sm:$0xf]
            %v5460 = vld [vmem:[#allocation42 + $0x38] sm:$0xf]
            %v5461 = vld [vmem:[#allocation42 + $0x3c] sm:$0xf]
            %v5462 = vld [vmem:[#allocation44] sm:$0x1]
            %v5464 = vlaneseq
            %v5465 = vshrl.u32 %v5464, 7
            %v5466 = vsub.s32 0, %v5465
            %v5467 = vrot.slane %v5462, %v5466
            %v5485 = vunpack.c.l.b16 %v5446
            %v5486 = vunpack.c.l.b16 %v5447
            %v5487 = vunpack.c.l.b16 %v5448
            %v5488 = vunpack.c.l.b16 %v5449
            %v5489 = vunpack.c.l.b16 %v5450
            %v5490 = vunpack.c.l.b16 %v5451
            %v5491 = vunpack.c.l.b16 %v5452
            %v5492 = vunpack.c.l.b16 %v5453
            %v5493 = vunpack.c.l.b16 %v5454
            %v5494 = vunpack.c.l.b16 %v5455
            %v5495 = vunpack.c.l.b16 %v5456
            %v5496 = vunpack.c.l.b16 %v5457
            %v5497 = vunpack.c.l.b16 %v5458
            %v5498 = vunpack.c.l.b16 %v5459
            %v5499 = vunpack.c.l.b16 %v5460
            %v5500 = vunpack.c.l.b16 %v5461
            %v5501 = vpack.c.b16 %v5486, %v5485
            %v5502 = vpack.c.b16 %v5488, %v5487
            %v5503 = vpack.c.b16 %v5490, %v5489
            %v5504 = vpack.c.b16 %v5492, %v5491
            %v5505 = vpack.c.b16 %v5494, %v5493
            %v5506 = vpack.c.b16 %v5496, %v5495
            %v5507 = vpack.c.b16 %v5498, %v5497
            %v5508 = vpack.c.b16 %v5500, %v5499
            %5517 = vmatprep.subr.bf16.mxu0 0
            %5518 = vmatpush1.bf16.msra.mxu0 %v5501
            %5519 = vmatprep.subr.bf16.mxu0 0
            %5520 = vmatpush1.bf16.msra.mxu0 %v5502
            %5521 = vmatprep.subr.bf16.mxu0 0
            %5522 = vmatpush1.bf16.msra.mxu0 %v5503
            %5523 = vmatprep.subr.bf16.mxu0 0
            %5524 = vmatpush1.bf16.msra.mxu0 %v5504
            %5525 = vmatprep.subr.bf16.mxu0 0
            %5526 = vmatpush1.bf16.msra.mxu0 %v5505
            %5527 = vmatprep.subr.bf16.mxu0 0
            %5528 = vmatpush1.bf16.msra.mxu0 %v5506
            %5529 = vmatprep.subr.bf16.mxu0 0
            %5530 = vmatpush1.bf16.msra.mxu0 %v5507
            %5531 = vmatprep.subr.bf16.mxu0 0
            %5532 = vmatpush1.bf16.msra.mxu0 %v5508
            %5533 = vmatprep.subr.bf16.mxu0 0
            %5534 = vmatpush1.bf16.msra.mxu0 0
            %5535 = vmatprep.subr.bf16.mxu0 0
            %5536 = vmatpush1.bf16.msra.mxu0 0
            %5537 = vmatprep.subr.bf16.mxu0 0
            %5538 = vmatpush1.bf16.msra.mxu0 0
            %5539 = vmatprep.subr.bf16.mxu0 0
            %5540 = vmatpush1.bf16.msra.mxu0 0
            %5541 = vmatprep.subr.bf16.mxu0 0
            %5542 = vmatpush1.bf16.msra.mxu0 0
            %5543 = vmatprep.subr.bf16.mxu0 0
            %5544 = vmatpush1.bf16.msra.mxu0 0
            %5545 = vmatprep.subr.bf16.mxu0 0
            %5546 = vmatpush1.bf16.msra.mxu0 0
            %5547 = vmatprep.subr.bf16.mxu0 0
            %5548 = vmatpush1.bf16.msra.mxu0 0
            %5549 = vmatprep.mubr.bf16.mxu0 0
            %5550 = vmatmul.mubr.bf16.gmra.mrb[0].mxu0 %v5445
            %v5551 = vpop.f32.mrb[0].mxu0
            %v5552 = vadd.f32 %v5467, %v5551
            %v5553 = vpop.f32.mrb[0].mxu0
            %v5554 = vpop.f32.mrb[0].mxu0
            %v5555 = vpop.f32.mrb[0].mxu0
            %5556 = vdwg.mxu0
            %5557 = vst [vmem:[%s2754] sm:$0xff] %v5552
          $region340: #{transformer_forward.1} parent=335 // pred_fallthru
            _
        $region336: #{transformer_forward.1} parent=187 // pred_fallthru
          _
        %p5558 = scmp.lt.s32.totalorder %s117, 1
        %s5559 = scalar_select %p5558, %s117, 1
        %s5560 = smul.addr %s5559, 8
        %s5561 = scalar_lea.vmem %s85, %s5560
        // Predicated region
        $region341: #{transformer_forward.1} parent=187 // pred_check
          %p5562 = pneg %p1368
        $region342: #{transformer_forward.1} parent=187 // pred_check_branch
          %5564 = sbr.rel (%p5562) target = $region344
        $region343: #{transformer_forward.1} parent=187 // pred_region
          _
        $region344: #{transformer_forward.1} parent=187 // pred_fallthru
          _
      $region188: #{transformer_forward.1} parent=5 // pred_fallthru
        _
      %p5565 = scmp.le.s32.totalorder 2, %s108
      // Predicated region
      $region345: #{transformer_forward.1} parent=5 // pred_check
        %p5566 = pneg %p5565
      $region346: #{transformer_forward.1} parent=5 // pred_check_branch
        %5568 = sbr.rel (%p5566) target = $region348
      $region347: #{transformer_forward.1} parent=5 // pred_region
        %s5569 = ssub.s32 %s108, 2
        // Predicated region
        $region349: #{transformer_forward.1} parent=347 // pred_check
          %p5570 = pneg %p1374
        $region350: #{transformer_forward.1} parent=347 // pred_check_branch
          %5572 = sbr.rel (%p5570) target = $region352
        $region351: #{transformer_forward.1} parent=347 // pred_region
          %p5573 = scmp.lt.s32.totalorder %s119, 1
          %s5574 = scalar_select %p5573, %s119, 1
          %s5575 = smul.addr %s5574, 8
          %s5576 = scalar_lea.vmem %s85, %s5575
        $region352: #{transformer_forward.1} parent=347 // pred_fallthru
          _
      $region348: #{transformer_forward.1} parent=5 // pred_fallthru
        _
    $region6: #{transformer_forward.1} parent=1 // loop_footer
      %s112 = sadd.s32 1, %s108
    $region7: #{transformer_forward.1} parent=1 // loop_footer_branch
      %107 = sbr.rel target = $region3
    $region8: #{transformer_forward.1} parent=1 // loop_exit
      _
    %5577 = vsyncpa [#allocation6], 1
    %s5578 = scalar_lea.sflag [#allocation6], 1
    %5579 = vsyncpa %s5578, 1
    %5580 = vsyncpa [#allocation8], 1
    %s5581 = scalar_lea.sflag [#allocation8], 1
    %5582 = vsyncpa %s5581, 1
    %5583 = vsyncpa [#allocation11], 1
    %s5584 = scalar_lea.sflag [#allocation11], 1
    %5585 = vsyncpa %s5584, 1
    %5586 = vsyncpa [#allocation14], 1
    %s5587 = scalar_lea.sflag [#allocation14], 1
    %5588 = vsyncpa %s5587, 1
    %5589 = vsyncpa [#allocation17], 1
    %s5590 = scalar_lea.sflag [#allocation17], 1
    %5591 = vsyncpa %s5590, 1
    %5592 = vsyncpa [#allocation20], 1
    %5593 = vsyncpa [#allocation43], 1

</llo_original>
